<compile_context>
chip_gen: v7x
topology: tpu7x:2x2x1
jax: 0.10.0
libtpu: 0.0.40
codegen_flags: <defaults>
</compile_context>

<pallas_src>
import math

import jax
import jax.numpy as jnp
import numpy as np
from jax.experimental import pallas as pl
from jax.experimental.pallas import tpu as pltpu


def _round_up(a, b):
    return (a + b - 1) // b * b


# --------------------------- kernel 1: q / k projections ---------------------------
def _make_lorentz_linear_kernel(bias_lane):
    def kernel(scal_ref, x_ref, wqt_ref, bq_ref, wkt_ref, bk_ref, qm_ref, k_ref):
        """scal_ref (SMEM, (4,)) = [exp(log_scale_q), exp(log_scale_k),
                                    2/att_scale, 2/att_scale + att_bias].

        Outputs (bf16, they only feed the MXU in pass 2):
          qm_ref: LorentzLinear_q(x), time negated, whole vector scaled by
                  2/att_scale (folded in f32 *before* the bf16 cast); if a spare
                  zero-padded lane exists, it carries the additive constant.
          k_ref : LorentzLinear_k(x); spare lane carries 1.0 to pick the constant
                  up inside the cinner matmul.
        """
        x = x_ref[...]                                               # (tm1, Dp) bf16
        col = jax.lax.broadcasted_iota(jnp.int32, qm_ref.shape, 1)

        def lorentz_linear(wt_ref, b_ref, exp_scale, negate_time):
            # nn.Linear: y = x @ W.T + b  (W passed pre-transposed, bf16 in / f32 acc)
            y = jnp.dot(x, wt_ref[...], preferred_element_type=jnp.float32) + b_ref[...]
            time = jax.nn.sigmoid(y[:, 0:1]) * exp_scale + 1.1       # (tm1, 1)
            y_space = jnp.where(col == 0, 0.0, y)                    # space components
            sumsq = jnp.maximum(jnp.sum(y_space * y_space, axis=-1, keepdims=True), 1e-8)
            sf = jnp.sqrt((time * time - 1.0) / sumsq)               # (tm1, 1)
            t = -time if negate_time else time
            return jnp.where(col == 0, t, y_space * sf)

        qm = lorentz_linear(wqt_ref, bq_ref, scal_ref[0], True) * scal_ref[2]
        k = lorentz_linear(wkt_ref, bk_ref, scal_ref[1], False)
        if bias_lane >= 0:
            # Fold the additive attention constant into the MXU via a free lane.
            qm = jnp.where(col == bias_lane, scal_ref[3], qm)
            k = jnp.where(col == bias_lane, 1.0, k)
        qm_ref[...] = qm.astype(qm_ref.dtype)
        k_ref[...] = k.astype(k_ref.dtype)

    return kernel


# --------------------------- kernel 2: attention + aggregation ---------------------
def _make_agg_kernel(tn, resident, bias_folded):
    def kernel(scal_ref, qm_ref, k_ref, x_ref, adj_ref, out_ref):
        """scal_ref (SMEM, (1,)) = [2/att_scale + att_bias]; only used when the
        constant could not be folded into a spare lane (D == Dp)."""
        j = pl.program_id(1)

        @pl.when(j == 0)
        def _():
            out_ref[...] = jnp.zeros_like(out_ref)      # out_ref doubles as accumulator

        if resident:
            # k / x are fully VMEM-resident; slice the current column block.
            off = pl.multiple_of(j * tn, tn)
            k_blk = k_ref[pl.ds(off, tn), :]
            x_blk = x_ref[pl.ds(off, tn), :]
        else:
            k_blk = k_ref[...]
            x_blk = x_ref[...]

        # logit = (2 + 2*cinner(q, k)) / att_scale + att_bias.
        # 2/att_scale is folded into qm; the constant either rides in a spare
        # MXU lane (bias_folded) or is added here.
        logit = jax.lax.dot_general(qm_ref[...], k_blk,
                                    (((1,), (1,)), ((), ())),
                                    preferred_element_type=jnp.float32)   # (tm, tn)
        if not bias_folded:
            logit = logit + scal_ref[0]
        # sigmoid via EUP exp + approx reciprocal; clamp keeps exp finite.
        att = pl.reciprocal(1.0 + jnp.exp(jnp.minimum(-logit, 80.0)), approx=True)
        # Mask with the int8 adjacency tile; select in bf16 (MXU operand dtype).
        att = jnp.where(adj_ref[...] != 0, att.astype(jnp.bfloat16), 0.0)
        out_ref[...] += jnp.dot(att, x_blk, preferred_element_type=jnp.float32)

        @pl.when(j == pl.num_programs(1) - 1)
        def _():
            s = out_ref[...]
            col = jax.lax.broadcasted_iota(jnp.int32, s.shape, 1)
            space_sq = jnp.sum(jnp.where(col == 0, 0.0, s) ** 2, axis=-1, keepdims=True)
            inner = space_sq - s[:, 0:1] * s[:, 0:1]     # Lorentz self inner product
            out_ref[...] = s * jax.lax.rsqrt(jnp.maximum(jnp.abs(inner), 1e-8))

    return kernel


# ------------------------------------- wrapper -------------------------------------
def lorentz_agg(x, adj, wq, bq, wk, bk, log_scale_q, log_scale_k,
                att_scale, att_bias, *, tm=512, tn=512, resident=None,
                resident_vmem_budget=40 * 1024 * 1024):
    """LorentzAgg(use_att=True).forward in eval mode.

    x: (N, D) f32, adj: (N, N) dense {0,1}, wq/wk: (D, D) nn.Linear weights,
    bq/bk: (D,), log_scale_*: LorentzLinear log-scale, att_scale/att_bias scalars.
    """
    N, D = x.shape
    # Clamp tiles to the (128-padded) problem size so tiny graphs run in one step.
    tm = max(128, min(tm, _round_up(N, 128)))
    tn = max(128, min(tn, _round_up(N, 128)))
    assert tm % 128 == 0 and tn % 128 == 0
    Dp = _round_up(max(D, 128), 128)                 # lane-dense feature dim
    Np_r = _round_up(N, tm)                          # adj rows / output rows
    Np_c = _round_up(N, tn)                          # adj cols == k/x rows
    Np = max(Np_r, Np_c)                             # pass-1 extent covers both
    bf = jnp.bfloat16
    bias_lane = D if D < Dp else -1                  # spare zero-padded lane, if any

    # Zero-padded operands.  Padding stays exactly zero so it never pollutes
    # sumsq / cinner / the Lorentz inner product; zero adj columns mask out the
    # (nonzero-time) padded rows of k.
    x_p = jnp.zeros((Np, Dp), bf).at[:N, :D].set(x.astype(bf))
    adj_p = jnp.zeros((Np_r, Np_c), jnp.int8).at[:N, :N].set((adj != 0).astype(jnp.int8))
    wq_t = jnp.zeros((Dp, Dp), bf).at[:D, :D].set(wq.T.astype(bf))
    wk_t = jnp.zeros((Dp, Dp), bf).at[:D, :D].set(wk.T.astype(bf))
    bq_p = jnp.zeros((1, Dp), jnp.float32).at[0, :D].set(bq.astype(jnp.float32))
    bk_p = jnp.zeros((1, Dp), jnp.float32).at[0, :D].set(bk.astype(jnp.float32))

    # Scalar math folded on the host.
    inv_s = 2.0 / jnp.asarray(att_scale, jnp.float32)
    bias_c = inv_s + jnp.asarray(att_bias, jnp.float32)
    lin_scal = jnp.stack([jnp.exp(jnp.asarray(log_scale_q, jnp.float32)),
                          jnp.exp(jnp.asarray(log_scale_k, jnp.float32)),
                          inv_s, bias_c])
    agg_scal = jnp.reshape(bias_c, (1,))

    # ---- pass 1: q (scaled, time-negated) / k projections, hoisted out of the
    # adjacency loop.  Weights are resident; large row tiles (one step if possible).
    tm1 = min(Np, 1024)
    while Np % tm1:
        tm1 -= 128
    qm_p, k_p = pl.pallas_call(
        _make_lorentz_linear_kernel(bias_lane),
        out_shape=(jax.ShapeDtypeStruct((Np, Dp), bf),
                   jax.ShapeDtypeStruct((Np, Dp), bf)),
        grid_spec=pltpu.PrefetchScalarGridSpec(
            num_scalar_prefetch=1,
            grid=(Np // tm1,),
            in_specs=[
                pl.BlockSpec((tm1, Dp), lambda i, s: (i, 0)),    # x row tile
                pl.BlockSpec((Dp, Dp), lambda i, s: (0, 0)),     # Wq^T (resident)
                pl.BlockSpec((1, Dp), lambda i, s: (0, 0)),      # bq
                pl.BlockSpec((Dp, Dp), lambda i, s: (0, 0)),     # Wk^T (resident)
                pl.BlockSpec((1, Dp), lambda i, s: (0, 0)),      # bk
            ],
            out_specs=[pl.BlockSpec((tm1, Dp), lambda i, s: (i, 0)),
                       pl.BlockSpec((tm1, Dp), lambda i, s: (i, 0))],
        ),
        compiler_params=pltpu.CompilerParams(
            dimension_semantics=("parallel",),
            vmem_limit_bytes=32 * 1024 * 1024),
    )(lin_scal, x_p, wq_t, bq_p, wk_t, bk_p)

    # ---- pass 2: adjacency-streamed attention + aggregation + normalization.
    def p2_vmem(resident_kx):
        kx_rows = Np_c if resident_kx else tn
        return (2 * tm * Dp * 2              # qm tiles (bf16, double-buffered)
                + 2 * 2 * kx_rows * Dp * 2   # k + x (bf16)
                + 2 * tm * tn * 1            # adj tiles (int8)
                + 2 * tm * Dp * 4            # out tiles (f32)
                + 3 * tm * tn * 4)           # f32 logit/att working set

    if resident is None:
        # Conservative budget keeps the config valid on v7x (64 MiB per TC,
        # each core holds its own copy under the parallel row axis).
        resident = p2_vmem(True) <= resident_vmem_budget
    vmem_limit = min(64 * 1024 * 1024,
                     max(32 * 1024 * 1024, int(p2_vmem(resident) * 3 // 2)))

    grid = (Np_r // tm, Np_c // tn)
    if resident:
        # Constant block index -> fetched once, stays resident across the grid.
        kx_specs = [pl.BlockSpec((Np_c, Dp), lambda i, j, s: (0, 0)),
                    pl.BlockSpec((Np_c, Dp), lambda i, j, s: (0, 0))]
        kx_bytes = 2 * Np_c * Dp * 2
    else:
        kx_specs = [pl.BlockSpec((tn, Dp), lambda i, j, s: (j, 0)),
                    pl.BlockSpec((tn, Dp), lambda i, j, s: (j, 0))]
        kx_bytes = grid[0] * 2 * Np_c * Dp * 2

    flops = 4 * Np_r * Np_c * Dp
    bytes_accessed = (Np_r * Np_c * 1        # adj (int8) — dominant HBM stream
                      + Np_r * Dp * 2        # qm
                      + kx_bytes             # k + x
                      + Np_r * Dp * 4)       # f32 output
    out_p = pl.pallas_call(
        _make_agg_kernel(tn, resident, bias_lane >= 0),
        out_shape=jax.ShapeDtypeStruct((Np_r, Dp), jnp.float32),
        grid_spec=pltpu.PrefetchScalarGridSpec(
            num_scalar_prefetch=1,
            grid=grid,
            in_specs=[pl.BlockSpec((tm, Dp), lambda i, j, s: (i, 0))]   # qm row tile
                     + kx_specs
                     # adj tile; pipeline_mode=pl.Buffered(3) is an option if
                     # profiling still shows exposed DMA here.
                     + [pl.BlockSpec((tm, tn), lambda i, j, s: (i, j))],
            out_specs=pl.BlockSpec((tm, Dp), lambda i, j, s: (i, 0)),
        ),
        compiler_params=pltpu.CompilerParams(
            dimension_semantics=("parallel", "arbitrary"),
            vmem_limit_bytes=vmem_limit),
        cost_estimate=pl.CostEstimate(flops=int(flops),
                                      transcendentals=int(Np_r * Np_c),
                                      bytes_accessed=int(bytes_accessed)),
    )(agg_scal, qm_p, k_p, x_p, adj_p)

    return out_p[:N, :D]


# ---------------- pure-JAX f32 reference (mirrors the PyTorch code) ----------------
def _lorentz_linear_ref(x, W, b, log_scale):
    y = x @ W.T + b
    time = jax.nn.sigmoid(y[:, :1]) * jnp.exp(log_scale) + 1.1
    xn = y[:, 1:]
    sf = (time * time - 1.0) / jnp.clip(jnp.sum(xn * xn, -1, keepdims=True), 1e-8)
    return jnp.concatenate([time, xn * jnp.sqrt(sf)], axis=-1)


def _lorentz_agg_ref(x, adj, wq, bq, wk, bk, log_scale_q, log_scale_k,
                     att_scale, att_bias):
    q = _lorentz_linear_ref(x, wq, bq, log_scale_q)
    k = _lorentz_linear_ref(x, wk, bk, log_scale_k)
    qm = q.at[:, 0].multiply(-1.0)
    cinner = qm @ k.T
    att = jax.nn.sigmoid((2.0 + 2.0 * cinner) / att_scale + att_bias)
    att = adj * att
    support = att @ x
    inner = -support[:, :1] ** 2 + jnp.sum(support[:, 1:] ** 2, -1, keepdims=True)
    denorm = jnp.sqrt(jnp.clip(jnp.abs(inner), 1e-8))
    return support / denorm


if __name__ == "__main__":
    def make_params(key, d):
        kq, kk = jax.random.split(key)
        stdv = 1.0 / math.sqrt(d)
        wq = jax.random.uniform(kq, (d, d), minval=-stdv, maxval=stdv, dtype=jnp.float32)
        wq = wq.at[:, 0].set(0.0)          # reset_parameters zeroes column 0
        wk = jax.random.uniform(kk, (d, d), minval=-stdv, maxval=stdv, dtype=jnp.float32)
        wk = wk.at[:, 0].set(0.0)
        return wq, jnp.zeros((d,), jnp.float32), wk, jnp.zeros((d,), jnp.float32)

    root = jax.random.PRNGKey(0)
    k1, k2, k3, k4, k5, k6 = jax.random.split(root, 6)

    # ---- check 1: module defaults (scale=10, att_bias=20, att_scale=sqrt(D)),
    # resident-k/x path, default 512x512 tiles -> grid (2, 2).
    N, D = 600, 32
    x = jax.random.normal(k1, (N, D), dtype=jnp.float32)
    adj = (jax.random.uniform(k2, (N, N)) < 0.3).astype(jnp.float32)
    wq, bq, wk, bk = make_params(k3, D)
    log_scale = math.log(10.0)
    att_scale, att_bias = math.sqrt(D), 20.0
    out = jax.block_until_ready(
        lorentz_agg(x, adj, wq, bq, wk, bk, log_scale, log_scale, att_scale, att_bias))
    ref = _lorentz_agg_ref(x, adj, wq, bq, wk, bk, log_scale, log_scale,
                           att_scale, att_bias)
    np.testing.assert_allclose(np.asarray(out), np.asarray(ref), rtol=5e-2, atol=5e-2)

    # ---- check 2: non-saturating attention bias (exercises the sigmoid slope,
    # per review), forced column-streaming fallback, 256x256 tiles -> grid (2, 2).
    N2, D2 = 300, 48
    x2 = jax.random.normal(k4, (N2, D2), dtype=jnp.float32)
    adj2 = (jax.random.uniform(k5, (N2, N2)) < 0.3).astype(jnp.float32)
    wq2, bq2, wk2, bk2 = make_params(k6, D2)
    log_scale2 = math.log(5.0)
    att_scale2, att_bias2 = math.sqrt(D2), 2.0
    out2 = jax.block_until_ready(
        lorentz_agg(x2, adj2, wq2, bq2, wk2, bk2, log_scale2, log_scale2,
                    att_scale2, att_bias2, tm=256, tn=256, resident=False))
    ref2 = _lorentz_agg_ref(x2, adj2, wq2, bq2, wk2, bk2, log_scale2, log_scale2,
                            att_scale2, att_bias2)
    # bf16 MXU operands + non-saturated sigmoid -> slightly looser tolerance.
    np.testing.assert_allclose(np.asarray(out2), np.asarray(ref2), rtol=6e-2, atol=6e-2)

    print("KERNEL_OK")
</pallas_src>

<mosaic_0001>
module attributes {stable_mosaic.version = 11 : i64} {
  func.func @kernel(%arg0: i32, %arg1: memref<4xf32, #tpu.memory_space<smem>>, %arg2: memref<1024x128xbf16, #tpu.memory_space<vmem>>, %arg3: memref<128x128xbf16, #tpu.memory_space<vmem>>, %arg4: memref<1x128xf32, #tpu.memory_space<vmem>>, %arg5: memref<128x128xbf16, #tpu.memory_space<vmem>>, %arg6: memref<1x128xf32, #tpu.memory_space<vmem>>, %arg7: memref<1024x128xbf16, #tpu.memory_space<vmem>>, %arg8: memref<1024x128xbf16, #tpu.memory_space<vmem>>) attributes {dimension_semantics = [#tpu.dimension_semantics<parallel>], iteration_bounds = array<i64: 1>, scalar_prefetch = 1 : i64, scratch_operands = 0 : i64, tpu.core_type = #tpu.core_type<tc>, window_params = [{transform_indices = @transform_0, window_bounds = array<i64: 1024, 128>}, {pipeline_mode = #tpu.pipeline_mode<synchronous>, transform_indices = @transform_1, window_bounds = array<i64: 128, 128>}, {pipeline_mode = #tpu.pipeline_mode<synchronous>, transform_indices = @transform_2, window_bounds = array<i64: 1, 128>}, {pipeline_mode = #tpu.pipeline_mode<synchronous>, transform_indices = @transform_3, window_bounds = array<i64: 128, 128>}, {pipeline_mode = #tpu.pipeline_mode<synchronous>, transform_indices = @transform_4, window_bounds = array<i64: 1, 128>}, {transform_indices = @transform_5, window_bounds = array<i64: 1024, 128>}, {transform_indices = @transform_6, window_bounds = array<i64: 1024, 128>}]} {
    %c0 = arith.constant 0 : index
    %c0_0 = arith.constant 0 : index
    %0 = vector.load %arg2[%c0, %c0_0] : memref<1024x128xbf16, #tpu.memory_space<vmem>>, vector<1024x128xbf16>
    %1 = tpu.iota {dimensions = array<i32: 1>} : vector<1024x128xi32>
    %c0_1 = arith.constant 0 : index
    %2 = memref.load %arg1[%c0_1] : memref<4xf32, #tpu.memory_space<smem>>
    %c0_2 = arith.constant 0 : index
    %c0_3 = arith.constant 0 : index
    %3 = vector.load %arg3[%c0_2, %c0_3] : memref<128x128xbf16, #tpu.memory_space<vmem>>, vector<128x128xbf16>
    %cst = arith.constant dense<0.000000e+00> : vector<1024x128xf32>
    %4 = tpu.matmul %0, %3, %cst {dimension_numbers = #tpu.dot_dimension_numbers<[1], [0], [0], [1], [0, 0, 1, 1], [], []>} : vector<1024x128xbf16>, vector<128x128xbf16>, vector<1024x128xf32> -> vector<1024x128xf32>
    %c0_4 = arith.constant 0 : index
    %c0_5 = arith.constant 0 : index
    %5 = vector.load %arg4[%c0_4, %c0_5] : memref<1x128xf32, #tpu.memory_space<vmem>>, vector<1x128xf32>
    %6 = vector.broadcast %5 : vector<1x128xf32> to vector<1024x128xf32>
    %7 = arith.addf %4, %6 : vector<1024x128xf32>
    %8 = vector.extract_strided_slice %7 {offsets = [0, 0], sizes = [1024, 1], strides = [1, 1]} : vector<1024x128xf32> to vector<1024x1xf32>
    %9 = arith.negf %8 : vector<1024x1xf32>
    %10 = math.exp %9 : vector<1024x1xf32>
    %cst_6 = arith.constant 1.000000e+00 : f32
    %11 = vector.broadcast %cst_6 : f32 to vector<1024x1xf32>
    %12 = arith.addf %11, %10 : vector<1024x1xf32>
    %13 = arith.divf %11, %12 : vector<1024x1xf32>
    %14 = vector.broadcast %2 : f32 to vector<1024x1xf32>
    %15 = arith.mulf %13, %14 : vector<1024x1xf32>
    %cst_7 = arith.constant 1.100000e+00 : f32
    %16 = vector.broadcast %cst_7 : f32 to vector<1024x1xf32>
    %17 = arith.addf %15, %16 : vector<1024x1xf32>
    %c0_i32 = arith.constant 0 : i32
    %18 = vector.broadcast %c0_i32 : i32 to vector<1024x128xi32>
    %19 = arith.cmpi eq, %1, %18 : vector<1024x128xi32>
    %cst_8 = arith.constant 0.000000e+00 : f32
    %20 = vector.broadcast %cst_8 : f32 to vector<1024x128xf32>
    %21 = arith.select %19, %20, %7 : vector<1024x128xi1>, vector<1024x128xf32>
    %22 = arith.mulf %21, %21 : vector<1024x128xf32>
    %cst_9 = arith.constant dense<0.000000e+00> : vector<1024xf32>
    %23 = vector.multi_reduction <add>, %22, %cst_9 [1] : vector<1024x128xf32> to vector<1024xf32>
    %24 = vector.shape_cast %23 : vector<1024xf32> to vector<1024x1xf32>
    %cst_10 = arith.constant 9.99999993E-9 : f32
    %25 = vector.broadcast %cst_10 : f32 to vector<1024x1xf32>
    %26 = arith.maximumf %24, %25 : vector<1024x1xf32>
    %27 = arith.mulf %17, %17 : vector<1024x1xf32>
    %cst_11 = arith.constant 1.000000e+00 : f32
    %28 = vector.broadcast %cst_11 : f32 to vector<1024x1xf32>
    %29 = arith.subf %27, %28 : vector<1024x1xf32>
    %30 = arith.divf %29, %26 : vector<1024x1xf32>
    %31 = math.sqrt %30 : vector<1024x1xf32>
    %cst_12 = arith.constant 0.000000e+00 : f32
    %32 = vector.broadcast %cst_12 : f32 to vector<1024x1xf32>
    %33 = arith.subf %32, %17 : vector<1024x1xf32>
    %c0_i32_13 = arith.constant 0 : i32
    %34 = vector.broadcast %c0_i32_13 : i32 to vector<1024x128xi32>
    %35 = arith.cmpi eq, %1, %34 : vector<1024x128xi32>
    %36 = vector.broadcast %31 : vector<1024x1xf32> to vector<1024x128xf32>
    %37 = arith.mulf %21, %36 : vector<1024x128xf32>
    %38 = vector.shape_cast %33 : vector<1024x1xf32> to vector<1024x1xf32>
    %39 = vector.broadcast %38 : vector<1024x1xf32> to vector<1024x128xf32>
    %40 = arith.select %35, %39, %37 : vector<1024x128xi1>, vector<1024x128xf32>
    %c2 = arith.constant 2 : index
    %41 = memref.load %arg1[%c2] : memref<4xf32, #tpu.memory_space<smem>>
    %42 = vector.broadcast %41 : f32 to vector<1024x128xf32>
    %43 = arith.mulf %40, %42 : vector<1024x128xf32>
    %c1 = arith.constant 1 : index
    %44 = memref.load %arg1[%c1] : memref<4xf32, #tpu.memory_space<smem>>
    %c0_14 = arith.constant 0 : index
    %c0_15 = arith.constant 0 : index
    %45 = vector.load %arg5[%c0_14, %c0_15] : memref<128x128xbf16, #tpu.memory_space<vmem>>, vector<128x128xbf16>
    %cst_16 = arith.constant dense<0.000000e+00> : vector<1024x128xf32>
    %46 = tpu.matmul %0, %45, %cst_16 {dimension_numbers = #tpu.dot_dimension_numbers<[1], [0], [0], [1], [0, 0, 1, 1], [], []>} : vector<1024x128xbf16>, vector<128x128xbf16>, vector<1024x128xf32> -> vector<1024x128xf32>
    %c0_17 = arith.constant 0 : index
    %c0_18 = arith.constant 0 : index
    %47 = vector.load %arg6[%c0_17, %c0_18] : memref<1x128xf32, #tpu.memory_space<vmem>>, vector<1x128xf32>
    %48 = vector.broadcast %47 : vector<1x128xf32> to vector<1024x128xf32>
    %49 = arith.addf %46, %48 : vector<1024x128xf32>
    %50 = vector.extract_strided_slice %49 {offsets = [0, 0], sizes = [1024, 1], strides = [1, 1]} : vector<1024x128xf32> to vector<1024x1xf32>
    %51 = arith.negf %50 : vector<1024x1xf32>
    %52 = math.exp %51 : vector<1024x1xf32>
    %cst_19 = arith.constant 1.000000e+00 : f32
    %53 = vector.broadcast %cst_19 : f32 to vector<1024x1xf32>
    %54 = arith.addf %53, %52 : vector<1024x1xf32>
    %55 = arith.divf %53, %54 : vector<1024x1xf32>
    %56 = vector.broadcast %44 : f32 to vector<1024x1xf32>
    %57 = arith.mulf %55, %56 : vector<1024x1xf32>
    %cst_20 = arith.constant 1.100000e+00 : f32
    %58 = vector.broadcast %cst_20 : f32 to vector<1024x1xf32>
    %59 = arith.addf %57, %58 : vector<1024x1xf32>
    %c0_i32_21 = arith.constant 0 : i32
    %60 = vector.broadcast %c0_i32_21 : i32 to vector<1024x128xi32>
    %61 = arith.cmpi eq, %1, %60 : vector<1024x128xi32>
    %cst_22 = arith.constant 0.000000e+00 : f32
    %62 = vector.broadcast %cst_22 : f32 to vector<1024x128xf32>
    %63 = arith.select %61, %62, %49 : vector<1024x128xi1>, vector<1024x128xf32>
    %64 = arith.mulf %63, %63 : vector<1024x128xf32>
    %cst_23 = arith.constant dense<0.000000e+00> : vector<1024xf32>
    %65 = vector.multi_reduction <add>, %64, %cst_23 [1] : vector<1024x128xf32> to vector<1024xf32>
    %66 = vector.shape_cast %65 : vector<1024xf32> to vector<1024x1xf32>
    %cst_24 = arith.constant 9.99999993E-9 : f32
    %67 = vector.broadcast %cst_24 : f32 to vector<1024x1xf32>
    %68 = arith.maximumf %66, %67 : vector<1024x1xf32>
    %69 = arith.mulf %59, %59 : vector<1024x1xf32>
    %cst_25 = arith.constant 1.000000e+00 : f32
    %70 = vector.broadcast %cst_25 : f32 to vector<1024x1xf32>
    %71 = arith.subf %69, %70 : vector<1024x1xf32>
    %72 = arith.divf %71, %68 : vector<1024x1xf32>
    %73 = math.sqrt %72 : vector<1024x1xf32>
    %c0_i32_26 = arith.constant 0 : i32
    %74 = vector.broadcast %c0_i32_26 : i32 to vector<1024x128xi32>
    %75 = arith.cmpi eq, %1, %74 : vector<1024x128xi32>
    %76 = vector.broadcast %73 : vector<1024x1xf32> to vector<1024x128xf32>
    %77 = arith.mulf %63, %76 : vector<1024x128xf32>
    %78 = vector.shape_cast %59 : vector<1024x1xf32> to vector<1024x1xf32>
    %79 = vector.broadcast %78 : vector<1024x1xf32> to vector<1024x128xf32>
    %80 = arith.select %75, %79, %77 : vector<1024x128xi1>, vector<1024x128xf32>
    %c32_i32 = arith.constant 32 : i32
    %81 = vector.broadcast %c32_i32 : i32 to vector<1024x128xi32>
    %82 = arith.cmpi eq, %1, %81 : vector<1024x128xi32>
    %c3 = arith.constant 3 : index
    %83 = memref.load %arg1[%c3] : memref<4xf32, #tpu.memory_space<smem>>
    %84 = vector.broadcast %83 : f32 to vector<1024x128xf32>
    %85 = arith.select %82, %84, %43 : vector<1024x128xi1>, vector<1024x128xf32>
    %c32_i32_27 = arith.constant 32 : i32
    %86 = vector.broadcast %c32_i32_27 : i32 to vector<1024x128xi32>
    %87 = arith.cmpi eq, %1, %86 : vector<1024x128xi32>
    %cst_28 = arith.constant 1.000000e+00 : f32
    %88 = vector.broadcast %cst_28 : f32 to vector<1024x128xf32>
    %89 = arith.select %87, %88, %80 : vector<1024x128xi1>, vector<1024x128xf32>
    %90 = arith.truncf %85 : vector<1024x128xf32> to vector<1024x128xbf16>
    %c0_29 = arith.constant 0 : index
    %c0_30 = arith.constant 0 : index
    %91 = vector.load %arg7[%c0_29, %c0_30] : memref<1024x128xbf16, #tpu.memory_space<vmem>>, vector<1024x128xbf16>
    tpu.vector_store %arg7[%c0_29, %c0_30], %90 {strides = array<i32>} : memref<1024x128xbf16, #tpu.memory_space<vmem>>, vector<1024x128xbf16>,
    %92 = arith.truncf %89 : vector<1024x128xf32> to vector<1024x128xbf16>
    %c0_31 = arith.constant 0 : index
    %c0_32 = arith.constant 0 : index
    %93 = vector.load %arg8[%c0_31, %c0_32] : memref<1024x128xbf16, #tpu.memory_space<vmem>>, vector<1024x128xbf16>
    tpu.vector_store %arg8[%c0_31, %c0_32], %92 {strides = array<i32>} : memref<1024x128xbf16, #tpu.memory_space<vmem>>, vector<1024x128xbf16>,
    return
  }
  func.func @transform_0(%arg0: i32, %arg1: memref<4xf32, #tpu.memory_space<smem>>) -> (i32, i32) {
    %c0_i32 = arith.constant 0 : i32
    %c0_i32_0 = arith.constant 0 : i32
    return %arg0, %c0_i32 : i32, i32
  }
  func.func @transform_1(%arg0: i32, %arg1: memref<4xf32, #tpu.memory_space<smem>>) -> (i32, i32) {
    %c0_i32 = arith.constant 0 : i32
    %c0_i32_0 = arith.constant 0 : i32
    %c0_i32_1 = arith.constant 0 : i32
    return %c0_i32, %c0_i32_0 : i32, i32
  }
  func.func @transform_2(%arg0: i32, %arg1: memref<4xf32, #tpu.memory_space<smem>>) -> (i32, i32) {
    %c0_i32 = arith.constant 0 : i32
    %c0_i32_0 = arith.constant 0 : i32
    %c0_i32_1 = arith.constant 0 : i32
    return %c0_i32, %c0_i32_0 : i32, i32
  }
  func.func @transform_3(%arg0: i32, %arg1: memref<4xf32, #tpu.memory_space<smem>>) -> (i32, i32) {
    %c0_i32 = arith.constant 0 : i32
    %c0_i32_0 = arith.constant 0 : i32
    %c0_i32_1 = arith.constant 0 : i32
    return %c0_i32, %c0_i32_0 : i32, i32
  }
  func.func @transform_4(%arg0: i32, %arg1: memref<4xf32, #tpu.memory_space<smem>>) -> (i32, i32) {
    %c0_i32 = arith.constant 0 : i32
    %c0_i32_0 = arith.constant 0 : i32
    %c0_i32_1 = arith.constant 0 : i32
    return %c0_i32, %c0_i32_0 : i32, i32
  }
  func.func @transform_5(%arg0: i32, %arg1: memref<4xf32, #tpu.memory_space<smem>>) -> (i32, i32) {
    %c0_i32 = arith.constant 0 : i32
    %c0_i32_0 = arith.constant 0 : i32
    return %arg0, %c0_i32 : i32, i32
  }
  func.func @transform_6(%arg0: i32, %arg1: memref<4xf32, #tpu.memory_space<smem>>) -> (i32, i32) {
    %c0_i32 = arith.constant 0 : i32
    %c0_i32_0 = arith.constant 0 : i32
    return %arg0, %c0_i32 : i32, i32
  }
}

</mosaic_0001>

<llo_original>
// kernel: tpu_custom_call.1
$region0: #{tpu_custom_call.1}
  #allocation0 [shape = 'u32[]', space=smem, size = 0x4, offset = 0x4, fixed_abs, tag = 'smem constant byte address 0x4 - core index']
  #allocation1 [shape = 'u32[144,128]{1,0:T(1,128)}', space=vmem, size = 0x12000, scoped, tag = 'internal scratch']
  #allocation2 [shape = 's32[1]{0}', space=sflag, size = 0x4, scoped, tag = 'scoped memory for tpu_custom_call.1']
  #allocation3 [shape = 'u8[512]{0}', space=smem, size = 0x200, scoped, tag = 'prefetched SMEM operand 0']
  %s0 = inlined_call_operand.hbm [shape: f32[4], index: 0, kind: input, shape index: {}]
  %s1 = inlined_call_operand.hbm [shape: bf16[1024,128], index: 1, kind: input, shape index: {}]
  %s2 = inlined_call_operand.hbm [shape: bf16[128,128], index: 2, kind: input, shape index: {}]
  %s3 = inlined_call_operand.vmem [shape: f32[1,128], index: 3, kind: input, shape index: {}]
  %s4 = inlined_call_operand.hbm [shape: bf16[128,128], index: 4, kind: input, shape index: {}]
  %s5 = inlined_call_operand.vmem [shape: f32[1,128], index: 5, kind: input, shape index: {}]
  %s6 = inlined_call_operand.hbm [shape: bf16[1024,128], index: 6, kind: output, shape index: {0}]
  %s7 = inlined_call_operand.hbm [shape: bf16[1024,128], index: 7, kind: output, shape index: {1}]
  %8 = xla_tuple %s6, %s7
  %s9 = sld [smem:[#allocation0]]
  $region50: #{tpu_custom_call.1} parent=0
    _
  %s11 = ssub.s32 1, %s9
  %s12 = scalar_select 0, %s11, %s9
  %14 = dma.hbm_to_smem %s0, 16, [#allocation3], [#allocation2]
  %15 = dma.done [#allocation2], 16
  %16 = sfence
  $region1: #{tpu_custom_call.1} parent=0
    #allocation4 [shape = 'u8[262144]{0}', space=vmem, size = 0x40000, scoped, tag = 'input window, operand 1, single buffered']
    #allocation5 [shape = 's32[1]{0}', space=sflag, size = 0x4, scoped, tag = 'scoped memory for tpu_custom_call.1']
    #allocation6 [shape = 's32[1]{0}', space=sflag, size = 0x4, scoped, tag = 'scoped memory for tpu_custom_call.1']
    #allocation7 [shape = 'u8[32768]{0}', space=vmem, size = 0x8000, scoped, tag = 'input window, operand 2, single buffered']
    #allocation8 [shape = 's32[1]{0}', space=sflag, size = 0x4, scoped, tag = 'scoped memory for tpu_custom_call.1']
    #allocation9 [shape = 'u8[32768]{0}', space=vmem, size = 0x8000, scoped, tag = 'input window, operand 4, single buffered']
    #allocation10 [shape = 'u8[262144]{0}', space=vmem, size = 0x40000, scoped, tag = 'output window, operand 0, single buffered']
    #allocation11 [shape = 'u8[262144]{0}', space=vmem, size = 0x40000, scoped, tag = 'output window, operand 1, single buffered']
    #allocation12 [shape = 's32[1]{0}', space=sflag, size = 0x4, scoped, tag = 'scoped memory for tpu_custom_call.1']
    %17 = vsyncpa [#allocation5], 0
    %18 = vsyncpa [#allocation8], 0
    %19 = vsyncpa [#allocation6], 0
    %20 = vsyncpa [#allocation12], 0
    // Predicated region
    $region2: #{tpu_custom_call.1} parent=1 // pred_check
      _
    $region3: #{tpu_custom_call.1} parent=1 // pred_check_branch
      %22 = sbr.rel (0) target = $region5
    $region4: #{tpu_custom_call.1} parent=1 // pred_region
      %s24 = ssub.s32 8192, 8192
      %25 = vsyncadd [#allocation5], %s24
      %s26 = sshll.u32 [#allocation4], 4
      %s27 = int_to_ptr.vmem [resolvable:$true] %s26
      %32 = dma.hbm_to_vmem [thread:$0]  %s1, 8192, %s27, [#allocation5], 64, 64, 4
    $region5: #{tpu_custom_call.1} parent=1 // pred_fallthru
      _
    // Predicated region
    $region6: #{tpu_custom_call.1} parent=1 // pred_check
      _
    $region7: #{tpu_custom_call.1} parent=1 // pred_check_branch
      %34 = sbr.rel (0) target = $region9
    $region8: #{tpu_custom_call.1} parent=1 // pred_region
      %s36 = ssub.s32 1024, 1024
      %37 = vsyncadd [#allocation8], %s36
      %s38 = sshll.u32 [#allocation7], 4
      %s39 = int_to_ptr.vmem [resolvable:$true] %s38
      %44 = dma.hbm_to_vmem [thread:$0]  %s2, 1024, %s39, [#allocation8], 64, 64, 4
    $region9: #{tpu_custom_call.1} parent=1 // pred_fallthru
      _
    // Predicated region
    $region10: #{tpu_custom_call.1} parent=1 // pred_check
      _
    $region11: #{tpu_custom_call.1} parent=1 // pred_check_branch
      %46 = sbr.rel (0) target = $region13
    $region12: #{tpu_custom_call.1} parent=1 // pred_region
      _
    $region13: #{tpu_custom_call.1} parent=1 // pred_fallthru
      _
    // Predicated region
    $region14: #{tpu_custom_call.1} parent=1 // pred_check
      _
    $region15: #{tpu_custom_call.1} parent=1 // pred_check_branch
      %48 = sbr.rel (0) target = $region17
    $region16: #{tpu_custom_call.1} parent=1 // pred_region
      %s50 = ssub.s32 1024, 1024
      %51 = vsyncadd [#allocation8], %s50
      %s52 = sshll.u32 [#allocation9], 4
      %s53 = int_to_ptr.vmem [resolvable:$true] %s52
      %58 = dma.hbm_to_vmem [thread:$0]  %s4, 1024, %s53, [#allocation8], 64, 64, 4
    $region17: #{tpu_custom_call.1} parent=1 // pred_fallthru
      _
    // Predicated region
    $region18: #{tpu_custom_call.1} parent=1 // pred_check
      _
    $region19: #{tpu_custom_call.1} parent=1 // pred_check_branch
      %60 = sbr.rel (0) target = $region21
    $region20: #{tpu_custom_call.1} parent=1 // pred_region
      _
    $region21: #{tpu_custom_call.1} parent=1 // pred_fallthru
      _
    // Predicated region
    $region22: #{tpu_custom_call.1} parent=1 // pred_check
      _
    $region23: #{tpu_custom_call.1} parent=1 // pred_check_branch
      %62 = sbr.rel (0) target = $region25
    $region24: #{tpu_custom_call.1} parent=1 // pred_region
      %63 = dma.done [#allocation5], 8192
    $region25: #{tpu_custom_call.1} parent=1 // pred_fallthru
      _
    // Predicated region
    $region26: #{tpu_custom_call.1} parent=1 // pred_check
      _
    $region27: #{tpu_custom_call.1} parent=1 // pred_check_branch
      %65 = sbr.rel (0) target = $region29
    $region28: #{tpu_custom_call.1} parent=1 // pred_region
      %66 = dma.done [#allocation8], 1024
    $region29: #{tpu_custom_call.1} parent=1 // pred_fallthru
      _
    // Predicated region
    $region30: #{tpu_custom_call.1} parent=1 // pred_check
      _
    $region31: #{tpu_custom_call.1} parent=1 // pred_check_branch
      %68 = sbr.rel (0) target = $region33
    $region32: #{tpu_custom_call.1} parent=1 // pred_region
      %69 = dma.done [#allocation8], 1024
    $region33: #{tpu_custom_call.1} parent=1 // pred_fallthru
      _
    %v71 = vld [vmem:[#allocation4] sm:$0xf]
    %v72 = vld [vmem:[#allocation4 + $0x4] sm:$0xf]
    %v73 = vld [vmem:[#allocation4 + $0x8] sm:$0xf]
    %v74 = vld [vmem:[#allocation4 + $0xc] sm:$0xf]
    %v75 = vld [vmem:[#allocation4 + $0x10] sm:$0xf]
    %v76 = vld [vmem:[#allocation4 + $0x14] sm:$0xf]
    %v77 = vld [vmem:[#allocation4 + $0x18] sm:$0xf]
    %v78 = vld [vmem:[#allocation4 + $0x1c] sm:$0xf]
    %v79 = vld [vmem:[#allocation4 + $0x20] sm:$0xf]
    %v80 = vld [vmem:[#allocation4 + $0x24] sm:$0xf]
    %v81 = vld [vmem:[#allocation4 + $0x28] sm:$0xf]
    %v82 = vld [vmem:[#allocation4 + $0x2c] sm:$0xf]
    %v83 = vld [vmem:[#allocation4 + $0x30] sm:$0xf]
    %v84 = vld [vmem:[#allocation4 + $0x34] sm:$0xf]
    %v85 = vld [vmem:[#allocation4 + $0x38] sm:$0xf]
    %v86 = vld [vmem:[#allocation4 + $0x3c] sm:$0xf]
    %v87 = vld [vmem:[#allocation4 + $0x40] sm:$0xf]
    %v88 = vld [vmem:[#allocation4 + $0x44] sm:$0xf]
    %v89 = vld [vmem:[#allocation4 + $0x48] sm:$0xf]
    %v90 = vld [vmem:[#allocation4 + $0x4c] sm:$0xf]
    %v91 = vld [vmem:[#allocation4 + $0x50] sm:$0xf]
    %v92 = vld [vmem:[#allocation4 + $0x54] sm:$0xf]
    %v93 = vld [vmem:[#allocation4 + $0x58] sm:$0xf]
    %v94 = vld [vmem:[#allocation4 + $0x5c] sm:$0xf]
    %v95 = vld [vmem:[#allocation4 + $0x60] sm:$0xf]
    %v96 = vld [vmem:[#allocation4 + $0x64] sm:$0xf]
    %v97 = vld [vmem:[#allocation4 + $0x68] sm:$0xf]
    %v98 = vld [vmem:[#allocation4 + $0x6c] sm:$0xf]
    %v99 = vld [vmem:[#allocation4 + $0x70] sm:$0xf]
    %v100 = vld [vmem:[#allocation4 + $0x74] sm:$0xf]
    %v101 = vld [vmem:[#allocation4 + $0x78] sm:$0xf]
    %v102 = vld [vmem:[#allocation4 + $0x7c] sm:$0xf]
    %v103 = vld [vmem:[#allocation4 + $0x80] sm:$0xf]
    %v104 = vld [vmem:[#allocation4 + $0x84] sm:$0xf]
    %v105 = vld [vmem:[#allocation4 + $0x88] sm:$0xf]
    %v106 = vld [vmem:[#allocation4 + $0x8c] sm:$0xf]
    %v107 = vld [vmem:[#allocation4 + $0x90] sm:$0xf]
    %v108 = vld [vmem:[#allocation4 + $0x94] sm:$0xf]
    %v109 = vld [vmem:[#allocation4 + $0x98] sm:$0xf]
    %v110 = vld [vmem:[#allocation4 + $0x9c] sm:$0xf]
    %v111 = vld [vmem:[#allocation4 + $0xa0] sm:$0xf]
    %v112 = vld [vmem:[#allocation4 + $0xa4] sm:$0xf]
    %v113 = vld [vmem:[#allocation4 + $0xa8] sm:$0xf]
    %v114 = vld [vmem:[#allocation4 + $0xac] sm:$0xf]
    %v115 = vld [vmem:[#allocation4 + $0xb0] sm:$0xf]
    %v116 = vld [vmem:[#allocation4 + $0xb4] sm:$0xf]
    %v117 = vld [vmem:[#allocation4 + $0xb8] sm:$0xf]
    %v118 = vld [vmem:[#allocation4 + $0xbc] sm:$0xf]
    %v119 = vld [vmem:[#allocation4 + $0xc0] sm:$0xf]
    %v120 = vld [vmem:[#allocation4 + $0xc4] sm:$0xf]
    %v121 = vld [vmem:[#allocation4 + $0xc8] sm:$0xf]
    %v122 = vld [vmem:[#allocation4 + $0xcc] sm:$0xf]
    %v123 = vld [vmem:[#allocation4 + $0xd0] sm:$0xf]
    %v124 = vld [vmem:[#allocation4 + $0xd4] sm:$0xf]
    %v125 = vld [vmem:[#allocation4 + $0xd8] sm:$0xf]
    %v126 = vld [vmem:[#allocation4 + $0xdc] sm:$0xf]
    %v127 = vld [vmem:[#allocation4 + $0xe0] sm:$0xf]
    %v128 = vld [vmem:[#allocation4 + $0xe4] sm:$0xf]
    %v129 = vld [vmem:[#allocation4 + $0xe8] sm:$0xf]
    %v130 = vld [vmem:[#allocation4 + $0xec] sm:$0xf]
    %v131 = vld [vmem:[#allocation4 + $0xf0] sm:$0xf]
    %v132 = vld [vmem:[#allocation4 + $0xf4] sm:$0xf]
    %v133 = vld [vmem:[#allocation4 + $0xf8] sm:$0xf]
    %v134 = vld [vmem:[#allocation4 + $0xfc] sm:$0xf]
    %v135 = vld [vmem:[#allocation4 + $0x100] sm:$0xf]
    %v136 = vld [vmem:[#allocation4 + $0x104] sm:$0xf]
    %v137 = vld [vmem:[#allocation4 + $0x108] sm:$0xf]
    %v138 = vld [vmem:[#allocation4 + $0x10c] sm:$0xf]
    %v139 = vld [vmem:[#allocation4 + $0x110] sm:$0xf]
    %v140 = vld [vmem:[#allocation4 + $0x114] sm:$0xf]
    %v141 = vld [vmem:[#allocation4 + $0x118] sm:$0xf]
    %v142 = vld [vmem:[#allocation4 + $0x11c] sm:$0xf]
    %v143 = vld [vmem:[#allocation4 + $0x120] sm:$0xf]
    %v144 = vld [vmem:[#allocation4 + $0x124] sm:$0xf]
    %v145 = vld [vmem:[#allocation4 + $0x128] sm:$0xf]
    %v146 = vld [vmem:[#allocation4 + $0x12c] sm:$0xf]
    %v147 = vld [vmem:[#allocation4 + $0x130] sm:$0xf]
    %v148 = vld [vmem:[#allocation4 + $0x134] sm:$0xf]
    %v149 = vld [vmem:[#allocation4 + $0x138] sm:$0xf]
    %v150 = vld [vmem:[#allocation4 + $0x13c] sm:$0xf]
    %v151 = vld [vmem:[#allocation4 + $0x140] sm:$0xf]
    %v152 = vld [vmem:[#allocation4 + $0x144] sm:$0xf]
    %v153 = vld [vmem:[#allocation4 + $0x148] sm:$0xf]
    %v154 = vld [vmem:[#allocation4 + $0x14c] sm:$0xf]
    %v155 = vld [vmem:[#allocation4 + $0x150] sm:$0xf]
    %v156 = vld [vmem:[#allocation4 + $0x154] sm:$0xf]
    %v157 = vld [vmem:[#allocation4 + $0x158] sm:$0xf]
    %v158 = vld [vmem:[#allocation4 + $0x15c] sm:$0xf]
    %v159 = vld [vmem:[#allocation4 + $0x160] sm:$0xf]
    %v160 = vld [vmem:[#allocation4 + $0x164] sm:$0xf]
    %v161 = vld [vmem:[#allocation4 + $0x168] sm:$0xf]
    %v162 = vld [vmem:[#allocation4 + $0x16c] sm:$0xf]
    %v163 = vld [vmem:[#allocation4 + $0x170] sm:$0xf]
    %v164 = vld [vmem:[#allocation4 + $0x174] sm:$0xf]
    %v165 = vld [vmem:[#allocation4 + $0x178] sm:$0xf]
    %v166 = vld [vmem:[#allocation4 + $0x17c] sm:$0xf]
    %v167 = vld [vmem:[#allocation4 + $0x180] sm:$0xf]
    %v168 = vld [vmem:[#allocation4 + $0x184] sm:$0xf]
    %v169 = vld [vmem:[#allocation4 + $0x188] sm:$0xf]
    %v170 = vld [vmem:[#allocation4 + $0x18c] sm:$0xf]
    %v171 = vld [vmem:[#allocation4 + $0x190] sm:$0xf]
    %v172 = vld [vmem:[#allocation4 + $0x194] sm:$0xf]
    %v173 = vld [vmem:[#allocation4 + $0x198] sm:$0xf]
    %v174 = vld [vmem:[#allocation4 + $0x19c] sm:$0xf]
    %v175 = vld [vmem:[#allocation4 + $0x1a0] sm:$0xf]
    %v176 = vld [vmem:[#allocation4 + $0x1a4] sm:$0xf]
    %v177 = vld [vmem:[#allocation4 + $0x1a8] sm:$0xf]
    %v178 = vld [vmem:[#allocation4 + $0x1ac] sm:$0xf]
    %v179 = vld [vmem:[#allocation4 + $0x1b0] sm:$0xf]
    %v180 = vld [vmem:[#allocation4 + $0x1b4] sm:$0xf]
    %v181 = vld [vmem:[#allocation4 + $0x1b8] sm:$0xf]
    %v182 = vld [vmem:[#allocation4 + $0x1bc] sm:$0xf]
    %v183 = vld [vmem:[#allocation4 + $0x1c0] sm:$0xf]
    %v184 = vld [vmem:[#allocation4 + $0x1c4] sm:$0xf]
    %v185 = vld [vmem:[#allocation4 + $0x1c8] sm:$0xf]
    %v186 = vld [vmem:[#allocation4 + $0x1cc] sm:$0xf]
    %v187 = vld [vmem:[#allocation4 + $0x1d0] sm:$0xf]
    %v188 = vld [vmem:[#allocation4 + $0x1d4] sm:$0xf]
    %v189 = vld [vmem:[#allocation4 + $0x1d8] sm:$0xf]
    %v190 = vld [vmem:[#allocation4 + $0x1dc] sm:$0xf]
    %v191 = vld [vmem:[#allocation4 + $0x1e0] sm:$0xf]
    %v192 = vld [vmem:[#allocation4 + $0x1e4] sm:$0xf]
    %v193 = vld [vmem:[#allocation4 + $0x1e8] sm:$0xf]
    %v194 = vld [vmem:[#allocation4 + $0x1ec] sm:$0xf]
    %v195 = vld [vmem:[#allocation4 + $0x1f0] sm:$0xf]
    %v196 = vld [vmem:[#allocation4 + $0x1f4] sm:$0xf]
    %v197 = vld [vmem:[#allocation4 + $0x1f8] sm:$0xf]
    %v198 = vld [vmem:[#allocation4 + $0x1fc] sm:$0xf]
    %v199 = vlaneseq
    %v200 = vand.u32 %v199, 127
    %s201 = sld [smem:[#allocation3]]
    %v202 = vld [vmem:[#allocation7] sm:$0xf]
    %v203 = vld [vmem:[#allocation7 + $0x4] sm:$0xf]
    %v204 = vld [vmem:[#allocation7 + $0x8] sm:$0xf]
    %v205 = vld [vmem:[#allocation7 + $0xc] sm:$0xf]
    %v206 = vld [vmem:[#allocation7 + $0x10] sm:$0xf]
    %v207 = vld [vmem:[#allocation7 + $0x14] sm:$0xf]
    %v208 = vld [vmem:[#allocation7 + $0x18] sm:$0xf]
    %v209 = vld [vmem:[#allocation7 + $0x1c] sm:$0xf]
    %v210 = vld [vmem:[#allocation7 + $0x20] sm:$0xf]
    %v211 = vld [vmem:[#allocation7 + $0x24] sm:$0xf]
    %v212 = vld [vmem:[#allocation7 + $0x28] sm:$0xf]
    %v213 = vld [vmem:[#allocation7 + $0x2c] sm:$0xf]
    %v214 = vld [vmem:[#allocation7 + $0x30] sm:$0xf]
    %v215 = vld [vmem:[#allocation7 + $0x34] sm:$0xf]
    %v216 = vld [vmem:[#allocation7 + $0x38] sm:$0xf]
    %v217 = vld [vmem:[#allocation7 + $0x3c] sm:$0xf]
    %v218 = vld [vmem:[%s3] sm:$0x1]
    %v220 = vlaneseq
    %v221 = vshrl.u32 %v220, 7
    %v222 = vsub.s32 0, %v221
    %v223 = vrot.slane %v218, %v222
    %v353 = vunpack.c.l.b16 %v71
    %v354 = vunpack.c.l.b16 %v72
    %v355 = vunpack.c.l.b16 %v73
    %v356 = vunpack.c.l.b16 %v74
    %v357 = vunpack.c.l.b16 %v75
    %v358 = vunpack.c.l.b16 %v76
    %v359 = vunpack.c.l.b16 %v77
    %v360 = vunpack.c.l.b16 %v78
    %v361 = vunpack.c.l.b16 %v79
    %v362 = vunpack.c.l.b16 %v80
    %v363 = vunpack.c.l.b16 %v81
    %v364 = vunpack.c.l.b16 %v82
    %v365 = vunpack.c.l.b16 %v83
    %v366 = vunpack.c.l.b16 %v84
    %v367 = vunpack.c.l.b16 %v85
    %v368 = vunpack.c.l.b16 %v86
    %v369 = vunpack.c.l.b16 %v87
    %v370 = vunpack.c.l.b16 %v88
    %v371 = vunpack.c.l.b16 %v89
    %v372 = vunpack.c.l.b16 %v90
    %v373 = vunpack.c.l.b16 %v91
    %v374 = vunpack.c.l.b16 %v92
    %v375 = vunpack.c.l.b16 %v93
    %v376 = vunpack.c.l.b16 %v94
    %v377 = vunpack.c.l.b16 %v95
    %v378 = vunpack.c.l.b16 %v96
    %v379 = vunpack.c.l.b16 %v97
    %v380 = vunpack.c.l.b16 %v98
    %v381 = vunpack.c.l.b16 %v99
    %v382 = vunpack.c.l.b16 %v100
    %v383 = vunpack.c.l.b16 %v101
    %v384 = vunpack.c.l.b16 %v102
    %v385 = vunpack.c.l.b16 %v103
    %v386 = vunpack.c.l.b16 %v104
    %v387 = vunpack.c.l.b16 %v105
    %v388 = vunpack.c.l.b16 %v106
    %v389 = vunpack.c.l.b16 %v107
    %v390 = vunpack.c.l.b16 %v108
    %v391 = vunpack.c.l.b16 %v109
    %v392 = vunpack.c.l.b16 %v110
    %v393 = vunpack.c.l.b16 %v111
    %v394 = vunpack.c.l.b16 %v112
    %v395 = vunpack.c.l.b16 %v113
    %v396 = vunpack.c.l.b16 %v114
    %v397 = vunpack.c.l.b16 %v115
    %v398 = vunpack.c.l.b16 %v116
    %v399 = vunpack.c.l.b16 %v117
    %v400 = vunpack.c.l.b16 %v118
    %v401 = vunpack.c.l.b16 %v119
    %v402 = vunpack.c.l.b16 %v120
    %v403 = vunpack.c.l.b16 %v121
    %v404 = vunpack.c.l.b16 %v122
    %v405 = vunpack.c.l.b16 %v123
    %v406 = vunpack.c.l.b16 %v124
    %v407 = vunpack.c.l.b16 %v125
    %v408 = vunpack.c.l.b16 %v126
    %v409 = vunpack.c.l.b16 %v127
    %v410 = vunpack.c.l.b16 %v128
    %v411 = vunpack.c.l.b16 %v129
    %v412 = vunpack.c.l.b16 %v130
    %v413 = vunpack.c.l.b16 %v131
    %v414 = vunpack.c.l.b16 %v132
    %v415 = vunpack.c.l.b16 %v133
    %v416 = vunpack.c.l.b16 %v134
    %v417 = vunpack.c.l.b16 %v135
    %v418 = vunpack.c.l.b16 %v136
    %v419 = vunpack.c.l.b16 %v137
    %v420 = vunpack.c.l.b16 %v138
    %v421 = vunpack.c.l.b16 %v139
    %v422 = vunpack.c.l.b16 %v140
    %v423 = vunpack.c.l.b16 %v141
    %v424 = vunpack.c.l.b16 %v142
    %v425 = vunpack.c.l.b16 %v143
    %v426 = vunpack.c.l.b16 %v144
    %v427 = vunpack.c.l.b16 %v145
    %v428 = vunpack.c.l.b16 %v146
    %v429 = vunpack.c.l.b16 %v147
    %v430 = vunpack.c.l.b16 %v148
    %v431 = vunpack.c.l.b16 %v149
    %v432 = vunpack.c.l.b16 %v150
    %v433 = vunpack.c.l.b16 %v151
    %v434 = vunpack.c.l.b16 %v152
    %v435 = vunpack.c.l.b16 %v153
    %v436 = vunpack.c.l.b16 %v154
    %v437 = vunpack.c.l.b16 %v155
    %v438 = vunpack.c.l.b16 %v156
    %v439 = vunpack.c.l.b16 %v157
    %v440 = vunpack.c.l.b16 %v158
    %v441 = vunpack.c.l.b16 %v159
    %v442 = vunpack.c.l.b16 %v160
    %v443 = vunpack.c.l.b16 %v161
    %v444 = vunpack.c.l.b16 %v162
    %v445 = vunpack.c.l.b16 %v163
    %v446 = vunpack.c.l.b16 %v164
    %v447 = vunpack.c.l.b16 %v165
    %v448 = vunpack.c.l.b16 %v166
    %v449 = vunpack.c.l.b16 %v167
    %v450 = vunpack.c.l.b16 %v168
    %v451 = vunpack.c.l.b16 %v169
    %v452 = vunpack.c.l.b16 %v170
    %v453 = vunpack.c.l.b16 %v171
    %v454 = vunpack.c.l.b16 %v172
    %v455 = vunpack.c.l.b16 %v173
    %v456 = vunpack.c.l.b16 %v174
    %v457 = vunpack.c.l.b16 %v175
    %v458 = vunpack.c.l.b16 %v176
    %v459 = vunpack.c.l.b16 %v177
    %v460 = vunpack.c.l.b16 %v178
    %v461 = vunpack.c.l.b16 %v179
    %v462 = vunpack.c.l.b16 %v180
    %v463 = vunpack.c.l.b16 %v181
    %v464 = vunpack.c.l.b16 %v182
    %v465 = vunpack.c.l.b16 %v183
    %v466 = vunpack.c.l.b16 %v184
    %v467 = vunpack.c.l.b16 %v185
    %v468 = vunpack.c.l.b16 %v186
    %v469 = vunpack.c.l.b16 %v187
    %v470 = vunpack.c.l.b16 %v188
    %v471 = vunpack.c.l.b16 %v189
    %v472 = vunpack.c.l.b16 %v190
    %v473 = vunpack.c.l.b16 %v191
    %v474 = vunpack.c.l.b16 %v192
    %v475 = vunpack.c.l.b16 %v193
    %v476 = vunpack.c.l.b16 %v194
    %v477 = vunpack.c.l.b16 %v195
    %v478 = vunpack.c.l.b16 %v196
    %v479 = vunpack.c.l.b16 %v197
    %v480 = vunpack.c.l.b16 %v198
    %v481 = vpack.c.b16 %v354, %v353
    %v482 = vpack.c.b16 %v356, %v355
    %v483 = vpack.c.b16 %v358, %v357
    %v484 = vpack.c.b16 %v360, %v359
    %v485 = vpack.c.b16 %v362, %v361
    %v486 = vpack.c.b16 %v364, %v363
    %v487 = vpack.c.b16 %v366, %v365
    %v488 = vpack.c.b16 %v368, %v367
    %v489 = vpack.c.b16 %v370, %v369
    %v490 = vpack.c.b16 %v372, %v371
    %v491 = vpack.c.b16 %v374, %v373
    %v492 = vpack.c.b16 %v376, %v375
    %v493 = vpack.c.b16 %v378, %v377
    %v494 = vpack.c.b16 %v380, %v379
    %v495 = vpack.c.b16 %v382, %v381
    %v496 = vpack.c.b16 %v384, %v383
    %v497 = vpack.c.b16 %v386, %v385
    %v498 = vpack.c.b16 %v388, %v387
    %v499 = vpack.c.b16 %v390, %v389
    %v500 = vpack.c.b16 %v392, %v391
    %v501 = vpack.c.b16 %v394, %v393
    %v502 = vpack.c.b16 %v396, %v395
    %v503 = vpack.c.b16 %v398, %v397
    %v504 = vpack.c.b16 %v400, %v399
    %v505 = vpack.c.b16 %v402, %v401
    %v506 = vpack.c.b16 %v404, %v403
    %v507 = vpack.c.b16 %v406, %v405
    %v508 = vpack.c.b16 %v408, %v407
    %v509 = vpack.c.b16 %v410, %v409
    %v510 = vpack.c.b16 %v412, %v411
    %v511 = vpack.c.b16 %v414, %v413
    %v512 = vpack.c.b16 %v416, %v415
    %v513 = vpack.c.b16 %v418, %v417
    %v514 = vpack.c.b16 %v420, %v419
    %v515 = vpack.c.b16 %v422, %v421
    %v516 = vpack.c.b16 %v424, %v423
    %v517 = vpack.c.b16 %v426, %v425
    %v518 = vpack.c.b16 %v428, %v427
    %v519 = vpack.c.b16 %v430, %v429
    %v520 = vpack.c.b16 %v432, %v431
    %v521 = vpack.c.b16 %v434, %v433
    %v522 = vpack.c.b16 %v436, %v435
    %v523 = vpack.c.b16 %v438, %v437
    %v524 = vpack.c.b16 %v440, %v439
    %v525 = vpack.c.b16 %v442, %v441
    %v526 = vpack.c.b16 %v444, %v443
    %v527 = vpack.c.b16 %v446, %v445
    %v528 = vpack.c.b16 %v448, %v447
    %v529 = vpack.c.b16 %v450, %v449
    %v530 = vpack.c.b16 %v452, %v451
    %v531 = vpack.c.b16 %v454, %v453
    %v532 = vpack.c.b16 %v456, %v455
    %v533 = vpack.c.b16 %v458, %v457
    %v534 = vpack.c.b16 %v460, %v459
    %v535 = vpack.c.b16 %v462, %v461
    %v536 = vpack.c.b16 %v464, %v463
    %v537 = vpack.c.b16 %v466, %v465
    %v538 = vpack.c.b16 %v468, %v467
    %v539 = vpack.c.b16 %v470, %v469
    %v540 = vpack.c.b16 %v472, %v471
    %v541 = vpack.c.b16 %v474, %v473
    %v542 = vpack.c.b16 %v476, %v475
    %v543 = vpack.c.b16 %v478, %v477
    %v544 = vpack.c.b16 %v480, %v479
    %v625 = vunpack.c.l.b16 %v202
    %v626 = vunpack.c.l.b16 %v203
    %v627 = vunpack.c.l.b16 %v204
    %v628 = vunpack.c.l.b16 %v205
    %v629 = vunpack.c.l.b16 %v206
    %v630 = vunpack.c.l.b16 %v207
    %v631 = vunpack.c.l.b16 %v208
    %v632 = vunpack.c.l.b16 %v209
    %v633 = vunpack.c.l.b16 %v210
    %v634 = vunpack.c.l.b16 %v211
    %v635 = vunpack.c.l.b16 %v212
    %v636 = vunpack.c.l.b16 %v213
    %v637 = vunpack.c.l.b16 %v214
    %v638 = vunpack.c.l.b16 %v215
    %v639 = vunpack.c.l.b16 %v216
    %v640 = vunpack.c.l.b16 %v217
    %v641 = vpack.c.b16 %v626, %v625
    %v642 = vpack.c.b16 %v628, %v627
    %v643 = vpack.c.b16 %v630, %v629
    %v644 = vpack.c.b16 %v632, %v631
    %v645 = vpack.c.b16 %v634, %v633
    %v646 = vpack.c.b16 %v636, %v635
    %v647 = vpack.c.b16 %v638, %v637
    %v648 = vpack.c.b16 %v640, %v639
    %657 = vmatprep.subr.bf16.mxu0 0
    %658 = vmatpush1.bf16.msra.mxu0 %v641
    %659 = vmatprep.subr.bf16.mxu0 0
    %660 = vmatpush1.bf16.msra.mxu0 %v642
    %661 = vmatprep.subr.bf16.mxu0 0
    %662 = vmatpush1.bf16.msra.mxu0 %v643
    %663 = vmatprep.subr.bf16.mxu0 0
    %664 = vmatpush1.bf16.msra.mxu0 %v644
    %665 = vmatprep.subr.bf16.mxu0 0
    %666 = vmatpush1.bf16.msra.mxu0 %v645
    %667 = vmatprep.subr.bf16.mxu0 0
    %668 = vmatpush1.bf16.msra.mxu0 %v646
    %669 = vmatprep.subr.bf16.mxu0 0
    %670 = vmatpush1.bf16.msra.mxu0 %v647
    %671 = vmatprep.subr.bf16.mxu0 0
    %672 = vmatpush1.bf16.msra.mxu0 %v648
    %673 = vmatprep.subr.bf16.mxu0 0
    %674 = vmatpush1.bf16.msra.mxu0 0
    %675 = vmatprep.subr.bf16.mxu0 0
    %676 = vmatpush1.bf16.msra.mxu0 0
    %677 = vmatprep.subr.bf16.mxu0 0
    %678 = vmatpush1.bf16.msra.mxu0 0
    %679 = vmatprep.subr.bf16.mxu0 0
    %680 = vmatpush1.bf16.msra.mxu0 0
    %681 = vmatprep.subr.bf16.mxu0 0
    %682 = vmatpush1.bf16.msra.mxu0 0
    %683 = vmatprep.subr.bf16.mxu0 0
    %684 = vmatpush1.bf16.msra.mxu0 0
    %685 = vmatprep.subr.bf16.mxu0 0
    %686 = vmatpush1.bf16.msra.mxu0 0
    %687 = vmatprep.subr.bf16.mxu0 0
    %688 = vmatpush1.bf16.msra.mxu0 0
    %689 = vmatprep.mubr.bf16.mxu0 0
    %690 = vmatmul.mubr.bf16.gmra.mrb[0].mxu0 %v481
    %v691 = vpop.f32.mrb[0].mxu0
    %v692 = vadd.f32 %v223, %v691
    %v693 = vpop.f32.mrb[0].mxu0
    %v694 = vpop.f32.mrb[0].mxu0
    %v695 = vadd.f32 %v223, %v694
    %v696 = vpop.f32.mrb[0].mxu0
    %697 = vmatprep.mubr.bf16.mxu0 0
    %698 = vmatmul.mubr.bf16.gmra.mrb[0].mxu0 %v482
    %v699 = vpop.f32.mrb[0].mxu0
    %v700 = vadd.f32 %v223, %v699
    %v701 = vpop.f32.mrb[0].mxu0
    %v702 = vpop.f32.mrb[0].mxu0
    %v703 = vadd.f32 %v223, %v702
    %v704 = vpop.f32.mrb[0].mxu0
    %705 = vmatprep.mubr.bf16.mxu0 0
    %706 = vmatmul.mubr.bf16.gmra.mrb[0].mxu0 %v483
    %v707 = vpop.f32.mrb[0].mxu0
    %v708 = vadd.f32 %v223, %v707
    %v709 = vpop.f32.mrb[0].mxu0
    %v710 = vpop.f32.mrb[0].mxu0
    %v711 = vadd.f32 %v223, %v710
    %v712 = vpop.f32.mrb[0].mxu0
    %713 = vmatprep.mubr.bf16.mxu0 0
    %714 = vmatmul.mubr.bf16.gmra.mrb[0].mxu0 %v484
    %v715 = vpop.f32.mrb[0].mxu0
    %v716 = vadd.f32 %v223, %v715
    %v717 = vpop.f32.mrb[0].mxu0
    %v718 = vpop.f32.mrb[0].mxu0
    %v719 = vadd.f32 %v223, %v718
    %v720 = vpop.f32.mrb[0].mxu0
    %721 = vmatprep.mubr.bf16.mxu0 0
    %722 = vmatmul.mubr.bf16.gmra.mrb[0].mxu0 %v485
    %v723 = vpop.f32.mrb[0].mxu0
    %v724 = vadd.f32 %v223, %v723
    %v725 = vpop.f32.mrb[0].mxu0
    %v726 = vpop.f32.mrb[0].mxu0
    %v727 = vadd.f32 %v223, %v726
    %v728 = vpop.f32.mrb[0].mxu0
    %729 = vmatprep.mubr.bf16.mxu0 0
    %730 = vmatmul.mubr.bf16.gmra.mrb[0].mxu0 %v486
    %v731 = vpop.f32.mrb[0].mxu0
    %v732 = vadd.f32 %v223, %v731
    %v733 = vpop.f32.mrb[0].mxu0
    %v734 = vpop.f32.mrb[0].mxu0
    %v735 = vadd.f32 %v223, %v734
    %v736 = vpop.f32.mrb[0].mxu0
    %737 = vmatprep.mubr.bf16.mxu0 0
    %738 = vmatmul.mubr.bf16.gmra.mrb[0].mxu0 %v487
    %v739 = vpop.f32.mrb[0].mxu0
    %v740 = vadd.f32 %v223, %v739
    %v741 = vpop.f32.mrb[0].mxu0
    %v742 = vpop.f32.mrb[0].mxu0
    %v743 = vadd.f32 %v223, %v742
    %v744 = vpop.f32.mrb[0].mxu0
    %745 = vmatprep.mubr.bf16.mxu0 0
    %746 = vmatmul.mubr.bf16.gmra.mrb[0].mxu0 %v488
    %v747 = vpop.f32.mrb[0].mxu0
    %v748 = vadd.f32 %v223, %v747
    %v749 = vpop.f32.mrb[0].mxu0
    %v750 = vpop.f32.mrb[0].mxu0
    %v751 = vadd.f32 %v223, %v750
    %v752 = vpop.f32.mrb[0].mxu0
    %753 = vmatprep.mubr.bf16.mxu0 0
    %754 = vmatmul.mubr.bf16.gmra.mrb[0].mxu0 %v489
    %v755 = vpop.f32.mrb[0].mxu0
    %v756 = vadd.f32 %v223, %v755
    %v757 = vpop.f32.mrb[0].mxu0
    %v758 = vpop.f32.mrb[0].mxu0
    %v759 = vadd.f32 %v223, %v758
    %v760 = vpop.f32.mrb[0].mxu0
    %761 = vmatprep.mubr.bf16.mxu0 0
    %762 = vmatmul.mubr.bf16.gmra.mrb[0].mxu0 %v490
    %v763 = vpop.f32.mrb[0].mxu0
    %v764 = vadd.f32 %v223, %v763
    %v765 = vpop.f32.mrb[0].mxu0
    %v766 = vpop.f32.mrb[0].mxu0
    %v767 = vadd.f32 %v223, %v766
    %v768 = vpop.f32.mrb[0].mxu0
    %769 = vmatprep.mubr.bf16.mxu0 0
    %770 = vmatmul.mubr.bf16.gmra.mrb[0].mxu0 %v491
    %v771 = vpop.f32.mrb[0].mxu0
    %v772 = vadd.f32 %v223, %v771
    %v773 = vpop.f32.mrb[0].mxu0
    %v774 = vpop.f32.mrb[0].mxu0
    %v775 = vadd.f32 %v223, %v774
    %v776 = vpop.f32.mrb[0].mxu0
    %777 = vmatprep.mubr.bf16.mxu0 0
    %778 = vmatmul.mubr.bf16.gmra.mrb[0].mxu0 %v492
    %v779 = vpop.f32.mrb[0].mxu0
    %v780 = vadd.f32 %v223, %v779
    %v781 = vpop.f32.mrb[0].mxu0
    %v782 = vpop.f32.mrb[0].mxu0
    %v783 = vadd.f32 %v223, %v782
    %v784 = vpop.f32.mrb[0].mxu0
    %785 = vmatprep.mubr.bf16.mxu0 0
    %786 = vmatmul.mubr.bf16.gmra.mrb[0].mxu0 %v493
    %v787 = vpop.f32.mrb[0].mxu0
    %v788 = vadd.f32 %v223, %v787
    %v789 = vpop.f32.mrb[0].mxu0
    %v790 = vpop.f32.mrb[0].mxu0
    %v791 = vadd.f32 %v223, %v790
    %v792 = vpop.f32.mrb[0].mxu0
    %793 = vmatprep.mubr.bf16.mxu0 0
    %794 = vmatmul.mubr.bf16.gmra.mrb[0].mxu0 %v494
    %v795 = vpop.f32.mrb[0].mxu0
    %v796 = vadd.f32 %v223, %v795
    %v797 = vpop.f32.mrb[0].mxu0
    %v798 = vpop.f32.mrb[0].mxu0
    %v799 = vadd.f32 %v223, %v798
    %v800 = vpop.f32.mrb[0].mxu0
    %801 = vmatprep.mubr.bf16.mxu0 0
    %802 = vmatmul.mubr.bf16.gmra.mrb[0].mxu0 %v495
    %v803 = vpop.f32.mrb[0].mxu0
    %v804 = vadd.f32 %v223, %v803
    %v805 = vpop.f32.mrb[0].mxu0
    %v806 = vpop.f32.mrb[0].mxu0
    %v807 = vadd.f32 %v223, %v806
    %v808 = vpop.f32.mrb[0].mxu0
    %809 = vmatprep.mubr.bf16.mxu0 0
    %810 = vmatmul.mubr.bf16.gmra.mrb[0].mxu0 %v496
    %v811 = vpop.f32.mrb[0].mxu0
    %v812 = vadd.f32 %v223, %v811
    %v813 = vpop.f32.mrb[0].mxu0
    %v814 = vpop.f32.mrb[0].mxu0
    %v815 = vadd.f32 %v223, %v814
    %v816 = vpop.f32.mrb[0].mxu0
    %817 = vmatprep.mubr.bf16.mxu0 0
    %818 = vmatmul.mubr.bf16.gmra.mrb[0].mxu0 %v497
    %v819 = vpop.f32.mrb[0].mxu0
    %v820 = vadd.f32 %v223, %v819
    %v821 = vpop.f32.mrb[0].mxu0
    %v822 = vpop.f32.mrb[0].mxu0
    %v823 = vadd.f32 %v223, %v822
    %v824 = vpop.f32.mrb[0].mxu0
    %825 = vmatprep.mubr.bf16.mxu0 0
    %826 = vmatmul.mubr.bf16.gmra.mrb[0].mxu0 %v498
    %v827 = vpop.f32.mrb[0].mxu0
    %v828 = vadd.f32 %v223, %v827
    %v829 = vpop.f32.mrb[0].mxu0
    %v830 = vpop.f32.mrb[0].mxu0
    %v831 = vadd.f32 %v223, %v830
    %v832 = vpop.f32.mrb[0].mxu0
    %833 = vmatprep.mubr.bf16.mxu0 0
    %834 = vmatmul.mubr.bf16.gmra.mrb[0].mxu0 %v499
    %v835 = vpop.f32.mrb[0].mxu0
    %v836 = vadd.f32 %v223, %v835
    %v837 = vpop.f32.mrb[0].mxu0
    %v838 = vpop.f32.mrb[0].mxu0
    %v839 = vadd.f32 %v223, %v838
    %v840 = vpop.f32.mrb[0].mxu0
    %841 = vmatprep.mubr.bf16.mxu0 0
    %842 = vmatmul.mubr.bf16.gmra.mrb[0].mxu0 %v500
    %v843 = vpop.f32.mrb[0].mxu0
    %v844 = vadd.f32 %v223, %v843
    %v845 = vpop.f32.mrb[0].mxu0
    %v846 = vpop.f32.mrb[0].mxu0
    %v847 = vadd.f32 %v223, %v846
    %v848 = vpop.f32.mrb[0].mxu0
    %849 = vmatprep.mubr.bf16.mxu0 0
    %850 = vmatmul.mubr.bf16.gmra.mrb[0].mxu0 %v501
    %v851 = vpop.f32.mrb[0].mxu0
    %v852 = vadd.f32 %v223, %v851
    %v853 = vpop.f32.mrb[0].mxu0
    %v854 = vpop.f32.mrb[0].mxu0
    %v855 = vadd.f32 %v223, %v854
    %v856 = vpop.f32.mrb[0].mxu0
    %857 = vmatprep.mubr.bf16.mxu0 0
    %858 = vmatmul.mubr.bf16.gmra.mrb[0].mxu0 %v502
    %v859 = vpop.f32.mrb[0].mxu0
    %v860 = vadd.f32 %v223, %v859
    %v861 = vpop.f32.mrb[0].mxu0
    %v862 = vpop.f32.mrb[0].mxu0
    %v863 = vadd.f32 %v223, %v862
    %v864 = vpop.f32.mrb[0].mxu0
    %865 = vmatprep.mubr.bf16.mxu0 0
    %866 = vmatmul.mubr.bf16.gmra.mrb[0].mxu0 %v503
    %v867 = vpop.f32.mrb[0].mxu0
    %v868 = vadd.f32 %v223, %v867
    %v869 = vpop.f32.mrb[0].mxu0
    %v870 = vpop.f32.mrb[0].mxu0
    %v871 = vadd.f32 %v223, %v870
    %v872 = vpop.f32.mrb[0].mxu0
    %873 = vmatprep.mubr.bf16.mxu0 0
    %874 = vmatmul.mubr.bf16.gmra.mrb[0].mxu0 %v504
    %v875 = vpop.f32.mrb[0].mxu0
    %v876 = vadd.f32 %v223, %v875
    %v877 = vpop.f32.mrb[0].mxu0
    %v878 = vpop.f32.mrb[0].mxu0
    %v879 = vadd.f32 %v223, %v878
    %v880 = vpop.f32.mrb[0].mxu0
    %881 = vmatprep.mubr.bf16.mxu0 0
    %882 = vmatmul.mubr.bf16.gmra.mrb[0].mxu0 %v505
    %v883 = vpop.f32.mrb[0].mxu0
    %v884 = vadd.f32 %v223, %v883
    %v885 = vpop.f32.mrb[0].mxu0
    %v886 = vpop.f32.mrb[0].mxu0
    %v887 = vadd.f32 %v223, %v886
    %v888 = vpop.f32.mrb[0].mxu0
    %889 = vmatprep.mubr.bf16.mxu0 0
    %890 = vmatmul.mubr.bf16.gmra.mrb[0].mxu0 %v506
    %v891 = vpop.f32.mrb[0].mxu0
    %v892 = vadd.f32 %v223, %v891
    %v893 = vpop.f32.mrb[0].mxu0
    %v894 = vpop.f32.mrb[0].mxu0
    %v895 = vadd.f32 %v223, %v894
    %v896 = vpop.f32.mrb[0].mxu0
    %897 = vmatprep.mubr.bf16.mxu0 0
    %898 = vmatmul.mubr.bf16.gmra.mrb[0].mxu0 %v507
    %v899 = vpop.f32.mrb[0].mxu0
    %v900 = vadd.f32 %v223, %v899
    %v901 = vpop.f32.mrb[0].mxu0
    %v902 = vpop.f32.mrb[0].mxu0
    %v903 = vadd.f32 %v223, %v902
    %v904 = vpop.f32.mrb[0].mxu0
    %905 = vmatprep.mubr.bf16.mxu0 0
    %906 = vmatmul.mubr.bf16.gmra.mrb[0].mxu0 %v508
    %v907 = vpop.f32.mrb[0].mxu0
    %v908 = vadd.f32 %v223, %v907
    %v909 = vpop.f32.mrb[0].mxu0
    %v910 = vpop.f32.mrb[0].mxu0
    %v911 = vadd.f32 %v223, %v910
    %v912 = vpop.f32.mrb[0].mxu0
    %913 = vmatprep.mubr.bf16.mxu0 0
    %914 = vmatmul.mubr.bf16.gmra.mrb[0].mxu0 %v509
    %v915 = vpop.f32.mrb[0].mxu0
    %v916 = vadd.f32 %v223, %v915
    %v917 = vpop.f32.mrb[0].mxu0
    %v918 = vpop.f32.mrb[0].mxu0
    %v919 = vadd.f32 %v223, %v918
    %v920 = vpop.f32.mrb[0].mxu0
    %921 = vmatprep.mubr.bf16.mxu0 0
    %922 = vmatmul.mubr.bf16.gmra.mrb[0].mxu0 %v510
    %v923 = vpop.f32.mrb[0].mxu0
    %v924 = vadd.f32 %v223, %v923
    %v925 = vpop.f32.mrb[0].mxu0
    %v926 = vpop.f32.mrb[0].mxu0
    %v927 = vadd.f32 %v223, %v926
    %v928 = vpop.f32.mrb[0].mxu0
    %929 = vmatprep.mubr.bf16.mxu0 0
    %930 = vmatmul.mubr.bf16.gmra.mrb[0].mxu0 %v511
    %v931 = vpop.f32.mrb[0].mxu0
    %v932 = vadd.f32 %v223, %v931
    %v933 = vpop.f32.mrb[0].mxu0
    %v934 = vpop.f32.mrb[0].mxu0
    %v935 = vadd.f32 %v223, %v934
    %v936 = vpop.f32.mrb[0].mxu0
    %937 = vmatprep.mubr.bf16.mxu0 0
    %938 = vmatmul.mubr.bf16.gmra.mrb[0].mxu0 %v512
    %v939 = vpop.f32.mrb[0].mxu0
    %v940 = vadd.f32 %v223, %v939
    %v941 = vpop.f32.mrb[0].mxu0
    %v942 = vpop.f32.mrb[0].mxu0
    %v943 = vadd.f32 %v223, %v942
    %v944 = vpop.f32.mrb[0].mxu0
    %945 = vmatprep.mubr.bf16.mxu0 0
    %946 = vmatmul.mubr.bf16.gmra.mrb[0].mxu0 %v513
    %v947 = vpop.f32.mrb[0].mxu0
    %v948 = vadd.f32 %v223, %v947
    %v949 = vpop.f32.mrb[0].mxu0
    %v950 = vpop.f32.mrb[0].mxu0
    %v951 = vadd.f32 %v223, %v950
    %v952 = vpop.f32.mrb[0].mxu0
    %953 = vmatprep.mubr.bf16.mxu0 0
    %954 = vmatmul.mubr.bf16.gmra.mrb[0].mxu0 %v514
    %v955 = vpop.f32.mrb[0].mxu0
    %v956 = vadd.f32 %v223, %v955
    %v957 = vpop.f32.mrb[0].mxu0
    %v958 = vpop.f32.mrb[0].mxu0
    %v959 = vadd.f32 %v223, %v958
    %v960 = vpop.f32.mrb[0].mxu0
    %961 = vmatprep.mubr.bf16.mxu0 0
    %962 = vmatmul.mubr.bf16.gmra.mrb[0].mxu0 %v515
    %v963 = vpop.f32.mrb[0].mxu0
    %v964 = vadd.f32 %v223, %v963
    %v965 = vpop.f32.mrb[0].mxu0
    %v966 = vpop.f32.mrb[0].mxu0
    %v967 = vadd.f32 %v223, %v966
    %v968 = vpop.f32.mrb[0].mxu0
    %969 = vmatprep.mubr.bf16.mxu0 0
    %970 = vmatmul.mubr.bf16.gmra.mrb[0].mxu0 %v516
    %v971 = vpop.f32.mrb[0].mxu0
    %v972 = vadd.f32 %v223, %v971
    %v973 = vpop.f32.mrb[0].mxu0
    %v974 = vpop.f32.mrb[0].mxu0
    %v975 = vadd.f32 %v223, %v974
    %v976 = vpop.f32.mrb[0].mxu0
    %977 = vmatprep.mubr.bf16.mxu0 0
    %978 = vmatmul.mubr.bf16.gmra.mrb[0].mxu0 %v517
    %v979 = vpop.f32.mrb[0].mxu0
    %v980 = vadd.f32 %v223, %v979
    %v981 = vpop.f32.mrb[0].mxu0
    %v982 = vpop.f32.mrb[0].mxu0
    %v983 = vadd.f32 %v223, %v982
    %v984 = vpop.f32.mrb[0].mxu0
    %985 = vmatprep.mubr.bf16.mxu0 0
    %986 = vmatmul.mubr.bf16.gmra.mrb[0].mxu0 %v518
    %v987 = vpop.f32.mrb[0].mxu0
    %v988 = vadd.f32 %v223, %v987
    %v989 = vpop.f32.mrb[0].mxu0
    %v990 = vpop.f32.mrb[0].mxu0
    %v991 = vadd.f32 %v223, %v990
    %v992 = vpop.f32.mrb[0].mxu0
    %993 = vmatprep.mubr.bf16.mxu0 0
    %994 = vmatmul.mubr.bf16.gmra.mrb[0].mxu0 %v519
    %v995 = vpop.f32.mrb[0].mxu0
    %v996 = vadd.f32 %v223, %v995
    %v997 = vpop.f32.mrb[0].mxu0
    %v998 = vpop.f32.mrb[0].mxu0
    %v999 = vadd.f32 %v223, %v998
    %v1000 = vpop.f32.mrb[0].mxu0
    %1001 = vmatprep.mubr.bf16.mxu0 0
    %1002 = vmatmul.mubr.bf16.gmra.mrb[0].mxu0 %v520
    %v1003 = vpop.f32.mrb[0].mxu0
    %v1004 = vadd.f32 %v223, %v1003
    %v1005 = vpop.f32.mrb[0].mxu0
    %v1006 = vpop.f32.mrb[0].mxu0
    %v1007 = vadd.f32 %v223, %v1006
    %v1008 = vpop.f32.mrb[0].mxu0
    %1009 = vmatprep.mubr.bf16.mxu0 0
    %1010 = vmatmul.mubr.bf16.gmra.mrb[0].mxu0 %v521
    %v1011 = vpop.f32.mrb[0].mxu0
    %v1012 = vadd.f32 %v223, %v1011
    %v1013 = vpop.f32.mrb[0].mxu0
    %v1014 = vpop.f32.mrb[0].mxu0
    %v1015 = vadd.f32 %v223, %v1014
    %v1016 = vpop.f32.mrb[0].mxu0
    %1017 = vmatprep.mubr.bf16.mxu0 0
    %1018 = vmatmul.mubr.bf16.gmra.mrb[0].mxu0 %v522
    %v1019 = vpop.f32.mrb[0].mxu0
    %v1020 = vadd.f32 %v223, %v1019
    %v1021 = vpop.f32.mrb[0].mxu0
    %v1022 = vpop.f32.mrb[0].mxu0
    %v1023 = vadd.f32 %v223, %v1022
    %v1024 = vpop.f32.mrb[0].mxu0
    %1025 = vmatprep.mubr.bf16.mxu0 0
    %1026 = vmatmul.mubr.bf16.gmra.mrb[0].mxu0 %v523
    %v1027 = vpop.f32.mrb[0].mxu0
    %v1028 = vadd.f32 %v223, %v1027
    %v1029 = vpop.f32.mrb[0].mxu0
    %v1030 = vpop.f32.mrb[0].mxu0
    %v1031 = vadd.f32 %v223, %v1030
    %v1032 = vpop.f32.mrb[0].mxu0
    %1033 = vmatprep.mubr.bf16.mxu0 0
    %1034 = vmatmul.mubr.bf16.gmra.mrb[0].mxu0 %v524
    %v1035 = vpop.f32.mrb[0].mxu0
    %v1036 = vadd.f32 %v223, %v1035
    %v1037 = vpop.f32.mrb[0].mxu0
    %v1038 = vpop.f32.mrb[0].mxu0
    %v1039 = vadd.f32 %v223, %v1038
    %v1040 = vpop.f32.mrb[0].mxu0
    %1041 = vmatprep.mubr.bf16.mxu0 0
    %1042 = vmatmul.mubr.bf16.gmra.mrb[0].mxu0 %v525
    %v1043 = vpop.f32.mrb[0].mxu0
    %v1044 = vadd.f32 %v223, %v1043
    %v1045 = vpop.f32.mrb[0].mxu0
    %v1046 = vpop.f32.mrb[0].mxu0
    %v1047 = vadd.f32 %v223, %v1046
    %v1048 = vpop.f32.mrb[0].mxu0
    %1049 = vmatprep.mubr.bf16.mxu0 0
    %1050 = vmatmul.mubr.bf16.gmra.mrb[0].mxu0 %v526
    %v1051 = vpop.f32.mrb[0].mxu0
    %v1052 = vadd.f32 %v223, %v1051
    %v1053 = vpop.f32.mrb[0].mxu0
    %v1054 = vpop.f32.mrb[0].mxu0
    %v1055 = vadd.f32 %v223, %v1054
    %v1056 = vpop.f32.mrb[0].mxu0
    %1057 = vmatprep.mubr.bf16.mxu0 0
    %1058 = vmatmul.mubr.bf16.gmra.mrb[0].mxu0 %v527
    %v1059 = vpop.f32.mrb[0].mxu0
    %v1060 = vadd.f32 %v223, %v1059
    %v1061 = vpop.f32.mrb[0].mxu0
    %v1062 = vpop.f32.mrb[0].mxu0
    %v1063 = vadd.f32 %v223, %v1062
    %v1064 = vpop.f32.mrb[0].mxu0
    %1065 = vmatprep.mubr.bf16.mxu0 0
    %1066 = vmatmul.mubr.bf16.gmra.mrb[0].mxu0 %v528
    %v1067 = vpop.f32.mrb[0].mxu0
    %v1068 = vadd.f32 %v223, %v1067
    %v1069 = vpop.f32.mrb[0].mxu0
    %v1070 = vpop.f32.mrb[0].mxu0
    %v1071 = vadd.f32 %v223, %v1070
    %v1072 = vpop.f32.mrb[0].mxu0
    %1073 = vmatprep.mubr.bf16.mxu0 0
    %1074 = vmatmul.mubr.bf16.gmra.mrb[0].mxu0 %v529
    %v1075 = vpop.f32.mrb[0].mxu0
    %v1076 = vadd.f32 %v223, %v1075
    %v1077 = vpop.f32.mrb[0].mxu0
    %v1078 = vpop.f32.mrb[0].mxu0
    %v1079 = vadd.f32 %v223, %v1078
    %v1080 = vpop.f32.mrb[0].mxu0
    %1081 = vmatprep.mubr.bf16.mxu0 0
    %1082 = vmatmul.mubr.bf16.gmra.mrb[0].mxu0 %v530
    %v1083 = vpop.f32.mrb[0].mxu0
    %v1084 = vadd.f32 %v223, %v1083
    %v1085 = vpop.f32.mrb[0].mxu0
    %v1086 = vpop.f32.mrb[0].mxu0
    %v1087 = vadd.f32 %v223, %v1086
    %v1088 = vpop.f32.mrb[0].mxu0
    %1089 = vmatprep.mubr.bf16.mxu0 0
    %1090 = vmatmul.mubr.bf16.gmra.mrb[0].mxu0 %v531
    %v1091 = vpop.f32.mrb[0].mxu0
    %v1092 = vadd.f32 %v223, %v1091
    %v1093 = vpop.f32.mrb[0].mxu0
    %v1094 = vpop.f32.mrb[0].mxu0
    %v1095 = vadd.f32 %v223, %v1094
    %v1096 = vpop.f32.mrb[0].mxu0
    %1097 = vmatprep.mubr.bf16.mxu0 0
    %1098 = vmatmul.mubr.bf16.gmra.mrb[0].mxu0 %v532
    %v1099 = vpop.f32.mrb[0].mxu0
    %v1100 = vadd.f32 %v223, %v1099
    %v1101 = vpop.f32.mrb[0].mxu0
    %v1102 = vpop.f32.mrb[0].mxu0
    %v1103 = vadd.f32 %v223, %v1102
    %v1104 = vpop.f32.mrb[0].mxu0
    %1105 = vmatprep.mubr.bf16.mxu0 0
    %1106 = vmatmul.mubr.bf16.gmra.mrb[0].mxu0 %v533
    %v1107 = vpop.f32.mrb[0].mxu0
    %v1108 = vadd.f32 %v223, %v1107
    %v1109 = vpop.f32.mrb[0].mxu0
    %v1110 = vpop.f32.mrb[0].mxu0
    %v1111 = vadd.f32 %v223, %v1110
    %v1112 = vpop.f32.mrb[0].mxu0
    %1113 = vmatprep.mubr.bf16.mxu0 0
    %1114 = vmatmul.mubr.bf16.gmra.mrb[0].mxu0 %v534
    %v1115 = vpop.f32.mrb[0].mxu0
    %v1116 = vadd.f32 %v223, %v1115
    %v1117 = vpop.f32.mrb[0].mxu0
    %v1118 = vpop.f32.mrb[0].mxu0
    %v1119 = vadd.f32 %v223, %v1118
    %v1120 = vpop.f32.mrb[0].mxu0
    %1121 = vmatprep.mubr.bf16.mxu0 0
    %1122 = vmatmul.mubr.bf16.gmra.mrb[0].mxu0 %v535
    %v1123 = vpop.f32.mrb[0].mxu0
    %v1124 = vadd.f32 %v223, %v1123
    %v1125 = vpop.f32.mrb[0].mxu0
    %v1126 = vpop.f32.mrb[0].mxu0
    %v1127 = vadd.f32 %v223, %v1126
    %v1128 = vpop.f32.mrb[0].mxu0
    %1129 = vmatprep.mubr.bf16.mxu0 0
    %1130 = vmatmul.mubr.bf16.gmra.mrb[0].mxu0 %v536
    %v1131 = vpop.f32.mrb[0].mxu0
    %v1132 = vadd.f32 %v223, %v1131
    %v1133 = vpop.f32.mrb[0].mxu0
    %v1134 = vpop.f32.mrb[0].mxu0
    %v1135 = vadd.f32 %v223, %v1134
    %v1136 = vpop.f32.mrb[0].mxu0
    %1137 = vmatprep.mubr.bf16.mxu0 0
    %1138 = vmatmul.mubr.bf16.gmra.mrb[0].mxu0 %v537
    %v1139 = vpop.f32.mrb[0].mxu0
    %v1140 = vadd.f32 %v223, %v1139
    %v1141 = vpop.f32.mrb[0].mxu0
    %v1142 = vpop.f32.mrb[0].mxu0
    %v1143 = vadd.f32 %v223, %v1142
    %v1144 = vpop.f32.mrb[0].mxu0
    %1145 = vmatprep.mubr.bf16.mxu0 0
    %1146 = vmatmul.mubr.bf16.gmra.mrb[0].mxu0 %v538
    %v1147 = vpop.f32.mrb[0].mxu0
    %v1148 = vadd.f32 %v223, %v1147
    %v1149 = vpop.f32.mrb[0].mxu0
    %v1150 = vpop.f32.mrb[0].mxu0
    %v1151 = vadd.f32 %v223, %v1150
    %v1152 = vpop.f32.mrb[0].mxu0
    %1153 = vmatprep.mubr.bf16.mxu0 0
    %1154 = vmatmul.mubr.bf16.gmra.mrb[0].mxu0 %v539
    %v1155 = vpop.f32.mrb[0].mxu0
    %v1156 = vadd.f32 %v223, %v1155
    %v1157 = vpop.f32.mrb[0].mxu0
    %v1158 = vpop.f32.mrb[0].mxu0
    %v1159 = vadd.f32 %v223, %v1158
    %v1160 = vpop.f32.mrb[0].mxu0
    %1161 = vmatprep.mubr.bf16.mxu0 0
    %1162 = vmatmul.mubr.bf16.gmra.mrb[0].mxu0 %v540
    %v1163 = vpop.f32.mrb[0].mxu0
    %v1164 = vadd.f32 %v223, %v1163
    %v1165 = vpop.f32.mrb[0].mxu0
    %v1166 = vpop.f32.mrb[0].mxu0
    %v1167 = vadd.f32 %v223, %v1166
    %v1168 = vpop.f32.mrb[0].mxu0
    %1169 = vmatprep.mubr.bf16.mxu0 0
    %1170 = vmatmul.mubr.bf16.gmra.mrb[0].mxu0 %v541
    %v1171 = vpop.f32.mrb[0].mxu0
    %v1172 = vadd.f32 %v223, %v1171
    %v1173 = vpop.f32.mrb[0].mxu0
    %v1174 = vpop.f32.mrb[0].mxu0
    %v1175 = vadd.f32 %v223, %v1174
    %v1176 = vpop.f32.mrb[0].mxu0
    %1177 = vmatprep.mubr.bf16.mxu0 0
    %1178 = vmatmul.mubr.bf16.gmra.mrb[0].mxu0 %v542
    %v1179 = vpop.f32.mrb[0].mxu0
    %v1180 = vadd.f32 %v223, %v1179
    %v1181 = vpop.f32.mrb[0].mxu0
    %v1182 = vpop.f32.mrb[0].mxu0
    %v1183 = vadd.f32 %v223, %v1182
    %v1184 = vpop.f32.mrb[0].mxu0
    %1185 = vmatprep.mubr.bf16.mxu0 0
    %1186 = vmatmul.mubr.bf16.gmra.mrb[0].mxu0 %v543
    %v1187 = vpop.f32.mrb[0].mxu0
    %v1188 = vadd.f32 %v223, %v1187
    %v1189 = vpop.f32.mrb[0].mxu0
    %v1190 = vpop.f32.mrb[0].mxu0
    %v1191 = vadd.f32 %v223, %v1190
    %v1192 = vpop.f32.mrb[0].mxu0
    %1193 = vmatprep.mubr.bf16.mxu0 0
    %1194 = vmatmul.mubr.bf16.gmra.mrb[0].mxu0 %v544
    %v1195 = vpop.f32.mrb[0].mxu0
    %v1196 = vadd.f32 %v223, %v1195
    %v1197 = vpop.f32.mrb[0].mxu0
    %v1198 = vpop.f32.mrb[0].mxu0
    %v1199 = vadd.f32 %v223, %v1198
    %v1200 = vpop.f32.mrb[0].mxu0
    %1201 = vdwg.mxu0
    %v1202 = vxor.u32 %v692, 2147483648
    %v1203 = vxor.u32 %v695, 2147483648
    %v1204 = vxor.u32 %v700, 2147483648
    %v1205 = vxor.u32 %v703, 2147483648
    %v1206 = vxor.u32 %v708, 2147483648
    %v1207 = vxor.u32 %v711, 2147483648
    %v1208 = vxor.u32 %v716, 2147483648
    %v1209 = vxor.u32 %v719, 2147483648
    %v1210 = vxor.u32 %v724, 2147483648
    %v1211 = vxor.u32 %v727, 2147483648
    %v1212 = vxor.u32 %v732, 2147483648
    %v1213 = vxor.u32 %v735, 2147483648
    %v1214 = vxor.u32 %v740, 2147483648
    %v1215 = vxor.u32 %v743, 2147483648
    %v1216 = vxor.u32 %v748, 2147483648
    %v1217 = vxor.u32 %v751, 2147483648
    %v1218 = vxor.u32 %v756, 2147483648
    %v1219 = vxor.u32 %v759, 2147483648
    %v1220 = vxor.u32 %v764, 2147483648
    %v1221 = vxor.u32 %v767, 2147483648
    %v1222 = vxor.u32 %v772, 2147483648
    %v1223 = vxor.u32 %v775, 2147483648
    %v1224 = vxor.u32 %v780, 2147483648
    %v1225 = vxor.u32 %v783, 2147483648
    %v1226 = vxor.u32 %v788, 2147483648
    %v1227 = vxor.u32 %v791, 2147483648
    %v1228 = vxor.u32 %v796, 2147483648
    %v1229 = vxor.u32 %v799, 2147483648
    %v1230 = vxor.u32 %v804, 2147483648
    %v1231 = vxor.u32 %v807, 2147483648
    %v1232 = vxor.u32 %v812, 2147483648
    %v1233 = vxor.u32 %v815, 2147483648
    %v1234 = vxor.u32 %v820, 2147483648
    %v1235 = vxor.u32 %v823, 2147483648
    %v1236 = vxor.u32 %v828, 2147483648
    %v1237 = vxor.u32 %v831, 2147483648
    %v1238 = vxor.u32 %v836, 2147483648
    %v1239 = vxor.u32 %v839, 2147483648
    %v1240 = vxor.u32 %v844, 2147483648
    %v1241 = vxor.u32 %v847, 2147483648
    %v1242 = vxor.u32 %v852, 2147483648
    %v1243 = vxor.u32 %v855, 2147483648
    %v1244 = vxor.u32 %v860, 2147483648
    %v1245 = vxor.u32 %v863, 2147483648
    %v1246 = vxor.u32 %v868, 2147483648
    %v1247 = vxor.u32 %v871, 2147483648
    %v1248 = vxor.u32 %v876, 2147483648
    %v1249 = vxor.u32 %v879, 2147483648
    %v1250 = vxor.u32 %v884, 2147483648
    %v1251 = vxor.u32 %v887, 2147483648
    %v1252 = vxor.u32 %v892, 2147483648
    %v1253 = vxor.u32 %v895, 2147483648
    %v1254 = vxor.u32 %v900, 2147483648
    %v1255 = vxor.u32 %v903, 2147483648
    %v1256 = vxor.u32 %v908, 2147483648
    %v1257 = vxor.u32 %v911, 2147483648
    %v1258 = vxor.u32 %v916, 2147483648
    %v1259 = vxor.u32 %v919, 2147483648
    %v1260 = vxor.u32 %v924, 2147483648
    %v1261 = vxor.u32 %v927, 2147483648
    %v1262 = vxor.u32 %v932, 2147483648
    %v1263 = vxor.u32 %v935, 2147483648
    %v1264 = vxor.u32 %v940, 2147483648
    %v1265 = vxor.u32 %v943, 2147483648
    %v1266 = vxor.u32 %v948, 2147483648
    %v1267 = vxor.u32 %v951, 2147483648
    %v1268 = vxor.u32 %v956, 2147483648
    %v1269 = vxor.u32 %v959, 2147483648
    %v1270 = vxor.u32 %v964, 2147483648
    %v1271 = vxor.u32 %v967, 2147483648
    %v1272 = vxor.u32 %v972, 2147483648
    %v1273 = vxor.u32 %v975, 2147483648
    %v1274 = vxor.u32 %v980, 2147483648
    %v1275 = vxor.u32 %v983, 2147483648
    %v1276 = vxor.u32 %v988, 2147483648
    %v1277 = vxor.u32 %v991, 2147483648
    %v1278 = vxor.u32 %v996, 2147483648
    %v1279 = vxor.u32 %v999, 2147483648
    %v1280 = vxor.u32 %v1004, 2147483648
    %v1281 = vxor.u32 %v1007, 2147483648
    %v1282 = vxor.u32 %v1012, 2147483648
    %v1283 = vxor.u32 %v1015, 2147483648
    %v1284 = vxor.u32 %v1020, 2147483648
    %v1285 = vxor.u32 %v1023, 2147483648
    %v1286 = vxor.u32 %v1028, 2147483648
    %v1287 = vxor.u32 %v1031, 2147483648
    %v1288 = vxor.u32 %v1036, 2147483648
    %v1289 = vxor.u32 %v1039, 2147483648
    %v1290 = vxor.u32 %v1044, 2147483648
    %v1291 = vxor.u32 %v1047, 2147483648
    %v1292 = vxor.u32 %v1052, 2147483648
    %v1293 = vxor.u32 %v1055, 2147483648
    %v1294 = vxor.u32 %v1060, 2147483648
    %v1295 = vxor.u32 %v1063, 2147483648
    %v1296 = vxor.u32 %v1068, 2147483648
    %v1297 = vxor.u32 %v1071, 2147483648
    %v1298 = vxor.u32 %v1076, 2147483648
    %v1299 = vxor.u32 %v1079, 2147483648
    %v1300 = vxor.u32 %v1084, 2147483648
    %v1301 = vxor.u32 %v1087, 2147483648
    %v1302 = vxor.u32 %v1092, 2147483648
    %v1303 = vxor.u32 %v1095, 2147483648
    %v1304 = vxor.u32 %v1100, 2147483648
    %v1305 = vxor.u32 %v1103, 2147483648
    %v1306 = vxor.u32 %v1108, 2147483648
    %v1307 = vxor.u32 %v1111, 2147483648
    %v1308 = vxor.u32 %v1116, 2147483648
    %v1309 = vxor.u32 %v1119, 2147483648
    %v1310 = vxor.u32 %v1124, 2147483648
    %v1311 = vxor.u32 %v1127, 2147483648
    %v1312 = vxor.u32 %v1132, 2147483648
    %v1313 = vxor.u32 %v1135, 2147483648
    %v1314 = vxor.u32 %v1140, 2147483648
    %v1315 = vxor.u32 %v1143, 2147483648
    %v1316 = vxor.u32 %v1148, 2147483648
    %v1317 = vxor.u32 %v1151, 2147483648
    %v1318 = vxor.u32 %v1156, 2147483648
    %v1319 = vxor.u32 %v1159, 2147483648
    %v1320 = vxor.u32 %v1164, 2147483648
    %v1321 = vxor.u32 %v1167, 2147483648
    %v1322 = vxor.u32 %v1172, 2147483648
    %v1323 = vxor.u32 %v1175, 2147483648
    %v1324 = vxor.u32 %v1180, 2147483648
    %v1325 = vxor.u32 %v1183, 2147483648
    %v1326 = vxor.u32 %v1188, 2147483648
    %v1327 = vxor.u32 %v1191, 2147483648
    %v1328 = vxor.u32 %v1196, 2147483648
    %v1329 = vxor.u32 %v1199, 2147483648
    %v1330 = vmul.f32 %v1202, 1.442695
    %v1331 = vpow.pop %v1330
    %v1332 = vmul.f32 %v1203, 1.442695
    %v1333 = vpow.pop %v1332
    %v1334 = vmul.f32 %v1204, 1.442695
    %v1335 = vpow.pop %v1334
    %v1336 = vmul.f32 %v1205, 1.442695
    %v1337 = vpow.pop %v1336
    %v1338 = vmul.f32 %v1206, 1.442695
    %v1339 = vpow.pop %v1338
    %v1340 = vmul.f32 %v1207, 1.442695
    %v1341 = vpow.pop %v1340
    %v1342 = vmul.f32 %v1208, 1.442695
    %v1343 = vpow.pop %v1342
    %v1344 = vmul.f32 %v1209, 1.442695
    %v1345 = vpow.pop %v1344
    %v1346 = vmul.f32 %v1210, 1.442695
    %v1347 = vpow.pop %v1346
    %v1348 = vmul.f32 %v1211, 1.442695
    %v1349 = vpow.pop %v1348
    %v1350 = vmul.f32 %v1212, 1.442695
    %v1351 = vpow.pop %v1350
    %v1352 = vmul.f32 %v1213, 1.442695
    %v1353 = vpow.pop %v1352
    %v1354 = vmul.f32 %v1214, 1.442695
    %v1355 = vpow.pop %v1354
    %v1356 = vmul.f32 %v1215, 1.442695
    %v1357 = vpow.pop %v1356
    %v1358 = vmul.f32 %v1216, 1.442695
    %v1359 = vpow.pop %v1358
    %v1360 = vmul.f32 %v1217, 1.442695
    %v1361 = vpow.pop %v1360
    %v1362 = vmul.f32 %v1218, 1.442695
    %v1363 = vpow.pop %v1362
    %v1364 = vmul.f32 %v1219, 1.442695
    %v1365 = vpow.pop %v1364
    %v1366 = vmul.f32 %v1220, 1.442695
    %v1367 = vpow.pop %v1366
    %v1368 = vmul.f32 %v1221, 1.442695
    %v1369 = vpow.pop %v1368
    %v1370 = vmul.f32 %v1222, 1.442695
    %v1371 = vpow.pop %v1370
    %v1372 = vmul.f32 %v1223, 1.442695
    %v1373 = vpow.pop %v1372
    %v1374 = vmul.f32 %v1224, 1.442695
    %v1375 = vpow.pop %v1374
    %v1376 = vmul.f32 %v1225, 1.442695
    %v1377 = vpow.pop %v1376
    %v1378 = vmul.f32 %v1226, 1.442695
    %v1379 = vpow.pop %v1378
    %v1380 = vmul.f32 %v1227, 1.442695
    %v1381 = vpow.pop %v1380
    %v1382 = vmul.f32 %v1228, 1.442695
    %v1383 = vpow.pop %v1382
    %v1384 = vmul.f32 %v1229, 1.442695
    %v1385 = vpow.pop %v1384
    %v1386 = vmul.f32 %v1230, 1.442695
    %v1387 = vpow.pop %v1386
    %v1388 = vmul.f32 %v1231, 1.442695
    %v1389 = vpow.pop %v1388
    %v1390 = vmul.f32 %v1232, 1.442695
    %v1391 = vpow.pop %v1390
    %v1392 = vmul.f32 %v1233, 1.442695
    %v1393 = vpow.pop %v1392
    %v1394 = vmul.f32 %v1234, 1.442695
    %v1395 = vpow.pop %v1394
    %v1396 = vmul.f32 %v1235, 1.442695
    %v1397 = vpow.pop %v1396
    %v1398 = vmul.f32 %v1236, 1.442695
    %v1399 = vpow.pop %v1398
    %v1400 = vmul.f32 %v1237, 1.442695
    %v1401 = vpow.pop %v1400
    %v1402 = vmul.f32 %v1238, 1.442695
    %v1403 = vpow.pop %v1402
    %v1404 = vmul.f32 %v1239, 1.442695
    %v1405 = vpow.pop %v1404
    %v1406 = vmul.f32 %v1240, 1.442695
    %v1407 = vpow.pop %v1406
    %v1408 = vmul.f32 %v1241, 1.442695
    %v1409 = vpow.pop %v1408
    %v1410 = vmul.f32 %v1242, 1.442695
    %v1411 = vpow.pop %v1410
    %v1412 = vmul.f32 %v1243, 1.442695
    %v1413 = vpow.pop %v1412
    %v1414 = vmul.f32 %v1244, 1.442695
    %v1415 = vpow.pop %v1414
    %v1416 = vmul.f32 %v1245, 1.442695
    %v1417 = vpow.pop %v1416
    %v1418 = vmul.f32 %v1246, 1.442695
    %v1419 = vpow.pop %v1418
    %v1420 = vmul.f32 %v1247, 1.442695
    %v1421 = vpow.pop %v1420
    %v1422 = vmul.f32 %v1248, 1.442695
    %v1423 = vpow.pop %v1422
    %v1424 = vmul.f32 %v1249, 1.442695
    %v1425 = vpow.pop %v1424
    %v1426 = vmul.f32 %v1250, 1.442695
    %v1427 = vpow.pop %v1426
    %v1428 = vmul.f32 %v1251, 1.442695
    %v1429 = vpow.pop %v1428
    %v1430 = vmul.f32 %v1252, 1.442695
    %v1431 = vpow.pop %v1430
    %v1432 = vmul.f32 %v1253, 1.442695
    %v1433 = vpow.pop %v1432
    %v1434 = vmul.f32 %v1254, 1.442695
    %v1435 = vpow.pop %v1434
    %v1436 = vmul.f32 %v1255, 1.442695
    %v1437 = vpow.pop %v1436
    %v1438 = vmul.f32 %v1256, 1.442695
    %v1439 = vpow.pop %v1438
    %v1440 = vmul.f32 %v1257, 1.442695
    %v1441 = vpow.pop %v1440
    %v1442 = vmul.f32 %v1258, 1.442695
    %v1443 = vpow.pop %v1442
    %v1444 = vmul.f32 %v1259, 1.442695
    %v1445 = vpow.pop %v1444
    %v1446 = vmul.f32 %v1260, 1.442695
    %v1447 = vpow.pop %v1446
    %v1448 = vmul.f32 %v1261, 1.442695
    %v1449 = vpow.pop %v1448
    %v1450 = vmul.f32 %v1262, 1.442695
    %v1451 = vpow.pop %v1450
    %v1452 = vmul.f32 %v1263, 1.442695
    %v1453 = vpow.pop %v1452
    %v1454 = vmul.f32 %v1264, 1.442695
    %v1455 = vpow.pop %v1454
    %v1456 = vmul.f32 %v1265, 1.442695
    %v1457 = vpow.pop %v1456
    %v1458 = vmul.f32 %v1266, 1.442695
    %v1459 = vpow.pop %v1458
    %v1460 = vmul.f32 %v1267, 1.442695
    %v1461 = vpow.pop %v1460
    %v1462 = vmul.f32 %v1268, 1.442695
    %v1463 = vpow.pop %v1462
    %v1464 = vmul.f32 %v1269, 1.442695
    %v1465 = vpow.pop %v1464
    %v1466 = vmul.f32 %v1270, 1.442695
    %v1467 = vpow.pop %v1466
    %v1468 = vmul.f32 %v1271, 1.442695
    %v1469 = vpow.pop %v1468
    %v1470 = vmul.f32 %v1272, 1.442695
    %v1471 = vpow.pop %v1470
    %v1472 = vmul.f32 %v1273, 1.442695
    %v1473 = vpow.pop %v1472
    %v1474 = vmul.f32 %v1274, 1.442695
    %v1475 = vpow.pop %v1474
    %v1476 = vmul.f32 %v1275, 1.442695
    %v1477 = vpow.pop %v1476
    %v1478 = vmul.f32 %v1276, 1.442695
    %v1479 = vpow.pop %v1478
    %v1480 = vmul.f32 %v1277, 1.442695
    %v1481 = vpow.pop %v1480
    %v1482 = vmul.f32 %v1278, 1.442695
    %v1483 = vpow.pop %v1482
    %v1484 = vmul.f32 %v1279, 1.442695
    %v1485 = vpow.pop %v1484
    %v1486 = vmul.f32 %v1280, 1.442695
    %v1487 = vpow.pop %v1486
    %v1488 = vmul.f32 %v1281, 1.442695
    %v1489 = vpow.pop %v1488
    %v1490 = vmul.f32 %v1282, 1.442695
    %v1491 = vpow.pop %v1490
    %v1492 = vmul.f32 %v1283, 1.442695
    %v1493 = vpow.pop %v1492
    %v1494 = vmul.f32 %v1284, 1.442695
    %v1495 = vpow.pop %v1494
    %v1496 = vmul.f32 %v1285, 1.442695
    %v1497 = vpow.pop %v1496
    %v1498 = vmul.f32 %v1286, 1.442695
    %v1499 = vpow.pop %v1498
    %v1500 = vmul.f32 %v1287, 1.442695
    %v1501 = vpow.pop %v1500
    %v1502 = vmul.f32 %v1288, 1.442695
    %v1503 = vpow.pop %v1502
    %v1504 = vmul.f32 %v1289, 1.442695
    %v1505 = vpow.pop %v1504
    %v1506 = vmul.f32 %v1290, 1.442695
    %v1507 = vpow.pop %v1506
    %v1508 = vmul.f32 %v1291, 1.442695
    %v1509 = vpow.pop %v1508
    %v1510 = vmul.f32 %v1292, 1.442695
    %v1511 = vpow.pop %v1510
    %v1512 = vmul.f32 %v1293, 1.442695
    %v1513 = vpow.pop %v1512
    %v1514 = vmul.f32 %v1294, 1.442695
    %v1515 = vpow.pop %v1514
    %v1516 = vmul.f32 %v1295, 1.442695
    %v1517 = vpow.pop %v1516
    %v1518 = vmul.f32 %v1296, 1.442695
    %v1519 = vpow.pop %v1518
    %v1520 = vmul.f32 %v1297, 1.442695
    %v1521 = vpow.pop %v1520
    %v1522 = vmul.f32 %v1298, 1.442695
    %v1523 = vpow.pop %v1522
    %v1524 = vmul.f32 %v1299, 1.442695
    %v1525 = vpow.pop %v1524
    %v1526 = vmul.f32 %v1300, 1.442695
    %v1527 = vpow.pop %v1526
    %v1528 = vmul.f32 %v1301, 1.442695
    %v1529 = vpow.pop %v1528
    %v1530 = vmul.f32 %v1302, 1.442695
    %v1531 = vpow.pop %v1530
    %v1532 = vmul.f32 %v1303, 1.442695
    %v1533 = vpow.pop %v1532
    %v1534 = vmul.f32 %v1304, 1.442695
    %v1535 = vpow.pop %v1534
    %v1536 = vmul.f32 %v1305, 1.442695
    %v1537 = vpow.pop %v1536
    %v1538 = vmul.f32 %v1306, 1.442695
    %v1539 = vpow.pop %v1538
    %v1540 = vmul.f32 %v1307, 1.442695
    %v1541 = vpow.pop %v1540
    %v1542 = vmul.f32 %v1308, 1.442695
    %v1543 = vpow.pop %v1542
    %v1544 = vmul.f32 %v1309, 1.442695
    %v1545 = vpow.pop %v1544
    %v1546 = vmul.f32 %v1310, 1.442695
    %v1547 = vpow.pop %v1546
    %v1548 = vmul.f32 %v1311, 1.442695
    %v1549 = vpow.pop %v1548
    %v1550 = vmul.f32 %v1312, 1.442695
    %v1551 = vpow.pop %v1550
    %v1552 = vmul.f32 %v1313, 1.442695
    %v1553 = vpow.pop %v1552
    %v1554 = vmul.f32 %v1314, 1.442695
    %v1555 = vpow.pop %v1554
    %v1556 = vmul.f32 %v1315, 1.442695
    %v1557 = vpow.pop %v1556
    %v1558 = vmul.f32 %v1316, 1.442695
    %v1559 = vpow.pop %v1558
    %v1560 = vmul.f32 %v1317, 1.442695
    %v1561 = vpow.pop %v1560
    %v1562 = vmul.f32 %v1318, 1.442695
    %v1563 = vpow.pop %v1562
    %v1564 = vmul.f32 %v1319, 1.442695
    %v1565 = vpow.pop %v1564
    %v1566 = vmul.f32 %v1320, 1.442695
    %v1567 = vpow.pop %v1566
    %v1568 = vmul.f32 %v1321, 1.442695
    %v1569 = vpow.pop %v1568
    %v1570 = vmul.f32 %v1322, 1.442695
    %v1571 = vpow.pop %v1570
    %v1572 = vmul.f32 %v1323, 1.442695
    %v1573 = vpow.pop %v1572
    %v1574 = vmul.f32 %v1324, 1.442695
    %v1575 = vpow.pop %v1574
    %v1576 = vmul.f32 %v1325, 1.442695
    %v1577 = vpow.pop %v1576
    %v1578 = vmul.f32 %v1326, 1.442695
    %v1579 = vpow.pop %v1578
    %v1580 = vmul.f32 %v1327, 1.442695
    %v1581 = vpow.pop %v1580
    %v1582 = vmul.f32 %v1328, 1.442695
    %v1583 = vpow.pop %v1582
    %v1584 = vmul.f32 %v1329, 1.442695
    %v1585 = vpow.pop %v1584
    %v1586 = vadd.f32 %v1331, 1.0
    %v1587 = vadd.f32 %v1333, 1.0
    %v1588 = vadd.f32 %v1335, 1.0
    %v1589 = vadd.f32 %v1337, 1.0
    %v1590 = vadd.f32 %v1339, 1.0
    %v1591 = vadd.f32 %v1341, 1.0
    %v1592 = vadd.f32 %v1343, 1.0
    %v1593 = vadd.f32 %v1345, 1.0
    %v1594 = vadd.f32 %v1347, 1.0
    %v1595 = vadd.f32 %v1349, 1.0
    %v1596 = vadd.f32 %v1351, 1.0
    %v1597 = vadd.f32 %v1353, 1.0
    %v1598 = vadd.f32 %v1355, 1.0
    %v1599 = vadd.f32 %v1357, 1.0
    %v1600 = vadd.f32 %v1359, 1.0
    %v1601 = vadd.f32 %v1361, 1.0
    %v1602 = vadd.f32 %v1363, 1.0
    %v1603 = vadd.f32 %v1365, 1.0
    %v1604 = vadd.f32 %v1367, 1.0
    %v1605 = vadd.f32 %v1369, 1.0
    %v1606 = vadd.f32 %v1371, 1.0
    %v1607 = vadd.f32 %v1373, 1.0
    %v1608 = vadd.f32 %v1375, 1.0
    %v1609 = vadd.f32 %v1377, 1.0
    %v1610 = vadd.f32 %v1379, 1.0
    %v1611 = vadd.f32 %v1381, 1.0
    %v1612 = vadd.f32 %v1383, 1.0
    %v1613 = vadd.f32 %v1385, 1.0
    %v1614 = vadd.f32 %v1387, 1.0
    %v1615 = vadd.f32 %v1389, 1.0
    %v1616 = vadd.f32 %v1391, 1.0
    %v1617 = vadd.f32 %v1393, 1.0
    %v1618 = vadd.f32 %v1395, 1.0
    %v1619 = vadd.f32 %v1397, 1.0
    %v1620 = vadd.f32 %v1399, 1.0
    %v1621 = vadd.f32 %v1401, 1.0
    %v1622 = vadd.f32 %v1403, 1.0
    %v1623 = vadd.f32 %v1405, 1.0
    %v1624 = vadd.f32 %v1407, 1.0
    %v1625 = vadd.f32 %v1409, 1.0
    %v1626 = vadd.f32 %v1411, 1.0
    %v1627 = vadd.f32 %v1413, 1.0
    %v1628 = vadd.f32 %v1415, 1.0
    %v1629 = vadd.f32 %v1417, 1.0
    %v1630 = vadd.f32 %v1419, 1.0
    %v1631 = vadd.f32 %v1421, 1.0
    %v1632 = vadd.f32 %v1423, 1.0
    %v1633 = vadd.f32 %v1425, 1.0
    %v1634 = vadd.f32 %v1427, 1.0
    %v1635 = vadd.f32 %v1429, 1.0
    %v1636 = vadd.f32 %v1431, 1.0
    %v1637 = vadd.f32 %v1433, 1.0
    %v1638 = vadd.f32 %v1435, 1.0
    %v1639 = vadd.f32 %v1437, 1.0
    %v1640 = vadd.f32 %v1439, 1.0
    %v1641 = vadd.f32 %v1441, 1.0
    %v1642 = vadd.f32 %v1443, 1.0
    %v1643 = vadd.f32 %v1445, 1.0
    %v1644 = vadd.f32 %v1447, 1.0
    %v1645 = vadd.f32 %v1449, 1.0
    %v1646 = vadd.f32 %v1451, 1.0
    %v1647 = vadd.f32 %v1453, 1.0
    %v1648 = vadd.f32 %v1455, 1.0
    %v1649 = vadd.f32 %v1457, 1.0
    %v1650 = vadd.f32 %v1459, 1.0
    %v1651 = vadd.f32 %v1461, 1.0
    %v1652 = vadd.f32 %v1463, 1.0
    %v1653 = vadd.f32 %v1465, 1.0
    %v1654 = vadd.f32 %v1467, 1.0
    %v1655 = vadd.f32 %v1469, 1.0
    %v1656 = vadd.f32 %v1471, 1.0
    %v1657 = vadd.f32 %v1473, 1.0
    %v1658 = vadd.f32 %v1475, 1.0
    %v1659 = vadd.f32 %v1477, 1.0
    %v1660 = vadd.f32 %v1479, 1.0
    %v1661 = vadd.f32 %v1481, 1.0
    %v1662 = vadd.f32 %v1483, 1.0
    %v1663 = vadd.f32 %v1485, 1.0
    %v1664 = vadd.f32 %v1487, 1.0
    %v1665 = vadd.f32 %v1489, 1.0
    %v1666 = vadd.f32 %v1491, 1.0
    %v1667 = vadd.f32 %v1493, 1.0
    %v1668 = vadd.f32 %v1495, 1.0
    %v1669 = vadd.f32 %v1497, 1.0
    %v1670 = vadd.f32 %v1499, 1.0
    %v1671 = vadd.f32 %v1501, 1.0
    %v1672 = vadd.f32 %v1503, 1.0
    %v1673 = vadd.f32 %v1505, 1.0
    %v1674 = vadd.f32 %v1507, 1.0
    %v1675 = vadd.f32 %v1509, 1.0
    %v1676 = vadd.f32 %v1511, 1.0
    %v1677 = vadd.f32 %v1513, 1.0
    %v1678 = vadd.f32 %v1515, 1.0
    %v1679 = vadd.f32 %v1517, 1.0
    %v1680 = vadd.f32 %v1519, 1.0
    %v1681 = vadd.f32 %v1521, 1.0
    %v1682 = vadd.f32 %v1523, 1.0
    %v1683 = vadd.f32 %v1525, 1.0
    %v1684 = vadd.f32 %v1527, 1.0
    %v1685 = vadd.f32 %v1529, 1.0
    %v1686 = vadd.f32 %v1531, 1.0
    %v1687 = vadd.f32 %v1533, 1.0
    %v1688 = vadd.f32 %v1535, 1.0
    %v1689 = vadd.f32 %v1537, 1.0
    %v1690 = vadd.f32 %v1539, 1.0
    %v1691 = vadd.f32 %v1541, 1.0
    %v1692 = vadd.f32 %v1543, 1.0
    %v1693 = vadd.f32 %v1545, 1.0
    %v1694 = vadd.f32 %v1547, 1.0
    %v1695 = vadd.f32 %v1549, 1.0
    %v1696 = vadd.f32 %v1551, 1.0
    %v1697 = vadd.f32 %v1553, 1.0
    %v1698 = vadd.f32 %v1555, 1.0
    %v1699 = vadd.f32 %v1557, 1.0
    %v1700 = vadd.f32 %v1559, 1.0
    %v1701 = vadd.f32 %v1561, 1.0
    %v1702 = vadd.f32 %v1563, 1.0
    %v1703 = vadd.f32 %v1565, 1.0
    %v1704 = vadd.f32 %v1567, 1.0
    %v1705 = vadd.f32 %v1569, 1.0
    %v1706 = vadd.f32 %v1571, 1.0
    %v1707 = vadd.f32 %v1573, 1.0
    %v1708 = vadd.f32 %v1575, 1.0
    %v1709 = vadd.f32 %v1577, 1.0
    %v1710 = vadd.f32 %v1579, 1.0
    %v1711 = vadd.f32 %v1581, 1.0
    %v1712 = vadd.f32 %v1583, 1.0
    %v1713 = vadd.f32 %v1585, 1.0
    %v1714 = vrcp.pop %v1586
    %v1715 = vmul.f32 1.0, %v1714
    %v1716 = vrcp.pop %v1587
    %v1717 = vmul.f32 1.0, %v1716
    %v1718 = vrcp.pop %v1588
    %v1719 = vmul.f32 1.0, %v1718
    %v1720 = vrcp.pop %v1589
    %v1721 = vmul.f32 1.0, %v1720
    %v1722 = vrcp.pop %v1590
    %v1723 = vmul.f32 1.0, %v1722
    %v1724 = vrcp.pop %v1591
    %v1725 = vmul.f32 1.0, %v1724
    %v1726 = vrcp.pop %v1592
    %v1727 = vmul.f32 1.0, %v1726
    %v1728 = vrcp.pop %v1593
    %v1729 = vmul.f32 1.0, %v1728
    %v1730 = vrcp.pop %v1594
    %v1731 = vmul.f32 1.0, %v1730
    %v1732 = vrcp.pop %v1595
    %v1733 = vmul.f32 1.0, %v1732
    %v1734 = vrcp.pop %v1596
    %v1735 = vmul.f32 1.0, %v1734
    %v1736 = vrcp.pop %v1597
    %v1737 = vmul.f32 1.0, %v1736
    %v1738 = vrcp.pop %v1598
    %v1739 = vmul.f32 1.0, %v1738
    %v1740 = vrcp.pop %v1599
    %v1741 = vmul.f32 1.0, %v1740
    %v1742 = vrcp.pop %v1600
    %v1743 = vmul.f32 1.0, %v1742
    %v1744 = vrcp.pop %v1601
    %v1745 = vmul.f32 1.0, %v1744
    %v1746 = vrcp.pop %v1602
    %v1747 = vmul.f32 1.0, %v1746
    %v1748 = vrcp.pop %v1603
    %v1749 = vmul.f32 1.0, %v1748
    %v1750 = vrcp.pop %v1604
    %v1751 = vmul.f32 1.0, %v1750
    %v1752 = vrcp.pop %v1605
    %v1753 = vmul.f32 1.0, %v1752
    %v1754 = vrcp.pop %v1606
    %v1755 = vmul.f32 1.0, %v1754
    %v1756 = vrcp.pop %v1607
    %v1757 = vmul.f32 1.0, %v1756
    %v1758 = vrcp.pop %v1608
    %v1759 = vmul.f32 1.0, %v1758
    %v1760 = vrcp.pop %v1609
    %v1761 = vmul.f32 1.0, %v1760
    %v1762 = vrcp.pop %v1610
    %v1763 = vmul.f32 1.0, %v1762
    %v1764 = vrcp.pop %v1611
    %v1765 = vmul.f32 1.0, %v1764
    %v1766 = vrcp.pop %v1612
    %v1767 = vmul.f32 1.0, %v1766
    %v1768 = vrcp.pop %v1613
    %v1769 = vmul.f32 1.0, %v1768
    %v1770 = vrcp.pop %v1614
    %v1771 = vmul.f32 1.0, %v1770
    %v1772 = vrcp.pop %v1615
    %v1773 = vmul.f32 1.0, %v1772
    %v1774 = vrcp.pop %v1616
    %v1775 = vmul.f32 1.0, %v1774
    %v1776 = vrcp.pop %v1617
    %v1777 = vmul.f32 1.0, %v1776
    %v1778 = vrcp.pop %v1618
    %v1779 = vmul.f32 1.0, %v1778
    %v1780 = vrcp.pop %v1619
    %v1781 = vmul.f32 1.0, %v1780
    %v1782 = vrcp.pop %v1620
    %v1783 = vmul.f32 1.0, %v1782
    %v1784 = vrcp.pop %v1621
    %v1785 = vmul.f32 1.0, %v1784
    %v1786 = vrcp.pop %v1622
    %v1787 = vmul.f32 1.0, %v1786
    %v1788 = vrcp.pop %v1623
    %v1789 = vmul.f32 1.0, %v1788
    %v1790 = vrcp.pop %v1624
    %v1791 = vmul.f32 1.0, %v1790
    %v1792 = vrcp.pop %v1625
    %v1793 = vmul.f32 1.0, %v1792
    %v1794 = vrcp.pop %v1626
    %v1795 = vmul.f32 1.0, %v1794
    %v1796 = vrcp.pop %v1627
    %v1797 = vmul.f32 1.0, %v1796
    %v1798 = vrcp.pop %v1628
    %v1799 = vmul.f32 1.0, %v1798
    %v1800 = vrcp.pop %v1629
    %v1801 = vmul.f32 1.0, %v1800
    %v1802 = vrcp.pop %v1630
    %v1803 = vmul.f32 1.0, %v1802
    %v1804 = vrcp.pop %v1631
    %v1805 = vmul.f32 1.0, %v1804
    %v1806 = vrcp.pop %v1632
    %v1807 = vmul.f32 1.0, %v1806
    %v1808 = vrcp.pop %v1633
    %v1809 = vmul.f32 1.0, %v1808
    %v1810 = vrcp.pop %v1634
    %v1811 = vmul.f32 1.0, %v1810
    %v1812 = vrcp.pop %v1635
    %v1813 = vmul.f32 1.0, %v1812
    %v1814 = vrcp.pop %v1636
    %v1815 = vmul.f32 1.0, %v1814
    %v1816 = vrcp.pop %v1637
    %v1817 = vmul.f32 1.0, %v1816
    %v1818 = vrcp.pop %v1638
    %v1819 = vmul.f32 1.0, %v1818
    %v1820 = vrcp.pop %v1639
    %v1821 = vmul.f32 1.0, %v1820
    %v1822 = vrcp.pop %v1640
    %v1823 = vmul.f32 1.0, %v1822
    %v1824 = vrcp.pop %v1641
    %v1825 = vmul.f32 1.0, %v1824
    %v1826 = vrcp.pop %v1642
    %v1827 = vmul.f32 1.0, %v1826
    %v1828 = vrcp.pop %v1643
    %v1829 = vmul.f32 1.0, %v1828
    %v1830 = vrcp.pop %v1644
    %v1831 = vmul.f32 1.0, %v1830
    %v1832 = vrcp.pop %v1645
    %v1833 = vmul.f32 1.0, %v1832
    %v1834 = vrcp.pop %v1646
    %v1835 = vmul.f32 1.0, %v1834
    %v1836 = vrcp.pop %v1647
    %v1837 = vmul.f32 1.0, %v1836
    %v1838 = vrcp.pop %v1648
    %v1839 = vmul.f32 1.0, %v1838
    %v1840 = vrcp.pop %v1649
    %v1841 = vmul.f32 1.0, %v1840
    %v1842 = vrcp.pop %v1650
    %v1843 = vmul.f32 1.0, %v1842
    %v1844 = vrcp.pop %v1651
    %v1845 = vmul.f32 1.0, %v1844
    %v1846 = vrcp.pop %v1652
    %v1847 = vmul.f32 1.0, %v1846
    %v1848 = vrcp.pop %v1653
    %v1849 = vmul.f32 1.0, %v1848
    %v1850 = vrcp.pop %v1654
    %v1851 = vmul.f32 1.0, %v1850
    %v1852 = vrcp.pop %v1655
    %v1853 = vmul.f32 1.0, %v1852
    %v1854 = vrcp.pop %v1656
    %v1855 = vmul.f32 1.0, %v1854
    %v1856 = vrcp.pop %v1657
    %v1857 = vmul.f32 1.0, %v1856
    %v1858 = vrcp.pop %v1658
    %v1859 = vmul.f32 1.0, %v1858
    %v1860 = vrcp.pop %v1659
    %v1861 = vmul.f32 1.0, %v1860
    %v1862 = vrcp.pop %v1660
    %v1863 = vmul.f32 1.0, %v1862
    %v1864 = vrcp.pop %v1661
    %v1865 = vmul.f32 1.0, %v1864
    %v1866 = vrcp.pop %v1662
    %v1867 = vmul.f32 1.0, %v1866
    %v1868 = vrcp.pop %v1663
    %v1869 = vmul.f32 1.0, %v1868
    %v1870 = vrcp.pop %v1664
    %v1871 = vmul.f32 1.0, %v1870
    %v1872 = vrcp.pop %v1665
    %v1873 = vmul.f32 1.0, %v1872
    %v1874 = vrcp.pop %v1666
    %v1875 = vmul.f32 1.0, %v1874
    %v1876 = vrcp.pop %v1667
    %v1877 = vmul.f32 1.0, %v1876
    %v1878 = vrcp.pop %v1668
    %v1879 = vmul.f32 1.0, %v1878
    %v1880 = vrcp.pop %v1669
    %v1881 = vmul.f32 1.0, %v1880
    %v1882 = vrcp.pop %v1670
    %v1883 = vmul.f32 1.0, %v1882
    %v1884 = vrcp.pop %v1671
    %v1885 = vmul.f32 1.0, %v1884
    %v1886 = vrcp.pop %v1672
    %v1887 = vmul.f32 1.0, %v1886
    %v1888 = vrcp.pop %v1673
    %v1889 = vmul.f32 1.0, %v1888
    %v1890 = vrcp.pop %v1674
    %v1891 = vmul.f32 1.0, %v1890
    %v1892 = vrcp.pop %v1675
    %v1893 = vmul.f32 1.0, %v1892
    %v1894 = vrcp.pop %v1676
    %v1895 = vmul.f32 1.0, %v1894
    %v1896 = vrcp.pop %v1677
    %v1897 = vmul.f32 1.0, %v1896
    %v1898 = vrcp.pop %v1678
    %v1899 = vmul.f32 1.0, %v1898
    %v1900 = vrcp.pop %v1679
    %v1901 = vmul.f32 1.0, %v1900
    %v1902 = vrcp.pop %v1680
    %v1903 = vmul.f32 1.0, %v1902
    %v1904 = vrcp.pop %v1681
    %v1905 = vmul.f32 1.0, %v1904
    %v1906 = vrcp.pop %v1682
    %v1907 = vmul.f32 1.0, %v1906
    %v1908 = vrcp.pop %v1683
    %v1909 = vmul.f32 1.0, %v1908
    %v1910 = vrcp.pop %v1684
    %v1911 = vmul.f32 1.0, %v1910
    %v1912 = vrcp.pop %v1685
    %v1913 = vmul.f32 1.0, %v1912
    %v1914 = vrcp.pop %v1686
    %v1915 = vmul.f32 1.0, %v1914
    %v1916 = vrcp.pop %v1687
    %v1917 = vmul.f32 1.0, %v1916
    %v1918 = vrcp.pop %v1688
    %v1919 = vmul.f32 1.0, %v1918
    %v1920 = vrcp.pop %v1689
    %v1921 = vmul.f32 1.0, %v1920
    %v1922 = vrcp.pop %v1690
    %v1923 = vmul.f32 1.0, %v1922
    %v1924 = vrcp.pop %v1691
    %v1925 = vmul.f32 1.0, %v1924
    %v1926 = vrcp.pop %v1692
    %v1927 = vmul.f32 1.0, %v1926
    %v1928 = vrcp.pop %v1693
    %v1929 = vmul.f32 1.0, %v1928
    %v1930 = vrcp.pop %v1694
    %v1931 = vmul.f32 1.0, %v1930
    %v1932 = vrcp.pop %v1695
    %v1933 = vmul.f32 1.0, %v1932
    %v1934 = vrcp.pop %v1696
    %v1935 = vmul.f32 1.0, %v1934
    %v1936 = vrcp.pop %v1697
    %v1937 = vmul.f32 1.0, %v1936
    %v1938 = vrcp.pop %v1698
    %v1939 = vmul.f32 1.0, %v1938
    %v1940 = vrcp.pop %v1699
    %v1941 = vmul.f32 1.0, %v1940
    %v1942 = vrcp.pop %v1700
    %v1943 = vmul.f32 1.0, %v1942
    %v1944 = vrcp.pop %v1701
    %v1945 = vmul.f32 1.0, %v1944
    %v1946 = vrcp.pop %v1702
    %v1947 = vmul.f32 1.0, %v1946
    %v1948 = vrcp.pop %v1703
    %v1949 = vmul.f32 1.0, %v1948
    %v1950 = vrcp.pop %v1704
    %v1951 = vmul.f32 1.0, %v1950
    %v1952 = vrcp.pop %v1705
    %v1953 = vmul.f32 1.0, %v1952
    %v1954 = vrcp.pop %v1706
    %v1955 = vmul.f32 1.0, %v1954
    %v1956 = vrcp.pop %v1707
    %v1957 = vmul.f32 1.0, %v1956
    %v1958 = vrcp.pop %v1708
    %v1959 = vmul.f32 1.0, %v1958
    %v1960 = vrcp.pop %v1709
    %v1961 = vmul.f32 1.0, %v1960
    %v1962 = vrcp.pop %v1710
    %v1963 = vmul.f32 1.0, %v1962
    %v1964 = vrcp.pop %v1711
    %v1965 = vmul.f32 1.0, %v1964
    %v1966 = vrcp.pop %v1712
    %v1967 = vmul.f32 1.0, %v1966
    %v1968 = vrcp.pop %v1713
    %v1969 = vmul.f32 1.0, %v1968
    %v1970 = vstv %s201
    %v1971 = vmul.f32 %v1715, %v1970
    %v1972 = vmul.f32 %v1717, %v1970
    %v1973 = vmul.f32 %v1719, %v1970
    %v1974 = vmul.f32 %v1721, %v1970
    %v1975 = vmul.f32 %v1723, %v1970
    %v1976 = vmul.f32 %v1725, %v1970
    %v1977 = vmul.f32 %v1727, %v1970
    %v1978 = vmul.f32 %v1729, %v1970
    %v1979 = vmul.f32 %v1731, %v1970
    %v1980 = vmul.f32 %v1733, %v1970
    %v1981 = vmul.f32 %v1735, %v1970
    %v1982 = vmul.f32 %v1737, %v1970
    %v1983 = vmul.f32 %v1739, %v1970
    %v1984 = vmul.f32 %v1741, %v1970
    %v1985 = vmul.f32 %v1743, %v1970
    %v1986 = vmul.f32 %v1745, %v1970
    %v1987 = vmul.f32 %v1747, %v1970
    %v1988 = vmul.f32 %v1749, %v1970
    %v1989 = vmul.f32 %v1751, %v1970
    %v1990 = vmul.f32 %v1753, %v1970
    %v1991 = vmul.f32 %v1755, %v1970
    %v1992 = vmul.f32 %v1757, %v1970
    %v1993 = vmul.f32 %v1759, %v1970
    %v1994 = vmul.f32 %v1761, %v1970
    %v1995 = vmul.f32 %v1763, %v1970
    %v1996 = vmul.f32 %v1765, %v1970
    %v1997 = vmul.f32 %v1767, %v1970
    %v1998 = vmul.f32 %v1769, %v1970
    %v1999 = vmul.f32 %v1771, %v1970
    %v2000 = vmul.f32 %v1773, %v1970
    %v2001 = vmul.f32 %v1775, %v1970
    %v2002 = vmul.f32 %v1777, %v1970
    %v2003 = vmul.f32 %v1779, %v1970
    %v2004 = vmul.f32 %v1781, %v1970
    %v2005 = vmul.f32 %v1783, %v1970
    %v2006 = vmul.f32 %v1785, %v1970
    %v2007 = vmul.f32 %v1787, %v1970
    %v2008 = vmul.f32 %v1789, %v1970
    %v2009 = vmul.f32 %v1791, %v1970
    %v2010 = vmul.f32 %v1793, %v1970
    %v2011 = vmul.f32 %v1795, %v1970
    %v2012 = vmul.f32 %v1797, %v1970
    %v2013 = vmul.f32 %v1799, %v1970
    %v2014 = vmul.f32 %v1801, %v1970
    %v2015 = vmul.f32 %v1803, %v1970
    %v2016 = vmul.f32 %v1805, %v1970
    %v2017 = vmul.f32 %v1807, %v1970
    %v2018 = vmul.f32 %v1809, %v1970
    %v2019 = vmul.f32 %v1811, %v1970
    %v2020 = vmul.f32 %v1813, %v1970
    %v2021 = vmul.f32 %v1815, %v1970
    %v2022 = vmul.f32 %v1817, %v1970
    %v2023 = vmul.f32 %v1819, %v1970
    %v2024 = vmul.f32 %v1821, %v1970
    %v2025 = vmul.f32 %v1823, %v1970
    %v2026 = vmul.f32 %v1825, %v1970
    %v2027 = vmul.f32 %v1827, %v1970
    %v2028 = vmul.f32 %v1829, %v1970
    %v2029 = vmul.f32 %v1831, %v1970
    %v2030 = vmul.f32 %v1833, %v1970
    %v2031 = vmul.f32 %v1835, %v1970
    %v2032 = vmul.f32 %v1837, %v1970
    %v2033 = vmul.f32 %v1839, %v1970
    %v2034 = vmul.f32 %v1841, %v1970
    %v2035 = vmul.f32 %v1843, %v1970
    %v2036 = vmul.f32 %v1845, %v1970
    %v2037 = vmul.f32 %v1847, %v1970
    %v2038 = vmul.f32 %v1849, %v1970
    %v2039 = vmul.f32 %v1851, %v1970
    %v2040 = vmul.f32 %v1853, %v1970
    %v2041 = vmul.f32 %v1855, %v1970
    %v2042 = vmul.f32 %v1857, %v1970
    %v2043 = vmul.f32 %v1859, %v1970
    %v2044 = vmul.f32 %v1861, %v1970
    %v2045 = vmul.f32 %v1863, %v1970
    %v2046 = vmul.f32 %v1865, %v1970
    %v2047 = vmul.f32 %v1867, %v1970
    %v2048 = vmul.f32 %v1869, %v1970
    %v2049 = vmul.f32 %v1871, %v1970
    %v2050 = vmul.f32 %v1873, %v1970
    %v2051 = vmul.f32 %v1875, %v1970
    %v2052 = vmul.f32 %v1877, %v1970
    %v2053 = vmul.f32 %v1879, %v1970
    %v2054 = vmul.f32 %v1881, %v1970
    %v2055 = vmul.f32 %v1883, %v1970
    %v2056 = vmul.f32 %v1885, %v1970
    %v2057 = vmul.f32 %v1887, %v1970
    %v2058 = vmul.f32 %v1889, %v1970
    %v2059 = vmul.f32 %v1891, %v1970
    %v2060 = vmul.f32 %v1893, %v1970
    %v2061 = vmul.f32 %v1895, %v1970
    %v2062 = vmul.f32 %v1897, %v1970
    %v2063 = vmul.f32 %v1899, %v1970
    %v2064 = vmul.f32 %v1901, %v1970
    %v2065 = vmul.f32 %v1903, %v1970
    %v2066 = vmul.f32 %v1905, %v1970
    %v2067 = vmul.f32 %v1907, %v1970
    %v2068 = vmul.f32 %v1909, %v1970
    %v2069 = vmul.f32 %v1911, %v1970
    %v2070 = vmul.f32 %v1913, %v1970
    %v2071 = vmul.f32 %v1915, %v1970
    %v2072 = vmul.f32 %v1917, %v1970
    %v2073 = vmul.f32 %v1919, %v1970
    %v2074 = vmul.f32 %v1921, %v1970
    %v2075 = vmul.f32 %v1923, %v1970
    %v2076 = vmul.f32 %v1925, %v1970
    %v2077 = vmul.f32 %v1927, %v1970
    %v2078 = vmul.f32 %v1929, %v1970
    %v2079 = vmul.f32 %v1931, %v1970
    %v2080 = vmul.f32 %v1933, %v1970
    %v2081 = vmul.f32 %v1935, %v1970
    %v2082 = vmul.f32 %v1937, %v1970
    %v2083 = vmul.f32 %v1939, %v1970
    %v2084 = vmul.f32 %v1941, %v1970
    %v2085 = vmul.f32 %v1943, %v1970
    %v2086 = vmul.f32 %v1945, %v1970
    %v2087 = vmul.f32 %v1947, %v1970
    %v2088 = vmul.f32 %v1949, %v1970
    %v2089 = vmul.f32 %v1951, %v1970
    %v2090 = vmul.f32 %v1953, %v1970
    %v2091 = vmul.f32 %v1955, %v1970
    %v2092 = vmul.f32 %v1957, %v1970
    %v2093 = vmul.f32 %v1959, %v1970
    %v2094 = vmul.f32 %v1961, %v1970
    %v2095 = vmul.f32 %v1963, %v1970
    %v2096 = vmul.f32 %v1965, %v1970
    %v2097 = vmul.f32 %v1967, %v1970
    %v2098 = vmul.f32 %v1969, %v1970
    %v2099 = vadd.f32 %v1971, 1.1
    %v2100 = vadd.f32 %v1972, 1.1
    %v2101 = vadd.f32 %v1973, 1.1
    %v2102 = vadd.f32 %v1974, 1.1
    %v2103 = vadd.f32 %v1975, 1.1
    %v2104 = vadd.f32 %v1976, 1.1
    %v2105 = vadd.f32 %v1977, 1.1
    %v2106 = vadd.f32 %v1978, 1.1
    %v2107 = vadd.f32 %v1979, 1.1
    %v2108 = vadd.f32 %v1980, 1.1
    %v2109 = vadd.f32 %v1981, 1.1
    %v2110 = vadd.f32 %v1982, 1.1
    %v2111 = vadd.f32 %v1983, 1.1
    %v2112 = vadd.f32 %v1984, 1.1
    %v2113 = vadd.f32 %v1985, 1.1
    %v2114 = vadd.f32 %v1986, 1.1
    %v2115 = vadd.f32 %v1987, 1.1
    %v2116 = vadd.f32 %v1988, 1.1
    %v2117 = vadd.f32 %v1989, 1.1
    %v2118 = vadd.f32 %v1990, 1.1
    %v2119 = vadd.f32 %v1991, 1.1
    %v2120 = vadd.f32 %v1992, 1.1
    %v2121 = vadd.f32 %v1993, 1.1
    %v2122 = vadd.f32 %v1994, 1.1
    %v2123 = vadd.f32 %v1995, 1.1
    %v2124 = vadd.f32 %v1996, 1.1
    %v2125 = vadd.f32 %v1997, 1.1
    %v2126 = vadd.f32 %v1998, 1.1
    %v2127 = vadd.f32 %v1999, 1.1
    %v2128 = vadd.f32 %v2000, 1.1
    %v2129 = vadd.f32 %v2001, 1.1
    %v2130 = vadd.f32 %v2002, 1.1
    %v2131 = vadd.f32 %v2003, 1.1
    %v2132 = vadd.f32 %v2004, 1.1
    %v2133 = vadd.f32 %v2005, 1.1
    %v2134 = vadd.f32 %v2006, 1.1
    %v2135 = vadd.f32 %v2007, 1.1
    %v2136 = vadd.f32 %v2008, 1.1
    %v2137 = vadd.f32 %v2009, 1.1
    %v2138 = vadd.f32 %v2010, 1.1
    %v2139 = vadd.f32 %v2011, 1.1
    %v2140 = vadd.f32 %v2012, 1.1
    %v2141 = vadd.f32 %v2013, 1.1
    %v2142 = vadd.f32 %v2014, 1.1
    %v2143 = vadd.f32 %v2015, 1.1
    %v2144 = vadd.f32 %v2016, 1.1
    %v2145 = vadd.f32 %v2017, 1.1
    %v2146 = vadd.f32 %v2018, 1.1
    %v2147 = vadd.f32 %v2019, 1.1
    %v2148 = vadd.f32 %v2020, 1.1
    %v2149 = vadd.f32 %v2021, 1.1
    %v2150 = vadd.f32 %v2022, 1.1
    %v2151 = vadd.f32 %v2023, 1.1
    %v2152 = vadd.f32 %v2024, 1.1
    %v2153 = vadd.f32 %v2025, 1.1
    %v2154 = vadd.f32 %v2026, 1.1
    %v2155 = vadd.f32 %v2027, 1.1
    %v2156 = vadd.f32 %v2028, 1.1
    %v2157 = vadd.f32 %v2029, 1.1
    %v2158 = vadd.f32 %v2030, 1.1
    %v2159 = vadd.f32 %v2031, 1.1
    %v2160 = vadd.f32 %v2032, 1.1
    %v2161 = vadd.f32 %v2033, 1.1
    %v2162 = vadd.f32 %v2034, 1.1
    %v2163 = vadd.f32 %v2035, 1.1
    %v2164 = vadd.f32 %v2036, 1.1
    %v2165 = vadd.f32 %v2037, 1.1
    %v2166 = vadd.f32 %v2038, 1.1
    %v2167 = vadd.f32 %v2039, 1.1
    %v2168 = vadd.f32 %v2040, 1.1
    %v2169 = vadd.f32 %v2041, 1.1
    %v2170 = vadd.f32 %v2042, 1.1
    %v2171 = vadd.f32 %v2043, 1.1
    %v2172 = vadd.f32 %v2044, 1.1
    %v2173 = vadd.f32 %v2045, 1.1
    %v2174 = vadd.f32 %v2046, 1.1
    %v2175 = vadd.f32 %v2047, 1.1
    %v2176 = vadd.f32 %v2048, 1.1
    %v2177 = vadd.f32 %v2049, 1.1
    %v2178 = vadd.f32 %v2050, 1.1
    %v2179 = vadd.f32 %v2051, 1.1
    %v2180 = vadd.f32 %v2052, 1.1
    %v2181 = vadd.f32 %v2053, 1.1
    %v2182 = vadd.f32 %v2054, 1.1
    %v2183 = vadd.f32 %v2055, 1.1
    %v2184 = vadd.f32 %v2056, 1.1
    %v2185 = vadd.f32 %v2057, 1.1
    %v2186 = vadd.f32 %v2058, 1.1
    %v2187 = vadd.f32 %v2059, 1.1
    %v2188 = vadd.f32 %v2060, 1.1
    %v2189 = vadd.f32 %v2061, 1.1
    %v2190 = vadd.f32 %v2062, 1.1
    %v2191 = vadd.f32 %v2063, 1.1
    %v2192 = vadd.f32 %v2064, 1.1
    %v2193 = vadd.f32 %v2065, 1.1
    %v2194 = vadd.f32 %v2066, 1.1
    %v2195 = vadd.f32 %v2067, 1.1
    %v2196 = vadd.f32 %v2068, 1.1
    %v2197 = vadd.f32 %v2069, 1.1
    %v2198 = vadd.f32 %v2070, 1.1
    %v2199 = vadd.f32 %v2071, 1.1
    %v2200 = vadd.f32 %v2072, 1.1
    %v2201 = vadd.f32 %v2073, 1.1
    %v2202 = vadd.f32 %v2074, 1.1
    %v2203 = vadd.f32 %v2075, 1.1
    %v2204 = vadd.f32 %v2076, 1.1
    %v2205 = vadd.f32 %v2077, 1.1
    %v2206 = vadd.f32 %v2078, 1.1
    %v2207 = vadd.f32 %v2079, 1.1
    %v2208 = vadd.f32 %v2080, 1.1
    %v2209 = vadd.f32 %v2081, 1.1
    %v2210 = vadd.f32 %v2082, 1.1
    %v2211 = vadd.f32 %v2083, 1.1
    %v2212 = vadd.f32 %v2084, 1.1
    %v2213 = vadd.f32 %v2085, 1.1
    %v2214 = vadd.f32 %v2086, 1.1
    %v2215 = vadd.f32 %v2087, 1.1
    %v2216 = vadd.f32 %v2088, 1.1
    %v2217 = vadd.f32 %v2089, 1.1
    %v2218 = vadd.f32 %v2090, 1.1
    %v2219 = vadd.f32 %v2091, 1.1
    %v2220 = vadd.f32 %v2092, 1.1
    %v2221 = vadd.f32 %v2093, 1.1
    %v2222 = vadd.f32 %v2094, 1.1
    %v2223 = vadd.f32 %v2095, 1.1
    %v2224 = vadd.f32 %v2096, 1.1
    %v2225 = vadd.f32 %v2097, 1.1
    %v2226 = vadd.f32 %v2098, 1.1
    %vm2227 = vcmp.eq.s32.totalorder %v200, 0
    %v2228 = vsel %vm2227, 0.0, %v692
    %v2229 = vsel %vm2227, 0.0, %v695
    %v2230 = vsel %vm2227, 0.0, %v700
    %v2231 = vsel %vm2227, 0.0, %v703
    %v2232 = vsel %vm2227, 0.0, %v708
    %v2233 = vsel %vm2227, 0.0, %v711
    %v2234 = vsel %vm2227, 0.0, %v716
    %v2235 = vsel %vm2227, 0.0, %v719
    %v2236 = vsel %vm2227, 0.0, %v724
    %v2237 = vsel %vm2227, 0.0, %v727
    %v2238 = vsel %vm2227, 0.0, %v732
    %v2239 = vsel %vm2227, 0.0, %v735
    %v2240 = vsel %vm2227, 0.0, %v740
    %v2241 = vsel %vm2227, 0.0, %v743
    %v2242 = vsel %vm2227, 0.0, %v748
    %v2243 = vsel %vm2227, 0.0, %v751
    %v2244 = vsel %vm2227, 0.0, %v756
    %v2245 = vsel %vm2227, 0.0, %v759
    %v2246 = vsel %vm2227, 0.0, %v764
    %v2247 = vsel %vm2227, 0.0, %v767
    %v2248 = vsel %vm2227, 0.0, %v772
    %v2249 = vsel %vm2227, 0.0, %v775
    %v2250 = vsel %vm2227, 0.0, %v780
    %v2251 = vsel %vm2227, 0.0, %v783
    %v2252 = vsel %vm2227, 0.0, %v788
    %v2253 = vsel %vm2227, 0.0, %v791
    %v2254 = vsel %vm2227, 0.0, %v796
    %v2255 = vsel %vm2227, 0.0, %v799
    %v2256 = vsel %vm2227, 0.0, %v804
    %v2257 = vsel %vm2227, 0.0, %v807
    %v2258 = vsel %vm2227, 0.0, %v812
    %v2259 = vsel %vm2227, 0.0, %v815
    %v2260 = vsel %vm2227, 0.0, %v820
    %v2261 = vsel %vm2227, 0.0, %v823
    %v2262 = vsel %vm2227, 0.0, %v828
    %v2263 = vsel %vm2227, 0.0, %v831
    %v2264 = vsel %vm2227, 0.0, %v836
    %v2265 = vsel %vm2227, 0.0, %v839
    %v2266 = vsel %vm2227, 0.0, %v844
    %v2267 = vsel %vm2227, 0.0, %v847
    %v2268 = vsel %vm2227, 0.0, %v852
    %v2269 = vsel %vm2227, 0.0, %v855
    %v2270 = vsel %vm2227, 0.0, %v860
    %v2271 = vsel %vm2227, 0.0, %v863
    %v2272 = vsel %vm2227, 0.0, %v868
    %v2273 = vsel %vm2227, 0.0, %v871
    %v2274 = vsel %vm2227, 0.0, %v876
    %v2275 = vsel %vm2227, 0.0, %v879
    %v2276 = vsel %vm2227, 0.0, %v884
    %v2277 = vsel %vm2227, 0.0, %v887
    %v2278 = vsel %vm2227, 0.0, %v892
    %v2279 = vsel %vm2227, 0.0, %v895
    %v2280 = vsel %vm2227, 0.0, %v900
    %v2281 = vsel %vm2227, 0.0, %v903
    %v2282 = vsel %vm2227, 0.0, %v908
    %v2283 = vsel %vm2227, 0.0, %v911
    %v2284 = vsel %vm2227, 0.0, %v916
    %v2285 = vsel %vm2227, 0.0, %v919
    %v2286 = vsel %vm2227, 0.0, %v924
    %v2287 = vsel %vm2227, 0.0, %v927
    %v2288 = vsel %vm2227, 0.0, %v932
    %v2289 = vsel %vm2227, 0.0, %v935
    %v2290 = vsel %vm2227, 0.0, %v940
    %v2291 = vsel %vm2227, 0.0, %v943
    %v2292 = vsel %vm2227, 0.0, %v948
    %v2293 = vsel %vm2227, 0.0, %v951
    %v2294 = vsel %vm2227, 0.0, %v956
    %v2295 = vsel %vm2227, 0.0, %v959
    %v2296 = vsel %vm2227, 0.0, %v964
    %v2297 = vsel %vm2227, 0.0, %v967
    %v2298 = vsel %vm2227, 0.0, %v972
    %v2299 = vsel %vm2227, 0.0, %v975
    %v2300 = vsel %vm2227, 0.0, %v980
    %v2301 = vsel %vm2227, 0.0, %v983
    %v2302 = vsel %vm2227, 0.0, %v988
    %v2303 = vsel %vm2227, 0.0, %v991
    %v2304 = vsel %vm2227, 0.0, %v996
    %v2305 = vsel %vm2227, 0.0, %v999
    %v2306 = vsel %vm2227, 0.0, %v1004
    %v2307 = vsel %vm2227, 0.0, %v1007
    %v2308 = vsel %vm2227, 0.0, %v1012
    %v2309 = vsel %vm2227, 0.0, %v1015
    %v2310 = vsel %vm2227, 0.0, %v1020
    %v2311 = vsel %vm2227, 0.0, %v1023
    %v2312 = vsel %vm2227, 0.0, %v1028
    %v2313 = vsel %vm2227, 0.0, %v1031
    %v2314 = vsel %vm2227, 0.0, %v1036
    %v2315 = vsel %vm2227, 0.0, %v1039
    %v2316 = vsel %vm2227, 0.0, %v1044
    %v2317 = vsel %vm2227, 0.0, %v1047
    %v2318 = vsel %vm2227, 0.0, %v1052
    %v2319 = vsel %vm2227, 0.0, %v1055
    %v2320 = vsel %vm2227, 0.0, %v1060
    %v2321 = vsel %vm2227, 0.0, %v1063
    %v2322 = vsel %vm2227, 0.0, %v1068
    %v2323 = vsel %vm2227, 0.0, %v1071
    %v2324 = vsel %vm2227, 0.0, %v1076
    %v2325 = vsel %vm2227, 0.0, %v1079
    %v2326 = vsel %vm2227, 0.0, %v1084
    %v2327 = vsel %vm2227, 0.0, %v1087
    %v2328 = vsel %vm2227, 0.0, %v1092
    %v2329 = vsel %vm2227, 0.0, %v1095
    %v2330 = vsel %vm2227, 0.0, %v1100
    %v2331 = vsel %vm2227, 0.0, %v1103
    %v2332 = vsel %vm2227, 0.0, %v1108
    %v2333 = vsel %vm2227, 0.0, %v1111
    %v2334 = vsel %vm2227, 0.0, %v1116
    %v2335 = vsel %vm2227, 0.0, %v1119
    %v2336 = vsel %vm2227, 0.0, %v1124
    %v2337 = vsel %vm2227, 0.0, %v1127
    %v2338 = vsel %vm2227, 0.0, %v1132
    %v2339 = vsel %vm2227, 0.0, %v1135
    %v2340 = vsel %vm2227, 0.0, %v1140
    %v2341 = vsel %vm2227, 0.0, %v1143
    %v2342 = vsel %vm2227, 0.0, %v1148
    %v2343 = vsel %vm2227, 0.0, %v1151
    %v2344 = vsel %vm2227, 0.0, %v1156
    %v2345 = vsel %vm2227, 0.0, %v1159
    %v2346 = vsel %vm2227, 0.0, %v1164
    %v2347 = vsel %vm2227, 0.0, %v1167
    %v2348 = vsel %vm2227, 0.0, %v1172
    %v2349 = vsel %vm2227, 0.0, %v1175
    %v2350 = vsel %vm2227, 0.0, %v1180
    %v2351 = vsel %vm2227, 0.0, %v1183
    %v2352 = vsel %vm2227, 0.0, %v1188
    %v2353 = vsel %vm2227, 0.0, %v1191
    %v2354 = vsel %vm2227, 0.0, %v1196
    %v2355 = vsel %vm2227, 0.0, %v1199
    %v2356 = vmul.f32 %v2228, %v2228
    %v2357 = vmul.f32 %v2229, %v2229
    %v2358 = vmul.f32 %v2230, %v2230
    %v2359 = vmul.f32 %v2231, %v2231
    %v2360 = vmul.f32 %v2232, %v2232
    %v2361 = vmul.f32 %v2233, %v2233
    %v2362 = vmul.f32 %v2234, %v2234
    %v2363 = vmul.f32 %v2235, %v2235
    %v2364 = vmul.f32 %v2236, %v2236
    %v2365 = vmul.f32 %v2237, %v2237
    %v2366 = vmul.f32 %v2238, %v2238
    %v2367 = vmul.f32 %v2239, %v2239
    %v2368 = vmul.f32 %v2240, %v2240
    %v2369 = vmul.f32 %v2241, %v2241
    %v2370 = vmul.f32 %v2242, %v2242
    %v2371 = vmul.f32 %v2243, %v2243
    %v2372 = vmul.f32 %v2244, %v2244
    %v2373 = vmul.f32 %v2245, %v2245
    %v2374 = vmul.f32 %v2246, %v2246
    %v2375 = vmul.f32 %v2247, %v2247
    %v2376 = vmul.f32 %v2248, %v2248
    %v2377 = vmul.f32 %v2249, %v2249
    %v2378 = vmul.f32 %v2250, %v2250
    %v2379 = vmul.f32 %v2251, %v2251
    %v2380 = vmul.f32 %v2252, %v2252
    %v2381 = vmul.f32 %v2253, %v2253
    %v2382 = vmul.f32 %v2254, %v2254
    %v2383 = vmul.f32 %v2255, %v2255
    %v2384 = vmul.f32 %v2256, %v2256
    %v2385 = vmul.f32 %v2257, %v2257
    %v2386 = vmul.f32 %v2258, %v2258
    %v2387 = vmul.f32 %v2259, %v2259
    %v2388 = vmul.f32 %v2260, %v2260
    %v2389 = vmul.f32 %v2261, %v2261
    %v2390 = vmul.f32 %v2262, %v2262
    %v2391 = vmul.f32 %v2263, %v2263
    %v2392 = vmul.f32 %v2264, %v2264
    %v2393 = vmul.f32 %v2265, %v2265
    %v2394 = vmul.f32 %v2266, %v2266
    %v2395 = vmul.f32 %v2267, %v2267
    %v2396 = vmul.f32 %v2268, %v2268
    %v2397 = vmul.f32 %v2269, %v2269
    %v2398 = vmul.f32 %v2270, %v2270
    %v2399 = vmul.f32 %v2271, %v2271
    %v2400 = vmul.f32 %v2272, %v2272
    %v2401 = vmul.f32 %v2273, %v2273
    %v2402 = vmul.f32 %v2274, %v2274
    %v2403 = vmul.f32 %v2275, %v2275
    %v2404 = vmul.f32 %v2276, %v2276
    %v2405 = vmul.f32 %v2277, %v2277
    %v2406 = vmul.f32 %v2278, %v2278
    %v2407 = vmul.f32 %v2279, %v2279
    %v2408 = vmul.f32 %v2280, %v2280
    %v2409 = vmul.f32 %v2281, %v2281
    %v2410 = vmul.f32 %v2282, %v2282
    %v2411 = vmul.f32 %v2283, %v2283
    %v2412 = vmul.f32 %v2284, %v2284
    %v2413 = vmul.f32 %v2285, %v2285
    %v2414 = vmul.f32 %v2286, %v2286
    %v2415 = vmul.f32 %v2287, %v2287
    %v2416 = vmul.f32 %v2288, %v2288
    %v2417 = vmul.f32 %v2289, %v2289
    %v2418 = vmul.f32 %v2290, %v2290
    %v2419 = vmul.f32 %v2291, %v2291
    %v2420 = vmul.f32 %v2292, %v2292
    %v2421 = vmul.f32 %v2293, %v2293
    %v2422 = vmul.f32 %v2294, %v2294
    %v2423 = vmul.f32 %v2295, %v2295
    %v2424 = vmul.f32 %v2296, %v2296
    %v2425 = vmul.f32 %v2297, %v2297
    %v2426 = vmul.f32 %v2298, %v2298
    %v2427 = vmul.f32 %v2299, %v2299
    %v2428 = vmul.f32 %v2300, %v2300
    %v2429 = vmul.f32 %v2301, %v2301
    %v2430 = vmul.f32 %v2302, %v2302
    %v2431 = vmul.f32 %v2303, %v2303
    %v2432 = vmul.f32 %v2304, %v2304
    %v2433 = vmul.f32 %v2305, %v2305
    %v2434 = vmul.f32 %v2306, %v2306
    %v2435 = vmul.f32 %v2307, %v2307
    %v2436 = vmul.f32 %v2308, %v2308
    %v2437 = vmul.f32 %v2309, %v2309
    %v2438 = vmul.f32 %v2310, %v2310
    %v2439 = vmul.f32 %v2311, %v2311
    %v2440 = vmul.f32 %v2312, %v2312
    %v2441 = vmul.f32 %v2313, %v2313
    %v2442 = vmul.f32 %v2314, %v2314
    %v2443 = vmul.f32 %v2315, %v2315
    %v2444 = vmul.f32 %v2316, %v2316
    %v2445 = vmul.f32 %v2317, %v2317
    %v2446 = vmul.f32 %v2318, %v2318
    %v2447 = vmul.f32 %v2319, %v2319
    %v2448 = vmul.f32 %v2320, %v2320
    %v2449 = vmul.f32 %v2321, %v2321
    %v2450 = vmul.f32 %v2322, %v2322
    %v2451 = vmul.f32 %v2323, %v2323
    %v2452 = vmul.f32 %v2324, %v2324
    %v2453 = vmul.f32 %v2325, %v2325
    %v2454 = vmul.f32 %v2326, %v2326
    %v2455 = vmul.f32 %v2327, %v2327
    %v2456 = vmul.f32 %v2328, %v2328
    %v2457 = vmul.f32 %v2329, %v2329
    %v2458 = vmul.f32 %v2330, %v2330
    %v2459 = vmul.f32 %v2331, %v2331
    %v2460 = vmul.f32 %v2332, %v2332
    %v2461 = vmul.f32 %v2333, %v2333
    %v2462 = vmul.f32 %v2334, %v2334
    %v2463 = vmul.f32 %v2335, %v2335
    %v2464 = vmul.f32 %v2336, %v2336
    %v2465 = vmul.f32 %v2337, %v2337
    %v2466 = vmul.f32 %v2338, %v2338
    %v2467 = vmul.f32 %v2339, %v2339
    %v2468 = vmul.f32 %v2340, %v2340
    %v2469 = vmul.f32 %v2341, %v2341
    %v2470 = vmul.f32 %v2342, %v2342
    %v2471 = vmul.f32 %v2343, %v2343
    %v2472 = vmul.f32 %v2344, %v2344
    %v2473 = vmul.f32 %v2345, %v2345
    %v2474 = vmul.f32 %v2346, %v2346
    %v2475 = vmul.f32 %v2347, %v2347
    %v2476 = vmul.f32 %v2348, %v2348
    %v2477 = vmul.f32 %v2349, %v2349
    %v2478 = vmul.f32 %v2350, %v2350
    %v2479 = vmul.f32 %v2351, %v2351
    %v2480 = vmul.f32 %v2352, %v2352
    %v2481 = vmul.f32 %v2353, %v2353
    %v2482 = vmul.f32 %v2354, %v2354
    %v2483 = vmul.f32 %v2355, %v2355
    %2484 = vadd.xlane.f32.xlu0 %v2356
    %v2485 = vpop.xlane.xlu0 %2484
    %2486 = vadd.xlane.f32.xlu0 %v2357
    %v2487 = vpop.xlane.xlu0 %2486
    %2488 = vadd.xlane.f32.xlu0 %v2358
    %v2489 = vpop.xlane.xlu0 %2488
    %2490 = vadd.xlane.f32.xlu0 %v2359
    %v2491 = vpop.xlane.xlu0 %2490
    %2492 = vadd.xlane.f32.xlu0 %v2360
    %v2493 = vpop.xlane.xlu0 %2492
    %2494 = vadd.xlane.f32.xlu0 %v2361
    %v2495 = vpop.xlane.xlu0 %2494
    %2496 = vadd.xlane.f32.xlu0 %v2362
    %v2497 = vpop.xlane.xlu0 %2496
    %2498 = vadd.xlane.f32.xlu0 %v2363
    %v2499 = vpop.xlane.xlu0 %2498
    %2500 = vadd.xlane.f32.xlu0 %v2364
    %v2501 = vpop.xlane.xlu0 %2500
    %2502 = vadd.xlane.f32.xlu0 %v2365
    %v2503 = vpop.xlane.xlu0 %2502
    %2504 = vadd.xlane.f32.xlu0 %v2366
    %v2505 = vpop.xlane.xlu0 %2504
    %2506 = vadd.xlane.f32.xlu0 %v2367
    %v2507 = vpop.xlane.xlu0 %2506
    %2508 = vadd.xlane.f32.xlu0 %v2368
    %v2509 = vpop.xlane.xlu0 %2508
    %2510 = vadd.xlane.f32.xlu0 %v2369
    %v2511 = vpop.xlane.xlu0 %2510
    %2512 = vadd.xlane.f32.xlu0 %v2370
    %v2513 = vpop.xlane.xlu0 %2512
    %2514 = vadd.xlane.f32.xlu0 %v2371
    %v2515 = vpop.xlane.xlu0 %2514
    %2516 = vadd.xlane.f32.xlu0 %v2372
    %v2517 = vpop.xlane.xlu0 %2516
    %2518 = vadd.xlane.f32.xlu0 %v2373
    %v2519 = vpop.xlane.xlu0 %2518
    %2520 = vadd.xlane.f32.xlu0 %v2374
    %v2521 = vpop.xlane.xlu0 %2520
    %2522 = vadd.xlane.f32.xlu0 %v2375
    %v2523 = vpop.xlane.xlu0 %2522
    %2524 = vadd.xlane.f32.xlu0 %v2376
    %v2525 = vpop.xlane.xlu0 %2524
    %2526 = vadd.xlane.f32.xlu0 %v2377
    %v2527 = vpop.xlane.xlu0 %2526
    %2528 = vadd.xlane.f32.xlu0 %v2378
    %v2529 = vpop.xlane.xlu0 %2528
    %2530 = vadd.xlane.f32.xlu0 %v2379
    %v2531 = vpop.xlane.xlu0 %2530
    %2532 = vadd.xlane.f32.xlu0 %v2380
    %v2533 = vpop.xlane.xlu0 %2532
    %2534 = vadd.xlane.f32.xlu0 %v2381
    %v2535 = vpop.xlane.xlu0 %2534
    %2536 = vadd.xlane.f32.xlu0 %v2382
    %v2537 = vpop.xlane.xlu0 %2536
    %2538 = vadd.xlane.f32.xlu0 %v2383
    %v2539 = vpop.xlane.xlu0 %2538
    %2540 = vadd.xlane.f32.xlu0 %v2384
    %v2541 = vpop.xlane.xlu0 %2540
    %2542 = vadd.xlane.f32.xlu0 %v2385
    %v2543 = vpop.xlane.xlu0 %2542
    %2544 = vadd.xlane.f32.xlu0 %v2386
    %v2545 = vpop.xlane.xlu0 %2544
    %2546 = vadd.xlane.f32.xlu0 %v2387
    %v2547 = vpop.xlane.xlu0 %2546
    %2548 = vadd.xlane.f32.xlu0 %v2388
    %v2549 = vpop.xlane.xlu0 %2548
    %2550 = vadd.xlane.f32.xlu0 %v2389
    %v2551 = vpop.xlane.xlu0 %2550
    %2552 = vadd.xlane.f32.xlu0 %v2390
    %v2553 = vpop.xlane.xlu0 %2552
    %2554 = vadd.xlane.f32.xlu0 %v2391
    %v2555 = vpop.xlane.xlu0 %2554
    %2556 = vadd.xlane.f32.xlu0 %v2392
    %v2557 = vpop.xlane.xlu0 %2556
    %2558 = vadd.xlane.f32.xlu0 %v2393
    %v2559 = vpop.xlane.xlu0 %2558
    %2560 = vadd.xlane.f32.xlu0 %v2394
    %v2561 = vpop.xlane.xlu0 %2560
    %2562 = vadd.xlane.f32.xlu0 %v2395
    %v2563 = vpop.xlane.xlu0 %2562
    %2564 = vadd.xlane.f32.xlu0 %v2396
    %v2565 = vpop.xlane.xlu0 %2564
    %2566 = vadd.xlane.f32.xlu0 %v2397
    %v2567 = vpop.xlane.xlu0 %2566
    %2568 = vadd.xlane.f32.xlu0 %v2398
    %v2569 = vpop.xlane.xlu0 %2568
    %2570 = vadd.xlane.f32.xlu0 %v2399
    %v2571 = vpop.xlane.xlu0 %2570
    %2572 = vadd.xlane.f32.xlu0 %v2400
    %v2573 = vpop.xlane.xlu0 %2572
    %2574 = vadd.xlane.f32.xlu0 %v2401
    %v2575 = vpop.xlane.xlu0 %2574
    %2576 = vadd.xlane.f32.xlu0 %v2402
    %v2577 = vpop.xlane.xlu0 %2576
    %2578 = vadd.xlane.f32.xlu0 %v2403
    %v2579 = vpop.xlane.xlu0 %2578
    %2580 = vadd.xlane.f32.xlu0 %v2404
    %v2581 = vpop.xlane.xlu0 %2580
    %2582 = vadd.xlane.f32.xlu0 %v2405
    %v2583 = vpop.xlane.xlu0 %2582
    %2584 = vadd.xlane.f32.xlu0 %v2406
    %v2585 = vpop.xlane.xlu0 %2584
    %2586 = vadd.xlane.f32.xlu0 %v2407
    %v2587 = vpop.xlane.xlu0 %2586
    %2588 = vadd.xlane.f32.xlu0 %v2408
    %v2589 = vpop.xlane.xlu0 %2588
    %2590 = vadd.xlane.f32.xlu0 %v2409
    %v2591 = vpop.xlane.xlu0 %2590
    %2592 = vadd.xlane.f32.xlu0 %v2410
    %v2593 = vpop.xlane.xlu0 %2592
    %2594 = vadd.xlane.f32.xlu0 %v2411
    %v2595 = vpop.xlane.xlu0 %2594
    %2596 = vadd.xlane.f32.xlu0 %v2412
    %v2597 = vpop.xlane.xlu0 %2596
    %2598 = vadd.xlane.f32.xlu0 %v2413
    %v2599 = vpop.xlane.xlu0 %2598
    %2600 = vadd.xlane.f32.xlu0 %v2414
    %v2601 = vpop.xlane.xlu0 %2600
    %2602 = vadd.xlane.f32.xlu0 %v2415
    %v2603 = vpop.xlane.xlu0 %2602
    %2604 = vadd.xlane.f32.xlu0 %v2416
    %v2605 = vpop.xlane.xlu0 %2604
    %2606 = vadd.xlane.f32.xlu0 %v2417
    %v2607 = vpop.xlane.xlu0 %2606
    %2608 = vadd.xlane.f32.xlu0 %v2418
    %v2609 = vpop.xlane.xlu0 %2608
    %2610 = vadd.xlane.f32.xlu0 %v2419
    %v2611 = vpop.xlane.xlu0 %2610
    %2612 = vadd.xlane.f32.xlu0 %v2420
    %v2613 = vpop.xlane.xlu0 %2612
    %2614 = vadd.xlane.f32.xlu0 %v2421
    %v2615 = vpop.xlane.xlu0 %2614
    %2616 = vadd.xlane.f32.xlu0 %v2422
    %v2617 = vpop.xlane.xlu0 %2616
    %2618 = vadd.xlane.f32.xlu0 %v2423
    %v2619 = vpop.xlane.xlu0 %2618
    %2620 = vadd.xlane.f32.xlu0 %v2424
    %v2621 = vpop.xlane.xlu0 %2620
    %2622 = vadd.xlane.f32.xlu0 %v2425
    %v2623 = vpop.xlane.xlu0 %2622
    %2624 = vadd.xlane.f32.xlu0 %v2426
    %v2625 = vpop.xlane.xlu0 %2624
    %2626 = vadd.xlane.f32.xlu0 %v2427
    %v2627 = vpop.xlane.xlu0 %2626
    %2628 = vadd.xlane.f32.xlu0 %v2428
    %v2629 = vpop.xlane.xlu0 %2628
    %2630 = vadd.xlane.f32.xlu0 %v2429
    %v2631 = vpop.xlane.xlu0 %2630
    %2632 = vadd.xlane.f32.xlu0 %v2430
    %v2633 = vpop.xlane.xlu0 %2632
    %2634 = vadd.xlane.f32.xlu0 %v2431
    %v2635 = vpop.xlane.xlu0 %2634
    %2636 = vadd.xlane.f32.xlu0 %v2432
    %v2637 = vpop.xlane.xlu0 %2636
    %2638 = vadd.xlane.f32.xlu0 %v2433
    %v2639 = vpop.xlane.xlu0 %2638
    %2640 = vadd.xlane.f32.xlu0 %v2434
    %v2641 = vpop.xlane.xlu0 %2640
    %2642 = vadd.xlane.f32.xlu0 %v2435
    %v2643 = vpop.xlane.xlu0 %2642
    %2644 = vadd.xlane.f32.xlu0 %v2436
    %v2645 = vpop.xlane.xlu0 %2644
    %2646 = vadd.xlane.f32.xlu0 %v2437
    %v2647 = vpop.xlane.xlu0 %2646
    %2648 = vadd.xlane.f32.xlu0 %v2438
    %v2649 = vpop.xlane.xlu0 %2648
    %2650 = vadd.xlane.f32.xlu0 %v2439
    %v2651 = vpop.xlane.xlu0 %2650
    %2652 = vadd.xlane.f32.xlu0 %v2440
    %v2653 = vpop.xlane.xlu0 %2652
    %2654 = vadd.xlane.f32.xlu0 %v2441
    %v2655 = vpop.xlane.xlu0 %2654
    %2656 = vadd.xlane.f32.xlu0 %v2442
    %v2657 = vpop.xlane.xlu0 %2656
    %2658 = vadd.xlane.f32.xlu0 %v2443
    %v2659 = vpop.xlane.xlu0 %2658
    %2660 = vadd.xlane.f32.xlu0 %v2444
    %v2661 = vpop.xlane.xlu0 %2660
    %2662 = vadd.xlane.f32.xlu0 %v2445
    %v2663 = vpop.xlane.xlu0 %2662
    %2664 = vadd.xlane.f32.xlu0 %v2446
    %v2665 = vpop.xlane.xlu0 %2664
    %2666 = vadd.xlane.f32.xlu0 %v2447
    %v2667 = vpop.xlane.xlu0 %2666
    %2668 = vadd.xlane.f32.xlu0 %v2448
    %v2669 = vpop.xlane.xlu0 %2668
    %2670 = vadd.xlane.f32.xlu0 %v2449
    %v2671 = vpop.xlane.xlu0 %2670
    %2672 = vadd.xlane.f32.xlu0 %v2450
    %v2673 = vpop.xlane.xlu0 %2672
    %2674 = vadd.xlane.f32.xlu0 %v2451
    %v2675 = vpop.xlane.xlu0 %2674
    %2676 = vadd.xlane.f32.xlu0 %v2452
    %v2677 = vpop.xlane.xlu0 %2676
    %2678 = vadd.xlane.f32.xlu0 %v2453
    %v2679 = vpop.xlane.xlu0 %2678
    %2680 = vadd.xlane.f32.xlu0 %v2454
    %v2681 = vpop.xlane.xlu0 %2680
    %2682 = vadd.xlane.f32.xlu0 %v2455
    %v2683 = vpop.xlane.xlu0 %2682
    %2684 = vadd.xlane.f32.xlu0 %v2456
    %v2685 = vpop.xlane.xlu0 %2684
    %2686 = vadd.xlane.f32.xlu0 %v2457
    %v2687 = vpop.xlane.xlu0 %2686
    %2688 = vadd.xlane.f32.xlu0 %v2458
    %v2689 = vpop.xlane.xlu0 %2688
    %2690 = vadd.xlane.f32.xlu0 %v2459
    %v2691 = vpop.xlane.xlu0 %2690
    %2692 = vadd.xlane.f32.xlu0 %v2460
    %v2693 = vpop.xlane.xlu0 %2692
    %2694 = vadd.xlane.f32.xlu0 %v2461
    %v2695 = vpop.xlane.xlu0 %2694
    %2696 = vadd.xlane.f32.xlu0 %v2462
    %v2697 = vpop.xlane.xlu0 %2696
    %2698 = vadd.xlane.f32.xlu0 %v2463
    %v2699 = vpop.xlane.xlu0 %2698
    %2700 = vadd.xlane.f32.xlu0 %v2464
    %v2701 = vpop.xlane.xlu0 %2700
    %2702 = vadd.xlane.f32.xlu0 %v2465
    %v2703 = vpop.xlane.xlu0 %2702
    %2704 = vadd.xlane.f32.xlu0 %v2466
    %v2705 = vpop.xlane.xlu0 %2704
    %2706 = vadd.xlane.f32.xlu0 %v2467
    %v2707 = vpop.xlane.xlu0 %2706
    %2708 = vadd.xlane.f32.xlu0 %v2468
    %v2709 = vpop.xlane.xlu0 %2708
    %2710 = vadd.xlane.f32.xlu0 %v2469
    %v2711 = vpop.xlane.xlu0 %2710
    %2712 = vadd.xlane.f32.xlu0 %v2470
    %v2713 = vpop.xlane.xlu0 %2712
    %2714 = vadd.xlane.f32.xlu0 %v2471
    %v2715 = vpop.xlane.xlu0 %2714
    %2716 = vadd.xlane.f32.xlu0 %v2472
    %v2717 = vpop.xlane.xlu0 %2716
    %2718 = vadd.xlane.f32.xlu0 %v2473
    %v2719 = vpop.xlane.xlu0 %2718
    %2720 = vadd.xlane.f32.xlu0 %v2474
    %v2721 = vpop.xlane.xlu0 %2720
    %2722 = vadd.xlane.f32.xlu0 %v2475
    %v2723 = vpop.xlane.xlu0 %2722
    %2724 = vadd.xlane.f32.xlu0 %v2476
    %v2725 = vpop.xlane.xlu0 %2724
    %2726 = vadd.xlane.f32.xlu0 %v2477
    %v2727 = vpop.xlane.xlu0 %2726
    %2728 = vadd.xlane.f32.xlu0 %v2478
    %v2729 = vpop.xlane.xlu0 %2728
    %2730 = vadd.xlane.f32.xlu0 %v2479
    %v2731 = vpop.xlane.xlu0 %2730
    %2732 = vadd.xlane.f32.xlu0 %v2480
    %v2733 = vpop.xlane.xlu0 %2732
    %2734 = vadd.xlane.f32.xlu0 %v2481
    %v2735 = vpop.xlane.xlu0 %2734
    %2736 = vadd.xlane.f32.xlu0 %v2482
    %v2737 = vpop.xlane.xlu0 %2736
    %2738 = vadd.xlane.f32.xlu0 %v2483
    %v2739 = vpop.xlane.xlu0 %2738
    %v2740 = vmax.f32 %v2485, 1e-08
    %v2741 = vmax.f32 %v2487, 1e-08
    %v2742 = vmax.f32 %v2489, 1e-08
    %v2743 = vmax.f32 %v2491, 1e-08
    %v2744 = vmax.f32 %v2493, 1e-08
    %v2745 = vmax.f32 %v2495, 1e-08
    %v2746 = vmax.f32 %v2497, 1e-08
    %v2747 = vmax.f32 %v2499, 1e-08
    %v2748 = vmax.f32 %v2501, 1e-08
    %v2749 = vmax.f32 %v2503, 1e-08
    %v2750 = vmax.f32 %v2505, 1e-08
    %v2751 = vmax.f32 %v2507, 1e-08
    %v2752 = vmax.f32 %v2509, 1e-08
    %v2753 = vmax.f32 %v2511, 1e-08
    %v2754 = vmax.f32 %v2513, 1e-08
    %v2755 = vmax.f32 %v2515, 1e-08
    %v2756 = vmax.f32 %v2517, 1e-08
    %v2757 = vmax.f32 %v2519, 1e-08
    %v2758 = vmax.f32 %v2521, 1e-08
    %v2759 = vmax.f32 %v2523, 1e-08
    %v2760 = vmax.f32 %v2525, 1e-08
    %v2761 = vmax.f32 %v2527, 1e-08
    %v2762 = vmax.f32 %v2529, 1e-08
    %v2763 = vmax.f32 %v2531, 1e-08
    %v2764 = vmax.f32 %v2533, 1e-08
    %v2765 = vmax.f32 %v2535, 1e-08
    %v2766 = vmax.f32 %v2537, 1e-08
    %v2767 = vmax.f32 %v2539, 1e-08
    %v2768 = vmax.f32 %v2541, 1e-08
    %v2769 = vmax.f32 %v2543, 1e-08
    %v2770 = vmax.f32 %v2545, 1e-08
    %v2771 = vmax.f32 %v2547, 1e-08
    %v2772 = vmax.f32 %v2549, 1e-08
    %v2773 = vmax.f32 %v2551, 1e-08
    %v2774 = vmax.f32 %v2553, 1e-08
    %v2775 = vmax.f32 %v2555, 1e-08
    %v2776 = vmax.f32 %v2557, 1e-08
    %v2777 = vmax.f32 %v2559, 1e-08
    %v2778 = vmax.f32 %v2561, 1e-08
    %v2779 = vmax.f32 %v2563, 1e-08
    %v2780 = vmax.f32 %v2565, 1e-08
    %v2781 = vmax.f32 %v2567, 1e-08
    %v2782 = vmax.f32 %v2569, 1e-08
    %v2783 = vmax.f32 %v2571, 1e-08
    %v2784 = vmax.f32 %v2573, 1e-08
    %v2785 = vmax.f32 %v2575, 1e-08
    %v2786 = vmax.f32 %v2577, 1e-08
    %v2787 = vmax.f32 %v2579, 1e-08
    %v2788 = vmax.f32 %v2581, 1e-08
    %v2789 = vmax.f32 %v2583, 1e-08
    %v2790 = vmax.f32 %v2585, 1e-08
    %v2791 = vmax.f32 %v2587, 1e-08
    %v2792 = vmax.f32 %v2589, 1e-08
    %v2793 = vmax.f32 %v2591, 1e-08
    %v2794 = vmax.f32 %v2593, 1e-08
    %v2795 = vmax.f32 %v2595, 1e-08
    %v2796 = vmax.f32 %v2597, 1e-08
    %v2797 = vmax.f32 %v2599, 1e-08
    %v2798 = vmax.f32 %v2601, 1e-08
    %v2799 = vmax.f32 %v2603, 1e-08
    %v2800 = vmax.f32 %v2605, 1e-08
    %v2801 = vmax.f32 %v2607, 1e-08
    %v2802 = vmax.f32 %v2609, 1e-08
    %v2803 = vmax.f32 %v2611, 1e-08
    %v2804 = vmax.f32 %v2613, 1e-08
    %v2805 = vmax.f32 %v2615, 1e-08
    %v2806 = vmax.f32 %v2617, 1e-08
    %v2807 = vmax.f32 %v2619, 1e-08
    %v2808 = vmax.f32 %v2621, 1e-08
    %v2809 = vmax.f32 %v2623, 1e-08
    %v2810 = vmax.f32 %v2625, 1e-08
    %v2811 = vmax.f32 %v2627, 1e-08
    %v2812 = vmax.f32 %v2629, 1e-08
    %v2813 = vmax.f32 %v2631, 1e-08
    %v2814 = vmax.f32 %v2633, 1e-08
    %v2815 = vmax.f32 %v2635, 1e-08
    %v2816 = vmax.f32 %v2637, 1e-08
    %v2817 = vmax.f32 %v2639, 1e-08
    %v2818 = vmax.f32 %v2641, 1e-08
    %v2819 = vmax.f32 %v2643, 1e-08
    %v2820 = vmax.f32 %v2645, 1e-08
    %v2821 = vmax.f32 %v2647, 1e-08
    %v2822 = vmax.f32 %v2649, 1e-08
    %v2823 = vmax.f32 %v2651, 1e-08
    %v2824 = vmax.f32 %v2653, 1e-08
    %v2825 = vmax.f32 %v2655, 1e-08
    %v2826 = vmax.f32 %v2657, 1e-08
    %v2827 = vmax.f32 %v2659, 1e-08
    %v2828 = vmax.f32 %v2661, 1e-08
    %v2829 = vmax.f32 %v2663, 1e-08
    %v2830 = vmax.f32 %v2665, 1e-08
    %v2831 = vmax.f32 %v2667, 1e-08
    %v2832 = vmax.f32 %v2669, 1e-08
    %v2833 = vmax.f32 %v2671, 1e-08
    %v2834 = vmax.f32 %v2673, 1e-08
    %v2835 = vmax.f32 %v2675, 1e-08
    %v2836 = vmax.f32 %v2677, 1e-08
    %v2837 = vmax.f32 %v2679, 1e-08
    %v2838 = vmax.f32 %v2681, 1e-08
    %v2839 = vmax.f32 %v2683, 1e-08
    %v2840 = vmax.f32 %v2685, 1e-08
    %v2841 = vmax.f32 %v2687, 1e-08
    %v2842 = vmax.f32 %v2689, 1e-08
    %v2843 = vmax.f32 %v2691, 1e-08
    %v2844 = vmax.f32 %v2693, 1e-08
    %v2845 = vmax.f32 %v2695, 1e-08
    %v2846 = vmax.f32 %v2697, 1e-08
    %v2847 = vmax.f32 %v2699, 1e-08
    %v2848 = vmax.f32 %v2701, 1e-08
    %v2849 = vmax.f32 %v2703, 1e-08
    %v2850 = vmax.f32 %v2705, 1e-08
    %v2851 = vmax.f32 %v2707, 1e-08
    %v2852 = vmax.f32 %v2709, 1e-08
    %v2853 = vmax.f32 %v2711, 1e-08
    %v2854 = vmax.f32 %v2713, 1e-08
    %v2855 = vmax.f32 %v2715, 1e-08
    %v2856 = vmax.f32 %v2717, 1e-08
    %v2857 = vmax.f32 %v2719, 1e-08
    %v2858 = vmax.f32 %v2721, 1e-08
    %v2859 = vmax.f32 %v2723, 1e-08
    %v2860 = vmax.f32 %v2725, 1e-08
    %v2861 = vmax.f32 %v2727, 1e-08
    %v2862 = vmax.f32 %v2729, 1e-08
    %v2863 = vmax.f32 %v2731, 1e-08
    %v2864 = vmax.f32 %v2733, 1e-08
    %v2865 = vmax.f32 %v2735, 1e-08
    %v2866 = vmax.f32 %v2737, 1e-08
    %v2867 = vmax.f32 %v2739, 1e-08
    %v2868 = vmul.f32 %v2099, %v2099
    %v2869 = vmul.f32 %v2100, %v2100
    %v2870 = vmul.f32 %v2101, %v2101
    %v2871 = vmul.f32 %v2102, %v2102
    %v2872 = vmul.f32 %v2103, %v2103
    %v2873 = vmul.f32 %v2104, %v2104
    %v2874 = vmul.f32 %v2105, %v2105
    %v2875 = vmul.f32 %v2106, %v2106
    %v2876 = vmul.f32 %v2107, %v2107
    %v2877 = vmul.f32 %v2108, %v2108
    %v2878 = vmul.f32 %v2109, %v2109
    %v2879 = vmul.f32 %v2110, %v2110
    %v2880 = vmul.f32 %v2111, %v2111
    %v2881 = vmul.f32 %v2112, %v2112
    %v2882 = vmul.f32 %v2113, %v2113
    %v2883 = vmul.f32 %v2114, %v2114
    %v2884 = vmul.f32 %v2115, %v2115
    %v2885 = vmul.f32 %v2116, %v2116
    %v2886 = vmul.f32 %v2117, %v2117
    %v2887 = vmul.f32 %v2118, %v2118
    %v2888 = vmul.f32 %v2119, %v2119
    %v2889 = vmul.f32 %v2120, %v2120
    %v2890 = vmul.f32 %v2121, %v2121
    %v2891 = vmul.f32 %v2122, %v2122
    %v2892 = vmul.f32 %v2123, %v2123
    %v2893 = vmul.f32 %v2124, %v2124
    %v2894 = vmul.f32 %v2125, %v2125
    %v2895 = vmul.f32 %v2126, %v2126
    %v2896 = vmul.f32 %v2127, %v2127
    %v2897 = vmul.f32 %v2128, %v2128
    %v2898 = vmul.f32 %v2129, %v2129
    %v2899 = vmul.f32 %v2130, %v2130
    %v2900 = vmul.f32 %v2131, %v2131
    %v2901 = vmul.f32 %v2132, %v2132
    %v2902 = vmul.f32 %v2133, %v2133
    %v2903 = vmul.f32 %v2134, %v2134
    %v2904 = vmul.f32 %v2135, %v2135
    %v2905 = vmul.f32 %v2136, %v2136
    %v2906 = vmul.f32 %v2137, %v2137
    %v2907 = vmul.f32 %v2138, %v2138
    %v2908 = vmul.f32 %v2139, %v2139
    %v2909 = vmul.f32 %v2140, %v2140
    %v2910 = vmul.f32 %v2141, %v2141
    %v2911 = vmul.f32 %v2142, %v2142
    %v2912 = vmul.f32 %v2143, %v2143
    %v2913 = vmul.f32 %v2144, %v2144
    %v2914 = vmul.f32 %v2145, %v2145
    %v2915 = vmul.f32 %v2146, %v2146
    %v2916 = vmul.f32 %v2147, %v2147
    %v2917 = vmul.f32 %v2148, %v2148
    %v2918 = vmul.f32 %v2149, %v2149
    %v2919 = vmul.f32 %v2150, %v2150
    %v2920 = vmul.f32 %v2151, %v2151
    %v2921 = vmul.f32 %v2152, %v2152
    %v2922 = vmul.f32 %v2153, %v2153
    %v2923 = vmul.f32 %v2154, %v2154
    %v2924 = vmul.f32 %v2155, %v2155
    %v2925 = vmul.f32 %v2156, %v2156
    %v2926 = vmul.f32 %v2157, %v2157
    %v2927 = vmul.f32 %v2158, %v2158
    %v2928 = vmul.f32 %v2159, %v2159
    %v2929 = vmul.f32 %v2160, %v2160
    %v2930 = vmul.f32 %v2161, %v2161
    %v2931 = vmul.f32 %v2162, %v2162
    %v2932 = vmul.f32 %v2163, %v2163
    %v2933 = vmul.f32 %v2164, %v2164
    %v2934 = vmul.f32 %v2165, %v2165
    %v2935 = vmul.f32 %v2166, %v2166
    %v2936 = vmul.f32 %v2167, %v2167
    %v2937 = vmul.f32 %v2168, %v2168
    %v2938 = vmul.f32 %v2169, %v2169
    %v2939 = vmul.f32 %v2170, %v2170
    %v2940 = vmul.f32 %v2171, %v2171
    %v2941 = vmul.f32 %v2172, %v2172
    %v2942 = vmul.f32 %v2173, %v2173
    %v2943 = vmul.f32 %v2174, %v2174
    %v2944 = vmul.f32 %v2175, %v2175
    %v2945 = vmul.f32 %v2176, %v2176
    %v2946 = vmul.f32 %v2177, %v2177
    %v2947 = vmul.f32 %v2178, %v2178
    %v2948 = vmul.f32 %v2179, %v2179
    %v2949 = vmul.f32 %v2180, %v2180
    %v2950 = vmul.f32 %v2181, %v2181
    %v2951 = vmul.f32 %v2182, %v2182
    %v2952 = vmul.f32 %v2183, %v2183
    %v2953 = vmul.f32 %v2184, %v2184
    %v2954 = vmul.f32 %v2185, %v2185
    %v2955 = vmul.f32 %v2186, %v2186
    %v2956 = vmul.f32 %v2187, %v2187
    %v2957 = vmul.f32 %v2188, %v2188
    %v2958 = vmul.f32 %v2189, %v2189
    %v2959 = vmul.f32 %v2190, %v2190
    %v2960 = vmul.f32 %v2191, %v2191
    %v2961 = vmul.f32 %v2192, %v2192
    %v2962 = vmul.f32 %v2193, %v2193
    %v2963 = vmul.f32 %v2194, %v2194
    %v2964 = vmul.f32 %v2195, %v2195
    %v2965 = vmul.f32 %v2196, %v2196
    %v2966 = vmul.f32 %v2197, %v2197
    %v2967 = vmul.f32 %v2198, %v2198
    %v2968 = vmul.f32 %v2199, %v2199
    %v2969 = vmul.f32 %v2200, %v2200
    %v2970 = vmul.f32 %v2201, %v2201
    %v2971 = vmul.f32 %v2202, %v2202
    %v2972 = vmul.f32 %v2203, %v2203
    %v2973 = vmul.f32 %v2204, %v2204
    %v2974 = vmul.f32 %v2205, %v2205
    %v2975 = vmul.f32 %v2206, %v2206
    %v2976 = vmul.f32 %v2207, %v2207
    %v2977 = vmul.f32 %v2208, %v2208
    %v2978 = vmul.f32 %v2209, %v2209
    %v2979 = vmul.f32 %v2210, %v2210
    %v2980 = vmul.f32 %v2211, %v2211
    %v2981 = vmul.f32 %v2212, %v2212
    %v2982 = vmul.f32 %v2213, %v2213
    %v2983 = vmul.f32 %v2214, %v2214
    %v2984 = vmul.f32 %v2215, %v2215
    %v2985 = vmul.f32 %v2216, %v2216
    %v2986 = vmul.f32 %v2217, %v2217
    %v2987 = vmul.f32 %v2218, %v2218
    %v2988 = vmul.f32 %v2219, %v2219
    %v2989 = vmul.f32 %v2220, %v2220
    %v2990 = vmul.f32 %v2221, %v2221
    %v2991 = vmul.f32 %v2222, %v2222
    %v2992 = vmul.f32 %v2223, %v2223
    %v2993 = vmul.f32 %v2224, %v2224
    %v2994 = vmul.f32 %v2225, %v2225
    %v2995 = vmul.f32 %v2226, %v2226
    %v2996 = vsub.f32 %v2868, 1.0
    %v2997 = vsub.f32 %v2869, 1.0
    %v2998 = vsub.f32 %v2870, 1.0
    %v2999 = vsub.f32 %v2871, 1.0
    %v3000 = vsub.f32 %v2872, 1.0
    %v3001 = vsub.f32 %v2873, 1.0
    %v3002 = vsub.f32 %v2874, 1.0
    %v3003 = vsub.f32 %v2875, 1.0
    %v3004 = vsub.f32 %v2876, 1.0
    %v3005 = vsub.f32 %v2877, 1.0
    %v3006 = vsub.f32 %v2878, 1.0
    %v3007 = vsub.f32 %v2879, 1.0
    %v3008 = vsub.f32 %v2880, 1.0
    %v3009 = vsub.f32 %v2881, 1.0
    %v3010 = vsub.f32 %v2882, 1.0
    %v3011 = vsub.f32 %v2883, 1.0
    %v3012 = vsub.f32 %v2884, 1.0
    %v3013 = vsub.f32 %v2885, 1.0
    %v3014 = vsub.f32 %v2886, 1.0
    %v3015 = vsub.f32 %v2887, 1.0
    %v3016 = vsub.f32 %v2888, 1.0
    %v3017 = vsub.f32 %v2889, 1.0
    %v3018 = vsub.f32 %v2890, 1.0
    %v3019 = vsub.f32 %v2891, 1.0
    %v3020 = vsub.f32 %v2892, 1.0
    %v3021 = vsub.f32 %v2893, 1.0
    %v3022 = vsub.f32 %v2894, 1.0
    %v3023 = vsub.f32 %v2895, 1.0
    %v3024 = vsub.f32 %v2896, 1.0
    %v3025 = vsub.f32 %v2897, 1.0
    %v3026 = vsub.f32 %v2898, 1.0
    %v3027 = vsub.f32 %v2899, 1.0
    %v3028 = vsub.f32 %v2900, 1.0
    %v3029 = vsub.f32 %v2901, 1.0
    %v3030 = vsub.f32 %v2902, 1.0
    %v3031 = vsub.f32 %v2903, 1.0
    %v3032 = vsub.f32 %v2904, 1.0
    %v3033 = vsub.f32 %v2905, 1.0
    %v3034 = vsub.f32 %v2906, 1.0
    %v3035 = vsub.f32 %v2907, 1.0
    %v3036 = vsub.f32 %v2908, 1.0
    %v3037 = vsub.f32 %v2909, 1.0
    %v3038 = vsub.f32 %v2910, 1.0
    %v3039 = vsub.f32 %v2911, 1.0
    %v3040 = vsub.f32 %v2912, 1.0
    %v3041 = vsub.f32 %v2913, 1.0
    %v3042 = vsub.f32 %v2914, 1.0
    %v3043 = vsub.f32 %v2915, 1.0
    %v3044 = vsub.f32 %v2916, 1.0
    %v3045 = vsub.f32 %v2917, 1.0
    %v3046 = vsub.f32 %v2918, 1.0
    %v3047 = vsub.f32 %v2919, 1.0
    %v3048 = vsub.f32 %v2920, 1.0
    %v3049 = vsub.f32 %v2921, 1.0
    %v3050 = vsub.f32 %v2922, 1.0
    %v3051 = vsub.f32 %v2923, 1.0
    %v3052 = vsub.f32 %v2924, 1.0
    %v3053 = vsub.f32 %v2925, 1.0
    %v3054 = vsub.f32 %v2926, 1.0
    %v3055 = vsub.f32 %v2927, 1.0
    %v3056 = vsub.f32 %v2928, 1.0
    %v3057 = vsub.f32 %v2929, 1.0
    %v3058 = vsub.f32 %v2930, 1.0
    %v3059 = vsub.f32 %v2931, 1.0
    %v3060 = vsub.f32 %v2932, 1.0
    %v3061 = vsub.f32 %v2933, 1.0
    %v3062 = vsub.f32 %v2934, 1.0
    %v3063 = vsub.f32 %v2935, 1.0
    %v3064 = vsub.f32 %v2936, 1.0
    %v3065 = vsub.f32 %v2937, 1.0
    %v3066 = vsub.f32 %v2938, 1.0
    %v3067 = vsub.f32 %v2939, 1.0
    %v3068 = vsub.f32 %v2940, 1.0
    %v3069 = vsub.f32 %v2941, 1.0
    %v3070 = vsub.f32 %v2942, 1.0
    %v3071 = vsub.f32 %v2943, 1.0
    %v3072 = vsub.f32 %v2944, 1.0
    %v3073 = vsub.f32 %v2945, 1.0
    %v3074 = vsub.f32 %v2946, 1.0
    %v3075 = vsub.f32 %v2947, 1.0
    %v3076 = vsub.f32 %v2948, 1.0
    %v3077 = vsub.f32 %v2949, 1.0
    %v3078 = vsub.f32 %v2950, 1.0
    %v3079 = vsub.f32 %v2951, 1.0
    %v3080 = vsub.f32 %v2952, 1.0
    %v3081 = vsub.f32 %v2953, 1.0
    %v3082 = vsub.f32 %v2954, 1.0
    %v3083 = vsub.f32 %v2955, 1.0
    %v3084 = vsub.f32 %v2956, 1.0
    %v3085 = vsub.f32 %v2957, 1.0
    %v3086 = vsub.f32 %v2958, 1.0
    %v3087 = vsub.f32 %v2959, 1.0
    %v3088 = vsub.f32 %v2960, 1.0
    %v3089 = vsub.f32 %v2961, 1.0
    %v3090 = vsub.f32 %v2962, 1.0
    %v3091 = vsub.f32 %v2963, 1.0
    %v3092 = vsub.f32 %v2964, 1.0
    %v3093 = vsub.f32 %v2965, 1.0
    %v3094 = vsub.f32 %v2966, 1.0
    %v3095 = vsub.f32 %v2967, 1.0
    %v3096 = vsub.f32 %v2968, 1.0
    %v3097 = vsub.f32 %v2969, 1.0
    %v3098 = vsub.f32 %v2970, 1.0
    %v3099 = vsub.f32 %v2971, 1.0
    %v3100 = vsub.f32 %v2972, 1.0
    %v3101 = vsub.f32 %v2973, 1.0
    %v3102 = vsub.f32 %v2974, 1.0
    %v3103 = vsub.f32 %v2975, 1.0
    %v3104 = vsub.f32 %v2976, 1.0
    %v3105 = vsub.f32 %v2977, 1.0
    %v3106 = vsub.f32 %v2978, 1.0
    %v3107 = vsub.f32 %v2979, 1.0
    %v3108 = vsub.f32 %v2980, 1.0
    %v3109 = vsub.f32 %v2981, 1.0
    %v3110 = vsub.f32 %v2982, 1.0
    %v3111 = vsub.f32 %v2983, 1.0
    %v3112 = vsub.f32 %v2984, 1.0
    %v3113 = vsub.f32 %v2985, 1.0
    %v3114 = vsub.f32 %v2986, 1.0
    %v3115 = vsub.f32 %v2987, 1.0
    %v3116 = vsub.f32 %v2988, 1.0
    %v3117 = vsub.f32 %v2989, 1.0
    %v3118 = vsub.f32 %v2990, 1.0
    %v3119 = vsub.f32 %v2991, 1.0
    %v3120 = vsub.f32 %v2992, 1.0
    %v3121 = vsub.f32 %v2993, 1.0
    %v3122 = vsub.f32 %v2994, 1.0
    %v3123 = vsub.f32 %v2995, 1.0
    %v3124 = vrcp.pop %v2740
    %v3125 = vmul.f32 %v2996, %v3124
    %v3126 = vrcp.pop %v2741
    %v3127 = vmul.f32 %v2997, %v3126
    %v3128 = vrcp.pop %v2742
    %v3129 = vmul.f32 %v2998, %v3128
    %v3130 = vrcp.pop %v2743
    %v3131 = vmul.f32 %v2999, %v3130
    %v3132 = vrcp.pop %v2744
    %v3133 = vmul.f32 %v3000, %v3132
    %v3134 = vrcp.pop %v2745
    %v3135 = vmul.f32 %v3001, %v3134
    %v3136 = vrcp.pop %v2746
    %v3137 = vmul.f32 %v3002, %v3136
    %v3138 = vrcp.pop %v2747
    %v3139 = vmul.f32 %v3003, %v3138
    %v3140 = vrcp.pop %v2748
    %v3141 = vmul.f32 %v3004, %v3140
    %v3142 = vrcp.pop %v2749
    %v3143 = vmul.f32 %v3005, %v3142
    %v3144 = vrcp.pop %v2750
    %v3145 = vmul.f32 %v3006, %v3144
    %v3146 = vrcp.pop %v2751
    %v3147 = vmul.f32 %v3007, %v3146
    %v3148 = vrcp.pop %v2752
    %v3149 = vmul.f32 %v3008, %v3148
    %v3150 = vrcp.pop %v2753
    %v3151 = vmul.f32 %v3009, %v3150
    %v3152 = vrcp.pop %v2754
    %v3153 = vmul.f32 %v3010, %v3152
    %v3154 = vrcp.pop %v2755
    %v3155 = vmul.f32 %v3011, %v3154
    %v3156 = vrcp.pop %v2756
    %v3157 = vmul.f32 %v3012, %v3156
    %v3158 = vrcp.pop %v2757
    %v3159 = vmul.f32 %v3013, %v3158
    %v3160 = vrcp.pop %v2758
    %v3161 = vmul.f32 %v3014, %v3160
    %v3162 = vrcp.pop %v2759
    %v3163 = vmul.f32 %v3015, %v3162
    %v3164 = vrcp.pop %v2760
    %v3165 = vmul.f32 %v3016, %v3164
    %v3166 = vrcp.pop %v2761
    %v3167 = vmul.f32 %v3017, %v3166
    %v3168 = vrcp.pop %v2762
    %v3169 = vmul.f32 %v3018, %v3168
    %v3170 = vrcp.pop %v2763
    %v3171 = vmul.f32 %v3019, %v3170
    %v3172 = vrcp.pop %v2764
    %v3173 = vmul.f32 %v3020, %v3172
    %v3174 = vrcp.pop %v2765
    %v3175 = vmul.f32 %v3021, %v3174
    %v3176 = vrcp.pop %v2766
    %v3177 = vmul.f32 %v3022, %v3176
    %v3178 = vrcp.pop %v2767
    %v3179 = vmul.f32 %v3023, %v3178
    %v3180 = vrcp.pop %v2768
    %v3181 = vmul.f32 %v3024, %v3180
    %v3182 = vrcp.pop %v2769
    %v3183 = vmul.f32 %v3025, %v3182
    %v3184 = vrcp.pop %v2770
    %v3185 = vmul.f32 %v3026, %v3184
    %v3186 = vrcp.pop %v2771
    %v3187 = vmul.f32 %v3027, %v3186
    %v3188 = vrcp.pop %v2772
    %v3189 = vmul.f32 %v3028, %v3188
    %v3190 = vrcp.pop %v2773
    %v3191 = vmul.f32 %v3029, %v3190
    %v3192 = vrcp.pop %v2774
    %v3193 = vmul.f32 %v3030, %v3192
    %v3194 = vrcp.pop %v2775
    %v3195 = vmul.f32 %v3031, %v3194
    %v3196 = vrcp.pop %v2776
    %v3197 = vmul.f32 %v3032, %v3196
    %v3198 = vrcp.pop %v2777
    %v3199 = vmul.f32 %v3033, %v3198
    %v3200 = vrcp.pop %v2778
    %v3201 = vmul.f32 %v3034, %v3200
    %v3202 = vrcp.pop %v2779
    %v3203 = vmul.f32 %v3035, %v3202
    %v3204 = vrcp.pop %v2780
    %v3205 = vmul.f32 %v3036, %v3204
    %v3206 = vrcp.pop %v2781
    %v3207 = vmul.f32 %v3037, %v3206
    %v3208 = vrcp.pop %v2782
    %v3209 = vmul.f32 %v3038, %v3208
    %v3210 = vrcp.pop %v2783
    %v3211 = vmul.f32 %v3039, %v3210
    %v3212 = vrcp.pop %v2784
    %v3213 = vmul.f32 %v3040, %v3212
    %v3214 = vrcp.pop %v2785
    %v3215 = vmul.f32 %v3041, %v3214
    %v3216 = vrcp.pop %v2786
    %v3217 = vmul.f32 %v3042, %v3216
    %v3218 = vrcp.pop %v2787
    %v3219 = vmul.f32 %v3043, %v3218
    %v3220 = vrcp.pop %v2788
    %v3221 = vmul.f32 %v3044, %v3220
    %v3222 = vrcp.pop %v2789
    %v3223 = vmul.f32 %v3045, %v3222
    %v3224 = vrcp.pop %v2790
    %v3225 = vmul.f32 %v3046, %v3224
    %v3226 = vrcp.pop %v2791
    %v3227 = vmul.f32 %v3047, %v3226
    %v3228 = vrcp.pop %v2792
    %v3229 = vmul.f32 %v3048, %v3228
    %v3230 = vrcp.pop %v2793
    %v3231 = vmul.f32 %v3049, %v3230
    %v3232 = vrcp.pop %v2794
    %v3233 = vmul.f32 %v3050, %v3232
    %v3234 = vrcp.pop %v2795
    %v3235 = vmul.f32 %v3051, %v3234
    %v3236 = vrcp.pop %v2796
    %v3237 = vmul.f32 %v3052, %v3236
    %v3238 = vrcp.pop %v2797
    %v3239 = vmul.f32 %v3053, %v3238
    %v3240 = vrcp.pop %v2798
    %v3241 = vmul.f32 %v3054, %v3240
    %v3242 = vrcp.pop %v2799
    %v3243 = vmul.f32 %v3055, %v3242
    %v3244 = vrcp.pop %v2800
    %v3245 = vmul.f32 %v3056, %v3244
    %v3246 = vrcp.pop %v2801
    %v3247 = vmul.f32 %v3057, %v3246
    %v3248 = vrcp.pop %v2802
    %v3249 = vmul.f32 %v3058, %v3248
    %v3250 = vrcp.pop %v2803
    %v3251 = vmul.f32 %v3059, %v3250
    %v3252 = vrcp.pop %v2804
    %v3253 = vmul.f32 %v3060, %v3252
    %v3254 = vrcp.pop %v2805
    %v3255 = vmul.f32 %v3061, %v3254
    %v3256 = vrcp.pop %v2806
    %v3257 = vmul.f32 %v3062, %v3256
    %v3258 = vrcp.pop %v2807
    %v3259 = vmul.f32 %v3063, %v3258
    %v3260 = vrcp.pop %v2808
    %v3261 = vmul.f32 %v3064, %v3260
    %v3262 = vrcp.pop %v2809
    %v3263 = vmul.f32 %v3065, %v3262
    %v3264 = vrcp.pop %v2810
    %v3265 = vmul.f32 %v3066, %v3264
    %v3266 = vrcp.pop %v2811
    %v3267 = vmul.f32 %v3067, %v3266
    %v3268 = vrcp.pop %v2812
    %v3269 = vmul.f32 %v3068, %v3268
    %v3270 = vrcp.pop %v2813
    %v3271 = vmul.f32 %v3069, %v3270
    %v3272 = vrcp.pop %v2814
    %v3273 = vmul.f32 %v3070, %v3272
    %v3274 = vrcp.pop %v2815
    %v3275 = vmul.f32 %v3071, %v3274
    %v3276 = vrcp.pop %v2816
    %v3277 = vmul.f32 %v3072, %v3276
    %v3278 = vrcp.pop %v2817
    %v3279 = vmul.f32 %v3073, %v3278
    %v3280 = vrcp.pop %v2818
    %v3281 = vmul.f32 %v3074, %v3280
    %v3282 = vrcp.pop %v2819
    %v3283 = vmul.f32 %v3075, %v3282
    %v3284 = vrcp.pop %v2820
    %v3285 = vmul.f32 %v3076, %v3284
    %v3286 = vrcp.pop %v2821
    %v3287 = vmul.f32 %v3077, %v3286
    %v3288 = vrcp.pop %v2822
    %v3289 = vmul.f32 %v3078, %v3288
    %v3290 = vrcp.pop %v2823
    %v3291 = vmul.f32 %v3079, %v3290
    %v3292 = vrcp.pop %v2824
    %v3293 = vmul.f32 %v3080, %v3292
    %v3294 = vrcp.pop %v2825
    %v3295 = vmul.f32 %v3081, %v3294
    %v3296 = vrcp.pop %v2826
    %v3297 = vmul.f32 %v3082, %v3296
    %v3298 = vrcp.pop %v2827
    %v3299 = vmul.f32 %v3083, %v3298
    %v3300 = vrcp.pop %v2828
    %v3301 = vmul.f32 %v3084, %v3300
    %v3302 = vrcp.pop %v2829
    %v3303 = vmul.f32 %v3085, %v3302
    %v3304 = vrcp.pop %v2830
    %v3305 = vmul.f32 %v3086, %v3304
    %v3306 = vrcp.pop %v2831
    %v3307 = vmul.f32 %v3087, %v3306
    %v3308 = vrcp.pop %v2832
    %v3309 = vmul.f32 %v3088, %v3308
    %v3310 = vrcp.pop %v2833
    %v3311 = vmul.f32 %v3089, %v3310
    %v3312 = vrcp.pop %v2834
    %v3313 = vmul.f32 %v3090, %v3312
    %v3314 = vrcp.pop %v2835
    %v3315 = vmul.f32 %v3091, %v3314
    %v3316 = vrcp.pop %v2836
    %v3317 = vmul.f32 %v3092, %v3316
    %v3318 = vrcp.pop %v2837
    %v3319 = vmul.f32 %v3093, %v3318
    %v3320 = vrcp.pop %v2838
    %v3321 = vmul.f32 %v3094, %v3320
    %v3322 = vrcp.pop %v2839
    %v3323 = vmul.f32 %v3095, %v3322
    %v3324 = vrcp.pop %v2840
    %v3325 = vmul.f32 %v3096, %v3324
    %v3326 = vrcp.pop %v2841
    %v3327 = vmul.f32 %v3097, %v3326
    %v3328 = vrcp.pop %v2842
    %v3329 = vmul.f32 %v3098, %v3328
    %v3330 = vrcp.pop %v2843
    %v3331 = vmul.f32 %v3099, %v3330
    %v3332 = vrcp.pop %v2844
    %v3333 = vmul.f32 %v3100, %v3332
    %v3334 = vrcp.pop %v2845
    %v3335 = vmul.f32 %v3101, %v3334
    %v3336 = vrcp.pop %v2846
    %v3337 = vmul.f32 %v3102, %v3336
    %v3338 = vrcp.pop %v2847
    %v3339 = vmul.f32 %v3103, %v3338
    %v3340 = vrcp.pop %v2848
    %v3341 = vmul.f32 %v3104, %v3340
    %v3342 = vrcp.pop %v2849
    %v3343 = vmul.f32 %v3105, %v3342
    %v3344 = vrcp.pop %v2850
    %v3345 = vmul.f32 %v3106, %v3344
    %v3346 = vrcp.pop %v2851
    %v3347 = vmul.f32 %v3107, %v3346
    %v3348 = vrcp.pop %v2852
    %v3349 = vmul.f32 %v3108, %v3348
    %v3350 = vrcp.pop %v2853
    %v3351 = vmul.f32 %v3109, %v3350
    %v3352 = vrcp.pop %v2854
    %v3353 = vmul.f32 %v3110, %v3352
    %v3354 = vrcp.pop %v2855
    %v3355 = vmul.f32 %v3111, %v3354
    %v3356 = vrcp.pop %v2856
    %v3357 = vmul.f32 %v3112, %v3356
    %v3358 = vrcp.pop %v2857
    %v3359 = vmul.f32 %v3113, %v3358
    %v3360 = vrcp.pop %v2858
    %v3361 = vmul.f32 %v3114, %v3360
    %v3362 = vrcp.pop %v2859
    %v3363 = vmul.f32 %v3115, %v3362
    %v3364 = vrcp.pop %v2860
    %v3365 = vmul.f32 %v3116, %v3364
    %v3366 = vrcp.pop %v2861
    %v3367 = vmul.f32 %v3117, %v3366
    %v3368 = vrcp.pop %v2862
    %v3369 = vmul.f32 %v3118, %v3368
    %v3370 = vrcp.pop %v2863
    %v3371 = vmul.f32 %v3119, %v3370
    %v3372 = vrcp.pop %v2864
    %v3373 = vmul.f32 %v3120, %v3372
    %v3374 = vrcp.pop %v2865
    %v3375 = vmul.f32 %v3121, %v3374
    %v3376 = vrcp.pop %v2866
    %v3377 = vmul.f32 %v3122, %v3376
    %v3378 = vrcp.pop %v2867
    %v3379 = vmul.f32 %v3123, %v3378
    %v3380 = vrsqrt.pop %v3125
    %v3381 = vmul.f32 %v3125, %v3380
    %vm3382 = vcmp.eq.f32.partialorder %v3125, inf
    %v3383 = vsel %vm3382, %v3125, %v3381
    %vm3384 = vcmp.eq.f32.partialorder %v3125, 0.0
    %v3385 = vand.u32 %v3125, 2147483648
    %v3386 = vsel %vm3384, %v3385, %v3383
    %v3387 = vrsqrt.pop %v3127
    %v3388 = vmul.f32 %v3127, %v3387
    %vm3389 = vcmp.eq.f32.partialorder %v3127, inf
    %v3390 = vsel %vm3389, %v3127, %v3388
    %vm3391 = vcmp.eq.f32.partialorder %v3127, 0.0
    %v3392 = vand.u32 %v3127, 2147483648
    %v3393 = vsel %vm3391, %v3392, %v3390
    %v3394 = vrsqrt.pop %v3129
    %v3395 = vmul.f32 %v3129, %v3394
    %vm3396 = vcmp.eq.f32.partialorder %v3129, inf
    %v3397 = vsel %vm3396, %v3129, %v3395
    %vm3398 = vcmp.eq.f32.partialorder %v3129, 0.0
    %v3399 = vand.u32 %v3129, 2147483648
    %v3400 = vsel %vm3398, %v3399, %v3397
    %v3401 = vrsqrt.pop %v3131
    %v3402 = vmul.f32 %v3131, %v3401
    %vm3403 = vcmp.eq.f32.partialorder %v3131, inf
    %v3404 = vsel %vm3403, %v3131, %v3402
    %vm3405 = vcmp.eq.f32.partialorder %v3131, 0.0
    %v3406 = vand.u32 %v3131, 2147483648
    %v3407 = vsel %vm3405, %v3406, %v3404
    %v3408 = vrsqrt.pop %v3133
    %v3409 = vmul.f32 %v3133, %v3408
    %vm3410 = vcmp.eq.f32.partialorder %v3133, inf
    %v3411 = vsel %vm3410, %v3133, %v3409
    %vm3412 = vcmp.eq.f32.partialorder %v3133, 0.0
    %v3413 = vand.u32 %v3133, 2147483648
    %v3414 = vsel %vm3412, %v3413, %v3411
    %v3415 = vrsqrt.pop %v3135
    %v3416 = vmul.f32 %v3135, %v3415
    %vm3417 = vcmp.eq.f32.partialorder %v3135, inf
    %v3418 = vsel %vm3417, %v3135, %v3416
    %vm3419 = vcmp.eq.f32.partialorder %v3135, 0.0
    %v3420 = vand.u32 %v3135, 2147483648
    %v3421 = vsel %vm3419, %v3420, %v3418
    %v3422 = vrsqrt.pop %v3137
    %v3423 = vmul.f32 %v3137, %v3422
    %vm3424 = vcmp.eq.f32.partialorder %v3137, inf
    %v3425 = vsel %vm3424, %v3137, %v3423
    %vm3426 = vcmp.eq.f32.partialorder %v3137, 0.0
    %v3427 = vand.u32 %v3137, 2147483648
    %v3428 = vsel %vm3426, %v3427, %v3425
    %v3429 = vrsqrt.pop %v3139
    %v3430 = vmul.f32 %v3139, %v3429
    %vm3431 = vcmp.eq.f32.partialorder %v3139, inf
    %v3432 = vsel %vm3431, %v3139, %v3430
    %vm3433 = vcmp.eq.f32.partialorder %v3139, 0.0
    %v3434 = vand.u32 %v3139, 2147483648
    %v3435 = vsel %vm3433, %v3434, %v3432
    %v3436 = vrsqrt.pop %v3141
    %v3437 = vmul.f32 %v3141, %v3436
    %vm3438 = vcmp.eq.f32.partialorder %v3141, inf
    %v3439 = vsel %vm3438, %v3141, %v3437
    %vm3440 = vcmp.eq.f32.partialorder %v3141, 0.0
    %v3441 = vand.u32 %v3141, 2147483648
    %v3442 = vsel %vm3440, %v3441, %v3439
    %v3443 = vrsqrt.pop %v3143
    %v3444 = vmul.f32 %v3143, %v3443
    %vm3445 = vcmp.eq.f32.partialorder %v3143, inf
    %v3446 = vsel %vm3445, %v3143, %v3444
    %vm3447 = vcmp.eq.f32.partialorder %v3143, 0.0
    %v3448 = vand.u32 %v3143, 2147483648
    %v3449 = vsel %vm3447, %v3448, %v3446
    %v3450 = vrsqrt.pop %v3145
    %v3451 = vmul.f32 %v3145, %v3450
    %vm3452 = vcmp.eq.f32.partialorder %v3145, inf
    %v3453 = vsel %vm3452, %v3145, %v3451
    %vm3454 = vcmp.eq.f32.partialorder %v3145, 0.0
    %v3455 = vand.u32 %v3145, 2147483648
    %v3456 = vsel %vm3454, %v3455, %v3453
    %v3457 = vrsqrt.pop %v3147
    %v3458 = vmul.f32 %v3147, %v3457
    %vm3459 = vcmp.eq.f32.partialorder %v3147, inf
    %v3460 = vsel %vm3459, %v3147, %v3458
    %vm3461 = vcmp.eq.f32.partialorder %v3147, 0.0
    %v3462 = vand.u32 %v3147, 2147483648
    %v3463 = vsel %vm3461, %v3462, %v3460
    %v3464 = vrsqrt.pop %v3149
    %v3465 = vmul.f32 %v3149, %v3464
    %vm3466 = vcmp.eq.f32.partialorder %v3149, inf
    %v3467 = vsel %vm3466, %v3149, %v3465
    %vm3468 = vcmp.eq.f32.partialorder %v3149, 0.0
    %v3469 = vand.u32 %v3149, 2147483648
    %v3470 = vsel %vm3468, %v3469, %v3467
    %v3471 = vrsqrt.pop %v3151
    %v3472 = vmul.f32 %v3151, %v3471
    %vm3473 = vcmp.eq.f32.partialorder %v3151, inf
    %v3474 = vsel %vm3473, %v3151, %v3472
    %vm3475 = vcmp.eq.f32.partialorder %v3151, 0.0
    %v3476 = vand.u32 %v3151, 2147483648
    %v3477 = vsel %vm3475, %v3476, %v3474
    %v3478 = vrsqrt.pop %v3153
    %v3479 = vmul.f32 %v3153, %v3478
    %vm3480 = vcmp.eq.f32.partialorder %v3153, inf
    %v3481 = vsel %vm3480, %v3153, %v3479
    %vm3482 = vcmp.eq.f32.partialorder %v3153, 0.0
    %v3483 = vand.u32 %v3153, 2147483648
    %v3484 = vsel %vm3482, %v3483, %v3481
    %v3485 = vrsqrt.pop %v3155
    %v3486 = vmul.f32 %v3155, %v3485
    %vm3487 = vcmp.eq.f32.partialorder %v3155, inf
    %v3488 = vsel %vm3487, %v3155, %v3486
    %vm3489 = vcmp.eq.f32.partialorder %v3155, 0.0
    %v3490 = vand.u32 %v3155, 2147483648
    %v3491 = vsel %vm3489, %v3490, %v3488
    %v3492 = vrsqrt.pop %v3157
    %v3493 = vmul.f32 %v3157, %v3492
    %vm3494 = vcmp.eq.f32.partialorder %v3157, inf
    %v3495 = vsel %vm3494, %v3157, %v3493
    %vm3496 = vcmp.eq.f32.partialorder %v3157, 0.0
    %v3497 = vand.u32 %v3157, 2147483648
    %v3498 = vsel %vm3496, %v3497, %v3495
    %v3499 = vrsqrt.pop %v3159
    %v3500 = vmul.f32 %v3159, %v3499
    %vm3501 = vcmp.eq.f32.partialorder %v3159, inf
    %v3502 = vsel %vm3501, %v3159, %v3500
    %vm3503 = vcmp.eq.f32.partialorder %v3159, 0.0
    %v3504 = vand.u32 %v3159, 2147483648
    %v3505 = vsel %vm3503, %v3504, %v3502
    %v3506 = vrsqrt.pop %v3161
    %v3507 = vmul.f32 %v3161, %v3506
    %vm3508 = vcmp.eq.f32.partialorder %v3161, inf
    %v3509 = vsel %vm3508, %v3161, %v3507
    %vm3510 = vcmp.eq.f32.partialorder %v3161, 0.0
    %v3511 = vand.u32 %v3161, 2147483648
    %v3512 = vsel %vm3510, %v3511, %v3509
    %v3513 = vrsqrt.pop %v3163
    %v3514 = vmul.f32 %v3163, %v3513
    %vm3515 = vcmp.eq.f32.partialorder %v3163, inf
    %v3516 = vsel %vm3515, %v3163, %v3514
    %vm3517 = vcmp.eq.f32.partialorder %v3163, 0.0
    %v3518 = vand.u32 %v3163, 2147483648
    %v3519 = vsel %vm3517, %v3518, %v3516
    %v3520 = vrsqrt.pop %v3165
    %v3521 = vmul.f32 %v3165, %v3520
    %vm3522 = vcmp.eq.f32.partialorder %v3165, inf
    %v3523 = vsel %vm3522, %v3165, %v3521
    %vm3524 = vcmp.eq.f32.partialorder %v3165, 0.0
    %v3525 = vand.u32 %v3165, 2147483648
    %v3526 = vsel %vm3524, %v3525, %v3523
    %v3527 = vrsqrt.pop %v3167
    %v3528 = vmul.f32 %v3167, %v3527
    %vm3529 = vcmp.eq.f32.partialorder %v3167, inf
    %v3530 = vsel %vm3529, %v3167, %v3528
    %vm3531 = vcmp.eq.f32.partialorder %v3167, 0.0
    %v3532 = vand.u32 %v3167, 2147483648
    %v3533 = vsel %vm3531, %v3532, %v3530
    %v3534 = vrsqrt.pop %v3169
    %v3535 = vmul.f32 %v3169, %v3534
    %vm3536 = vcmp.eq.f32.partialorder %v3169, inf
    %v3537 = vsel %vm3536, %v3169, %v3535
    %vm3538 = vcmp.eq.f32.partialorder %v3169, 0.0
    %v3539 = vand.u32 %v3169, 2147483648
    %v3540 = vsel %vm3538, %v3539, %v3537
    %v3541 = vrsqrt.pop %v3171
    %v3542 = vmul.f32 %v3171, %v3541
    %vm3543 = vcmp.eq.f32.partialorder %v3171, inf
    %v3544 = vsel %vm3543, %v3171, %v3542
    %vm3545 = vcmp.eq.f32.partialorder %v3171, 0.0
    %v3546 = vand.u32 %v3171, 2147483648
    %v3547 = vsel %vm3545, %v3546, %v3544
    %v3548 = vrsqrt.pop %v3173
    %v3549 = vmul.f32 %v3173, %v3548
    %vm3550 = vcmp.eq.f32.partialorder %v3173, inf
    %v3551 = vsel %vm3550, %v3173, %v3549
    %vm3552 = vcmp.eq.f32.partialorder %v3173, 0.0
    %v3553 = vand.u32 %v3173, 2147483648
    %v3554 = vsel %vm3552, %v3553, %v3551
    %v3555 = vrsqrt.pop %v3175
    %v3556 = vmul.f32 %v3175, %v3555
    %vm3557 = vcmp.eq.f32.partialorder %v3175, inf
    %v3558 = vsel %vm3557, %v3175, %v3556
    %vm3559 = vcmp.eq.f32.partialorder %v3175, 0.0
    %v3560 = vand.u32 %v3175, 2147483648
    %v3561 = vsel %vm3559, %v3560, %v3558
    %v3562 = vrsqrt.pop %v3177
    %v3563 = vmul.f32 %v3177, %v3562
    %vm3564 = vcmp.eq.f32.partialorder %v3177, inf
    %v3565 = vsel %vm3564, %v3177, %v3563
    %vm3566 = vcmp.eq.f32.partialorder %v3177, 0.0
    %v3567 = vand.u32 %v3177, 2147483648
    %v3568 = vsel %vm3566, %v3567, %v3565
    %v3569 = vrsqrt.pop %v3179
    %v3570 = vmul.f32 %v3179, %v3569
    %vm3571 = vcmp.eq.f32.partialorder %v3179, inf
    %v3572 = vsel %vm3571, %v3179, %v3570
    %vm3573 = vcmp.eq.f32.partialorder %v3179, 0.0
    %v3574 = vand.u32 %v3179, 2147483648
    %v3575 = vsel %vm3573, %v3574, %v3572
    %v3576 = vrsqrt.pop %v3181
    %v3577 = vmul.f32 %v3181, %v3576
    %vm3578 = vcmp.eq.f32.partialorder %v3181, inf
    %v3579 = vsel %vm3578, %v3181, %v3577
    %vm3580 = vcmp.eq.f32.partialorder %v3181, 0.0
    %v3581 = vand.u32 %v3181, 2147483648
    %v3582 = vsel %vm3580, %v3581, %v3579
    %v3583 = vrsqrt.pop %v3183
    %v3584 = vmul.f32 %v3183, %v3583
    %vm3585 = vcmp.eq.f32.partialorder %v3183, inf
    %v3586 = vsel %vm3585, %v3183, %v3584
    %vm3587 = vcmp.eq.f32.partialorder %v3183, 0.0
    %v3588 = vand.u32 %v3183, 2147483648
    %v3589 = vsel %vm3587, %v3588, %v3586
    %v3590 = vrsqrt.pop %v3185
    %v3591 = vmul.f32 %v3185, %v3590
    %vm3592 = vcmp.eq.f32.partialorder %v3185, inf
    %v3593 = vsel %vm3592, %v3185, %v3591
    %vm3594 = vcmp.eq.f32.partialorder %v3185, 0.0
    %v3595 = vand.u32 %v3185, 2147483648
    %v3596 = vsel %vm3594, %v3595, %v3593
    %v3597 = vrsqrt.pop %v3187
    %v3598 = vmul.f32 %v3187, %v3597
    %vm3599 = vcmp.eq.f32.partialorder %v3187, inf
    %v3600 = vsel %vm3599, %v3187, %v3598
    %vm3601 = vcmp.eq.f32.partialorder %v3187, 0.0
    %v3602 = vand.u32 %v3187, 2147483648
    %v3603 = vsel %vm3601, %v3602, %v3600
    %v3604 = vrsqrt.pop %v3189
    %v3605 = vmul.f32 %v3189, %v3604
    %vm3606 = vcmp.eq.f32.partialorder %v3189, inf
    %v3607 = vsel %vm3606, %v3189, %v3605
    %vm3608 = vcmp.eq.f32.partialorder %v3189, 0.0
    %v3609 = vand.u32 %v3189, 2147483648
    %v3610 = vsel %vm3608, %v3609, %v3607
    %v3611 = vrsqrt.pop %v3191
    %v3612 = vmul.f32 %v3191, %v3611
    %vm3613 = vcmp.eq.f32.partialorder %v3191, inf
    %v3614 = vsel %vm3613, %v3191, %v3612
    %vm3615 = vcmp.eq.f32.partialorder %v3191, 0.0
    %v3616 = vand.u32 %v3191, 2147483648
    %v3617 = vsel %vm3615, %v3616, %v3614
    %v3618 = vrsqrt.pop %v3193
    %v3619 = vmul.f32 %v3193, %v3618
    %vm3620 = vcmp.eq.f32.partialorder %v3193, inf
    %v3621 = vsel %vm3620, %v3193, %v3619
    %vm3622 = vcmp.eq.f32.partialorder %v3193, 0.0
    %v3623 = vand.u32 %v3193, 2147483648
    %v3624 = vsel %vm3622, %v3623, %v3621
    %v3625 = vrsqrt.pop %v3195
    %v3626 = vmul.f32 %v3195, %v3625
    %vm3627 = vcmp.eq.f32.partialorder %v3195, inf
    %v3628 = vsel %vm3627, %v3195, %v3626
    %vm3629 = vcmp.eq.f32.partialorder %v3195, 0.0
    %v3630 = vand.u32 %v3195, 2147483648
    %v3631 = vsel %vm3629, %v3630, %v3628
    %v3632 = vrsqrt.pop %v3197
    %v3633 = vmul.f32 %v3197, %v3632
    %vm3634 = vcmp.eq.f32.partialorder %v3197, inf
    %v3635 = vsel %vm3634, %v3197, %v3633
    %vm3636 = vcmp.eq.f32.partialorder %v3197, 0.0
    %v3637 = vand.u32 %v3197, 2147483648
    %v3638 = vsel %vm3636, %v3637, %v3635
    %v3639 = vrsqrt.pop %v3199
    %v3640 = vmul.f32 %v3199, %v3639
    %vm3641 = vcmp.eq.f32.partialorder %v3199, inf
    %v3642 = vsel %vm3641, %v3199, %v3640
    %vm3643 = vcmp.eq.f32.partialorder %v3199, 0.0
    %v3644 = vand.u32 %v3199, 2147483648
    %v3645 = vsel %vm3643, %v3644, %v3642
    %v3646 = vrsqrt.pop %v3201
    %v3647 = vmul.f32 %v3201, %v3646
    %vm3648 = vcmp.eq.f32.partialorder %v3201, inf
    %v3649 = vsel %vm3648, %v3201, %v3647
    %vm3650 = vcmp.eq.f32.partialorder %v3201, 0.0
    %v3651 = vand.u32 %v3201, 2147483648
    %v3652 = vsel %vm3650, %v3651, %v3649
    %v3653 = vrsqrt.pop %v3203
    %v3654 = vmul.f32 %v3203, %v3653
    %vm3655 = vcmp.eq.f32.partialorder %v3203, inf
    %v3656 = vsel %vm3655, %v3203, %v3654
    %vm3657 = vcmp.eq.f32.partialorder %v3203, 0.0
    %v3658 = vand.u32 %v3203, 2147483648
    %v3659 = vsel %vm3657, %v3658, %v3656
    %v3660 = vrsqrt.pop %v3205
    %v3661 = vmul.f32 %v3205, %v3660
    %vm3662 = vcmp.eq.f32.partialorder %v3205, inf
    %v3663 = vsel %vm3662, %v3205, %v3661
    %vm3664 = vcmp.eq.f32.partialorder %v3205, 0.0
    %v3665 = vand.u32 %v3205, 2147483648
    %v3666 = vsel %vm3664, %v3665, %v3663
    %v3667 = vrsqrt.pop %v3207
    %v3668 = vmul.f32 %v3207, %v3667
    %vm3669 = vcmp.eq.f32.partialorder %v3207, inf
    %v3670 = vsel %vm3669, %v3207, %v3668
    %vm3671 = vcmp.eq.f32.partialorder %v3207, 0.0
    %v3672 = vand.u32 %v3207, 2147483648
    %v3673 = vsel %vm3671, %v3672, %v3670
    %v3674 = vrsqrt.pop %v3209
    %v3675 = vmul.f32 %v3209, %v3674
    %vm3676 = vcmp.eq.f32.partialorder %v3209, inf
    %v3677 = vsel %vm3676, %v3209, %v3675
    %vm3678 = vcmp.eq.f32.partialorder %v3209, 0.0
    %v3679 = vand.u32 %v3209, 2147483648
    %v3680 = vsel %vm3678, %v3679, %v3677
    %v3681 = vrsqrt.pop %v3211
    %v3682 = vmul.f32 %v3211, %v3681
    %vm3683 = vcmp.eq.f32.partialorder %v3211, inf
    %v3684 = vsel %vm3683, %v3211, %v3682
    %vm3685 = vcmp.eq.f32.partialorder %v3211, 0.0
    %v3686 = vand.u32 %v3211, 2147483648
    %v3687 = vsel %vm3685, %v3686, %v3684
    %v3688 = vrsqrt.pop %v3213
    %v3689 = vmul.f32 %v3213, %v3688
    %vm3690 = vcmp.eq.f32.partialorder %v3213, inf
    %v3691 = vsel %vm3690, %v3213, %v3689
    %vm3692 = vcmp.eq.f32.partialorder %v3213, 0.0
    %v3693 = vand.u32 %v3213, 2147483648
    %v3694 = vsel %vm3692, %v3693, %v3691
    %v3695 = vrsqrt.pop %v3215
    %v3696 = vmul.f32 %v3215, %v3695
    %vm3697 = vcmp.eq.f32.partialorder %v3215, inf
    %v3698 = vsel %vm3697, %v3215, %v3696
    %vm3699 = vcmp.eq.f32.partialorder %v3215, 0.0
    %v3700 = vand.u32 %v3215, 2147483648
    %v3701 = vsel %vm3699, %v3700, %v3698
    %v3702 = vrsqrt.pop %v3217
    %v3703 = vmul.f32 %v3217, %v3702
    %vm3704 = vcmp.eq.f32.partialorder %v3217, inf
    %v3705 = vsel %vm3704, %v3217, %v3703
    %vm3706 = vcmp.eq.f32.partialorder %v3217, 0.0
    %v3707 = vand.u32 %v3217, 2147483648
    %v3708 = vsel %vm3706, %v3707, %v3705
    %v3709 = vrsqrt.pop %v3219
    %v3710 = vmul.f32 %v3219, %v3709
    %vm3711 = vcmp.eq.f32.partialorder %v3219, inf
    %v3712 = vsel %vm3711, %v3219, %v3710
    %vm3713 = vcmp.eq.f32.partialorder %v3219, 0.0
    %v3714 = vand.u32 %v3219, 2147483648
    %v3715 = vsel %vm3713, %v3714, %v3712
    %v3716 = vrsqrt.pop %v3221
    %v3717 = vmul.f32 %v3221, %v3716
    %vm3718 = vcmp.eq.f32.partialorder %v3221, inf
    %v3719 = vsel %vm3718, %v3221, %v3717
    %vm3720 = vcmp.eq.f32.partialorder %v3221, 0.0
    %v3721 = vand.u32 %v3221, 2147483648
    %v3722 = vsel %vm3720, %v3721, %v3719
    %v3723 = vrsqrt.pop %v3223
    %v3724 = vmul.f32 %v3223, %v3723
    %vm3725 = vcmp.eq.f32.partialorder %v3223, inf
    %v3726 = vsel %vm3725, %v3223, %v3724
    %vm3727 = vcmp.eq.f32.partialorder %v3223, 0.0
    %v3728 = vand.u32 %v3223, 2147483648
    %v3729 = vsel %vm3727, %v3728, %v3726
    %v3730 = vrsqrt.pop %v3225
    %v3731 = vmul.f32 %v3225, %v3730
    %vm3732 = vcmp.eq.f32.partialorder %v3225, inf
    %v3733 = vsel %vm3732, %v3225, %v3731
    %vm3734 = vcmp.eq.f32.partialorder %v3225, 0.0
    %v3735 = vand.u32 %v3225, 2147483648
    %v3736 = vsel %vm3734, %v3735, %v3733
    %v3737 = vrsqrt.pop %v3227
    %v3738 = vmul.f32 %v3227, %v3737
    %vm3739 = vcmp.eq.f32.partialorder %v3227, inf
    %v3740 = vsel %vm3739, %v3227, %v3738
    %vm3741 = vcmp.eq.f32.partialorder %v3227, 0.0
    %v3742 = vand.u32 %v3227, 2147483648
    %v3743 = vsel %vm3741, %v3742, %v3740
    %v3744 = vrsqrt.pop %v3229
    %v3745 = vmul.f32 %v3229, %v3744
    %vm3746 = vcmp.eq.f32.partialorder %v3229, inf
    %v3747 = vsel %vm3746, %v3229, %v3745
    %vm3748 = vcmp.eq.f32.partialorder %v3229, 0.0
    %v3749 = vand.u32 %v3229, 2147483648
    %v3750 = vsel %vm3748, %v3749, %v3747
    %v3751 = vrsqrt.pop %v3231
    %v3752 = vmul.f32 %v3231, %v3751
    %vm3753 = vcmp.eq.f32.partialorder %v3231, inf
    %v3754 = vsel %vm3753, %v3231, %v3752
    %vm3755 = vcmp.eq.f32.partialorder %v3231, 0.0
    %v3756 = vand.u32 %v3231, 2147483648
    %v3757 = vsel %vm3755, %v3756, %v3754
    %v3758 = vrsqrt.pop %v3233
    %v3759 = vmul.f32 %v3233, %v3758
    %vm3760 = vcmp.eq.f32.partialorder %v3233, inf
    %v3761 = vsel %vm3760, %v3233, %v3759
    %vm3762 = vcmp.eq.f32.partialorder %v3233, 0.0
    %v3763 = vand.u32 %v3233, 2147483648
    %v3764 = vsel %vm3762, %v3763, %v3761
    %v3765 = vrsqrt.pop %v3235
    %v3766 = vmul.f32 %v3235, %v3765
    %vm3767 = vcmp.eq.f32.partialorder %v3235, inf
    %v3768 = vsel %vm3767, %v3235, %v3766
    %vm3769 = vcmp.eq.f32.partialorder %v3235, 0.0
    %v3770 = vand.u32 %v3235, 2147483648
    %v3771 = vsel %vm3769, %v3770, %v3768
    %v3772 = vrsqrt.pop %v3237
    %v3773 = vmul.f32 %v3237, %v3772
    %vm3774 = vcmp.eq.f32.partialorder %v3237, inf
    %v3775 = vsel %vm3774, %v3237, %v3773
    %vm3776 = vcmp.eq.f32.partialorder %v3237, 0.0
    %v3777 = vand.u32 %v3237, 2147483648
    %v3778 = vsel %vm3776, %v3777, %v3775
    %v3779 = vrsqrt.pop %v3239
    %v3780 = vmul.f32 %v3239, %v3779
    %vm3781 = vcmp.eq.f32.partialorder %v3239, inf
    %v3782 = vsel %vm3781, %v3239, %v3780
    %vm3783 = vcmp.eq.f32.partialorder %v3239, 0.0
    %v3784 = vand.u32 %v3239, 2147483648
    %v3785 = vsel %vm3783, %v3784, %v3782
    %v3786 = vrsqrt.pop %v3241
    %v3787 = vmul.f32 %v3241, %v3786
    %vm3788 = vcmp.eq.f32.partialorder %v3241, inf
    %v3789 = vsel %vm3788, %v3241, %v3787
    %vm3790 = vcmp.eq.f32.partialorder %v3241, 0.0
    %v3791 = vand.u32 %v3241, 2147483648
    %v3792 = vsel %vm3790, %v3791, %v3789
    %v3793 = vrsqrt.pop %v3243
    %v3794 = vmul.f32 %v3243, %v3793
    %vm3795 = vcmp.eq.f32.partialorder %v3243, inf
    %v3796 = vsel %vm3795, %v3243, %v3794
    %vm3797 = vcmp.eq.f32.partialorder %v3243, 0.0
    %v3798 = vand.u32 %v3243, 2147483648
    %v3799 = vsel %vm3797, %v3798, %v3796
    %v3800 = vrsqrt.pop %v3245
    %v3801 = vmul.f32 %v3245, %v3800
    %vm3802 = vcmp.eq.f32.partialorder %v3245, inf
    %v3803 = vsel %vm3802, %v3245, %v3801
    %vm3804 = vcmp.eq.f32.partialorder %v3245, 0.0
    %v3805 = vand.u32 %v3245, 2147483648
    %v3806 = vsel %vm3804, %v3805, %v3803
    %v3807 = vrsqrt.pop %v3247
    %v3808 = vmul.f32 %v3247, %v3807
    %vm3809 = vcmp.eq.f32.partialorder %v3247, inf
    %v3810 = vsel %vm3809, %v3247, %v3808
    %vm3811 = vcmp.eq.f32.partialorder %v3247, 0.0
    %v3812 = vand.u32 %v3247, 2147483648
    %v3813 = vsel %vm3811, %v3812, %v3810
    %v3814 = vrsqrt.pop %v3249
    %v3815 = vmul.f32 %v3249, %v3814
    %vm3816 = vcmp.eq.f32.partialorder %v3249, inf
    %v3817 = vsel %vm3816, %v3249, %v3815
    %vm3818 = vcmp.eq.f32.partialorder %v3249, 0.0
    %v3819 = vand.u32 %v3249, 2147483648
    %v3820 = vsel %vm3818, %v3819, %v3817
    %v3821 = vrsqrt.pop %v3251
    %v3822 = vmul.f32 %v3251, %v3821
    %vm3823 = vcmp.eq.f32.partialorder %v3251, inf
    %v3824 = vsel %vm3823, %v3251, %v3822
    %vm3825 = vcmp.eq.f32.partialorder %v3251, 0.0
    %v3826 = vand.u32 %v3251, 2147483648
    %v3827 = vsel %vm3825, %v3826, %v3824
    %v3828 = vrsqrt.pop %v3253
    %v3829 = vmul.f32 %v3253, %v3828
    %vm3830 = vcmp.eq.f32.partialorder %v3253, inf
    %v3831 = vsel %vm3830, %v3253, %v3829
    %vm3832 = vcmp.eq.f32.partialorder %v3253, 0.0
    %v3833 = vand.u32 %v3253, 2147483648
    %v3834 = vsel %vm3832, %v3833, %v3831
    %v3835 = vrsqrt.pop %v3255
    %v3836 = vmul.f32 %v3255, %v3835
    %vm3837 = vcmp.eq.f32.partialorder %v3255, inf
    %v3838 = vsel %vm3837, %v3255, %v3836
    %vm3839 = vcmp.eq.f32.partialorder %v3255, 0.0
    %v3840 = vand.u32 %v3255, 2147483648
    %v3841 = vsel %vm3839, %v3840, %v3838
    %v3842 = vrsqrt.pop %v3257
    %v3843 = vmul.f32 %v3257, %v3842
    %vm3844 = vcmp.eq.f32.partialorder %v3257, inf
    %v3845 = vsel %vm3844, %v3257, %v3843
    %vm3846 = vcmp.eq.f32.partialorder %v3257, 0.0
    %v3847 = vand.u32 %v3257, 2147483648
    %v3848 = vsel %vm3846, %v3847, %v3845
    %v3849 = vrsqrt.pop %v3259
    %v3850 = vmul.f32 %v3259, %v3849
    %vm3851 = vcmp.eq.f32.partialorder %v3259, inf
    %v3852 = vsel %vm3851, %v3259, %v3850
    %vm3853 = vcmp.eq.f32.partialorder %v3259, 0.0
    %v3854 = vand.u32 %v3259, 2147483648
    %v3855 = vsel %vm3853, %v3854, %v3852
    %v3856 = vrsqrt.pop %v3261
    %v3857 = vmul.f32 %v3261, %v3856
    %vm3858 = vcmp.eq.f32.partialorder %v3261, inf
    %v3859 = vsel %vm3858, %v3261, %v3857
    %vm3860 = vcmp.eq.f32.partialorder %v3261, 0.0
    %v3861 = vand.u32 %v3261, 2147483648
    %v3862 = vsel %vm3860, %v3861, %v3859
    %v3863 = vrsqrt.pop %v3263
    %v3864 = vmul.f32 %v3263, %v3863
    %vm3865 = vcmp.eq.f32.partialorder %v3263, inf
    %v3866 = vsel %vm3865, %v3263, %v3864
    %vm3867 = vcmp.eq.f32.partialorder %v3263, 0.0
    %v3868 = vand.u32 %v3263, 2147483648
    %v3869 = vsel %vm3867, %v3868, %v3866
    %v3870 = vrsqrt.pop %v3265
    %v3871 = vmul.f32 %v3265, %v3870
    %vm3872 = vcmp.eq.f32.partialorder %v3265, inf
    %v3873 = vsel %vm3872, %v3265, %v3871
    %vm3874 = vcmp.eq.f32.partialorder %v3265, 0.0
    %v3875 = vand.u32 %v3265, 2147483648
    %v3876 = vsel %vm3874, %v3875, %v3873
    %v3877 = vrsqrt.pop %v3267
    %v3878 = vmul.f32 %v3267, %v3877
    %vm3879 = vcmp.eq.f32.partialorder %v3267, inf
    %v3880 = vsel %vm3879, %v3267, %v3878
    %vm3881 = vcmp.eq.f32.partialorder %v3267, 0.0
    %v3882 = vand.u32 %v3267, 2147483648
    %v3883 = vsel %vm3881, %v3882, %v3880
    %v3884 = vrsqrt.pop %v3269
    %v3885 = vmul.f32 %v3269, %v3884
    %vm3886 = vcmp.eq.f32.partialorder %v3269, inf
    %v3887 = vsel %vm3886, %v3269, %v3885
    %vm3888 = vcmp.eq.f32.partialorder %v3269, 0.0
    %v3889 = vand.u32 %v3269, 2147483648
    %v3890 = vsel %vm3888, %v3889, %v3887
    %v3891 = vrsqrt.pop %v3271
    %v3892 = vmul.f32 %v3271, %v3891
    %vm3893 = vcmp.eq.f32.partialorder %v3271, inf
    %v3894 = vsel %vm3893, %v3271, %v3892
    %vm3895 = vcmp.eq.f32.partialorder %v3271, 0.0
    %v3896 = vand.u32 %v3271, 2147483648
    %v3897 = vsel %vm3895, %v3896, %v3894
    %v3898 = vrsqrt.pop %v3273
    %v3899 = vmul.f32 %v3273, %v3898
    %vm3900 = vcmp.eq.f32.partialorder %v3273, inf
    %v3901 = vsel %vm3900, %v3273, %v3899
    %vm3902 = vcmp.eq.f32.partialorder %v3273, 0.0
    %v3903 = vand.u32 %v3273, 2147483648
    %v3904 = vsel %vm3902, %v3903, %v3901
    %v3905 = vrsqrt.pop %v3275
    %v3906 = vmul.f32 %v3275, %v3905
    %vm3907 = vcmp.eq.f32.partialorder %v3275, inf
    %v3908 = vsel %vm3907, %v3275, %v3906
    %vm3909 = vcmp.eq.f32.partialorder %v3275, 0.0
    %v3910 = vand.u32 %v3275, 2147483648
    %v3911 = vsel %vm3909, %v3910, %v3908
    %v3912 = vrsqrt.pop %v3277
    %v3913 = vmul.f32 %v3277, %v3912
    %vm3914 = vcmp.eq.f32.partialorder %v3277, inf
    %v3915 = vsel %vm3914, %v3277, %v3913
    %vm3916 = vcmp.eq.f32.partialorder %v3277, 0.0
    %v3917 = vand.u32 %v3277, 2147483648
    %v3918 = vsel %vm3916, %v3917, %v3915
    %v3919 = vrsqrt.pop %v3279
    %v3920 = vmul.f32 %v3279, %v3919
    %vm3921 = vcmp.eq.f32.partialorder %v3279, inf
    %v3922 = vsel %vm3921, %v3279, %v3920
    %vm3923 = vcmp.eq.f32.partialorder %v3279, 0.0
    %v3924 = vand.u32 %v3279, 2147483648
    %v3925 = vsel %vm3923, %v3924, %v3922
    %v3926 = vrsqrt.pop %v3281
    %v3927 = vmul.f32 %v3281, %v3926
    %vm3928 = vcmp.eq.f32.partialorder %v3281, inf
    %v3929 = vsel %vm3928, %v3281, %v3927
    %vm3930 = vcmp.eq.f32.partialorder %v3281, 0.0
    %v3931 = vand.u32 %v3281, 2147483648
    %v3932 = vsel %vm3930, %v3931, %v3929
    %v3933 = vrsqrt.pop %v3283
    %v3934 = vmul.f32 %v3283, %v3933
    %vm3935 = vcmp.eq.f32.partialorder %v3283, inf
    %v3936 = vsel %vm3935, %v3283, %v3934
    %vm3937 = vcmp.eq.f32.partialorder %v3283, 0.0
    %v3938 = vand.u32 %v3283, 2147483648
    %v3939 = vsel %vm3937, %v3938, %v3936
    %v3940 = vrsqrt.pop %v3285
    %v3941 = vmul.f32 %v3285, %v3940
    %vm3942 = vcmp.eq.f32.partialorder %v3285, inf
    %v3943 = vsel %vm3942, %v3285, %v3941
    %vm3944 = vcmp.eq.f32.partialorder %v3285, 0.0
    %v3945 = vand.u32 %v3285, 2147483648
    %v3946 = vsel %vm3944, %v3945, %v3943
    %v3947 = vrsqrt.pop %v3287
    %v3948 = vmul.f32 %v3287, %v3947
    %vm3949 = vcmp.eq.f32.partialorder %v3287, inf
    %v3950 = vsel %vm3949, %v3287, %v3948
    %vm3951 = vcmp.eq.f32.partialorder %v3287, 0.0
    %v3952 = vand.u32 %v3287, 2147483648
    %v3953 = vsel %vm3951, %v3952, %v3950
    %v3954 = vrsqrt.pop %v3289
    %v3955 = vmul.f32 %v3289, %v3954
    %vm3956 = vcmp.eq.f32.partialorder %v3289, inf
    %v3957 = vsel %vm3956, %v3289, %v3955
    %vm3958 = vcmp.eq.f32.partialorder %v3289, 0.0
    %v3959 = vand.u32 %v3289, 2147483648
    %v3960 = vsel %vm3958, %v3959, %v3957
    %v3961 = vrsqrt.pop %v3291
    %v3962 = vmul.f32 %v3291, %v3961
    %vm3963 = vcmp.eq.f32.partialorder %v3291, inf
    %v3964 = vsel %vm3963, %v3291, %v3962
    %vm3965 = vcmp.eq.f32.partialorder %v3291, 0.0
    %v3966 = vand.u32 %v3291, 2147483648
    %v3967 = vsel %vm3965, %v3966, %v3964
    %v3968 = vrsqrt.pop %v3293
    %v3969 = vmul.f32 %v3293, %v3968
    %vm3970 = vcmp.eq.f32.partialorder %v3293, inf
    %v3971 = vsel %vm3970, %v3293, %v3969
    %vm3972 = vcmp.eq.f32.partialorder %v3293, 0.0
    %v3973 = vand.u32 %v3293, 2147483648
    %v3974 = vsel %vm3972, %v3973, %v3971
    %v3975 = vrsqrt.pop %v3295
    %v3976 = vmul.f32 %v3295, %v3975
    %vm3977 = vcmp.eq.f32.partialorder %v3295, inf
    %v3978 = vsel %vm3977, %v3295, %v3976
    %vm3979 = vcmp.eq.f32.partialorder %v3295, 0.0
    %v3980 = vand.u32 %v3295, 2147483648
    %v3981 = vsel %vm3979, %v3980, %v3978
    %v3982 = vrsqrt.pop %v3297
    %v3983 = vmul.f32 %v3297, %v3982
    %vm3984 = vcmp.eq.f32.partialorder %v3297, inf
    %v3985 = vsel %vm3984, %v3297, %v3983
    %vm3986 = vcmp.eq.f32.partialorder %v3297, 0.0
    %v3987 = vand.u32 %v3297, 2147483648
    %v3988 = vsel %vm3986, %v3987, %v3985
    %v3989 = vrsqrt.pop %v3299
    %v3990 = vmul.f32 %v3299, %v3989
    %vm3991 = vcmp.eq.f32.partialorder %v3299, inf
    %v3992 = vsel %vm3991, %v3299, %v3990
    %vm3993 = vcmp.eq.f32.partialorder %v3299, 0.0
    %v3994 = vand.u32 %v3299, 2147483648
    %v3995 = vsel %vm3993, %v3994, %v3992
    %v3996 = vrsqrt.pop %v3301
    %v3997 = vmul.f32 %v3301, %v3996
    %vm3998 = vcmp.eq.f32.partialorder %v3301, inf
    %v3999 = vsel %vm3998, %v3301, %v3997
    %vm4000 = vcmp.eq.f32.partialorder %v3301, 0.0
    %v4001 = vand.u32 %v3301, 2147483648
    %v4002 = vsel %vm4000, %v4001, %v3999
    %v4003 = vrsqrt.pop %v3303
    %v4004 = vmul.f32 %v3303, %v4003
    %vm4005 = vcmp.eq.f32.partialorder %v3303, inf
    %v4006 = vsel %vm4005, %v3303, %v4004
    %vm4007 = vcmp.eq.f32.partialorder %v3303, 0.0
    %v4008 = vand.u32 %v3303, 2147483648
    %v4009 = vsel %vm4007, %v4008, %v4006
    %v4010 = vrsqrt.pop %v3305
    %v4011 = vmul.f32 %v3305, %v4010
    %vm4012 = vcmp.eq.f32.partialorder %v3305, inf
    %v4013 = vsel %vm4012, %v3305, %v4011
    %vm4014 = vcmp.eq.f32.partialorder %v3305, 0.0
    %v4015 = vand.u32 %v3305, 2147483648
    %v4016 = vsel %vm4014, %v4015, %v4013
    %v4017 = vrsqrt.pop %v3307
    %v4018 = vmul.f32 %v3307, %v4017
    %vm4019 = vcmp.eq.f32.partialorder %v3307, inf
    %v4020 = vsel %vm4019, %v3307, %v4018
    %vm4021 = vcmp.eq.f32.partialorder %v3307, 0.0
    %v4022 = vand.u32 %v3307, 2147483648
    %v4023 = vsel %vm4021, %v4022, %v4020
    %v4024 = vrsqrt.pop %v3309
    %v4025 = vmul.f32 %v3309, %v4024
    %vm4026 = vcmp.eq.f32.partialorder %v3309, inf
    %v4027 = vsel %vm4026, %v3309, %v4025
    %vm4028 = vcmp.eq.f32.partialorder %v3309, 0.0
    %v4029 = vand.u32 %v3309, 2147483648
    %v4030 = vsel %vm4028, %v4029, %v4027
    %v4031 = vrsqrt.pop %v3311
    %v4032 = vmul.f32 %v3311, %v4031
    %vm4033 = vcmp.eq.f32.partialorder %v3311, inf
    %v4034 = vsel %vm4033, %v3311, %v4032
    %vm4035 = vcmp.eq.f32.partialorder %v3311, 0.0
    %v4036 = vand.u32 %v3311, 2147483648
    %v4037 = vsel %vm4035, %v4036, %v4034
    %v4038 = vrsqrt.pop %v3313
    %v4039 = vmul.f32 %v3313, %v4038
    %vm4040 = vcmp.eq.f32.partialorder %v3313, inf
    %v4041 = vsel %vm4040, %v3313, %v4039
    %vm4042 = vcmp.eq.f32.partialorder %v3313, 0.0
    %v4043 = vand.u32 %v3313, 2147483648
    %v4044 = vsel %vm4042, %v4043, %v4041
    %v4045 = vrsqrt.pop %v3315
    %v4046 = vmul.f32 %v3315, %v4045
    %vm4047 = vcmp.eq.f32.partialorder %v3315, inf
    %v4048 = vsel %vm4047, %v3315, %v4046
    %vm4049 = vcmp.eq.f32.partialorder %v3315, 0.0
    %v4050 = vand.u32 %v3315, 2147483648
    %v4051 = vsel %vm4049, %v4050, %v4048
    %v4052 = vrsqrt.pop %v3317
    %v4053 = vmul.f32 %v3317, %v4052
    %vm4054 = vcmp.eq.f32.partialorder %v3317, inf
    %v4055 = vsel %vm4054, %v3317, %v4053
    %vm4056 = vcmp.eq.f32.partialorder %v3317, 0.0
    %v4057 = vand.u32 %v3317, 2147483648
    %v4058 = vsel %vm4056, %v4057, %v4055
    %v4059 = vrsqrt.pop %v3319
    %v4060 = vmul.f32 %v3319, %v4059
    %vm4061 = vcmp.eq.f32.partialorder %v3319, inf
    %v4062 = vsel %vm4061, %v3319, %v4060
    %vm4063 = vcmp.eq.f32.partialorder %v3319, 0.0
    %v4064 = vand.u32 %v3319, 2147483648
    %v4065 = vsel %vm4063, %v4064, %v4062
    %v4066 = vrsqrt.pop %v3321
    %v4067 = vmul.f32 %v3321, %v4066
    %vm4068 = vcmp.eq.f32.partialorder %v3321, inf
    %v4069 = vsel %vm4068, %v3321, %v4067
    %vm4070 = vcmp.eq.f32.partialorder %v3321, 0.0
    %v4071 = vand.u32 %v3321, 2147483648
    %v4072 = vsel %vm4070, %v4071, %v4069
    %v4073 = vrsqrt.pop %v3323
    %v4074 = vmul.f32 %v3323, %v4073
    %vm4075 = vcmp.eq.f32.partialorder %v3323, inf
    %v4076 = vsel %vm4075, %v3323, %v4074
    %vm4077 = vcmp.eq.f32.partialorder %v3323, 0.0
    %v4078 = vand.u32 %v3323, 2147483648
    %v4079 = vsel %vm4077, %v4078, %v4076
    %v4080 = vrsqrt.pop %v3325
    %v4081 = vmul.f32 %v3325, %v4080
    %vm4082 = vcmp.eq.f32.partialorder %v3325, inf
    %v4083 = vsel %vm4082, %v3325, %v4081
    %vm4084 = vcmp.eq.f32.partialorder %v3325, 0.0
    %v4085 = vand.u32 %v3325, 2147483648
    %v4086 = vsel %vm4084, %v4085, %v4083
    %v4087 = vrsqrt.pop %v3327
    %v4088 = vmul.f32 %v3327, %v4087
    %vm4089 = vcmp.eq.f32.partialorder %v3327, inf
    %v4090 = vsel %vm4089, %v3327, %v4088
    %vm4091 = vcmp.eq.f32.partialorder %v3327, 0.0
    %v4092 = vand.u32 %v3327, 2147483648
    %v4093 = vsel %vm4091, %v4092, %v4090
    %v4094 = vrsqrt.pop %v3329
    %v4095 = vmul.f32 %v3329, %v4094
    %vm4096 = vcmp.eq.f32.partialorder %v3329, inf
    %v4097 = vsel %vm4096, %v3329, %v4095
    %vm4098 = vcmp.eq.f32.partialorder %v3329, 0.0
    %v4099 = vand.u32 %v3329, 2147483648
    %v4100 = vsel %vm4098, %v4099, %v4097
    %v4101 = vrsqrt.pop %v3331
    %v4102 = vmul.f32 %v3331, %v4101
    %vm4103 = vcmp.eq.f32.partialorder %v3331, inf
    %v4104 = vsel %vm4103, %v3331, %v4102
    %vm4105 = vcmp.eq.f32.partialorder %v3331, 0.0
    %v4106 = vand.u32 %v3331, 2147483648
    %v4107 = vsel %vm4105, %v4106, %v4104
    %v4108 = vrsqrt.pop %v3333
    %v4109 = vmul.f32 %v3333, %v4108
    %vm4110 = vcmp.eq.f32.partialorder %v3333, inf
    %v4111 = vsel %vm4110, %v3333, %v4109
    %vm4112 = vcmp.eq.f32.partialorder %v3333, 0.0
    %v4113 = vand.u32 %v3333, 2147483648
    %v4114 = vsel %vm4112, %v4113, %v4111
    %v4115 = vrsqrt.pop %v3335
    %v4116 = vmul.f32 %v3335, %v4115
    %vm4117 = vcmp.eq.f32.partialorder %v3335, inf
    %v4118 = vsel %vm4117, %v3335, %v4116
    %vm4119 = vcmp.eq.f32.partialorder %v3335, 0.0
    %v4120 = vand.u32 %v3335, 2147483648
    %v4121 = vsel %vm4119, %v4120, %v4118
    %v4122 = vrsqrt.pop %v3337
    %v4123 = vmul.f32 %v3337, %v4122
    %vm4124 = vcmp.eq.f32.partialorder %v3337, inf
    %v4125 = vsel %vm4124, %v3337, %v4123
    %vm4126 = vcmp.eq.f32.partialorder %v3337, 0.0
    %v4127 = vand.u32 %v3337, 2147483648
    %v4128 = vsel %vm4126, %v4127, %v4125
    %v4129 = vrsqrt.pop %v3339
    %v4130 = vmul.f32 %v3339, %v4129
    %vm4131 = vcmp.eq.f32.partialorder %v3339, inf
    %v4132 = vsel %vm4131, %v3339, %v4130
    %vm4133 = vcmp.eq.f32.partialorder %v3339, 0.0
    %v4134 = vand.u32 %v3339, 2147483648
    %v4135 = vsel %vm4133, %v4134, %v4132
    %v4136 = vrsqrt.pop %v3341
    %v4137 = vmul.f32 %v3341, %v4136
    %vm4138 = vcmp.eq.f32.partialorder %v3341, inf
    %v4139 = vsel %vm4138, %v3341, %v4137
    %vm4140 = vcmp.eq.f32.partialorder %v3341, 0.0
    %v4141 = vand.u32 %v3341, 2147483648
    %v4142 = vsel %vm4140, %v4141, %v4139
    %v4143 = vrsqrt.pop %v3343
    %v4144 = vmul.f32 %v3343, %v4143
    %vm4145 = vcmp.eq.f32.partialorder %v3343, inf
    %v4146 = vsel %vm4145, %v3343, %v4144
    %vm4147 = vcmp.eq.f32.partialorder %v3343, 0.0
    %v4148 = vand.u32 %v3343, 2147483648
    %v4149 = vsel %vm4147, %v4148, %v4146
    %v4150 = vrsqrt.pop %v3345
    %v4151 = vmul.f32 %v3345, %v4150
    %vm4152 = vcmp.eq.f32.partialorder %v3345, inf
    %v4153 = vsel %vm4152, %v3345, %v4151
    %vm4154 = vcmp.eq.f32.partialorder %v3345, 0.0
    %v4155 = vand.u32 %v3345, 2147483648
    %v4156 = vsel %vm4154, %v4155, %v4153
    %v4157 = vrsqrt.pop %v3347
    %v4158 = vmul.f32 %v3347, %v4157
    %vm4159 = vcmp.eq.f32.partialorder %v3347, inf
    %v4160 = vsel %vm4159, %v3347, %v4158
    %vm4161 = vcmp.eq.f32.partialorder %v3347, 0.0
    %v4162 = vand.u32 %v3347, 2147483648
    %v4163 = vsel %vm4161, %v4162, %v4160
    %v4164 = vrsqrt.pop %v3349
    %v4165 = vmul.f32 %v3349, %v4164
    %vm4166 = vcmp.eq.f32.partialorder %v3349, inf
    %v4167 = vsel %vm4166, %v3349, %v4165
    %vm4168 = vcmp.eq.f32.partialorder %v3349, 0.0
    %v4169 = vand.u32 %v3349, 2147483648
    %v4170 = vsel %vm4168, %v4169, %v4167
    %v4171 = vrsqrt.pop %v3351
    %v4172 = vmul.f32 %v3351, %v4171
    %vm4173 = vcmp.eq.f32.partialorder %v3351, inf
    %v4174 = vsel %vm4173, %v3351, %v4172
    %vm4175 = vcmp.eq.f32.partialorder %v3351, 0.0
    %v4176 = vand.u32 %v3351, 2147483648
    %v4177 = vsel %vm4175, %v4176, %v4174
    %v4178 = vrsqrt.pop %v3353
    %v4179 = vmul.f32 %v3353, %v4178
    %vm4180 = vcmp.eq.f32.partialorder %v3353, inf
    %v4181 = vsel %vm4180, %v3353, %v4179
    %vm4182 = vcmp.eq.f32.partialorder %v3353, 0.0
    %v4183 = vand.u32 %v3353, 2147483648
    %v4184 = vsel %vm4182, %v4183, %v4181
    %v4185 = vrsqrt.pop %v3355
    %v4186 = vmul.f32 %v3355, %v4185
    %vm4187 = vcmp.eq.f32.partialorder %v3355, inf
    %v4188 = vsel %vm4187, %v3355, %v4186
    %vm4189 = vcmp.eq.f32.partialorder %v3355, 0.0
    %v4190 = vand.u32 %v3355, 2147483648
    %v4191 = vsel %vm4189, %v4190, %v4188
    %v4192 = vrsqrt.pop %v3357
    %v4193 = vmul.f32 %v3357, %v4192
    %vm4194 = vcmp.eq.f32.partialorder %v3357, inf
    %v4195 = vsel %vm4194, %v3357, %v4193
    %vm4196 = vcmp.eq.f32.partialorder %v3357, 0.0
    %v4197 = vand.u32 %v3357, 2147483648
    %v4198 = vsel %vm4196, %v4197, %v4195
    %v4199 = vrsqrt.pop %v3359
    %v4200 = vmul.f32 %v3359, %v4199
    %vm4201 = vcmp.eq.f32.partialorder %v3359, inf
    %v4202 = vsel %vm4201, %v3359, %v4200
    %vm4203 = vcmp.eq.f32.partialorder %v3359, 0.0
    %v4204 = vand.u32 %v3359, 2147483648
    %v4205 = vsel %vm4203, %v4204, %v4202
    %v4206 = vrsqrt.pop %v3361
    %v4207 = vmul.f32 %v3361, %v4206
    %vm4208 = vcmp.eq.f32.partialorder %v3361, inf
    %v4209 = vsel %vm4208, %v3361, %v4207
    %vm4210 = vcmp.eq.f32.partialorder %v3361, 0.0
    %v4211 = vand.u32 %v3361, 2147483648
    %v4212 = vsel %vm4210, %v4211, %v4209
    %v4213 = vrsqrt.pop %v3363
    %v4214 = vmul.f32 %v3363, %v4213
    %vm4215 = vcmp.eq.f32.partialorder %v3363, inf
    %v4216 = vsel %vm4215, %v3363, %v4214
    %vm4217 = vcmp.eq.f32.partialorder %v3363, 0.0
    %v4218 = vand.u32 %v3363, 2147483648
    %v4219 = vsel %vm4217, %v4218, %v4216
    %v4220 = vrsqrt.pop %v3365
    %v4221 = vmul.f32 %v3365, %v4220
    %vm4222 = vcmp.eq.f32.partialorder %v3365, inf
    %v4223 = vsel %vm4222, %v3365, %v4221
    %vm4224 = vcmp.eq.f32.partialorder %v3365, 0.0
    %v4225 = vand.u32 %v3365, 2147483648
    %v4226 = vsel %vm4224, %v4225, %v4223
    %v4227 = vrsqrt.pop %v3367
    %v4228 = vmul.f32 %v3367, %v4227
    %vm4229 = vcmp.eq.f32.partialorder %v3367, inf
    %v4230 = vsel %vm4229, %v3367, %v4228
    %vm4231 = vcmp.eq.f32.partialorder %v3367, 0.0
    %v4232 = vand.u32 %v3367, 2147483648
    %v4233 = vsel %vm4231, %v4232, %v4230
    %v4234 = vrsqrt.pop %v3369
    %v4235 = vmul.f32 %v3369, %v4234
    %vm4236 = vcmp.eq.f32.partialorder %v3369, inf
    %v4237 = vsel %vm4236, %v3369, %v4235
    %vm4238 = vcmp.eq.f32.partialorder %v3369, 0.0
    %v4239 = vand.u32 %v3369, 2147483648
    %v4240 = vsel %vm4238, %v4239, %v4237
    %v4241 = vrsqrt.pop %v3371
    %v4242 = vmul.f32 %v3371, %v4241
    %vm4243 = vcmp.eq.f32.partialorder %v3371, inf
    %v4244 = vsel %vm4243, %v3371, %v4242
    %vm4245 = vcmp.eq.f32.partialorder %v3371, 0.0
    %v4246 = vand.u32 %v3371, 2147483648
    %v4247 = vsel %vm4245, %v4246, %v4244
    %v4248 = vrsqrt.pop %v3373
    %v4249 = vmul.f32 %v3373, %v4248
    %vm4250 = vcmp.eq.f32.partialorder %v3373, inf
    %v4251 = vsel %vm4250, %v3373, %v4249
    %vm4252 = vcmp.eq.f32.partialorder %v3373, 0.0
    %v4253 = vand.u32 %v3373, 2147483648
    %v4254 = vsel %vm4252, %v4253, %v4251
    %v4255 = vrsqrt.pop %v3375
    %v4256 = vmul.f32 %v3375, %v4255
    %vm4257 = vcmp.eq.f32.partialorder %v3375, inf
    %v4258 = vsel %vm4257, %v3375, %v4256
    %vm4259 = vcmp.eq.f32.partialorder %v3375, 0.0
    %v4260 = vand.u32 %v3375, 2147483648
    %v4261 = vsel %vm4259, %v4260, %v4258
    %v4262 = vrsqrt.pop %v3377
    %v4263 = vmul.f32 %v3377, %v4262
    %vm4264 = vcmp.eq.f32.partialorder %v3377, inf
    %v4265 = vsel %vm4264, %v3377, %v4263
    %vm4266 = vcmp.eq.f32.partialorder %v3377, 0.0
    %v4267 = vand.u32 %v3377, 2147483648
    %v4268 = vsel %vm4266, %v4267, %v4265
    %v4269 = vrsqrt.pop %v3379
    %v4270 = vmul.f32 %v3379, %v4269
    %vm4271 = vcmp.eq.f32.partialorder %v3379, inf
    %v4272 = vsel %vm4271, %v3379, %v4270
    %vm4273 = vcmp.eq.f32.partialorder %v3379, 0.0
    %v4274 = vand.u32 %v3379, 2147483648
    %v4275 = vsel %vm4273, %v4274, %v4272
    %v4276 = vsub.f32 0.0, %v2099
    %v4277 = vsub.f32 0.0, %v2100
    %v4278 = vsub.f32 0.0, %v2101
    %v4279 = vsub.f32 0.0, %v2102
    %v4280 = vsub.f32 0.0, %v2103
    %v4281 = vsub.f32 0.0, %v2104
    %v4282 = vsub.f32 0.0, %v2105
    %v4283 = vsub.f32 0.0, %v2106
    %v4284 = vsub.f32 0.0, %v2107
    %v4285 = vsub.f32 0.0, %v2108
    %v4286 = vsub.f32 0.0, %v2109
    %v4287 = vsub.f32 0.0, %v2110
    %v4288 = vsub.f32 0.0, %v2111
    %v4289 = vsub.f32 0.0, %v2112
    %v4290 = vsub.f32 0.0, %v2113
    %v4291 = vsub.f32 0.0, %v2114
    %v4292 = vsub.f32 0.0, %v2115
    %v4293 = vsub.f32 0.0, %v2116
    %v4294 = vsub.f32 0.0, %v2117
    %v4295 = vsub.f32 0.0, %v2118
    %v4296 = vsub.f32 0.0, %v2119
    %v4297 = vsub.f32 0.0, %v2120
    %v4298 = vsub.f32 0.0, %v2121
    %v4299 = vsub.f32 0.0, %v2122
    %v4300 = vsub.f32 0.0, %v2123
    %v4301 = vsub.f32 0.0, %v2124
    %v4302 = vsub.f32 0.0, %v2125
    %v4303 = vsub.f32 0.0, %v2126
    %v4304 = vsub.f32 0.0, %v2127
    %v4305 = vsub.f32 0.0, %v2128
    %v4306 = vsub.f32 0.0, %v2129
    %v4307 = vsub.f32 0.0, %v2130
    %v4308 = vsub.f32 0.0, %v2131
    %v4309 = vsub.f32 0.0, %v2132
    %v4310 = vsub.f32 0.0, %v2133
    %v4311 = vsub.f32 0.0, %v2134
    %v4312 = vsub.f32 0.0, %v2135
    %v4313 = vsub.f32 0.0, %v2136
    %v4314 = vsub.f32 0.0, %v2137
    %v4315 = vsub.f32 0.0, %v2138
    %v4316 = vsub.f32 0.0, %v2139
    %v4317 = vsub.f32 0.0, %v2140
    %v4318 = vsub.f32 0.0, %v2141
    %v4319 = vsub.f32 0.0, %v2142
    %v4320 = vsub.f32 0.0, %v2143
    %v4321 = vsub.f32 0.0, %v2144
    %v4322 = vsub.f32 0.0, %v2145
    %v4323 = vsub.f32 0.0, %v2146
    %v4324 = vsub.f32 0.0, %v2147
    %v4325 = vsub.f32 0.0, %v2148
    %v4326 = vsub.f32 0.0, %v2149
    %v4327 = vsub.f32 0.0, %v2150
    %v4328 = vsub.f32 0.0, %v2151
    %v4329 = vsub.f32 0.0, %v2152
    %v4330 = vsub.f32 0.0, %v2153
    %v4331 = vsub.f32 0.0, %v2154
    %v4332 = vsub.f32 0.0, %v2155
    %v4333 = vsub.f32 0.0, %v2156
    %v4334 = vsub.f32 0.0, %v2157
    %v4335 = vsub.f32 0.0, %v2158
    %v4336 = vsub.f32 0.0, %v2159
    %v4337 = vsub.f32 0.0, %v2160
    %v4338 = vsub.f32 0.0, %v2161
    %v4339 = vsub.f32 0.0, %v2162
    %v4340 = vsub.f32 0.0, %v2163
    %v4341 = vsub.f32 0.0, %v2164
    %v4342 = vsub.f32 0.0, %v2165
    %v4343 = vsub.f32 0.0, %v2166
    %v4344 = vsub.f32 0.0, %v2167
    %v4345 = vsub.f32 0.0, %v2168
    %v4346 = vsub.f32 0.0, %v2169
    %v4347 = vsub.f32 0.0, %v2170
    %v4348 = vsub.f32 0.0, %v2171
    %v4349 = vsub.f32 0.0, %v2172
    %v4350 = vsub.f32 0.0, %v2173
    %v4351 = vsub.f32 0.0, %v2174
    %v4352 = vsub.f32 0.0, %v2175
    %v4353 = vsub.f32 0.0, %v2176
    %v4354 = vsub.f32 0.0, %v2177
    %v4355 = vsub.f32 0.0, %v2178
    %v4356 = vsub.f32 0.0, %v2179
    %v4357 = vsub.f32 0.0, %v2180
    %v4358 = vsub.f32 0.0, %v2181
    %v4359 = vsub.f32 0.0, %v2182
    %v4360 = vsub.f32 0.0, %v2183
    %v4361 = vsub.f32 0.0, %v2184
    %v4362 = vsub.f32 0.0, %v2185
    %v4363 = vsub.f32 0.0, %v2186
    %v4364 = vsub.f32 0.0, %v2187
    %v4365 = vsub.f32 0.0, %v2188
    %v4366 = vsub.f32 0.0, %v2189
    %v4367 = vsub.f32 0.0, %v2190
    %v4368 = vsub.f32 0.0, %v2191
    %v4369 = vsub.f32 0.0, %v2192
    %v4370 = vsub.f32 0.0, %v2193
    %v4371 = vsub.f32 0.0, %v2194
    %v4372 = vsub.f32 0.0, %v2195
    %v4373 = vsub.f32 0.0, %v2196
    %v4374 = vsub.f32 0.0, %v2197
    %v4375 = vsub.f32 0.0, %v2198
    %v4376 = vsub.f32 0.0, %v2199
    %v4377 = vsub.f32 0.0, %v2200
    %v4378 = vsub.f32 0.0, %v2201
    %v4379 = vsub.f32 0.0, %v2202
    %v4380 = vsub.f32 0.0, %v2203
    %v4381 = vsub.f32 0.0, %v2204
    %v4382 = vsub.f32 0.0, %v2205
    %v4383 = vsub.f32 0.0, %v2206
    %v4384 = vsub.f32 0.0, %v2207
    %v4385 = vsub.f32 0.0, %v2208
    %v4386 = vsub.f32 0.0, %v2209
    %v4387 = vsub.f32 0.0, %v2210
    %v4388 = vsub.f32 0.0, %v2211
    %v4389 = vsub.f32 0.0, %v2212
    %v4390 = vsub.f32 0.0, %v2213
    %v4391 = vsub.f32 0.0, %v2214
    %v4392 = vsub.f32 0.0, %v2215
    %v4393 = vsub.f32 0.0, %v2216
    %v4394 = vsub.f32 0.0, %v2217
    %v4395 = vsub.f32 0.0, %v2218
    %v4396 = vsub.f32 0.0, %v2219
    %v4397 = vsub.f32 0.0, %v2220
    %v4398 = vsub.f32 0.0, %v2221
    %v4399 = vsub.f32 0.0, %v2222
    %v4400 = vsub.f32 0.0, %v2223
    %v4401 = vsub.f32 0.0, %v2224
    %v4402 = vsub.f32 0.0, %v2225
    %v4403 = vsub.f32 0.0, %v2226
    %4405 = vset.pattern.permute.xlu0 0
    %4406 = vperm.xlu0 %4405, %v3386
    %v4407 = vpop.permute.xlu0 %4406
    %4410 = vset.pattern.permute.xlu0 0
    %4411 = vperm.xlu0 %4410, %v3393
    %v4412 = vpop.permute.xlu0 %4411
    %4415 = vset.pattern.permute.xlu0 0
    %4416 = vperm.xlu0 %4415, %v3400
    %v4417 = vpop.permute.xlu0 %4416
    %4420 = vset.pattern.permute.xlu0 0
    %4421 = vperm.xlu0 %4420, %v3407
    %v4422 = vpop.permute.xlu0 %4421
    %4425 = vset.pattern.permute.xlu0 0
    %4426 = vperm.xlu0 %4425, %v3414
    %v4427 = vpop.permute.xlu0 %4426
    %4430 = vset.pattern.permute.xlu0 0
    %4431 = vperm.xlu0 %4430, %v3421
    %v4432 = vpop.permute.xlu0 %4431
    %4435 = vset.pattern.permute.xlu0 0
    %4436 = vperm.xlu0 %4435, %v3428
    %v4437 = vpop.permute.xlu0 %4436
    %4440 = vset.pattern.permute.xlu0 0
    %4441 = vperm.xlu0 %4440, %v3435
    %v4442 = vpop.permute.xlu0 %4441
    %4445 = vset.pattern.permute.xlu0 0
    %4446 = vperm.xlu0 %4445, %v3442
    %v4447 = vpop.permute.xlu0 %4446
    %4450 = vset.pattern.permute.xlu0 0
    %4451 = vperm.xlu0 %4450, %v3449
    %v4452 = vpop.permute.xlu0 %4451
    %4455 = vset.pattern.permute.xlu0 0
    %4456 = vperm.xlu0 %4455, %v3456
    %v4457 = vpop.permute.xlu0 %4456
    %4460 = vset.pattern.permute.xlu0 0
    %4461 = vperm.xlu0 %4460, %v3463
    %v4462 = vpop.permute.xlu0 %4461
    %4465 = vset.pattern.permute.xlu0 0
    %4466 = vperm.xlu0 %4465, %v3470
    %v4467 = vpop.permute.xlu0 %4466
    %4470 = vset.pattern.permute.xlu0 0
    %4471 = vperm.xlu0 %4470, %v3477
    %v4472 = vpop.permute.xlu0 %4471
    %4475 = vset.pattern.permute.xlu0 0
    %4476 = vperm.xlu0 %4475, %v3484
    %v4477 = vpop.permute.xlu0 %4476
    %4480 = vset.pattern.permute.xlu0 0
    %4481 = vperm.xlu0 %4480, %v3491
    %v4482 = vpop.permute.xlu0 %4481
    %4485 = vset.pattern.permute.xlu0 0
    %4486 = vperm.xlu0 %4485, %v3498
    %v4487 = vpop.permute.xlu0 %4486
    %4490 = vset.pattern.permute.xlu0 0
    %4491 = vperm.xlu0 %4490, %v3505
    %v4492 = vpop.permute.xlu0 %4491
    %4495 = vset.pattern.permute.xlu0 0
    %4496 = vperm.xlu0 %4495, %v3512
    %v4497 = vpop.permute.xlu0 %4496
    %4500 = vset.pattern.permute.xlu0 0
    %4501 = vperm.xlu0 %4500, %v3519
    %v4502 = vpop.permute.xlu0 %4501
    %4505 = vset.pattern.permute.xlu0 0
    %4506 = vperm.xlu0 %4505, %v3526
    %v4507 = vpop.permute.xlu0 %4506
    %4510 = vset.pattern.permute.xlu0 0
    %4511 = vperm.xlu0 %4510, %v3533
    %v4512 = vpop.permute.xlu0 %4511
    %4515 = vset.pattern.permute.xlu0 0
    %4516 = vperm.xlu0 %4515, %v3540
    %v4517 = vpop.permute.xlu0 %4516
    %4520 = vset.pattern.permute.xlu0 0
    %4521 = vperm.xlu0 %4520, %v3547
    %v4522 = vpop.permute.xlu0 %4521
    %4525 = vset.pattern.permute.xlu0 0
    %4526 = vperm.xlu0 %4525, %v3554
    %v4527 = vpop.permute.xlu0 %4526
    %4530 = vset.pattern.permute.xlu0 0
    %4531 = vperm.xlu0 %4530, %v3561
    %v4532 = vpop.permute.xlu0 %4531
    %4535 = vset.pattern.permute.xlu0 0
    %4536 = vperm.xlu0 %4535, %v3568
    %v4537 = vpop.permute.xlu0 %4536
    %4540 = vset.pattern.permute.xlu0 0
    %4541 = vperm.xlu0 %4540, %v3575
    %v4542 = vpop.permute.xlu0 %4541
    %4545 = vset.pattern.permute.xlu0 0
    %4546 = vperm.xlu0 %4545, %v3582
    %v4547 = vpop.permute.xlu0 %4546
    %4550 = vset.pattern.permute.xlu0 0
    %4551 = vperm.xlu0 %4550, %v3589
    %v4552 = vpop.permute.xlu0 %4551
    %4555 = vset.pattern.permute.xlu0 0
    %4556 = vperm.xlu0 %4555, %v3596
    %v4557 = vpop.permute.xlu0 %4556
    %4560 = vset.pattern.permute.xlu0 0
    %4561 = vperm.xlu0 %4560, %v3603
    %v4562 = vpop.permute.xlu0 %4561
    %4565 = vset.pattern.permute.xlu0 0
    %4566 = vperm.xlu0 %4565, %v3610
    %v4567 = vpop.permute.xlu0 %4566
    %4570 = vset.pattern.permute.xlu0 0
    %4571 = vperm.xlu0 %4570, %v3617
    %v4572 = vpop.permute.xlu0 %4571
    %4575 = vset.pattern.permute.xlu0 0
    %4576 = vperm.xlu0 %4575, %v3624
    %v4577 = vpop.permute.xlu0 %4576
    %4580 = vset.pattern.permute.xlu0 0
    %4581 = vperm.xlu0 %4580, %v3631
    %v4582 = vpop.permute.xlu0 %4581
    %4585 = vset.pattern.permute.xlu0 0
    %4586 = vperm.xlu0 %4585, %v3638
    %v4587 = vpop.permute.xlu0 %4586
    %4590 = vset.pattern.permute.xlu0 0
    %4591 = vperm.xlu0 %4590, %v3645
    %v4592 = vpop.permute.xlu0 %4591
    %4595 = vset.pattern.permute.xlu0 0
    %4596 = vperm.xlu0 %4595, %v3652
    %v4597 = vpop.permute.xlu0 %4596
    %4600 = vset.pattern.permute.xlu0 0
    %4601 = vperm.xlu0 %4600, %v3659
    %v4602 = vpop.permute.xlu0 %4601
    %4605 = vset.pattern.permute.xlu0 0
    %4606 = vperm.xlu0 %4605, %v3666
    %v4607 = vpop.permute.xlu0 %4606
    %4610 = vset.pattern.permute.xlu0 0
    %4611 = vperm.xlu0 %4610, %v3673
    %v4612 = vpop.permute.xlu0 %4611
    %4615 = vset.pattern.permute.xlu0 0
    %4616 = vperm.xlu0 %4615, %v3680
    %v4617 = vpop.permute.xlu0 %4616
    %4620 = vset.pattern.permute.xlu0 0
    %4621 = vperm.xlu0 %4620, %v3687
    %v4622 = vpop.permute.xlu0 %4621
    %4625 = vset.pattern.permute.xlu0 0
    %4626 = vperm.xlu0 %4625, %v3694
    %v4627 = vpop.permute.xlu0 %4626
    %4630 = vset.pattern.permute.xlu0 0
    %4631 = vperm.xlu0 %4630, %v3701
    %v4632 = vpop.permute.xlu0 %4631
    %4635 = vset.pattern.permute.xlu0 0
    %4636 = vperm.xlu0 %4635, %v3708
    %v4637 = vpop.permute.xlu0 %4636
    %4640 = vset.pattern.permute.xlu0 0
    %4641 = vperm.xlu0 %4640, %v3715
    %v4642 = vpop.permute.xlu0 %4641
    %4645 = vset.pattern.permute.xlu0 0
    %4646 = vperm.xlu0 %4645, %v3722
    %v4647 = vpop.permute.xlu0 %4646
    %4650 = vset.pattern.permute.xlu0 0
    %4651 = vperm.xlu0 %4650, %v3729
    %v4652 = vpop.permute.xlu0 %4651
    %4655 = vset.pattern.permute.xlu0 0
    %4656 = vperm.xlu0 %4655, %v3736
    %v4657 = vpop.permute.xlu0 %4656
    %4660 = vset.pattern.permute.xlu0 0
    %4661 = vperm.xlu0 %4660, %v3743
    %v4662 = vpop.permute.xlu0 %4661
    %4665 = vset.pattern.permute.xlu0 0
    %4666 = vperm.xlu0 %4665, %v3750
    %v4667 = vpop.permute.xlu0 %4666
    %4670 = vset.pattern.permute.xlu0 0
    %4671 = vperm.xlu0 %4670, %v3757
    %v4672 = vpop.permute.xlu0 %4671
    %4675 = vset.pattern.permute.xlu0 0
    %4676 = vperm.xlu0 %4675, %v3764
    %v4677 = vpop.permute.xlu0 %4676
    %4680 = vset.pattern.permute.xlu0 0
    %4681 = vperm.xlu0 %4680, %v3771
    %v4682 = vpop.permute.xlu0 %4681
    %4685 = vset.pattern.permute.xlu0 0
    %4686 = vperm.xlu0 %4685, %v3778
    %v4687 = vpop.permute.xlu0 %4686
    %4690 = vset.pattern.permute.xlu0 0
    %4691 = vperm.xlu0 %4690, %v3785
    %v4692 = vpop.permute.xlu0 %4691
    %4695 = vset.pattern.permute.xlu0 0
    %4696 = vperm.xlu0 %4695, %v3792
    %v4697 = vpop.permute.xlu0 %4696
    %4700 = vset.pattern.permute.xlu0 0
    %4701 = vperm.xlu0 %4700, %v3799
    %v4702 = vpop.permute.xlu0 %4701
    %4705 = vset.pattern.permute.xlu0 0
    %4706 = vperm.xlu0 %4705, %v3806
    %v4707 = vpop.permute.xlu0 %4706
    %4710 = vset.pattern.permute.xlu0 0
    %4711 = vperm.xlu0 %4710, %v3813
    %v4712 = vpop.permute.xlu0 %4711
    %4715 = vset.pattern.permute.xlu0 0
    %4716 = vperm.xlu0 %4715, %v3820
    %v4717 = vpop.permute.xlu0 %4716
    %4720 = vset.pattern.permute.xlu0 0
    %4721 = vperm.xlu0 %4720, %v3827
    %v4722 = vpop.permute.xlu0 %4721
    %4725 = vset.pattern.permute.xlu0 0
    %4726 = vperm.xlu0 %4725, %v3834
    %v4727 = vpop.permute.xlu0 %4726
    %4730 = vset.pattern.permute.xlu0 0
    %4731 = vperm.xlu0 %4730, %v3841
    %v4732 = vpop.permute.xlu0 %4731
    %4735 = vset.pattern.permute.xlu0 0
    %4736 = vperm.xlu0 %4735, %v3848
    %v4737 = vpop.permute.xlu0 %4736
    %4740 = vset.pattern.permute.xlu0 0
    %4741 = vperm.xlu0 %4740, %v3855
    %v4742 = vpop.permute.xlu0 %4741
    %4745 = vset.pattern.permute.xlu0 0
    %4746 = vperm.xlu0 %4745, %v3862
    %v4747 = vpop.permute.xlu0 %4746
    %4750 = vset.pattern.permute.xlu0 0
    %4751 = vperm.xlu0 %4750, %v3869
    %v4752 = vpop.permute.xlu0 %4751
    %4755 = vset.pattern.permute.xlu0 0
    %4756 = vperm.xlu0 %4755, %v3876
    %v4757 = vpop.permute.xlu0 %4756
    %4760 = vset.pattern.permute.xlu0 0
    %4761 = vperm.xlu0 %4760, %v3883
    %v4762 = vpop.permute.xlu0 %4761
    %4765 = vset.pattern.permute.xlu0 0
    %4766 = vperm.xlu0 %4765, %v3890
    %v4767 = vpop.permute.xlu0 %4766
    %4770 = vset.pattern.permute.xlu0 0
    %4771 = vperm.xlu0 %4770, %v3897
    %v4772 = vpop.permute.xlu0 %4771
    %4775 = vset.pattern.permute.xlu0 0
    %4776 = vperm.xlu0 %4775, %v3904
    %v4777 = vpop.permute.xlu0 %4776
    %4780 = vset.pattern.permute.xlu0 0
    %4781 = vperm.xlu0 %4780, %v3911
    %v4782 = vpop.permute.xlu0 %4781
    %4785 = vset.pattern.permute.xlu0 0
    %4786 = vperm.xlu0 %4785, %v3918
    %v4787 = vpop.permute.xlu0 %4786
    %4790 = vset.pattern.permute.xlu0 0
    %4791 = vperm.xlu0 %4790, %v3925
    %v4792 = vpop.permute.xlu0 %4791
    %4795 = vset.pattern.permute.xlu0 0
    %4796 = vperm.xlu0 %4795, %v3932
    %v4797 = vpop.permute.xlu0 %4796
    %4800 = vset.pattern.permute.xlu0 0
    %4801 = vperm.xlu0 %4800, %v3939
    %v4802 = vpop.permute.xlu0 %4801
    %4805 = vset.pattern.permute.xlu0 0
    %4806 = vperm.xlu0 %4805, %v3946
    %v4807 = vpop.permute.xlu0 %4806
    %4810 = vset.pattern.permute.xlu0 0
    %4811 = vperm.xlu0 %4810, %v3953
    %v4812 = vpop.permute.xlu0 %4811
    %4815 = vset.pattern.permute.xlu0 0
    %4816 = vperm.xlu0 %4815, %v3960
    %v4817 = vpop.permute.xlu0 %4816
    %4820 = vset.pattern.permute.xlu0 0
    %4821 = vperm.xlu0 %4820, %v3967
    %v4822 = vpop.permute.xlu0 %4821
    %4825 = vset.pattern.permute.xlu0 0
    %4826 = vperm.xlu0 %4825, %v3974
    %v4827 = vpop.permute.xlu0 %4826
    %4830 = vset.pattern.permute.xlu0 0
    %4831 = vperm.xlu0 %4830, %v3981
    %v4832 = vpop.permute.xlu0 %4831
    %4835 = vset.pattern.permute.xlu0 0
    %4836 = vperm.xlu0 %4835, %v3988
    %v4837 = vpop.permute.xlu0 %4836
    %4840 = vset.pattern.permute.xlu0 0
    %4841 = vperm.xlu0 %4840, %v3995
    %v4842 = vpop.permute.xlu0 %4841
    %4845 = vset.pattern.permute.xlu0 0
    %4846 = vperm.xlu0 %4845, %v4002
    %v4847 = vpop.permute.xlu0 %4846
    %4850 = vset.pattern.permute.xlu0 0
    %4851 = vperm.xlu0 %4850, %v4009
    %v4852 = vpop.permute.xlu0 %4851
    %4855 = vset.pattern.permute.xlu0 0
    %4856 = vperm.xlu0 %4855, %v4016
    %v4857 = vpop.permute.xlu0 %4856
    %4860 = vset.pattern.permute.xlu0 0
    %4861 = vperm.xlu0 %4860, %v4023
    %v4862 = vpop.permute.xlu0 %4861
    %4865 = vset.pattern.permute.xlu0 0
    %4866 = vperm.xlu0 %4865, %v4030
    %v4867 = vpop.permute.xlu0 %4866
    %4870 = vset.pattern.permute.xlu0 0
    %4871 = vperm.xlu0 %4870, %v4037
    %v4872 = vpop.permute.xlu0 %4871
    %4875 = vset.pattern.permute.xlu0 0
    %4876 = vperm.xlu0 %4875, %v4044
    %v4877 = vpop.permute.xlu0 %4876
    %4880 = vset.pattern.permute.xlu0 0
    %4881 = vperm.xlu0 %4880, %v4051
    %v4882 = vpop.permute.xlu0 %4881
    %4885 = vset.pattern.permute.xlu0 0
    %4886 = vperm.xlu0 %4885, %v4058
    %v4887 = vpop.permute.xlu0 %4886
    %4890 = vset.pattern.permute.xlu0 0
    %4891 = vperm.xlu0 %4890, %v4065
    %v4892 = vpop.permute.xlu0 %4891
    %4895 = vset.pattern.permute.xlu0 0
    %4896 = vperm.xlu0 %4895, %v4072
    %v4897 = vpop.permute.xlu0 %4896
    %4900 = vset.pattern.permute.xlu0 0
    %4901 = vperm.xlu0 %4900, %v4079
    %v4902 = vpop.permute.xlu0 %4901
    %4905 = vset.pattern.permute.xlu0 0
    %4906 = vperm.xlu0 %4905, %v4086
    %v4907 = vpop.permute.xlu0 %4906
    %4910 = vset.pattern.permute.xlu0 0
    %4911 = vperm.xlu0 %4910, %v4093
    %v4912 = vpop.permute.xlu0 %4911
    %4915 = vset.pattern.permute.xlu0 0
    %4916 = vperm.xlu0 %4915, %v4100
    %v4917 = vpop.permute.xlu0 %4916
    %4920 = vset.pattern.permute.xlu0 0
    %4921 = vperm.xlu0 %4920, %v4107
    %v4922 = vpop.permute.xlu0 %4921
    %4925 = vset.pattern.permute.xlu0 0
    %4926 = vperm.xlu0 %4925, %v4114
    %v4927 = vpop.permute.xlu0 %4926
    %4930 = vset.pattern.permute.xlu0 0
    %4931 = vperm.xlu0 %4930, %v4121
    %v4932 = vpop.permute.xlu0 %4931
    %4935 = vset.pattern.permute.xlu0 0
    %4936 = vperm.xlu0 %4935, %v4128
    %v4937 = vpop.permute.xlu0 %4936
    %4940 = vset.pattern.permute.xlu0 0
    %4941 = vperm.xlu0 %4940, %v4135
    %v4942 = vpop.permute.xlu0 %4941
    %4945 = vset.pattern.permute.xlu0 0
    %4946 = vperm.xlu0 %4945, %v4142
    %v4947 = vpop.permute.xlu0 %4946
    %4950 = vset.pattern.permute.xlu0 0
    %4951 = vperm.xlu0 %4950, %v4149
    %v4952 = vpop.permute.xlu0 %4951
    %4955 = vset.pattern.permute.xlu0 0
    %4956 = vperm.xlu0 %4955, %v4156
    %v4957 = vpop.permute.xlu0 %4956
    %4960 = vset.pattern.permute.xlu0 0
    %4961 = vperm.xlu0 %4960, %v4163
    %v4962 = vpop.permute.xlu0 %4961
    %4965 = vset.pattern.permute.xlu0 0
    %4966 = vperm.xlu0 %4965, %v4170
    %v4967 = vpop.permute.xlu0 %4966
    %4970 = vset.pattern.permute.xlu0 0
    %4971 = vperm.xlu0 %4970, %v4177
    %v4972 = vpop.permute.xlu0 %4971
    %4975 = vset.pattern.permute.xlu0 0
    %4976 = vperm.xlu0 %4975, %v4184
    %v4977 = vpop.permute.xlu0 %4976
    %4980 = vset.pattern.permute.xlu0 0
    %4981 = vperm.xlu0 %4980, %v4191
    %v4982 = vpop.permute.xlu0 %4981
    %4985 = vset.pattern.permute.xlu0 0
    %4986 = vperm.xlu0 %4985, %v4198
    %v4987 = vpop.permute.xlu0 %4986
    %4990 = vset.pattern.permute.xlu0 0
    %4991 = vperm.xlu0 %4990, %v4205
    %v4992 = vpop.permute.xlu0 %4991
    %4995 = vset.pattern.permute.xlu0 0
    %4996 = vperm.xlu0 %4995, %v4212
    %v4997 = vpop.permute.xlu0 %4996
    %5000 = vset.pattern.permute.xlu0 0
    %5001 = vperm.xlu0 %5000, %v4219
    %v5002 = vpop.permute.xlu0 %5001
    %5005 = vset.pattern.permute.xlu0 0
    %5006 = vperm.xlu0 %5005, %v4226
    %v5007 = vpop.permute.xlu0 %5006
    %5010 = vset.pattern.permute.xlu0 0
    %5011 = vperm.xlu0 %5010, %v4233
    %v5012 = vpop.permute.xlu0 %5011
    %5015 = vset.pattern.permute.xlu0 0
    %5016 = vperm.xlu0 %5015, %v4240
    %v5017 = vpop.permute.xlu0 %5016
    %5020 = vset.pattern.permute.xlu0 0
    %5021 = vperm.xlu0 %5020, %v4247
    %v5022 = vpop.permute.xlu0 %5021
    %5025 = vset.pattern.permute.xlu0 0
    %5026 = vperm.xlu0 %5025, %v4254
    %v5027 = vpop.permute.xlu0 %5026
    %5030 = vset.pattern.permute.xlu0 0
    %5031 = vperm.xlu0 %5030, %v4261
    %v5032 = vpop.permute.xlu0 %5031
    %5035 = vset.pattern.permute.xlu0 0
    %5036 = vperm.xlu0 %5035, %v4268
    %v5037 = vpop.permute.xlu0 %5036
    %5040 = vset.pattern.permute.xlu0 0
    %5041 = vperm.xlu0 %5040, %v4275
    %v5042 = vpop.permute.xlu0 %5041
    %v5044 = vmul.f32 %v2228, %v4407
    %v5045 = vmul.f32 %v2229, %v4412
    %v5046 = vmul.f32 %v2230, %v4417
    %v5047 = vmul.f32 %v2231, %v4422
    %v5048 = vmul.f32 %v2232, %v4427
    %v5049 = vmul.f32 %v2233, %v4432
    %v5050 = vmul.f32 %v2234, %v4437
    %v5051 = vmul.f32 %v2235, %v4442
    %v5052 = vmul.f32 %v2236, %v4447
    %v5053 = vmul.f32 %v2237, %v4452
    %v5054 = vmul.f32 %v2238, %v4457
    %v5055 = vmul.f32 %v2239, %v4462
    %v5056 = vmul.f32 %v2240, %v4467
    %v5057 = vmul.f32 %v2241, %v4472
    %v5058 = vmul.f32 %v2242, %v4477
    %v5059 = vmul.f32 %v2243, %v4482
    %v5060 = vmul.f32 %v2244, %v4487
    %v5061 = vmul.f32 %v2245, %v4492
    %v5062 = vmul.f32 %v2246, %v4497
    %v5063 = vmul.f32 %v2247, %v4502
    %v5064 = vmul.f32 %v2248, %v4507
    %v5065 = vmul.f32 %v2249, %v4512
    %v5066 = vmul.f32 %v2250, %v4517
    %v5067 = vmul.f32 %v2251, %v4522
    %v5068 = vmul.f32 %v2252, %v4527
    %v5069 = vmul.f32 %v2253, %v4532
    %v5070 = vmul.f32 %v2254, %v4537
    %v5071 = vmul.f32 %v2255, %v4542
    %v5072 = vmul.f32 %v2256, %v4547
    %v5073 = vmul.f32 %v2257, %v4552
    %v5074 = vmul.f32 %v2258, %v4557
    %v5075 = vmul.f32 %v2259, %v4562
    %v5076 = vmul.f32 %v2260, %v4567
    %v5077 = vmul.f32 %v2261, %v4572
    %v5078 = vmul.f32 %v2262, %v4577
    %v5079 = vmul.f32 %v2263, %v4582
    %v5080 = vmul.f32 %v2264, %v4587
    %v5081 = vmul.f32 %v2265, %v4592
    %v5082 = vmul.f32 %v2266, %v4597
    %v5083 = vmul.f32 %v2267, %v4602
    %v5084 = vmul.f32 %v2268, %v4607
    %v5085 = vmul.f32 %v2269, %v4612
    %v5086 = vmul.f32 %v2270, %v4617
    %v5087 = vmul.f32 %v2271, %v4622
    %v5088 = vmul.f32 %v2272, %v4627
    %v5089 = vmul.f32 %v2273, %v4632
    %v5090 = vmul.f32 %v2274, %v4637
    %v5091 = vmul.f32 %v2275, %v4642
    %v5092 = vmul.f32 %v2276, %v4647
    %v5093 = vmul.f32 %v2277, %v4652
    %v5094 = vmul.f32 %v2278, %v4657
    %v5095 = vmul.f32 %v2279, %v4662
    %v5096 = vmul.f32 %v2280, %v4667
    %v5097 = vmul.f32 %v2281, %v4672
    %v5098 = vmul.f32 %v2282, %v4677
    %v5099 = vmul.f32 %v2283, %v4682
    %v5100 = vmul.f32 %v2284, %v4687
    %v5101 = vmul.f32 %v2285, %v4692
    %v5102 = vmul.f32 %v2286, %v4697
    %v5103 = vmul.f32 %v2287, %v4702
    %v5104 = vmul.f32 %v2288, %v4707
    %v5105 = vmul.f32 %v2289, %v4712
    %v5106 = vmul.f32 %v2290, %v4717
    %v5107 = vmul.f32 %v2291, %v4722
    %v5108 = vmul.f32 %v2292, %v4727
    %v5109 = vmul.f32 %v2293, %v4732
    %v5110 = vmul.f32 %v2294, %v4737
    %v5111 = vmul.f32 %v2295, %v4742
    %v5112 = vmul.f32 %v2296, %v4747
    %v5113 = vmul.f32 %v2297, %v4752
    %v5114 = vmul.f32 %v2298, %v4757
    %v5115 = vmul.f32 %v2299, %v4762
    %v5116 = vmul.f32 %v2300, %v4767
    %v5117 = vmul.f32 %v2301, %v4772
    %v5118 = vmul.f32 %v2302, %v4777
    %v5119 = vmul.f32 %v2303, %v4782
    %v5120 = vmul.f32 %v2304, %v4787
    %v5121 = vmul.f32 %v2305, %v4792
    %v5122 = vmul.f32 %v2306, %v4797
    %v5123 = vmul.f32 %v2307, %v4802
    %v5124 = vmul.f32 %v2308, %v4807
    %v5125 = vmul.f32 %v2309, %v4812
    %v5126 = vmul.f32 %v2310, %v4817
    %v5127 = vmul.f32 %v2311, %v4822
    %v5128 = vmul.f32 %v2312, %v4827
    %v5129 = vmul.f32 %v2313, %v4832
    %v5130 = vmul.f32 %v2314, %v4837
    %v5131 = vmul.f32 %v2315, %v4842
    %v5132 = vmul.f32 %v2316, %v4847
    %v5133 = vmul.f32 %v2317, %v4852
    %v5134 = vmul.f32 %v2318, %v4857
    %v5135 = vmul.f32 %v2319, %v4862
    %v5136 = vmul.f32 %v2320, %v4867
    %v5137 = vmul.f32 %v2321, %v4872
    %v5138 = vmul.f32 %v2322, %v4877
    %v5139 = vmul.f32 %v2323, %v4882
    %v5140 = vmul.f32 %v2324, %v4887
    %v5141 = vmul.f32 %v2325, %v4892
    %v5142 = vmul.f32 %v2326, %v4897
    %v5143 = vmul.f32 %v2327, %v4902
    %v5144 = vmul.f32 %v2328, %v4907
    %v5145 = vmul.f32 %v2329, %v4912
    %v5146 = vmul.f32 %v2330, %v4917
    %v5147 = vmul.f32 %v2331, %v4922
    %v5148 = vmul.f32 %v2332, %v4927
    %v5149 = vmul.f32 %v2333, %v4932
    %v5150 = vmul.f32 %v2334, %v4937
    %v5151 = vmul.f32 %v2335, %v4942
    %v5152 = vmul.f32 %v2336, %v4947
    %v5153 = vmul.f32 %v2337, %v4952
    %v5154 = vmul.f32 %v2338, %v4957
    %v5155 = vmul.f32 %v2339, %v4962
    %v5156 = vmul.f32 %v2340, %v4967
    %v5157 = vmul.f32 %v2341, %v4972
    %v5158 = vmul.f32 %v2342, %v4977
    %v5159 = vmul.f32 %v2343, %v4982
    %v5160 = vmul.f32 %v2344, %v4987
    %v5161 = vmul.f32 %v2345, %v4992
    %v5162 = vmul.f32 %v2346, %v4997
    %v5163 = vmul.f32 %v2347, %v5002
    %v5164 = vmul.f32 %v2348, %v5007
    %v5165 = vmul.f32 %v2349, %v5012
    %v5166 = vmul.f32 %v2350, %v5017
    %v5167 = vmul.f32 %v2351, %v5022
    %v5168 = vmul.f32 %v2352, %v5027
    %v5169 = vmul.f32 %v2353, %v5032
    %v5170 = vmul.f32 %v2354, %v5037
    %v5171 = vmul.f32 %v2355, %v5042
    %5173 = vset.pattern.permute.xlu0 0
    %5174 = vperm.xlu0 %5173, %v4276
    %v5175 = vpop.permute.xlu0 %5174
    %5178 = vset.pattern.permute.xlu0 0
    %5179 = vperm.xlu0 %5178, %v4277
    %v5180 = vpop.permute.xlu0 %5179
    %5183 = vset.pattern.permute.xlu0 0
    %5184 = vperm.xlu0 %5183, %v4278
    %v5185 = vpop.permute.xlu0 %5184
    %5188 = vset.pattern.permute.xlu0 0
    %5189 = vperm.xlu0 %5188, %v4279
    %v5190 = vpop.permute.xlu0 %5189
    %5193 = vset.pattern.permute.xlu0 0
    %5194 = vperm.xlu0 %5193, %v4280
    %v5195 = vpop.permute.xlu0 %5194
    %5198 = vset.pattern.permute.xlu0 0
    %5199 = vperm.xlu0 %5198, %v4281
    %v5200 = vpop.permute.xlu0 %5199
    %5203 = vset.pattern.permute.xlu0 0
    %5204 = vperm.xlu0 %5203, %v4282
    %v5205 = vpop.permute.xlu0 %5204
    %5208 = vset.pattern.permute.xlu0 0
    %5209 = vperm.xlu0 %5208, %v4283
    %v5210 = vpop.permute.xlu0 %5209
    %5213 = vset.pattern.permute.xlu0 0
    %5214 = vperm.xlu0 %5213, %v4284
    %v5215 = vpop.permute.xlu0 %5214
    %5218 = vset.pattern.permute.xlu0 0
    %5219 = vperm.xlu0 %5218, %v4285
    %v5220 = vpop.permute.xlu0 %5219
    %5223 = vset.pattern.permute.xlu0 0
    %5224 = vperm.xlu0 %5223, %v4286
    %v5225 = vpop.permute.xlu0 %5224
    %5228 = vset.pattern.permute.xlu0 0
    %5229 = vperm.xlu0 %5228, %v4287
    %v5230 = vpop.permute.xlu0 %5229
    %5233 = vset.pattern.permute.xlu0 0
    %5234 = vperm.xlu0 %5233, %v4288
    %v5235 = vpop.permute.xlu0 %5234
    %5238 = vset.pattern.permute.xlu0 0
    %5239 = vperm.xlu0 %5238, %v4289
    %v5240 = vpop.permute.xlu0 %5239
    %5243 = vset.pattern.permute.xlu0 0
    %5244 = vperm.xlu0 %5243, %v4290
    %v5245 = vpop.permute.xlu0 %5244
    %5248 = vset.pattern.permute.xlu0 0
    %5249 = vperm.xlu0 %5248, %v4291
    %v5250 = vpop.permute.xlu0 %5249
    %5253 = vset.pattern.permute.xlu0 0
    %5254 = vperm.xlu0 %5253, %v4292
    %v5255 = vpop.permute.xlu0 %5254
    %5258 = vset.pattern.permute.xlu0 0
    %5259 = vperm.xlu0 %5258, %v4293
    %v5260 = vpop.permute.xlu0 %5259
    %5263 = vset.pattern.permute.xlu0 0
    %5264 = vperm.xlu0 %5263, %v4294
    %v5265 = vpop.permute.xlu0 %5264
    %5268 = vset.pattern.permute.xlu0 0
    %5269 = vperm.xlu0 %5268, %v4295
    %v5270 = vpop.permute.xlu0 %5269
    %5273 = vset.pattern.permute.xlu0 0
    %5274 = vperm.xlu0 %5273, %v4296
    %v5275 = vpop.permute.xlu0 %5274
    %5278 = vset.pattern.permute.xlu0 0
    %5279 = vperm.xlu0 %5278, %v4297
    %v5280 = vpop.permute.xlu0 %5279
    %5283 = vset.pattern.permute.xlu0 0
    %5284 = vperm.xlu0 %5283, %v4298
    %v5285 = vpop.permute.xlu0 %5284
    %5288 = vset.pattern.permute.xlu0 0
    %5289 = vperm.xlu0 %5288, %v4299
    %v5290 = vpop.permute.xlu0 %5289
    %5293 = vset.pattern.permute.xlu0 0
    %5294 = vperm.xlu0 %5293, %v4300
    %v5295 = vpop.permute.xlu0 %5294
    %5298 = vset.pattern.permute.xlu0 0
    %5299 = vperm.xlu0 %5298, %v4301
    %v5300 = vpop.permute.xlu0 %5299
    %5303 = vset.pattern.permute.xlu0 0
    %5304 = vperm.xlu0 %5303, %v4302
    %v5305 = vpop.permute.xlu0 %5304
    %5308 = vset.pattern.permute.xlu0 0
    %5309 = vperm.xlu0 %5308, %v4303
    %v5310 = vpop.permute.xlu0 %5309
    %5313 = vset.pattern.permute.xlu0 0
    %5314 = vperm.xlu0 %5313, %v4304
    %v5315 = vpop.permute.xlu0 %5314
    %5318 = vset.pattern.permute.xlu0 0
    %5319 = vperm.xlu0 %5318, %v4305
    %v5320 = vpop.permute.xlu0 %5319
    %5323 = vset.pattern.permute.xlu0 0
    %5324 = vperm.xlu0 %5323, %v4306
    %v5325 = vpop.permute.xlu0 %5324
    %5328 = vset.pattern.permute.xlu0 0
    %5329 = vperm.xlu0 %5328, %v4307
    %v5330 = vpop.permute.xlu0 %5329
    %5333 = vset.pattern.permute.xlu0 0
    %5334 = vperm.xlu0 %5333, %v4308
    %v5335 = vpop.permute.xlu0 %5334
    %5338 = vset.pattern.permute.xlu0 0
    %5339 = vperm.xlu0 %5338, %v4309
    %v5340 = vpop.permute.xlu0 %5339
    %5343 = vset.pattern.permute.xlu0 0
    %5344 = vperm.xlu0 %5343, %v4310
    %v5345 = vpop.permute.xlu0 %5344
    %5348 = vset.pattern.permute.xlu0 0
    %5349 = vperm.xlu0 %5348, %v4311
    %v5350 = vpop.permute.xlu0 %5349
    %5353 = vset.pattern.permute.xlu0 0
    %5354 = vperm.xlu0 %5353, %v4312
    %v5355 = vpop.permute.xlu0 %5354
    %5358 = vset.pattern.permute.xlu0 0
    %5359 = vperm.xlu0 %5358, %v4313
    %v5360 = vpop.permute.xlu0 %5359
    %5363 = vset.pattern.permute.xlu0 0
    %5364 = vperm.xlu0 %5363, %v4314
    %v5365 = vpop.permute.xlu0 %5364
    %5368 = vset.pattern.permute.xlu0 0
    %5369 = vperm.xlu0 %5368, %v4315
    %v5370 = vpop.permute.xlu0 %5369
    %5373 = vset.pattern.permute.xlu0 0
    %5374 = vperm.xlu0 %5373, %v4316
    %v5375 = vpop.permute.xlu0 %5374
    %5378 = vset.pattern.permute.xlu0 0
    %5379 = vperm.xlu0 %5378, %v4317
    %v5380 = vpop.permute.xlu0 %5379
    %5383 = vset.pattern.permute.xlu0 0
    %5384 = vperm.xlu0 %5383, %v4318
    %v5385 = vpop.permute.xlu0 %5384
    %5388 = vset.pattern.permute.xlu0 0
    %5389 = vperm.xlu0 %5388, %v4319
    %v5390 = vpop.permute.xlu0 %5389
    %5393 = vset.pattern.permute.xlu0 0
    %5394 = vperm.xlu0 %5393, %v4320
    %v5395 = vpop.permute.xlu0 %5394
    %5398 = vset.pattern.permute.xlu0 0
    %5399 = vperm.xlu0 %5398, %v4321
    %v5400 = vpop.permute.xlu0 %5399
    %5403 = vset.pattern.permute.xlu0 0
    %5404 = vperm.xlu0 %5403, %v4322
    %v5405 = vpop.permute.xlu0 %5404
    %5408 = vset.pattern.permute.xlu0 0
    %5409 = vperm.xlu0 %5408, %v4323
    %v5410 = vpop.permute.xlu0 %5409
    %5413 = vset.pattern.permute.xlu0 0
    %5414 = vperm.xlu0 %5413, %v4324
    %v5415 = vpop.permute.xlu0 %5414
    %5418 = vset.pattern.permute.xlu0 0
    %5419 = vperm.xlu0 %5418, %v4325
    %v5420 = vpop.permute.xlu0 %5419
    %5423 = vset.pattern.permute.xlu0 0
    %5424 = vperm.xlu0 %5423, %v4326
    %v5425 = vpop.permute.xlu0 %5424
    %5428 = vset.pattern.permute.xlu0 0
    %5429 = vperm.xlu0 %5428, %v4327
    %v5430 = vpop.permute.xlu0 %5429
    %5433 = vset.pattern.permute.xlu0 0
    %5434 = vperm.xlu0 %5433, %v4328
    %v5435 = vpop.permute.xlu0 %5434
    %5438 = vset.pattern.permute.xlu0 0
    %5439 = vperm.xlu0 %5438, %v4329
    %v5440 = vpop.permute.xlu0 %5439
    %5443 = vset.pattern.permute.xlu0 0
    %5444 = vperm.xlu0 %5443, %v4330
    %v5445 = vpop.permute.xlu0 %5444
    %5448 = vset.pattern.permute.xlu0 0
    %5449 = vperm.xlu0 %5448, %v4331
    %v5450 = vpop.permute.xlu0 %5449
    %5453 = vset.pattern.permute.xlu0 0
    %5454 = vperm.xlu0 %5453, %v4332
    %v5455 = vpop.permute.xlu0 %5454
    %5458 = vset.pattern.permute.xlu0 0
    %5459 = vperm.xlu0 %5458, %v4333
    %v5460 = vpop.permute.xlu0 %5459
    %5463 = vset.pattern.permute.xlu0 0
    %5464 = vperm.xlu0 %5463, %v4334
    %v5465 = vpop.permute.xlu0 %5464
    %5468 = vset.pattern.permute.xlu0 0
    %5469 = vperm.xlu0 %5468, %v4335
    %v5470 = vpop.permute.xlu0 %5469
    %5473 = vset.pattern.permute.xlu0 0
    %5474 = vperm.xlu0 %5473, %v4336
    %v5475 = vpop.permute.xlu0 %5474
    %5478 = vset.pattern.permute.xlu0 0
    %5479 = vperm.xlu0 %5478, %v4337
    %v5480 = vpop.permute.xlu0 %5479
    %5483 = vset.pattern.permute.xlu0 0
    %5484 = vperm.xlu0 %5483, %v4338
    %v5485 = vpop.permute.xlu0 %5484
    %5488 = vset.pattern.permute.xlu0 0
    %5489 = vperm.xlu0 %5488, %v4339
    %v5490 = vpop.permute.xlu0 %5489
    %5493 = vset.pattern.permute.xlu0 0
    %5494 = vperm.xlu0 %5493, %v4340
    %v5495 = vpop.permute.xlu0 %5494
    %5498 = vset.pattern.permute.xlu0 0
    %5499 = vperm.xlu0 %5498, %v4341
    %v5500 = vpop.permute.xlu0 %5499
    %5503 = vset.pattern.permute.xlu0 0
    %5504 = vperm.xlu0 %5503, %v4342
    %v5505 = vpop.permute.xlu0 %5504
    %5508 = vset.pattern.permute.xlu0 0
    %5509 = vperm.xlu0 %5508, %v4343
    %v5510 = vpop.permute.xlu0 %5509
    %5513 = vset.pattern.permute.xlu0 0
    %5514 = vperm.xlu0 %5513, %v4344
    %v5515 = vpop.permute.xlu0 %5514
    %5518 = vset.pattern.permute.xlu0 0
    %5519 = vperm.xlu0 %5518, %v4345
    %v5520 = vpop.permute.xlu0 %5519
    %5523 = vset.pattern.permute.xlu0 0
    %5524 = vperm.xlu0 %5523, %v4346
    %v5525 = vpop.permute.xlu0 %5524
    %5528 = vset.pattern.permute.xlu0 0
    %5529 = vperm.xlu0 %5528, %v4347
    %v5530 = vpop.permute.xlu0 %5529
    %5533 = vset.pattern.permute.xlu0 0
    %5534 = vperm.xlu0 %5533, %v4348
    %v5535 = vpop.permute.xlu0 %5534
    %5538 = vset.pattern.permute.xlu0 0
    %5539 = vperm.xlu0 %5538, %v4349
    %v5540 = vpop.permute.xlu0 %5539
    %5543 = vset.pattern.permute.xlu0 0
    %5544 = vperm.xlu0 %5543, %v4350
    %v5545 = vpop.permute.xlu0 %5544
    %5548 = vset.pattern.permute.xlu0 0
    %5549 = vperm.xlu0 %5548, %v4351
    %v5550 = vpop.permute.xlu0 %5549
    %5553 = vset.pattern.permute.xlu0 0
    %5554 = vperm.xlu0 %5553, %v4352
    %v5555 = vpop.permute.xlu0 %5554
    %5558 = vset.pattern.permute.xlu0 0
    %5559 = vperm.xlu0 %5558, %v4353
    %v5560 = vpop.permute.xlu0 %5559
    %5563 = vset.pattern.permute.xlu0 0
    %5564 = vperm.xlu0 %5563, %v4354
    %v5565 = vpop.permute.xlu0 %5564
    %5568 = vset.pattern.permute.xlu0 0
    %5569 = vperm.xlu0 %5568, %v4355
    %v5570 = vpop.permute.xlu0 %5569
    %5573 = vset.pattern.permute.xlu0 0
    %5574 = vperm.xlu0 %5573, %v4356
    %v5575 = vpop.permute.xlu0 %5574
    %5578 = vset.pattern.permute.xlu0 0
    %5579 = vperm.xlu0 %5578, %v4357
    %v5580 = vpop.permute.xlu0 %5579
    %5583 = vset.pattern.permute.xlu0 0
    %5584 = vperm.xlu0 %5583, %v4358
    %v5585 = vpop.permute.xlu0 %5584
    %5588 = vset.pattern.permute.xlu0 0
    %5589 = vperm.xlu0 %5588, %v4359
    %v5590 = vpop.permute.xlu0 %5589
    %5593 = vset.pattern.permute.xlu0 0
    %5594 = vperm.xlu0 %5593, %v4360
    %v5595 = vpop.permute.xlu0 %5594
    %5598 = vset.pattern.permute.xlu0 0
    %5599 = vperm.xlu0 %5598, %v4361
    %v5600 = vpop.permute.xlu0 %5599
    %5603 = vset.pattern.permute.xlu0 0
    %5604 = vperm.xlu0 %5603, %v4362
    %v5605 = vpop.permute.xlu0 %5604
    %5608 = vset.pattern.permute.xlu0 0
    %5609 = vperm.xlu0 %5608, %v4363
    %v5610 = vpop.permute.xlu0 %5609
    %5613 = vset.pattern.permute.xlu0 0
    %5614 = vperm.xlu0 %5613, %v4364
    %v5615 = vpop.permute.xlu0 %5614
    %5618 = vset.pattern.permute.xlu0 0
    %5619 = vperm.xlu0 %5618, %v4365
    %v5620 = vpop.permute.xlu0 %5619
    %5623 = vset.pattern.permute.xlu0 0
    %5624 = vperm.xlu0 %5623, %v4366
    %v5625 = vpop.permute.xlu0 %5624
    %5628 = vset.pattern.permute.xlu0 0
    %5629 = vperm.xlu0 %5628, %v4367
    %v5630 = vpop.permute.xlu0 %5629
    %5633 = vset.pattern.permute.xlu0 0
    %5634 = vperm.xlu0 %5633, %v4368
    %v5635 = vpop.permute.xlu0 %5634
    %5638 = vset.pattern.permute.xlu0 0
    %5639 = vperm.xlu0 %5638, %v4369
    %v5640 = vpop.permute.xlu0 %5639
    %5643 = vset.pattern.permute.xlu0 0
    %5644 = vperm.xlu0 %5643, %v4370
    %v5645 = vpop.permute.xlu0 %5644
    %5648 = vset.pattern.permute.xlu0 0
    %5649 = vperm.xlu0 %5648, %v4371
    %v5650 = vpop.permute.xlu0 %5649
    %5653 = vset.pattern.permute.xlu0 0
    %5654 = vperm.xlu0 %5653, %v4372
    %v5655 = vpop.permute.xlu0 %5654
    %5658 = vset.pattern.permute.xlu0 0
    %5659 = vperm.xlu0 %5658, %v4373
    %v5660 = vpop.permute.xlu0 %5659
    %5663 = vset.pattern.permute.xlu0 0
    %5664 = vperm.xlu0 %5663, %v4374
    %v5665 = vpop.permute.xlu0 %5664
    %5668 = vset.pattern.permute.xlu0 0
    %5669 = vperm.xlu0 %5668, %v4375
    %v5670 = vpop.permute.xlu0 %5669
    %5673 = vset.pattern.permute.xlu0 0
    %5674 = vperm.xlu0 %5673, %v4376
    %v5675 = vpop.permute.xlu0 %5674
    %5678 = vset.pattern.permute.xlu0 0
    %5679 = vperm.xlu0 %5678, %v4377
    %v5680 = vpop.permute.xlu0 %5679
    %5683 = vset.pattern.permute.xlu0 0
    %5684 = vperm.xlu0 %5683, %v4378
    %v5685 = vpop.permute.xlu0 %5684
    %5688 = vset.pattern.permute.xlu0 0
    %5689 = vperm.xlu0 %5688, %v4379
    %v5690 = vpop.permute.xlu0 %5689
    %5693 = vset.pattern.permute.xlu0 0
    %5694 = vperm.xlu0 %5693, %v4380
    %v5695 = vpop.permute.xlu0 %5694
    %5698 = vset.pattern.permute.xlu0 0
    %5699 = vperm.xlu0 %5698, %v4381
    %v5700 = vpop.permute.xlu0 %5699
    %5703 = vset.pattern.permute.xlu0 0
    %5704 = vperm.xlu0 %5703, %v4382
    %v5705 = vpop.permute.xlu0 %5704
    %5708 = vset.pattern.permute.xlu0 0
    %5709 = vperm.xlu0 %5708, %v4383
    %v5710 = vpop.permute.xlu0 %5709
    %5713 = vset.pattern.permute.xlu0 0
    %5714 = vperm.xlu0 %5713, %v4384
    %v5715 = vpop.permute.xlu0 %5714
    %5718 = vset.pattern.permute.xlu0 0
    %5719 = vperm.xlu0 %5718, %v4385
    %v5720 = vpop.permute.xlu0 %5719
    %5723 = vset.pattern.permute.xlu0 0
    %5724 = vperm.xlu0 %5723, %v4386
    %v5725 = vpop.permute.xlu0 %5724
    %5728 = vset.pattern.permute.xlu0 0
    %5729 = vperm.xlu0 %5728, %v4387
    %v5730 = vpop.permute.xlu0 %5729
    %5733 = vset.pattern.permute.xlu0 0
    %5734 = vperm.xlu0 %5733, %v4388
    %v5735 = vpop.permute.xlu0 %5734
    %5738 = vset.pattern.permute.xlu0 0
    %5739 = vperm.xlu0 %5738, %v4389
    %v5740 = vpop.permute.xlu0 %5739
    %5743 = vset.pattern.permute.xlu0 0
    %5744 = vperm.xlu0 %5743, %v4390
    %v5745 = vpop.permute.xlu0 %5744
    %5748 = vset.pattern.permute.xlu0 0
    %5749 = vperm.xlu0 %5748, %v4391
    %v5750 = vpop.permute.xlu0 %5749
    %5753 = vset.pattern.permute.xlu0 0
    %5754 = vperm.xlu0 %5753, %v4392
    %v5755 = vpop.permute.xlu0 %5754
    %5758 = vset.pattern.permute.xlu0 0
    %5759 = vperm.xlu0 %5758, %v4393
    %v5760 = vpop.permute.xlu0 %5759
    %5763 = vset.pattern.permute.xlu0 0
    %5764 = vperm.xlu0 %5763, %v4394
    %v5765 = vpop.permute.xlu0 %5764
    %5768 = vset.pattern.permute.xlu0 0
    %5769 = vperm.xlu0 %5768, %v4395
    %v5770 = vpop.permute.xlu0 %5769
    %5773 = vset.pattern.permute.xlu0 0
    %5774 = vperm.xlu0 %5773, %v4396
    %v5775 = vpop.permute.xlu0 %5774
    %5778 = vset.pattern.permute.xlu0 0
    %5779 = vperm.xlu0 %5778, %v4397
    %v5780 = vpop.permute.xlu0 %5779
    %5783 = vset.pattern.permute.xlu0 0
    %5784 = vperm.xlu0 %5783, %v4398
    %v5785 = vpop.permute.xlu0 %5784
    %5788 = vset.pattern.permute.xlu0 0
    %5789 = vperm.xlu0 %5788, %v4399
    %v5790 = vpop.permute.xlu0 %5789
    %5793 = vset.pattern.permute.xlu0 0
    %5794 = vperm.xlu0 %5793, %v4400
    %v5795 = vpop.permute.xlu0 %5794
    %5798 = vset.pattern.permute.xlu0 0
    %5799 = vperm.xlu0 %5798, %v4401
    %v5800 = vpop.permute.xlu0 %5799
    %5803 = vset.pattern.permute.xlu0 0
    %5804 = vperm.xlu0 %5803, %v4402
    %v5805 = vpop.permute.xlu0 %5804
    %5808 = vset.pattern.permute.xlu0 0
    %5809 = vperm.xlu0 %5808, %v4403
    %v5810 = vpop.permute.xlu0 %5809
    %v5812 = vsel %vm2227, %v5175, %v5044
    %v5813 = vsel %vm2227, %v5180, %v5045
    %v5814 = vsel %vm2227, %v5185, %v5046
    %v5815 = vsel %vm2227, %v5190, %v5047
    %v5816 = vsel %vm2227, %v5195, %v5048
    %v5817 = vsel %vm2227, %v5200, %v5049
    %v5818 = vsel %vm2227, %v5205, %v5050
    %v5819 = vsel %vm2227, %v5210, %v5051
    %v5820 = vsel %vm2227, %v5215, %v5052
    %v5821 = vsel %vm2227, %v5220, %v5053
    %v5822 = vsel %vm2227, %v5225, %v5054
    %v5823 = vsel %vm2227, %v5230, %v5055
    %v5824 = vsel %vm2227, %v5235, %v5056
    %v5825 = vsel %vm2227, %v5240, %v5057
    %v5826 = vsel %vm2227, %v5245, %v5058
    %v5827 = vsel %vm2227, %v5250, %v5059
    %v5828 = vsel %vm2227, %v5255, %v5060
    %v5829 = vsel %vm2227, %v5260, %v5061
    %v5830 = vsel %vm2227, %v5265, %v5062
    %v5831 = vsel %vm2227, %v5270, %v5063
    %v5832 = vsel %vm2227, %v5275, %v5064
    %v5833 = vsel %vm2227, %v5280, %v5065
    %v5834 = vsel %vm2227, %v5285, %v5066
    %v5835 = vsel %vm2227, %v5290, %v5067
    %v5836 = vsel %vm2227, %v5295, %v5068
    %v5837 = vsel %vm2227, %v5300, %v5069
    %v5838 = vsel %vm2227, %v5305, %v5070
    %v5839 = vsel %vm2227, %v5310, %v5071
    %v5840 = vsel %vm2227, %v5315, %v5072
    %v5841 = vsel %vm2227, %v5320, %v5073
    %v5842 = vsel %vm2227, %v5325, %v5074
    %v5843 = vsel %vm2227, %v5330, %v5075
    %v5844 = vsel %vm2227, %v5335, %v5076
    %v5845 = vsel %vm2227, %v5340, %v5077
    %v5846 = vsel %vm2227, %v5345, %v5078
    %v5847 = vsel %vm2227, %v5350, %v5079
    %v5848 = vsel %vm2227, %v5355, %v5080
    %v5849 = vsel %vm2227, %v5360, %v5081
    %v5850 = vsel %vm2227, %v5365, %v5082
    %v5851 = vsel %vm2227, %v5370, %v5083
    %v5852 = vsel %vm2227, %v5375, %v5084
    %v5853 = vsel %vm2227, %v5380, %v5085
    %v5854 = vsel %vm2227, %v5385, %v5086
    %v5855 = vsel %vm2227, %v5390, %v5087
    %v5856 = vsel %vm2227, %v5395, %v5088
    %v5857 = vsel %vm2227, %v5400, %v5089
    %v5858 = vsel %vm2227, %v5405, %v5090
    %v5859 = vsel %vm2227, %v5410, %v5091
    %v5860 = vsel %vm2227, %v5415, %v5092
    %v5861 = vsel %vm2227, %v5420, %v5093
    %v5862 = vsel %vm2227, %v5425, %v5094
    %v5863 = vsel %vm2227, %v5430, %v5095
    %v5864 = vsel %vm2227, %v5435, %v5096
    %v5865 = vsel %vm2227, %v5440, %v5097
    %v5866 = vsel %vm2227, %v5445, %v5098
    %v5867 = vsel %vm2227, %v5450, %v5099
    %v5868 = vsel %vm2227, %v5455, %v5100
    %v5869 = vsel %vm2227, %v5460, %v5101
    %v5870 = vsel %vm2227, %v5465, %v5102
    %v5871 = vsel %vm2227, %v5470, %v5103
    %v5872 = vsel %vm2227, %v5475, %v5104
    %v5873 = vsel %vm2227, %v5480, %v5105
    %v5874 = vsel %vm2227, %v5485, %v5106
    %v5875 = vsel %vm2227, %v5490, %v5107
    %v5876 = vsel %vm2227, %v5495, %v5108
    %v5877 = vsel %vm2227, %v5500, %v5109
    %v5878 = vsel %vm2227, %v5505, %v5110
    %v5879 = vsel %vm2227, %v5510, %v5111
    %v5880 = vsel %vm2227, %v5515, %v5112
    %v5881 = vsel %vm2227, %v5520, %v5113
    %v5882 = vsel %vm2227, %v5525, %v5114
    %v5883 = vsel %vm2227, %v5530, %v5115
    %v5884 = vsel %vm2227, %v5535, %v5116
    %v5885 = vsel %vm2227, %v5540, %v5117
    %v5886 = vsel %vm2227, %v5545, %v5118
    %v5887 = vsel %vm2227, %v5550, %v5119
    %v5888 = vsel %vm2227, %v5555, %v5120
    %v5889 = vsel %vm2227, %v5560, %v5121
    %v5890 = vsel %vm2227, %v5565, %v5122
    %v5891 = vsel %vm2227, %v5570, %v5123
    %v5892 = vsel %vm2227, %v5575, %v5124
    %v5893 = vsel %vm2227, %v5580, %v5125
    %v5894 = vsel %vm2227, %v5585, %v5126
    %v5895 = vsel %vm2227, %v5590, %v5127
    %v5896 = vsel %vm2227, %v5595, %v5128
    %v5897 = vsel %vm2227, %v5600, %v5129
    %v5898 = vsel %vm2227, %v5605, %v5130
    %v5899 = vsel %vm2227, %v5610, %v5131
    %v5900 = vsel %vm2227, %v5615, %v5132
    %v5901 = vsel %vm2227, %v5620, %v5133
    %v5902 = vsel %vm2227, %v5625, %v5134
    %v5903 = vsel %vm2227, %v5630, %v5135
    %v5904 = vsel %vm2227, %v5635, %v5136
    %v5905 = vsel %vm2227, %v5640, %v5137
    %v5906 = vsel %vm2227, %v5645, %v5138
    %v5907 = vsel %vm2227, %v5650, %v5139
    %v5908 = vsel %vm2227, %v5655, %v5140
    %v5909 = vsel %vm2227, %v5660, %v5141
    %v5910 = vsel %vm2227, %v5665, %v5142
    %v5911 = vsel %vm2227, %v5670, %v5143
    %v5912 = vsel %vm2227, %v5675, %v5144
    %v5913 = vsel %vm2227, %v5680, %v5145
    %v5914 = vsel %vm2227, %v5685, %v5146
    %v5915 = vsel %vm2227, %v5690, %v5147
    %v5916 = vsel %vm2227, %v5695, %v5148
    %v5917 = vsel %vm2227, %v5700, %v5149
    %v5918 = vsel %vm2227, %v5705, %v5150
    %v5919 = vsel %vm2227, %v5710, %v5151
    %v5920 = vsel %vm2227, %v5715, %v5152
    %v5921 = vsel %vm2227, %v5720, %v5153
    %v5922 = vsel %vm2227, %v5725, %v5154
    %v5923 = vsel %vm2227, %v5730, %v5155
    %v5924 = vsel %vm2227, %v5735, %v5156
    %v5925 = vsel %vm2227, %v5740, %v5157
    %v5926 = vsel %vm2227, %v5745, %v5158
    %v5927 = vsel %vm2227, %v5750, %v5159
    %v5928 = vsel %vm2227, %v5755, %v5160
    %v5929 = vsel %vm2227, %v5760, %v5161
    %v5930 = vsel %vm2227, %v5765, %v5162
    %v5931 = vsel %vm2227, %v5770, %v5163
    %v5932 = vsel %vm2227, %v5775, %v5164
    %v5933 = vsel %vm2227, %v5780, %v5165
    %v5934 = vsel %vm2227, %v5785, %v5166
    %v5935 = vsel %vm2227, %v5790, %v5167
    %v5936 = vsel %vm2227, %v5795, %v5168
    %v5937 = vsel %vm2227, %v5800, %v5169
    %v5938 = vsel %vm2227, %v5805, %v5170
    %v5939 = vsel %vm2227, %v5810, %v5171
    %s5940 = sld [smem:[#allocation3 + $0x2]]
    %v5941 = vstv %s5940
    %v5942 = vmul.f32 %v5812, %v5941
    %v5943 = vmul.f32 %v5813, %v5941
    %v5944 = vmul.f32 %v5814, %v5941
    %v5945 = vmul.f32 %v5815, %v5941
    %v5946 = vmul.f32 %v5816, %v5941
    %v5947 = vmul.f32 %v5817, %v5941
    %v5948 = vmul.f32 %v5818, %v5941
    %v5949 = vmul.f32 %v5819, %v5941
    %v5950 = vmul.f32 %v5820, %v5941
    %v5951 = vmul.f32 %v5821, %v5941
    %v5952 = vmul.f32 %v5822, %v5941
    %v5953 = vmul.f32 %v5823, %v5941
    %v5954 = vmul.f32 %v5824, %v5941
    %v5955 = vmul.f32 %v5825, %v5941
    %v5956 = vmul.f32 %v5826, %v5941
    %v5957 = vmul.f32 %v5827, %v5941
    %v5958 = vmul.f32 %v5828, %v5941
    %v5959 = vmul.f32 %v5829, %v5941
    %v5960 = vmul.f32 %v5830, %v5941
    %v5961 = vmul.f32 %v5831, %v5941
    %v5962 = vmul.f32 %v5832, %v5941
    %v5963 = vmul.f32 %v5833, %v5941
    %v5964 = vmul.f32 %v5834, %v5941
    %v5965 = vmul.f32 %v5835, %v5941
    %v5966 = vmul.f32 %v5836, %v5941
    %v5967 = vmul.f32 %v5837, %v5941
    %v5968 = vmul.f32 %v5838, %v5941
    %v5969 = vmul.f32 %v5839, %v5941
    %v5970 = vmul.f32 %v5840, %v5941
    %v5971 = vmul.f32 %v5841, %v5941
    %v5972 = vmul.f32 %v5842, %v5941
    %v5973 = vmul.f32 %v5843, %v5941
    %v5974 = vmul.f32 %v5844, %v5941
    %v5975 = vmul.f32 %v5845, %v5941
    %v5976 = vmul.f32 %v5846, %v5941
    %v5977 = vmul.f32 %v5847, %v5941
    %v5978 = vmul.f32 %v5848, %v5941
    %v5979 = vmul.f32 %v5849, %v5941
    %v5980 = vmul.f32 %v5850, %v5941
    %v5981 = vmul.f32 %v5851, %v5941
    %v5982 = vmul.f32 %v5852, %v5941
    %v5983 = vmul.f32 %v5853, %v5941
    %v5984 = vmul.f32 %v5854, %v5941
    %v5985 = vmul.f32 %v5855, %v5941
    %v5986 = vmul.f32 %v5856, %v5941
    %v5987 = vmul.f32 %v5857, %v5941
    %v5988 = vmul.f32 %v5858, %v5941
    %v5989 = vmul.f32 %v5859, %v5941
    %v5990 = vmul.f32 %v5860, %v5941
    %v5991 = vmul.f32 %v5861, %v5941
    %v5992 = vmul.f32 %v5862, %v5941
    %v5993 = vmul.f32 %v5863, %v5941
    %v5994 = vmul.f32 %v5864, %v5941
    %v5995 = vmul.f32 %v5865, %v5941
    %v5996 = vmul.f32 %v5866, %v5941
    %v5997 = vmul.f32 %v5867, %v5941
    %v5998 = vmul.f32 %v5868, %v5941
    %v5999 = vmul.f32 %v5869, %v5941
    %v6000 = vmul.f32 %v5870, %v5941
    %v6001 = vmul.f32 %v5871, %v5941
    %v6002 = vmul.f32 %v5872, %v5941
    %v6003 = vmul.f32 %v5873, %v5941
    %v6004 = vmul.f32 %v5874, %v5941
    %v6005 = vmul.f32 %v5875, %v5941
    %v6006 = vmul.f32 %v5876, %v5941
    %v6007 = vmul.f32 %v5877, %v5941
    %v6008 = vmul.f32 %v5878, %v5941
    %v6009 = vmul.f32 %v5879, %v5941
    %v6010 = vmul.f32 %v5880, %v5941
    %v6011 = vmul.f32 %v5881, %v5941
    %v6012 = vmul.f32 %v5882, %v5941
    %v6013 = vmul.f32 %v5883, %v5941
    %v6014 = vmul.f32 %v5884, %v5941
    %v6015 = vmul.f32 %v5885, %v5941
    %v6016 = vmul.f32 %v5886, %v5941
    %v6017 = vmul.f32 %v5887, %v5941
    %v6018 = vmul.f32 %v5888, %v5941
    %v6019 = vmul.f32 %v5889, %v5941
    %v6020 = vmul.f32 %v5890, %v5941
    %v6021 = vmul.f32 %v5891, %v5941
    %v6022 = vmul.f32 %v5892, %v5941
    %v6023 = vmul.f32 %v5893, %v5941
    %v6024 = vmul.f32 %v5894, %v5941
    %v6025 = vmul.f32 %v5895, %v5941
    %v6026 = vmul.f32 %v5896, %v5941
    %v6027 = vmul.f32 %v5897, %v5941
    %v6028 = vmul.f32 %v5898, %v5941
    %v6029 = vmul.f32 %v5899, %v5941
    %v6030 = vmul.f32 %v5900, %v5941
    %v6031 = vmul.f32 %v5901, %v5941
    %v6032 = vmul.f32 %v5902, %v5941
    %v6033 = vmul.f32 %v5903, %v5941
    %v6034 = vmul.f32 %v5904, %v5941
    %v6035 = vmul.f32 %v5905, %v5941
    %v6036 = vmul.f32 %v5906, %v5941
    %v6037 = vmul.f32 %v5907, %v5941
    %v6038 = vmul.f32 %v5908, %v5941
    %v6039 = vmul.f32 %v5909, %v5941
    %v6040 = vmul.f32 %v5910, %v5941
    %v6041 = vmul.f32 %v5911, %v5941
    %v6042 = vmul.f32 %v5912, %v5941
    %v6043 = vmul.f32 %v5913, %v5941
    %v6044 = vmul.f32 %v5914, %v5941
    %v6045 = vmul.f32 %v5915, %v5941
    %v6046 = vmul.f32 %v5916, %v5941
    %v6047 = vmul.f32 %v5917, %v5941
    %v6048 = vmul.f32 %v5918, %v5941
    %v6049 = vmul.f32 %v5919, %v5941
    %v6050 = vmul.f32 %v5920, %v5941
    %v6051 = vmul.f32 %v5921, %v5941
    %v6052 = vmul.f32 %v5922, %v5941
    %v6053 = vmul.f32 %v5923, %v5941
    %v6054 = vmul.f32 %v5924, %v5941
    %v6055 = vmul.f32 %v5925, %v5941
    %v6056 = vmul.f32 %v5926, %v5941
    %v6057 = vmul.f32 %v5927, %v5941
    %v6058 = vmul.f32 %v5928, %v5941
    %v6059 = vmul.f32 %v5929, %v5941
    %v6060 = vmul.f32 %v5930, %v5941
    %v6061 = vmul.f32 %v5931, %v5941
    %v6062 = vmul.f32 %v5932, %v5941
    %v6063 = vmul.f32 %v5933, %v5941
    %v6064 = vmul.f32 %v5934, %v5941
    %v6065 = vmul.f32 %v5935, %v5941
    %v6066 = vmul.f32 %v5936, %v5941
    %v6067 = vmul.f32 %v5937, %v5941
    %v6068 = vmul.f32 %v5938, %v5941
    %v6069 = vmul.f32 %v5939, %v5941
    %s6070 = sld [smem:[#allocation3 + $0x1]]
    %v6071 = vld [vmem:[#allocation9] sm:$0xf]
    %v6072 = vld [vmem:[#allocation9 + $0x4] sm:$0xf]
    %v6073 = vld [vmem:[#allocation9 + $0x8] sm:$0xf]
    %v6074 = vld [vmem:[#allocation9 + $0xc] sm:$0xf]
    %v6075 = vld [vmem:[#allocation9 + $0x10] sm:$0xf]
    %v6076 = vld [vmem:[#allocation9 + $0x14] sm:$0xf]
    %v6077 = vld [vmem:[#allocation9 + $0x18] sm:$0xf]
    %v6078 = vld [vmem:[#allocation9 + $0x1c] sm:$0xf]
    %v6079 = vld [vmem:[#allocation9 + $0x20] sm:$0xf]
    %v6080 = vld [vmem:[#allocation9 + $0x24] sm:$0xf]
    %v6081 = vld [vmem:[#allocation9 + $0x28] sm:$0xf]
    %v6082 = vld [vmem:[#allocation9 + $0x2c] sm:$0xf]
    %v6083 = vld [vmem:[#allocation9 + $0x30] sm:$0xf]
    %v6084 = vld [vmem:[#allocation9 + $0x34] sm:$0xf]
    %v6085 = vld [vmem:[#allocation9 + $0x38] sm:$0xf]
    %v6086 = vld [vmem:[#allocation9 + $0x3c] sm:$0xf]
    %v6087 = vld [vmem:[%s5] sm:$0x1]
    %v6089 = vlaneseq
    %v6090 = vshrl.u32 %v6089, 7
    %v6091 = vsub.s32 0, %v6090
    %v6092 = vrot.slane %v6087, %v6091
    %v6110 = vunpack.c.l.b16 %v6071
    %v6111 = vunpack.c.l.b16 %v6072
    %v6112 = vunpack.c.l.b16 %v6073
    %v6113 = vunpack.c.l.b16 %v6074
    %v6114 = vunpack.c.l.b16 %v6075
    %v6115 = vunpack.c.l.b16 %v6076
    %v6116 = vunpack.c.l.b16 %v6077
    %v6117 = vunpack.c.l.b16 %v6078
    %v6118 = vunpack.c.l.b16 %v6079
    %v6119 = vunpack.c.l.b16 %v6080
    %v6120 = vunpack.c.l.b16 %v6081
    %v6121 = vunpack.c.l.b16 %v6082
    %v6122 = vunpack.c.l.b16 %v6083
    %v6123 = vunpack.c.l.b16 %v6084
    %v6124 = vunpack.c.l.b16 %v6085
    %v6125 = vunpack.c.l.b16 %v6086
    %v6126 = vpack.c.b16 %v6111, %v6110
    %v6127 = vpack.c.b16 %v6113, %v6112
    %v6128 = vpack.c.b16 %v6115, %v6114
    %v6129 = vpack.c.b16 %v6117, %v6116
    %v6130 = vpack.c.b16 %v6119, %v6118
    %v6131 = vpack.c.b16 %v6121, %v6120
    %v6132 = vpack.c.b16 %v6123, %v6122
    %v6133 = vpack.c.b16 %v6125, %v6124
    %6142 = vmatprep.subr.bf16.mxu0 0
    %6143 = vmatpush1.bf16.msra.mxu0 %v6126
    %6144 = vmatprep.subr.bf16.mxu0 0
    %6145 = vmatpush1.bf16.msra.mxu0 %v6127
    %6146 = vmatprep.subr.bf16.mxu0 0
    %6147 = vmatpush1.bf16.msra.mxu0 %v6128
    %6148 = vmatprep.subr.bf16.mxu0 0
    %6149 = vmatpush1.bf16.msra.mxu0 %v6129
    %6150 = vmatprep.subr.bf16.mxu0 0
    %6151 = vmatpush1.bf16.msra.mxu0 %v6130
    %6152 = vmatprep.subr.bf16.mxu0 0
    %6153 = vmatpush1.bf16.msra.mxu0 %v6131
    %6154 = vmatprep.subr.bf16.mxu0 0
    %6155 = vmatpush1.bf16.msra.mxu0 %v6132
    %6156 = vmatprep.subr.bf16.mxu0 0
    %6157 = vmatpush1.bf16.msra.mxu0 %v6133
    %6158 = vmatprep.subr.bf16.mxu0 0
    %6159 = vmatpush1.bf16.msra.mxu0 0
    %6160 = vmatprep.subr.bf16.mxu0 0
    %6161 = vmatpush1.bf16.msra.mxu0 0
    %6162 = vmatprep.subr.bf16.mxu0 0
    %6163 = vmatpush1.bf16.msra.mxu0 0
    %6164 = vmatprep.subr.bf16.mxu0 0
    %6165 = vmatpush1.bf16.msra.mxu0 0
    %6166 = vmatprep.subr.bf16.mxu0 0
    %6167 = vmatpush1.bf16.msra.mxu0 0
    %6168 = vmatprep.subr.bf16.mxu0 0
    %6169 = vmatpush1.bf16.msra.mxu0 0
    %6170 = vmatprep.subr.bf16.mxu0 0
    %6171 = vmatpush1.bf16.msra.mxu0 0
    %6172 = vmatprep.subr.bf16.mxu0 0
    %6173 = vmatpush1.bf16.msra.mxu0 0
    %6174 = vmatprep.mubr.bf16.mxu0 0
    %6175 = vmatmul.mubr.bf16.gmra.mrb[0].mxu0 %v481
    %v6176 = vpop.f32.mrb[0].mxu0
    %v6177 = vadd.f32 %v6092, %v6176
    %v6178 = vpop.f32.mrb[0].mxu0
    %v6179 = vpop.f32.mrb[0].mxu0
    %v6180 = vadd.f32 %v6092, %v6179
    %v6181 = vpop.f32.mrb[0].mxu0
    %6182 = vmatprep.mubr.bf16.mxu0 0
    %6183 = vmatmul.mubr.bf16.gmra.mrb[0].mxu0 %v482
    %v6184 = vpop.f32.mrb[0].mxu0
    %v6185 = vadd.f32 %v6092, %v6184
    %v6186 = vpop.f32.mrb[0].mxu0
    %v6187 = vpop.f32.mrb[0].mxu0
    %v6188 = vadd.f32 %v6092, %v6187
    %v6189 = vpop.f32.mrb[0].mxu0
    %6190 = vmatprep.mubr.bf16.mxu0 0
    %6191 = vmatmul.mubr.bf16.gmra.mrb[0].mxu0 %v483
    %v6192 = vpop.f32.mrb[0].mxu0
    %v6193 = vadd.f32 %v6092, %v6192
    %v6194 = vpop.f32.mrb[0].mxu0
    %v6195 = vpop.f32.mrb[0].mxu0
    %v6196 = vadd.f32 %v6092, %v6195
    %v6197 = vpop.f32.mrb[0].mxu0
    %6198 = vmatprep.mubr.bf16.mxu0 0
    %6199 = vmatmul.mubr.bf16.gmra.mrb[0].mxu0 %v484
    %v6200 = vpop.f32.mrb[0].mxu0
    %v6201 = vadd.f32 %v6092, %v6200
    %v6202 = vpop.f32.mrb[0].mxu0
    %v6203 = vpop.f32.mrb[0].mxu0
    %v6204 = vadd.f32 %v6092, %v6203
    %v6205 = vpop.f32.mrb[0].mxu0
    %6206 = vmatprep.mubr.bf16.mxu0 0
    %6207 = vmatmul.mubr.bf16.gmra.mrb[0].mxu0 %v485
    %v6208 = vpop.f32.mrb[0].mxu0
    %v6209 = vadd.f32 %v6092, %v6208
    %v6210 = vpop.f32.mrb[0].mxu0
    %v6211 = vpop.f32.mrb[0].mxu0
    %v6212 = vadd.f32 %v6092, %v6211
    %v6213 = vpop.f32.mrb[0].mxu0
    %6214 = vmatprep.mubr.bf16.mxu0 0
    %6215 = vmatmul.mubr.bf16.gmra.mrb[0].mxu0 %v486
    %v6216 = vpop.f32.mrb[0].mxu0
    %v6217 = vadd.f32 %v6092, %v6216
    %v6218 = vpop.f32.mrb[0].mxu0
    %v6219 = vpop.f32.mrb[0].mxu0
    %v6220 = vadd.f32 %v6092, %v6219
    %v6221 = vpop.f32.mrb[0].mxu0
    %6222 = vmatprep.mubr.bf16.mxu0 0
    %6223 = vmatmul.mubr.bf16.gmra.mrb[0].mxu0 %v487
    %v6224 = vpop.f32.mrb[0].mxu0
    %v6225 = vadd.f32 %v6092, %v6224
    %v6226 = vpop.f32.mrb[0].mxu0
    %v6227 = vpop.f32.mrb[0].mxu0
    %v6228 = vadd.f32 %v6092, %v6227
    %v6229 = vpop.f32.mrb[0].mxu0
    %6230 = vmatprep.mubr.bf16.mxu0 0
    %6231 = vmatmul.mubr.bf16.gmra.mrb[0].mxu0 %v488
    %v6232 = vpop.f32.mrb[0].mxu0
    %v6233 = vadd.f32 %v6092, %v6232
    %v6234 = vpop.f32.mrb[0].mxu0
    %v6235 = vpop.f32.mrb[0].mxu0
    %v6236 = vadd.f32 %v6092, %v6235
    %v6237 = vpop.f32.mrb[0].mxu0
    %6238 = vmatprep.mubr.bf16.mxu0 0
    %6239 = vmatmul.mubr.bf16.gmra.mrb[0].mxu0 %v489
    %v6240 = vpop.f32.mrb[0].mxu0
    %v6241 = vadd.f32 %v6092, %v6240
    %v6242 = vpop.f32.mrb[0].mxu0
    %v6243 = vpop.f32.mrb[0].mxu0
    %v6244 = vadd.f32 %v6092, %v6243
    %v6245 = vpop.f32.mrb[0].mxu0
    %6246 = vmatprep.mubr.bf16.mxu0 0
    %6247 = vmatmul.mubr.bf16.gmra.mrb[0].mxu0 %v490
    %v6248 = vpop.f32.mrb[0].mxu0
    %v6249 = vadd.f32 %v6092, %v6248
    %v6250 = vpop.f32.mrb[0].mxu0
    %v6251 = vpop.f32.mrb[0].mxu0
    %v6252 = vadd.f32 %v6092, %v6251
    %v6253 = vpop.f32.mrb[0].mxu0
    %6254 = vmatprep.mubr.bf16.mxu0 0
    %6255 = vmatmul.mubr.bf16.gmra.mrb[0].mxu0 %v491
    %v6256 = vpop.f32.mrb[0].mxu0
    %v6257 = vadd.f32 %v6092, %v6256
    %v6258 = vpop.f32.mrb[0].mxu0
    %v6259 = vpop.f32.mrb[0].mxu0
    %v6260 = vadd.f32 %v6092, %v6259
    %v6261 = vpop.f32.mrb[0].mxu0
    %6262 = vmatprep.mubr.bf16.mxu0 0
    %6263 = vmatmul.mubr.bf16.gmra.mrb[0].mxu0 %v492
    %v6264 = vpop.f32.mrb[0].mxu0
    %v6265 = vadd.f32 %v6092, %v6264
    %v6266 = vpop.f32.mrb[0].mxu0
    %v6267 = vpop.f32.mrb[0].mxu0
    %v6268 = vadd.f32 %v6092, %v6267
    %v6269 = vpop.f32.mrb[0].mxu0
    %6270 = vmatprep.mubr.bf16.mxu0 0
    %6271 = vmatmul.mubr.bf16.gmra.mrb[0].mxu0 %v493
    %v6272 = vpop.f32.mrb[0].mxu0
    %v6273 = vadd.f32 %v6092, %v6272
    %v6274 = vpop.f32.mrb[0].mxu0
    %v6275 = vpop.f32.mrb[0].mxu0
    %v6276 = vadd.f32 %v6092, %v6275
    %v6277 = vpop.f32.mrb[0].mxu0
    %6278 = vmatprep.mubr.bf16.mxu0 0
    %6279 = vmatmul.mubr.bf16.gmra.mrb[0].mxu0 %v494
    %v6280 = vpop.f32.mrb[0].mxu0
    %v6281 = vadd.f32 %v6092, %v6280
    %v6282 = vpop.f32.mrb[0].mxu0
    %v6283 = vpop.f32.mrb[0].mxu0
    %v6284 = vadd.f32 %v6092, %v6283
    %v6285 = vpop.f32.mrb[0].mxu0
    %6286 = vmatprep.mubr.bf16.mxu0 0
    %6287 = vmatmul.mubr.bf16.gmra.mrb[0].mxu0 %v495
    %v6288 = vpop.f32.mrb[0].mxu0
    %v6289 = vadd.f32 %v6092, %v6288
    %v6290 = vpop.f32.mrb[0].mxu0
    %v6291 = vpop.f32.mrb[0].mxu0
    %v6292 = vadd.f32 %v6092, %v6291
    %v6293 = vpop.f32.mrb[0].mxu0
    %6294 = vmatprep.mubr.bf16.mxu0 0
    %6295 = vmatmul.mubr.bf16.gmra.mrb[0].mxu0 %v496
    %v6296 = vpop.f32.mrb[0].mxu0
    %v6297 = vadd.f32 %v6092, %v6296
    %v6298 = vpop.f32.mrb[0].mxu0
    %v6299 = vpop.f32.mrb[0].mxu0
    %v6300 = vadd.f32 %v6092, %v6299
    %v6301 = vpop.f32.mrb[0].mxu0
    %6302 = vmatprep.mubr.bf16.mxu0 0
    %6303 = vmatmul.mubr.bf16.gmra.mrb[0].mxu0 %v497
    %v6304 = vpop.f32.mrb[0].mxu0
    %v6305 = vadd.f32 %v6092, %v6304
    %v6306 = vpop.f32.mrb[0].mxu0
    %v6307 = vpop.f32.mrb[0].mxu0
    %v6308 = vadd.f32 %v6092, %v6307
    %v6309 = vpop.f32.mrb[0].mxu0
    %6310 = vmatprep.mubr.bf16.mxu0 0
    %6311 = vmatmul.mubr.bf16.gmra.mrb[0].mxu0 %v498
    %v6312 = vpop.f32.mrb[0].mxu0
    %v6313 = vadd.f32 %v6092, %v6312
    %v6314 = vpop.f32.mrb[0].mxu0
    %v6315 = vpop.f32.mrb[0].mxu0
    %v6316 = vadd.f32 %v6092, %v6315
    %v6317 = vpop.f32.mrb[0].mxu0
    %6318 = vmatprep.mubr.bf16.mxu0 0
    %6319 = vmatmul.mubr.bf16.gmra.mrb[0].mxu0 %v499
    %v6320 = vpop.f32.mrb[0].mxu0
    %v6321 = vadd.f32 %v6092, %v6320
    %v6322 = vpop.f32.mrb[0].mxu0
    %v6323 = vpop.f32.mrb[0].mxu0
    %v6324 = vadd.f32 %v6092, %v6323
    %v6325 = vpop.f32.mrb[0].mxu0
    %6326 = vmatprep.mubr.bf16.mxu0 0
    %6327 = vmatmul.mubr.bf16.gmra.mrb[0].mxu0 %v500
    %v6328 = vpop.f32.mrb[0].mxu0
    %v6329 = vadd.f32 %v6092, %v6328
    %v6330 = vpop.f32.mrb[0].mxu0
    %v6331 = vpop.f32.mrb[0].mxu0
    %v6332 = vadd.f32 %v6092, %v6331
    %v6333 = vpop.f32.mrb[0].mxu0
    %6334 = vmatprep.mubr.bf16.mxu0 0
    %6335 = vmatmul.mubr.bf16.gmra.mrb[0].mxu0 %v501
    %v6336 = vpop.f32.mrb[0].mxu0
    %v6337 = vadd.f32 %v6092, %v6336
    %v6338 = vpop.f32.mrb[0].mxu0
    %v6339 = vpop.f32.mrb[0].mxu0
    %v6340 = vadd.f32 %v6092, %v6339
    %v6341 = vpop.f32.mrb[0].mxu0
    %6342 = vmatprep.mubr.bf16.mxu0 0
    %6343 = vmatmul.mubr.bf16.gmra.mrb[0].mxu0 %v502
    %v6344 = vpop.f32.mrb[0].mxu0
    %v6345 = vadd.f32 %v6092, %v6344
    %v6346 = vpop.f32.mrb[0].mxu0
    %v6347 = vpop.f32.mrb[0].mxu0
    %v6348 = vadd.f32 %v6092, %v6347
    %v6349 = vpop.f32.mrb[0].mxu0
    %6350 = vmatprep.mubr.bf16.mxu0 0
    %6351 = vmatmul.mubr.bf16.gmra.mrb[0].mxu0 %v503
    %v6352 = vpop.f32.mrb[0].mxu0
    %v6353 = vadd.f32 %v6092, %v6352
    %v6354 = vpop.f32.mrb[0].mxu0
    %v6355 = vpop.f32.mrb[0].mxu0
    %v6356 = vadd.f32 %v6092, %v6355
    %v6357 = vpop.f32.mrb[0].mxu0
    %6358 = vmatprep.mubr.bf16.mxu0 0
    %6359 = vmatmul.mubr.bf16.gmra.mrb[0].mxu0 %v504
    %v6360 = vpop.f32.mrb[0].mxu0
    %v6361 = vadd.f32 %v6092, %v6360
    %v6362 = vpop.f32.mrb[0].mxu0
    %v6363 = vpop.f32.mrb[0].mxu0
    %v6364 = vadd.f32 %v6092, %v6363
    %v6365 = vpop.f32.mrb[0].mxu0
    %6366 = vmatprep.mubr.bf16.mxu0 0
    %6367 = vmatmul.mubr.bf16.gmra.mrb[0].mxu0 %v505
    %v6368 = vpop.f32.mrb[0].mxu0
    %v6369 = vadd.f32 %v6092, %v6368
    %v6370 = vpop.f32.mrb[0].mxu0
    %v6371 = vpop.f32.mrb[0].mxu0
    %v6372 = vadd.f32 %v6092, %v6371
    %v6373 = vpop.f32.mrb[0].mxu0
    %6374 = vmatprep.mubr.bf16.mxu0 0
    %6375 = vmatmul.mubr.bf16.gmra.mrb[0].mxu0 %v506
    %v6376 = vpop.f32.mrb[0].mxu0
    %v6377 = vadd.f32 %v6092, %v6376
    %v6378 = vpop.f32.mrb[0].mxu0
    %v6379 = vpop.f32.mrb[0].mxu0
    %v6380 = vadd.f32 %v6092, %v6379
    %v6381 = vpop.f32.mrb[0].mxu0
    %6382 = vmatprep.mubr.bf16.mxu0 0
    %6383 = vmatmul.mubr.bf16.gmra.mrb[0].mxu0 %v507
    %v6384 = vpop.f32.mrb[0].mxu0
    %v6385 = vadd.f32 %v6092, %v6384
    %v6386 = vpop.f32.mrb[0].mxu0
    %v6387 = vpop.f32.mrb[0].mxu0
    %v6388 = vadd.f32 %v6092, %v6387
    %v6389 = vpop.f32.mrb[0].mxu0
    %6390 = vmatprep.mubr.bf16.mxu0 0
    %6391 = vmatmul.mubr.bf16.gmra.mrb[0].mxu0 %v508
    %v6392 = vpop.f32.mrb[0].mxu0
    %v6393 = vadd.f32 %v6092, %v6392
    %v6394 = vpop.f32.mrb[0].mxu0
    %v6395 = vpop.f32.mrb[0].mxu0
    %v6396 = vadd.f32 %v6092, %v6395
    %v6397 = vpop.f32.mrb[0].mxu0
    %6398 = vmatprep.mubr.bf16.mxu0 0
    %6399 = vmatmul.mubr.bf16.gmra.mrb[0].mxu0 %v509
    %v6400 = vpop.f32.mrb[0].mxu0
    %v6401 = vadd.f32 %v6092, %v6400
    %v6402 = vpop.f32.mrb[0].mxu0
    %v6403 = vpop.f32.mrb[0].mxu0
    %v6404 = vadd.f32 %v6092, %v6403
    %v6405 = vpop.f32.mrb[0].mxu0
    %6406 = vmatprep.mubr.bf16.mxu0 0
    %6407 = vmatmul.mubr.bf16.gmra.mrb[0].mxu0 %v510
    %v6408 = vpop.f32.mrb[0].mxu0
    %v6409 = vadd.f32 %v6092, %v6408
    %v6410 = vpop.f32.mrb[0].mxu0
    %v6411 = vpop.f32.mrb[0].mxu0
    %v6412 = vadd.f32 %v6092, %v6411
    %v6413 = vpop.f32.mrb[0].mxu0
    %6414 = vmatprep.mubr.bf16.mxu0 0
    %6415 = vmatmul.mubr.bf16.gmra.mrb[0].mxu0 %v511
    %v6416 = vpop.f32.mrb[0].mxu0
    %v6417 = vadd.f32 %v6092, %v6416
    %v6418 = vpop.f32.mrb[0].mxu0
    %v6419 = vpop.f32.mrb[0].mxu0
    %v6420 = vadd.f32 %v6092, %v6419
    %v6421 = vpop.f32.mrb[0].mxu0
    %6422 = vmatprep.mubr.bf16.mxu0 0
    %6423 = vmatmul.mubr.bf16.gmra.mrb[0].mxu0 %v512
    %v6424 = vpop.f32.mrb[0].mxu0
    %v6425 = vadd.f32 %v6092, %v6424
    %v6426 = vpop.f32.mrb[0].mxu0
    %v6427 = vpop.f32.mrb[0].mxu0
    %v6428 = vadd.f32 %v6092, %v6427
    %v6429 = vpop.f32.mrb[0].mxu0
    %6430 = vmatprep.mubr.bf16.mxu0 0
    %6431 = vmatmul.mubr.bf16.gmra.mrb[0].mxu0 %v513
    %v6432 = vpop.f32.mrb[0].mxu0
    %v6433 = vadd.f32 %v6092, %v6432
    %v6434 = vpop.f32.mrb[0].mxu0
    %v6435 = vpop.f32.mrb[0].mxu0
    %v6436 = vadd.f32 %v6092, %v6435
    %v6437 = vpop.f32.mrb[0].mxu0
    %6438 = vmatprep.mubr.bf16.mxu0 0
    %6439 = vmatmul.mubr.bf16.gmra.mrb[0].mxu0 %v514
    %v6440 = vpop.f32.mrb[0].mxu0
    %v6441 = vadd.f32 %v6092, %v6440
    %v6442 = vpop.f32.mrb[0].mxu0
    %v6443 = vpop.f32.mrb[0].mxu0
    %v6444 = vadd.f32 %v6092, %v6443
    %v6445 = vpop.f32.mrb[0].mxu0
    %6446 = vmatprep.mubr.bf16.mxu0 0
    %6447 = vmatmul.mubr.bf16.gmra.mrb[0].mxu0 %v515
    %v6448 = vpop.f32.mrb[0].mxu0
    %v6449 = vadd.f32 %v6092, %v6448
    %v6450 = vpop.f32.mrb[0].mxu0
    %v6451 = vpop.f32.mrb[0].mxu0
    %v6452 = vadd.f32 %v6092, %v6451
    %v6453 = vpop.f32.mrb[0].mxu0
    %6454 = vmatprep.mubr.bf16.mxu0 0
    %6455 = vmatmul.mubr.bf16.gmra.mrb[0].mxu0 %v516
    %v6456 = vpop.f32.mrb[0].mxu0
    %v6457 = vadd.f32 %v6092, %v6456
    %v6458 = vpop.f32.mrb[0].mxu0
    %v6459 = vpop.f32.mrb[0].mxu0
    %v6460 = vadd.f32 %v6092, %v6459
    %v6461 = vpop.f32.mrb[0].mxu0
    %6462 = vmatprep.mubr.bf16.mxu0 0
    %6463 = vmatmul.mubr.bf16.gmra.mrb[0].mxu0 %v517
    %v6464 = vpop.f32.mrb[0].mxu0
    %v6465 = vadd.f32 %v6092, %v6464
    %v6466 = vpop.f32.mrb[0].mxu0
    %v6467 = vpop.f32.mrb[0].mxu0
    %v6468 = vadd.f32 %v6092, %v6467
    %v6469 = vpop.f32.mrb[0].mxu0
    %6470 = vmatprep.mubr.bf16.mxu0 0
    %6471 = vmatmul.mubr.bf16.gmra.mrb[0].mxu0 %v518
    %v6472 = vpop.f32.mrb[0].mxu0
    %v6473 = vadd.f32 %v6092, %v6472
    %v6474 = vpop.f32.mrb[0].mxu0
    %v6475 = vpop.f32.mrb[0].mxu0
    %v6476 = vadd.f32 %v6092, %v6475
    %v6477 = vpop.f32.mrb[0].mxu0
    %6478 = vmatprep.mubr.bf16.mxu0 0
    %6479 = vmatmul.mubr.bf16.gmra.mrb[0].mxu0 %v519
    %v6480 = vpop.f32.mrb[0].mxu0
    %v6481 = vadd.f32 %v6092, %v6480
    %v6482 = vpop.f32.mrb[0].mxu0
    %v6483 = vpop.f32.mrb[0].mxu0
    %v6484 = vadd.f32 %v6092, %v6483
    %v6485 = vpop.f32.mrb[0].mxu0
    %6486 = vmatprep.mubr.bf16.mxu0 0
    %6487 = vmatmul.mubr.bf16.gmra.mrb[0].mxu0 %v520
    %v6488 = vpop.f32.mrb[0].mxu0
    %v6489 = vadd.f32 %v6092, %v6488
    %v6490 = vpop.f32.mrb[0].mxu0
    %v6491 = vpop.f32.mrb[0].mxu0
    %v6492 = vadd.f32 %v6092, %v6491
    %v6493 = vpop.f32.mrb[0].mxu0
    %6494 = vmatprep.mubr.bf16.mxu0 0
    %6495 = vmatmul.mubr.bf16.gmra.mrb[0].mxu0 %v521
    %v6496 = vpop.f32.mrb[0].mxu0
    %v6497 = vadd.f32 %v6092, %v6496
    %v6498 = vpop.f32.mrb[0].mxu0
    %v6499 = vpop.f32.mrb[0].mxu0
    %v6500 = vadd.f32 %v6092, %v6499
    %v6501 = vpop.f32.mrb[0].mxu0
    %6502 = vmatprep.mubr.bf16.mxu0 0
    %6503 = vmatmul.mubr.bf16.gmra.mrb[0].mxu0 %v522
    %v6504 = vpop.f32.mrb[0].mxu0
    %v6505 = vadd.f32 %v6092, %v6504
    %v6506 = vpop.f32.mrb[0].mxu0
    %v6507 = vpop.f32.mrb[0].mxu0
    %v6508 = vadd.f32 %v6092, %v6507
    %v6509 = vpop.f32.mrb[0].mxu0
    %6510 = vmatprep.mubr.bf16.mxu0 0
    %6511 = vmatmul.mubr.bf16.gmra.mrb[0].mxu0 %v523
    %v6512 = vpop.f32.mrb[0].mxu0
    %v6513 = vadd.f32 %v6092, %v6512
    %v6514 = vpop.f32.mrb[0].mxu0
    %v6515 = vpop.f32.mrb[0].mxu0
    %v6516 = vadd.f32 %v6092, %v6515
    %v6517 = vpop.f32.mrb[0].mxu0
    %6518 = vmatprep.mubr.bf16.mxu0 0
    %6519 = vmatmul.mubr.bf16.gmra.mrb[0].mxu0 %v524
    %v6520 = vpop.f32.mrb[0].mxu0
    %v6521 = vadd.f32 %v6092, %v6520
    %v6522 = vpop.f32.mrb[0].mxu0
    %v6523 = vpop.f32.mrb[0].mxu0
    %v6524 = vadd.f32 %v6092, %v6523
    %v6525 = vpop.f32.mrb[0].mxu0
    %6526 = vmatprep.mubr.bf16.mxu0 0
    %6527 = vmatmul.mubr.bf16.gmra.mrb[0].mxu0 %v525
    %v6528 = vpop.f32.mrb[0].mxu0
    %v6529 = vadd.f32 %v6092, %v6528
    %v6530 = vpop.f32.mrb[0].mxu0
    %v6531 = vpop.f32.mrb[0].mxu0
    %v6532 = vadd.f32 %v6092, %v6531
    %v6533 = vpop.f32.mrb[0].mxu0
    %6534 = vmatprep.mubr.bf16.mxu0 0
    %6535 = vmatmul.mubr.bf16.gmra.mrb[0].mxu0 %v526
    %v6536 = vpop.f32.mrb[0].mxu0
    %v6537 = vadd.f32 %v6092, %v6536
    %v6538 = vpop.f32.mrb[0].mxu0
    %v6539 = vpop.f32.mrb[0].mxu0
    %v6540 = vadd.f32 %v6092, %v6539
    %v6541 = vpop.f32.mrb[0].mxu0
    %6542 = vmatprep.mubr.bf16.mxu0 0
    %6543 = vmatmul.mubr.bf16.gmra.mrb[0].mxu0 %v527
    %v6544 = vpop.f32.mrb[0].mxu0
    %v6545 = vadd.f32 %v6092, %v6544
    %v6546 = vpop.f32.mrb[0].mxu0
    %v6547 = vpop.f32.mrb[0].mxu0
    %v6548 = vadd.f32 %v6092, %v6547
    %v6549 = vpop.f32.mrb[0].mxu0
    %6550 = vmatprep.mubr.bf16.mxu0 0
    %6551 = vmatmul.mubr.bf16.gmra.mrb[0].mxu0 %v528
    %v6552 = vpop.f32.mrb[0].mxu0
    %v6553 = vadd.f32 %v6092, %v6552
    %v6554 = vpop.f32.mrb[0].mxu0
    %v6555 = vpop.f32.mrb[0].mxu0
    %v6556 = vadd.f32 %v6092, %v6555
    %v6557 = vpop.f32.mrb[0].mxu0
    %6558 = vmatprep.mubr.bf16.mxu0 0
    %6559 = vmatmul.mubr.bf16.gmra.mrb[0].mxu0 %v529
    %v6560 = vpop.f32.mrb[0].mxu0
    %v6561 = vadd.f32 %v6092, %v6560
    %v6562 = vpop.f32.mrb[0].mxu0
    %v6563 = vpop.f32.mrb[0].mxu0
    %v6564 = vadd.f32 %v6092, %v6563
    %v6565 = vpop.f32.mrb[0].mxu0
    %6566 = vmatprep.mubr.bf16.mxu0 0
    %6567 = vmatmul.mubr.bf16.gmra.mrb[0].mxu0 %v530
    %v6568 = vpop.f32.mrb[0].mxu0
    %v6569 = vadd.f32 %v6092, %v6568
    %v6570 = vpop.f32.mrb[0].mxu0
    %v6571 = vpop.f32.mrb[0].mxu0
    %v6572 = vadd.f32 %v6092, %v6571
    %v6573 = vpop.f32.mrb[0].mxu0
    %6574 = vmatprep.mubr.bf16.mxu0 0
    %6575 = vmatmul.mubr.bf16.gmra.mrb[0].mxu0 %v531
    %v6576 = vpop.f32.mrb[0].mxu0
    %v6577 = vadd.f32 %v6092, %v6576
    %v6578 = vpop.f32.mrb[0].mxu0
    %v6579 = vpop.f32.mrb[0].mxu0
    %v6580 = vadd.f32 %v6092, %v6579
    %v6581 = vpop.f32.mrb[0].mxu0
    %6582 = vmatprep.mubr.bf16.mxu0 0
    %6583 = vmatmul.mubr.bf16.gmra.mrb[0].mxu0 %v532
    %v6584 = vpop.f32.mrb[0].mxu0
    %v6585 = vadd.f32 %v6092, %v6584
    %v6586 = vpop.f32.mrb[0].mxu0
    %v6587 = vpop.f32.mrb[0].mxu0
    %v6588 = vadd.f32 %v6092, %v6587
    %v6589 = vpop.f32.mrb[0].mxu0
    %6590 = vmatprep.mubr.bf16.mxu0 0
    %6591 = vmatmul.mubr.bf16.gmra.mrb[0].mxu0 %v533
    %v6592 = vpop.f32.mrb[0].mxu0
    %v6593 = vadd.f32 %v6092, %v6592
    %v6594 = vpop.f32.mrb[0].mxu0
    %v6595 = vpop.f32.mrb[0].mxu0
    %v6596 = vadd.f32 %v6092, %v6595
    %v6597 = vpop.f32.mrb[0].mxu0
    %6598 = vmatprep.mubr.bf16.mxu0 0
    %6599 = vmatmul.mubr.bf16.gmra.mrb[0].mxu0 %v534
    %v6600 = vpop.f32.mrb[0].mxu0
    %v6601 = vadd.f32 %v6092, %v6600
    %v6602 = vpop.f32.mrb[0].mxu0
    %v6603 = vpop.f32.mrb[0].mxu0
    %v6604 = vadd.f32 %v6092, %v6603
    %v6605 = vpop.f32.mrb[0].mxu0
    %6606 = vmatprep.mubr.bf16.mxu0 0
    %6607 = vmatmul.mubr.bf16.gmra.mrb[0].mxu0 %v535
    %v6608 = vpop.f32.mrb[0].mxu0
    %v6609 = vadd.f32 %v6092, %v6608
    %v6610 = vpop.f32.mrb[0].mxu0
    %v6611 = vpop.f32.mrb[0].mxu0
    %v6612 = vadd.f32 %v6092, %v6611
    %v6613 = vpop.f32.mrb[0].mxu0
    %6614 = vmatprep.mubr.bf16.mxu0 0
    %6615 = vmatmul.mubr.bf16.gmra.mrb[0].mxu0 %v536
    %v6616 = vpop.f32.mrb[0].mxu0
    %v6617 = vadd.f32 %v6092, %v6616
    %v6618 = vpop.f32.mrb[0].mxu0
    %v6619 = vpop.f32.mrb[0].mxu0
    %v6620 = vadd.f32 %v6092, %v6619
    %v6621 = vpop.f32.mrb[0].mxu0
    %6622 = vmatprep.mubr.bf16.mxu0 0
    %6623 = vmatmul.mubr.bf16.gmra.mrb[0].mxu0 %v537
    %v6624 = vpop.f32.mrb[0].mxu0
    %v6625 = vadd.f32 %v6092, %v6624
    %v6626 = vpop.f32.mrb[0].mxu0
    %v6627 = vpop.f32.mrb[0].mxu0
    %v6628 = vadd.f32 %v6092, %v6627
    %v6629 = vpop.f32.mrb[0].mxu0
    %6630 = vmatprep.mubr.bf16.mxu0 0
    %6631 = vmatmul.mubr.bf16.gmra.mrb[0].mxu0 %v538
    %v6632 = vpop.f32.mrb[0].mxu0
    %v6633 = vadd.f32 %v6092, %v6632
    %v6634 = vpop.f32.mrb[0].mxu0
    %v6635 = vpop.f32.mrb[0].mxu0
    %v6636 = vadd.f32 %v6092, %v6635
    %v6637 = vpop.f32.mrb[0].mxu0
    %6638 = vmatprep.mubr.bf16.mxu0 0
    %6639 = vmatmul.mubr.bf16.gmra.mrb[0].mxu0 %v539
    %v6640 = vpop.f32.mrb[0].mxu0
    %v6641 = vadd.f32 %v6092, %v6640
    %v6642 = vpop.f32.mrb[0].mxu0
    %v6643 = vpop.f32.mrb[0].mxu0
    %v6644 = vadd.f32 %v6092, %v6643
    %v6645 = vpop.f32.mrb[0].mxu0
    %6646 = vmatprep.mubr.bf16.mxu0 0
    %6647 = vmatmul.mubr.bf16.gmra.mrb[0].mxu0 %v540
    %v6648 = vpop.f32.mrb[0].mxu0
    %v6649 = vadd.f32 %v6092, %v6648
    %v6650 = vpop.f32.mrb[0].mxu0
    %v6651 = vpop.f32.mrb[0].mxu0
    %v6652 = vadd.f32 %v6092, %v6651
    %v6653 = vpop.f32.mrb[0].mxu0
    %6654 = vmatprep.mubr.bf16.mxu0 0
    %6655 = vmatmul.mubr.bf16.gmra.mrb[0].mxu0 %v541
    %v6656 = vpop.f32.mrb[0].mxu0
    %v6657 = vadd.f32 %v6092, %v6656
    %v6658 = vpop.f32.mrb[0].mxu0
    %v6659 = vpop.f32.mrb[0].mxu0
    %v6660 = vadd.f32 %v6092, %v6659
    %v6661 = vpop.f32.mrb[0].mxu0
    %6662 = vmatprep.mubr.bf16.mxu0 0
    %6663 = vmatmul.mubr.bf16.gmra.mrb[0].mxu0 %v542
    %v6664 = vpop.f32.mrb[0].mxu0
    %v6665 = vadd.f32 %v6092, %v6664
    %v6666 = vpop.f32.mrb[0].mxu0
    %v6667 = vpop.f32.mrb[0].mxu0
    %v6668 = vadd.f32 %v6092, %v6667
    %v6669 = vpop.f32.mrb[0].mxu0
    %6670 = vmatprep.mubr.bf16.mxu0 0
    %6671 = vmatmul.mubr.bf16.gmra.mrb[0].mxu0 %v543
    %v6672 = vpop.f32.mrb[0].mxu0
    %v6673 = vadd.f32 %v6092, %v6672
    %v6674 = vpop.f32.mrb[0].mxu0
    %v6675 = vpop.f32.mrb[0].mxu0
    %v6676 = vadd.f32 %v6092, %v6675
    %v6677 = vpop.f32.mrb[0].mxu0
    %6678 = vmatprep.mubr.bf16.mxu0 0
    %6679 = vmatmul.mubr.bf16.gmra.mrb[0].mxu0 %v544
    %v6680 = vpop.f32.mrb[0].mxu0
    %v6681 = vadd.f32 %v6092, %v6680
    %v6682 = vpop.f32.mrb[0].mxu0
    %v6683 = vpop.f32.mrb[0].mxu0
    %v6684 = vadd.f32 %v6092, %v6683
    %v6685 = vpop.f32.mrb[0].mxu0
    %6686 = vdwg.mxu0
    %v6687 = vxor.u32 %v6177, 2147483648
    %v6688 = vxor.u32 %v6180, 2147483648
    %v6689 = vxor.u32 %v6185, 2147483648
    %v6690 = vxor.u32 %v6188, 2147483648
    %v6691 = vxor.u32 %v6193, 2147483648
    %v6692 = vxor.u32 %v6196, 2147483648
    %v6693 = vxor.u32 %v6201, 2147483648
    %v6694 = vxor.u32 %v6204, 2147483648
    %v6695 = vxor.u32 %v6209, 2147483648
    %v6696 = vxor.u32 %v6212, 2147483648
    %v6697 = vxor.u32 %v6217, 2147483648
    %v6698 = vxor.u32 %v6220, 2147483648
    %v6699 = vxor.u32 %v6225, 2147483648
    %v6700 = vxor.u32 %v6228, 2147483648
    %v6701 = vxor.u32 %v6233, 2147483648
    %v6702 = vxor.u32 %v6236, 2147483648
    %v6703 = vxor.u32 %v6241, 2147483648
    %v6704 = vxor.u32 %v6244, 2147483648
    %v6705 = vxor.u32 %v6249, 2147483648
    %v6706 = vxor.u32 %v6252, 2147483648
    %v6707 = vxor.u32 %v6257, 2147483648
    %v6708 = vxor.u32 %v6260, 2147483648
    %v6709 = vxor.u32 %v6265, 2147483648
    %v6710 = vxor.u32 %v6268, 2147483648
    %v6711 = vxor.u32 %v6273, 2147483648
    %v6712 = vxor.u32 %v6276, 2147483648
    %v6713 = vxor.u32 %v6281, 2147483648
    %v6714 = vxor.u32 %v6284, 2147483648
    %v6715 = vxor.u32 %v6289, 2147483648
    %v6716 = vxor.u32 %v6292, 2147483648
    %v6717 = vxor.u32 %v6297, 2147483648
    %v6718 = vxor.u32 %v6300, 2147483648
    %v6719 = vxor.u32 %v6305, 2147483648
    %v6720 = vxor.u32 %v6308, 2147483648
    %v6721 = vxor.u32 %v6313, 2147483648
    %v6722 = vxor.u32 %v6316, 2147483648
    %v6723 = vxor.u32 %v6321, 2147483648
    %v6724 = vxor.u32 %v6324, 2147483648
    %v6725 = vxor.u32 %v6329, 2147483648
    %v6726 = vxor.u32 %v6332, 2147483648
    %v6727 = vxor.u32 %v6337, 2147483648
    %v6728 = vxor.u32 %v6340, 2147483648
    %v6729 = vxor.u32 %v6345, 2147483648
    %v6730 = vxor.u32 %v6348, 2147483648
    %v6731 = vxor.u32 %v6353, 2147483648
    %v6732 = vxor.u32 %v6356, 2147483648
    %v6733 = vxor.u32 %v6361, 2147483648
    %v6734 = vxor.u32 %v6364, 2147483648
    %v6735 = vxor.u32 %v6369, 2147483648
    %v6736 = vxor.u32 %v6372, 2147483648
    %v6737 = vxor.u32 %v6377, 2147483648
    %v6738 = vxor.u32 %v6380, 2147483648
    %v6739 = vxor.u32 %v6385, 2147483648
    %v6740 = vxor.u32 %v6388, 2147483648
    %v6741 = vxor.u32 %v6393, 2147483648
    %v6742 = vxor.u32 %v6396, 2147483648
    %v6743 = vxor.u32 %v6401, 2147483648
    %v6744 = vxor.u32 %v6404, 2147483648
    %v6745 = vxor.u32 %v6409, 2147483648
    %v6746 = vxor.u32 %v6412, 2147483648
    %v6747 = vxor.u32 %v6417, 2147483648
    %v6748 = vxor.u32 %v6420, 2147483648
    %v6749 = vxor.u32 %v6425, 2147483648
    %v6750 = vxor.u32 %v6428, 2147483648
    %v6751 = vxor.u32 %v6433, 2147483648
    %v6752 = vxor.u32 %v6436, 2147483648
    %v6753 = vxor.u32 %v6441, 2147483648
    %v6754 = vxor.u32 %v6444, 2147483648
    %v6755 = vxor.u32 %v6449, 2147483648
    %v6756 = vxor.u32 %v6452, 2147483648
    %v6757 = vxor.u32 %v6457, 2147483648
    %v6758 = vxor.u32 %v6460, 2147483648
    %v6759 = vxor.u32 %v6465, 2147483648
    %v6760 = vxor.u32 %v6468, 2147483648
    %v6761 = vxor.u32 %v6473, 2147483648
    %v6762 = vxor.u32 %v6476, 2147483648
    %v6763 = vxor.u32 %v6481, 2147483648
    %v6764 = vxor.u32 %v6484, 2147483648
    %v6765 = vxor.u32 %v6489, 2147483648
    %v6766 = vxor.u32 %v6492, 2147483648
    %v6767 = vxor.u32 %v6497, 2147483648
    %v6768 = vxor.u32 %v6500, 2147483648
    %v6769 = vxor.u32 %v6505, 2147483648
    %v6770 = vxor.u32 %v6508, 2147483648
    %v6771 = vxor.u32 %v6513, 2147483648
    %v6772 = vxor.u32 %v6516, 2147483648
    %v6773 = vxor.u32 %v6521, 2147483648
    %v6774 = vxor.u32 %v6524, 2147483648
    %v6775 = vxor.u32 %v6529, 2147483648
    %v6776 = vxor.u32 %v6532, 2147483648
    %v6777 = vxor.u32 %v6537, 2147483648
    %v6778 = vxor.u32 %v6540, 2147483648
    %v6779 = vxor.u32 %v6545, 2147483648
    %v6780 = vxor.u32 %v6548, 2147483648
    %v6781 = vxor.u32 %v6553, 2147483648
    %v6782 = vxor.u32 %v6556, 2147483648
    %v6783 = vxor.u32 %v6561, 2147483648
    %v6784 = vxor.u32 %v6564, 2147483648
    %v6785 = vxor.u32 %v6569, 2147483648
    %v6786 = vxor.u32 %v6572, 2147483648
    %v6787 = vxor.u32 %v6577, 2147483648
    %v6788 = vxor.u32 %v6580, 2147483648
    %v6789 = vxor.u32 %v6585, 2147483648
    %v6790 = vxor.u32 %v6588, 2147483648
    %v6791 = vxor.u32 %v6593, 2147483648
    %v6792 = vxor.u32 %v6596, 2147483648
    %v6793 = vxor.u32 %v6601, 2147483648
    %v6794 = vxor.u32 %v6604, 2147483648
    %v6795 = vxor.u32 %v6609, 2147483648
    %v6796 = vxor.u32 %v6612, 2147483648
    %v6797 = vxor.u32 %v6617, 2147483648
    %v6798 = vxor.u32 %v6620, 2147483648
    %v6799 = vxor.u32 %v6625, 2147483648
    %v6800 = vxor.u32 %v6628, 2147483648
    %v6801 = vxor.u32 %v6633, 2147483648
    %v6802 = vxor.u32 %v6636, 2147483648
    %v6803 = vxor.u32 %v6641, 2147483648
    %v6804 = vxor.u32 %v6644, 2147483648
    %v6805 = vxor.u32 %v6649, 2147483648
    %v6806 = vxor.u32 %v6652, 2147483648
    %v6807 = vxor.u32 %v6657, 2147483648
    %v6808 = vxor.u32 %v6660, 2147483648
    %v6809 = vxor.u32 %v6665, 2147483648
    %v6810 = vxor.u32 %v6668, 2147483648
    %v6811 = vxor.u32 %v6673, 2147483648
    %v6812 = vxor.u32 %v6676, 2147483648
    %v6813 = vxor.u32 %v6681, 2147483648
    %v6814 = vxor.u32 %v6684, 2147483648
    %v6815 = vmul.f32 %v6687, 1.442695
    %v6816 = vpow.pop %v6815
    %v6817 = vmul.f32 %v6688, 1.442695
    %v6818 = vpow.pop %v6817
    %v6819 = vmul.f32 %v6689, 1.442695
    %v6820 = vpow.pop %v6819
    %v6821 = vmul.f32 %v6690, 1.442695
    %v6822 = vpow.pop %v6821
    %v6823 = vmul.f32 %v6691, 1.442695
    %v6824 = vpow.pop %v6823
    %v6825 = vmul.f32 %v6692, 1.442695
    %v6826 = vpow.pop %v6825
    %v6827 = vmul.f32 %v6693, 1.442695
    %v6828 = vpow.pop %v6827
    %v6829 = vmul.f32 %v6694, 1.442695
    %v6830 = vpow.pop %v6829
    %v6831 = vmul.f32 %v6695, 1.442695
    %v6832 = vpow.pop %v6831
    %v6833 = vmul.f32 %v6696, 1.442695
    %v6834 = vpow.pop %v6833
    %v6835 = vmul.f32 %v6697, 1.442695
    %v6836 = vpow.pop %v6835
    %v6837 = vmul.f32 %v6698, 1.442695
    %v6838 = vpow.pop %v6837
    %v6839 = vmul.f32 %v6699, 1.442695
    %v6840 = vpow.pop %v6839
    %v6841 = vmul.f32 %v6700, 1.442695
    %v6842 = vpow.pop %v6841
    %v6843 = vmul.f32 %v6701, 1.442695
    %v6844 = vpow.pop %v6843
    %v6845 = vmul.f32 %v6702, 1.442695
    %v6846 = vpow.pop %v6845
    %v6847 = vmul.f32 %v6703, 1.442695
    %v6848 = vpow.pop %v6847
    %v6849 = vmul.f32 %v6704, 1.442695
    %v6850 = vpow.pop %v6849
    %v6851 = vmul.f32 %v6705, 1.442695
    %v6852 = vpow.pop %v6851
    %v6853 = vmul.f32 %v6706, 1.442695
    %v6854 = vpow.pop %v6853
    %v6855 = vmul.f32 %v6707, 1.442695
    %v6856 = vpow.pop %v6855
    %v6857 = vmul.f32 %v6708, 1.442695
    %v6858 = vpow.pop %v6857
    %v6859 = vmul.f32 %v6709, 1.442695
    %v6860 = vpow.pop %v6859
    %v6861 = vmul.f32 %v6710, 1.442695
    %v6862 = vpow.pop %v6861
    %v6863 = vmul.f32 %v6711, 1.442695
    %v6864 = vpow.pop %v6863
    %v6865 = vmul.f32 %v6712, 1.442695
    %v6866 = vpow.pop %v6865
    %v6867 = vmul.f32 %v6713, 1.442695
    %v6868 = vpow.pop %v6867
    %v6869 = vmul.f32 %v6714, 1.442695
    %v6870 = vpow.pop %v6869
    %v6871 = vmul.f32 %v6715, 1.442695
    %v6872 = vpow.pop %v6871
    %v6873 = vmul.f32 %v6716, 1.442695
    %v6874 = vpow.pop %v6873
    %v6875 = vmul.f32 %v6717, 1.442695
    %v6876 = vpow.pop %v6875
    %v6877 = vmul.f32 %v6718, 1.442695
    %v6878 = vpow.pop %v6877
    %v6879 = vmul.f32 %v6719, 1.442695
    %v6880 = vpow.pop %v6879
    %v6881 = vmul.f32 %v6720, 1.442695
    %v6882 = vpow.pop %v6881
    %v6883 = vmul.f32 %v6721, 1.442695
    %v6884 = vpow.pop %v6883
    %v6885 = vmul.f32 %v6722, 1.442695
    %v6886 = vpow.pop %v6885
    %v6887 = vmul.f32 %v6723, 1.442695
    %v6888 = vpow.pop %v6887
    %v6889 = vmul.f32 %v6724, 1.442695
    %v6890 = vpow.pop %v6889
    %v6891 = vmul.f32 %v6725, 1.442695
    %v6892 = vpow.pop %v6891
    %v6893 = vmul.f32 %v6726, 1.442695
    %v6894 = vpow.pop %v6893
    %v6895 = vmul.f32 %v6727, 1.442695
    %v6896 = vpow.pop %v6895
    %v6897 = vmul.f32 %v6728, 1.442695
    %v6898 = vpow.pop %v6897
    %v6899 = vmul.f32 %v6729, 1.442695
    %v6900 = vpow.pop %v6899
    %v6901 = vmul.f32 %v6730, 1.442695
    %v6902 = vpow.pop %v6901
    %v6903 = vmul.f32 %v6731, 1.442695
    %v6904 = vpow.pop %v6903
    %v6905 = vmul.f32 %v6732, 1.442695
    %v6906 = vpow.pop %v6905
    %v6907 = vmul.f32 %v6733, 1.442695
    %v6908 = vpow.pop %v6907
    %v6909 = vmul.f32 %v6734, 1.442695
    %v6910 = vpow.pop %v6909
    %v6911 = vmul.f32 %v6735, 1.442695
    %v6912 = vpow.pop %v6911
    %v6913 = vmul.f32 %v6736, 1.442695
    %v6914 = vpow.pop %v6913
    %v6915 = vmul.f32 %v6737, 1.442695
    %v6916 = vpow.pop %v6915
    %v6917 = vmul.f32 %v6738, 1.442695
    %v6918 = vpow.pop %v6917
    %v6919 = vmul.f32 %v6739, 1.442695
    %v6920 = vpow.pop %v6919
    %v6921 = vmul.f32 %v6740, 1.442695
    %v6922 = vpow.pop %v6921
    %v6923 = vmul.f32 %v6741, 1.442695
    %v6924 = vpow.pop %v6923
    %v6925 = vmul.f32 %v6742, 1.442695
    %v6926 = vpow.pop %v6925
    %v6927 = vmul.f32 %v6743, 1.442695
    %v6928 = vpow.pop %v6927
    %v6929 = vmul.f32 %v6744, 1.442695
    %v6930 = vpow.pop %v6929
    %v6931 = vmul.f32 %v6745, 1.442695
    %v6932 = vpow.pop %v6931
    %v6933 = vmul.f32 %v6746, 1.442695
    %v6934 = vpow.pop %v6933
    %v6935 = vmul.f32 %v6747, 1.442695
    %v6936 = vpow.pop %v6935
    %v6937 = vmul.f32 %v6748, 1.442695
    %v6938 = vpow.pop %v6937
    %v6939 = vmul.f32 %v6749, 1.442695
    %v6940 = vpow.pop %v6939
    %v6941 = vmul.f32 %v6750, 1.442695
    %v6942 = vpow.pop %v6941
    %v6943 = vmul.f32 %v6751, 1.442695
    %v6944 = vpow.pop %v6943
    %v6945 = vmul.f32 %v6752, 1.442695
    %v6946 = vpow.pop %v6945
    %v6947 = vmul.f32 %v6753, 1.442695
    %v6948 = vpow.pop %v6947
    %v6949 = vmul.f32 %v6754, 1.442695
    %v6950 = vpow.pop %v6949
    %v6951 = vmul.f32 %v6755, 1.442695
    %v6952 = vpow.pop %v6951
    %v6953 = vmul.f32 %v6756, 1.442695
    %v6954 = vpow.pop %v6953
    %v6955 = vmul.f32 %v6757, 1.442695
    %v6956 = vpow.pop %v6955
    %v6957 = vmul.f32 %v6758, 1.442695
    %v6958 = vpow.pop %v6957
    %v6959 = vmul.f32 %v6759, 1.442695
    %v6960 = vpow.pop %v6959
    %v6961 = vmul.f32 %v6760, 1.442695
    %v6962 = vpow.pop %v6961
    %v6963 = vmul.f32 %v6761, 1.442695
    %v6964 = vpow.pop %v6963
    %v6965 = vmul.f32 %v6762, 1.442695
    %v6966 = vpow.pop %v6965
    %v6967 = vmul.f32 %v6763, 1.442695
    %v6968 = vpow.pop %v6967
    %v6969 = vmul.f32 %v6764, 1.442695
    %v6970 = vpow.pop %v6969
    %v6971 = vmul.f32 %v6765, 1.442695
    %v6972 = vpow.pop %v6971
    %v6973 = vmul.f32 %v6766, 1.442695
    %v6974 = vpow.pop %v6973
    %v6975 = vmul.f32 %v6767, 1.442695
    %v6976 = vpow.pop %v6975
    %v6977 = vmul.f32 %v6768, 1.442695
    %v6978 = vpow.pop %v6977
    %v6979 = vmul.f32 %v6769, 1.442695
    %v6980 = vpow.pop %v6979
    %v6981 = vmul.f32 %v6770, 1.442695
    %v6982 = vpow.pop %v6981
    %v6983 = vmul.f32 %v6771, 1.442695
    %v6984 = vpow.pop %v6983
    %v6985 = vmul.f32 %v6772, 1.442695
    %v6986 = vpow.pop %v6985
    %v6987 = vmul.f32 %v6773, 1.442695
    %v6988 = vpow.pop %v6987
    %v6989 = vmul.f32 %v6774, 1.442695
    %v6990 = vpow.pop %v6989
    %v6991 = vmul.f32 %v6775, 1.442695
    %v6992 = vpow.pop %v6991
    %v6993 = vmul.f32 %v6776, 1.442695
    %v6994 = vpow.pop %v6993
    %v6995 = vmul.f32 %v6777, 1.442695
    %v6996 = vpow.pop %v6995
    %v6997 = vmul.f32 %v6778, 1.442695
    %v6998 = vpow.pop %v6997
    %v6999 = vmul.f32 %v6779, 1.442695
    %v7000 = vpow.pop %v6999
    %v7001 = vmul.f32 %v6780, 1.442695
    %v7002 = vpow.pop %v7001
    %v7003 = vmul.f32 %v6781, 1.442695
    %v7004 = vpow.pop %v7003
    %v7005 = vmul.f32 %v6782, 1.442695
    %v7006 = vpow.pop %v7005
    %v7007 = vmul.f32 %v6783, 1.442695
    %v7008 = vpow.pop %v7007
    %v7009 = vmul.f32 %v6784, 1.442695
    %v7010 = vpow.pop %v7009
    %v7011 = vmul.f32 %v6785, 1.442695
    %v7012 = vpow.pop %v7011
    %v7013 = vmul.f32 %v6786, 1.442695
    %v7014 = vpow.pop %v7013
    %v7015 = vmul.f32 %v6787, 1.442695
    %v7016 = vpow.pop %v7015
    %v7017 = vmul.f32 %v6788, 1.442695
    %v7018 = vpow.pop %v7017
    %v7019 = vmul.f32 %v6789, 1.442695
    %v7020 = vpow.pop %v7019
    %v7021 = vmul.f32 %v6790, 1.442695
    %v7022 = vpow.pop %v7021
    %v7023 = vmul.f32 %v6791, 1.442695
    %v7024 = vpow.pop %v7023
    %v7025 = vmul.f32 %v6792, 1.442695
    %v7026 = vpow.pop %v7025
    %v7027 = vmul.f32 %v6793, 1.442695
    %v7028 = vpow.pop %v7027
    %v7029 = vmul.f32 %v6794, 1.442695
    %v7030 = vpow.pop %v7029
    %v7031 = vmul.f32 %v6795, 1.442695
    %v7032 = vpow.pop %v7031
    %v7033 = vmul.f32 %v6796, 1.442695
    %v7034 = vpow.pop %v7033
    %v7035 = vmul.f32 %v6797, 1.442695
    %v7036 = vpow.pop %v7035
    %v7037 = vmul.f32 %v6798, 1.442695
    %v7038 = vpow.pop %v7037
    %v7039 = vmul.f32 %v6799, 1.442695
    %v7040 = vpow.pop %v7039
    %v7041 = vmul.f32 %v6800, 1.442695
    %v7042 = vpow.pop %v7041
    %v7043 = vmul.f32 %v6801, 1.442695
    %v7044 = vpow.pop %v7043
    %v7045 = vmul.f32 %v6802, 1.442695
    %v7046 = vpow.pop %v7045
    %v7047 = vmul.f32 %v6803, 1.442695
    %v7048 = vpow.pop %v7047
    %v7049 = vmul.f32 %v6804, 1.442695
    %v7050 = vpow.pop %v7049
    %v7051 = vmul.f32 %v6805, 1.442695
    %v7052 = vpow.pop %v7051
    %v7053 = vmul.f32 %v6806, 1.442695
    %v7054 = vpow.pop %v7053
    %v7055 = vmul.f32 %v6807, 1.442695
    %v7056 = vpow.pop %v7055
    %v7057 = vmul.f32 %v6808, 1.442695
    %v7058 = vpow.pop %v7057
    %v7059 = vmul.f32 %v6809, 1.442695
    %v7060 = vpow.pop %v7059
    %v7061 = vmul.f32 %v6810, 1.442695
    %v7062 = vpow.pop %v7061
    %v7063 = vmul.f32 %v6811, 1.442695
    %v7064 = vpow.pop %v7063
    %v7065 = vmul.f32 %v6812, 1.442695
    %v7066 = vpow.pop %v7065
    %v7067 = vmul.f32 %v6813, 1.442695
    %v7068 = vpow.pop %v7067
    %v7069 = vmul.f32 %v6814, 1.442695
    %v7070 = vpow.pop %v7069
    %v7071 = vadd.f32 %v6816, 1.0
    %v7072 = vadd.f32 %v6818, 1.0
    %v7073 = vadd.f32 %v6820, 1.0
    %v7074 = vadd.f32 %v6822, 1.0
    %v7075 = vadd.f32 %v6824, 1.0
    %v7076 = vadd.f32 %v6826, 1.0
    %v7077 = vadd.f32 %v6828, 1.0
    %v7078 = vadd.f32 %v6830, 1.0
    %v7079 = vadd.f32 %v6832, 1.0
    %v7080 = vadd.f32 %v6834, 1.0
    %v7081 = vadd.f32 %v6836, 1.0
    %v7082 = vadd.f32 %v6838, 1.0
    %v7083 = vadd.f32 %v6840, 1.0
    %v7084 = vadd.f32 %v6842, 1.0
    %v7085 = vadd.f32 %v6844, 1.0
    %v7086 = vadd.f32 %v6846, 1.0
    %v7087 = vadd.f32 %v6848, 1.0
    %v7088 = vadd.f32 %v6850, 1.0
    %v7089 = vadd.f32 %v6852, 1.0
    %v7090 = vadd.f32 %v6854, 1.0
    %v7091 = vadd.f32 %v6856, 1.0
    %v7092 = vadd.f32 %v6858, 1.0
    %v7093 = vadd.f32 %v6860, 1.0
    %v7094 = vadd.f32 %v6862, 1.0
    %v7095 = vadd.f32 %v6864, 1.0
    %v7096 = vadd.f32 %v6866, 1.0
    %v7097 = vadd.f32 %v6868, 1.0
    %v7098 = vadd.f32 %v6870, 1.0
    %v7099 = vadd.f32 %v6872, 1.0
    %v7100 = vadd.f32 %v6874, 1.0
    %v7101 = vadd.f32 %v6876, 1.0
    %v7102 = vadd.f32 %v6878, 1.0
    %v7103 = vadd.f32 %v6880, 1.0
    %v7104 = vadd.f32 %v6882, 1.0
    %v7105 = vadd.f32 %v6884, 1.0
    %v7106 = vadd.f32 %v6886, 1.0
    %v7107 = vadd.f32 %v6888, 1.0
    %v7108 = vadd.f32 %v6890, 1.0
    %v7109 = vadd.f32 %v6892, 1.0
    %v7110 = vadd.f32 %v6894, 1.0
    %v7111 = vadd.f32 %v6896, 1.0
    %v7112 = vadd.f32 %v6898, 1.0
    %v7113 = vadd.f32 %v6900, 1.0
    %v7114 = vadd.f32 %v6902, 1.0
    %v7115 = vadd.f32 %v6904, 1.0
    %v7116 = vadd.f32 %v6906, 1.0
    %v7117 = vadd.f32 %v6908, 1.0
    %v7118 = vadd.f32 %v6910, 1.0
    %v7119 = vadd.f32 %v6912, 1.0
    %v7120 = vadd.f32 %v6914, 1.0
    %v7121 = vadd.f32 %v6916, 1.0
    %v7122 = vadd.f32 %v6918, 1.0
    %v7123 = vadd.f32 %v6920, 1.0
    %v7124 = vadd.f32 %v6922, 1.0
    %v7125 = vadd.f32 %v6924, 1.0
    %v7126 = vadd.f32 %v6926, 1.0
    %v7127 = vadd.f32 %v6928, 1.0
    %v7128 = vadd.f32 %v6930, 1.0
    %v7129 = vadd.f32 %v6932, 1.0
    %v7130 = vadd.f32 %v6934, 1.0
    %v7131 = vadd.f32 %v6936, 1.0
    %v7132 = vadd.f32 %v6938, 1.0
    %v7133 = vadd.f32 %v6940, 1.0
    %v7134 = vadd.f32 %v6942, 1.0
    %v7135 = vadd.f32 %v6944, 1.0
    %v7136 = vadd.f32 %v6946, 1.0
    %v7137 = vadd.f32 %v6948, 1.0
    %v7138 = vadd.f32 %v6950, 1.0
    %v7139 = vadd.f32 %v6952, 1.0
    %v7140 = vadd.f32 %v6954, 1.0
    %v7141 = vadd.f32 %v6956, 1.0
    %v7142 = vadd.f32 %v6958, 1.0
    %v7143 = vadd.f32 %v6960, 1.0
    %v7144 = vadd.f32 %v6962, 1.0
    %v7145 = vadd.f32 %v6964, 1.0
    %v7146 = vadd.f32 %v6966, 1.0
    %v7147 = vadd.f32 %v6968, 1.0
    %v7148 = vadd.f32 %v6970, 1.0
    %v7149 = vadd.f32 %v6972, 1.0
    %v7150 = vadd.f32 %v6974, 1.0
    %v7151 = vadd.f32 %v6976, 1.0
    %v7152 = vadd.f32 %v6978, 1.0
    %v7153 = vadd.f32 %v6980, 1.0
    %v7154 = vadd.f32 %v6982, 1.0
    %v7155 = vadd.f32 %v6984, 1.0
    %v7156 = vadd.f32 %v6986, 1.0
    %v7157 = vadd.f32 %v6988, 1.0
    %v7158 = vadd.f32 %v6990, 1.0
    %v7159 = vadd.f32 %v6992, 1.0
    %v7160 = vadd.f32 %v6994, 1.0
    %v7161 = vadd.f32 %v6996, 1.0
    %v7162 = vadd.f32 %v6998, 1.0
    %v7163 = vadd.f32 %v7000, 1.0
    %v7164 = vadd.f32 %v7002, 1.0
    %v7165 = vadd.f32 %v7004, 1.0
    %v7166 = vadd.f32 %v7006, 1.0
    %v7167 = vadd.f32 %v7008, 1.0
    %v7168 = vadd.f32 %v7010, 1.0
    %v7169 = vadd.f32 %v7012, 1.0
    %v7170 = vadd.f32 %v7014, 1.0
    %v7171 = vadd.f32 %v7016, 1.0
    %v7172 = vadd.f32 %v7018, 1.0
    %v7173 = vadd.f32 %v7020, 1.0
    %v7174 = vadd.f32 %v7022, 1.0
    %v7175 = vadd.f32 %v7024, 1.0
    %v7176 = vadd.f32 %v7026, 1.0
    %v7177 = vadd.f32 %v7028, 1.0
    %v7178 = vadd.f32 %v7030, 1.0
    %v7179 = vadd.f32 %v7032, 1.0
    %v7180 = vadd.f32 %v7034, 1.0
    %v7181 = vadd.f32 %v7036, 1.0
    %v7182 = vadd.f32 %v7038, 1.0
    %v7183 = vadd.f32 %v7040, 1.0
    %v7184 = vadd.f32 %v7042, 1.0
    %v7185 = vadd.f32 %v7044, 1.0
    %v7186 = vadd.f32 %v7046, 1.0
    %v7187 = vadd.f32 %v7048, 1.0
    %v7188 = vadd.f32 %v7050, 1.0
    %v7189 = vadd.f32 %v7052, 1.0
    %v7190 = vadd.f32 %v7054, 1.0
    %v7191 = vadd.f32 %v7056, 1.0
    %v7192 = vadd.f32 %v7058, 1.0
    %v7193 = vadd.f32 %v7060, 1.0
    %v7194 = vadd.f32 %v7062, 1.0
    %v7195 = vadd.f32 %v7064, 1.0
    %v7196 = vadd.f32 %v7066, 1.0
    %v7197 = vadd.f32 %v7068, 1.0
    %v7198 = vadd.f32 %v7070, 1.0
    %v7199 = vrcp.pop %v7071
    %v7200 = vmul.f32 1.0, %v7199
    %v7201 = vrcp.pop %v7072
    %v7202 = vmul.f32 1.0, %v7201
    %v7203 = vrcp.pop %v7073
    %v7204 = vmul.f32 1.0, %v7203
    %v7205 = vrcp.pop %v7074
    %v7206 = vmul.f32 1.0, %v7205
    %v7207 = vrcp.pop %v7075
    %v7208 = vmul.f32 1.0, %v7207
    %v7209 = vrcp.pop %v7076
    %v7210 = vmul.f32 1.0, %v7209
    %v7211 = vrcp.pop %v7077
    %v7212 = vmul.f32 1.0, %v7211
    %v7213 = vrcp.pop %v7078
    %v7214 = vmul.f32 1.0, %v7213
    %v7215 = vrcp.pop %v7079
    %v7216 = vmul.f32 1.0, %v7215
    %v7217 = vrcp.pop %v7080
    %v7218 = vmul.f32 1.0, %v7217
    %v7219 = vrcp.pop %v7081
    %v7220 = vmul.f32 1.0, %v7219
    %v7221 = vrcp.pop %v7082
    %v7222 = vmul.f32 1.0, %v7221
    %v7223 = vrcp.pop %v7083
    %v7224 = vmul.f32 1.0, %v7223
    %v7225 = vrcp.pop %v7084
    %v7226 = vmul.f32 1.0, %v7225
    %v7227 = vrcp.pop %v7085
    %v7228 = vmul.f32 1.0, %v7227
    %v7229 = vrcp.pop %v7086
    %v7230 = vmul.f32 1.0, %v7229
    %v7231 = vrcp.pop %v7087
    %v7232 = vmul.f32 1.0, %v7231
    %v7233 = vrcp.pop %v7088
    %v7234 = vmul.f32 1.0, %v7233
    %v7235 = vrcp.pop %v7089
    %v7236 = vmul.f32 1.0, %v7235
    %v7237 = vrcp.pop %v7090
    %v7238 = vmul.f32 1.0, %v7237
    %v7239 = vrcp.pop %v7091
    %v7240 = vmul.f32 1.0, %v7239
    %v7241 = vrcp.pop %v7092
    %v7242 = vmul.f32 1.0, %v7241
    %v7243 = vrcp.pop %v7093
    %v7244 = vmul.f32 1.0, %v7243
    %v7245 = vrcp.pop %v7094
    %v7246 = vmul.f32 1.0, %v7245
    %v7247 = vrcp.pop %v7095
    %v7248 = vmul.f32 1.0, %v7247
    %v7249 = vrcp.pop %v7096
    %v7250 = vmul.f32 1.0, %v7249
    %v7251 = vrcp.pop %v7097
    %v7252 = vmul.f32 1.0, %v7251
    %v7253 = vrcp.pop %v7098
    %v7254 = vmul.f32 1.0, %v7253
    %v7255 = vrcp.pop %v7099
    %v7256 = vmul.f32 1.0, %v7255
    %v7257 = vrcp.pop %v7100
    %v7258 = vmul.f32 1.0, %v7257
    %v7259 = vrcp.pop %v7101
    %v7260 = vmul.f32 1.0, %v7259
    %v7261 = vrcp.pop %v7102
    %v7262 = vmul.f32 1.0, %v7261
    %v7263 = vrcp.pop %v7103
    %v7264 = vmul.f32 1.0, %v7263
    %v7265 = vrcp.pop %v7104
    %v7266 = vmul.f32 1.0, %v7265
    %v7267 = vrcp.pop %v7105
    %v7268 = vmul.f32 1.0, %v7267
    %v7269 = vrcp.pop %v7106
    %v7270 = vmul.f32 1.0, %v7269
    %v7271 = vrcp.pop %v7107
    %v7272 = vmul.f32 1.0, %v7271
    %v7273 = vrcp.pop %v7108
    %v7274 = vmul.f32 1.0, %v7273
    %v7275 = vrcp.pop %v7109
    %v7276 = vmul.f32 1.0, %v7275
    %v7277 = vrcp.pop %v7110
    %v7278 = vmul.f32 1.0, %v7277
    %v7279 = vrcp.pop %v7111
    %v7280 = vmul.f32 1.0, %v7279
    %v7281 = vrcp.pop %v7112
    %v7282 = vmul.f32 1.0, %v7281
    %v7283 = vrcp.pop %v7113
    %v7284 = vmul.f32 1.0, %v7283
    %v7285 = vrcp.pop %v7114
    %v7286 = vmul.f32 1.0, %v7285
    %v7287 = vrcp.pop %v7115
    %v7288 = vmul.f32 1.0, %v7287
    %v7289 = vrcp.pop %v7116
    %v7290 = vmul.f32 1.0, %v7289
    %v7291 = vrcp.pop %v7117
    %v7292 = vmul.f32 1.0, %v7291
    %v7293 = vrcp.pop %v7118
    %v7294 = vmul.f32 1.0, %v7293
    %v7295 = vrcp.pop %v7119
    %v7296 = vmul.f32 1.0, %v7295
    %v7297 = vrcp.pop %v7120
    %v7298 = vmul.f32 1.0, %v7297
    %v7299 = vrcp.pop %v7121
    %v7300 = vmul.f32 1.0, %v7299
    %v7301 = vrcp.pop %v7122
    %v7302 = vmul.f32 1.0, %v7301
    %v7303 = vrcp.pop %v7123
    %v7304 = vmul.f32 1.0, %v7303
    %v7305 = vrcp.pop %v7124
    %v7306 = vmul.f32 1.0, %v7305
    %v7307 = vrcp.pop %v7125
    %v7308 = vmul.f32 1.0, %v7307
    %v7309 = vrcp.pop %v7126
    %v7310 = vmul.f32 1.0, %v7309
    %v7311 = vrcp.pop %v7127
    %v7312 = vmul.f32 1.0, %v7311
    %v7313 = vrcp.pop %v7128
    %v7314 = vmul.f32 1.0, %v7313
    %v7315 = vrcp.pop %v7129
    %v7316 = vmul.f32 1.0, %v7315
    %v7317 = vrcp.pop %v7130
    %v7318 = vmul.f32 1.0, %v7317
    %v7319 = vrcp.pop %v7131
    %v7320 = vmul.f32 1.0, %v7319
    %v7321 = vrcp.pop %v7132
    %v7322 = vmul.f32 1.0, %v7321
    %v7323 = vrcp.pop %v7133
    %v7324 = vmul.f32 1.0, %v7323
    %v7325 = vrcp.pop %v7134
    %v7326 = vmul.f32 1.0, %v7325
    %v7327 = vrcp.pop %v7135
    %v7328 = vmul.f32 1.0, %v7327
    %v7329 = vrcp.pop %v7136
    %v7330 = vmul.f32 1.0, %v7329
    %v7331 = vrcp.pop %v7137
    %v7332 = vmul.f32 1.0, %v7331
    %v7333 = vrcp.pop %v7138
    %v7334 = vmul.f32 1.0, %v7333
    %v7335 = vrcp.pop %v7139
    %v7336 = vmul.f32 1.0, %v7335
    %v7337 = vrcp.pop %v7140
    %v7338 = vmul.f32 1.0, %v7337
    %v7339 = vrcp.pop %v7141
    %v7340 = vmul.f32 1.0, %v7339
    %v7341 = vrcp.pop %v7142
    %v7342 = vmul.f32 1.0, %v7341
    %v7343 = vrcp.pop %v7143
    %v7344 = vmul.f32 1.0, %v7343
    %v7345 = vrcp.pop %v7144
    %v7346 = vmul.f32 1.0, %v7345
    %v7347 = vrcp.pop %v7145
    %v7348 = vmul.f32 1.0, %v7347
    %v7349 = vrcp.pop %v7146
    %v7350 = vmul.f32 1.0, %v7349
    %v7351 = vrcp.pop %v7147
    %v7352 = vmul.f32 1.0, %v7351
    %v7353 = vrcp.pop %v7148
    %v7354 = vmul.f32 1.0, %v7353
    %v7355 = vrcp.pop %v7149
    %v7356 = vmul.f32 1.0, %v7355
    %v7357 = vrcp.pop %v7150
    %v7358 = vmul.f32 1.0, %v7357
    %v7359 = vrcp.pop %v7151
    %v7360 = vmul.f32 1.0, %v7359
    %v7361 = vrcp.pop %v7152
    %v7362 = vmul.f32 1.0, %v7361
    %v7363 = vrcp.pop %v7153
    %v7364 = vmul.f32 1.0, %v7363
    %v7365 = vrcp.pop %v7154
    %v7366 = vmul.f32 1.0, %v7365
    %v7367 = vrcp.pop %v7155
    %v7368 = vmul.f32 1.0, %v7367
    %v7369 = vrcp.pop %v7156
    %v7370 = vmul.f32 1.0, %v7369
    %v7371 = vrcp.pop %v7157
    %v7372 = vmul.f32 1.0, %v7371
    %v7373 = vrcp.pop %v7158
    %v7374 = vmul.f32 1.0, %v7373
    %v7375 = vrcp.pop %v7159
    %v7376 = vmul.f32 1.0, %v7375
    %v7377 = vrcp.pop %v7160
    %v7378 = vmul.f32 1.0, %v7377
    %v7379 = vrcp.pop %v7161
    %v7380 = vmul.f32 1.0, %v7379
    %v7381 = vrcp.pop %v7162
    %v7382 = vmul.f32 1.0, %v7381
    %v7383 = vrcp.pop %v7163
    %v7384 = vmul.f32 1.0, %v7383
    %v7385 = vrcp.pop %v7164
    %v7386 = vmul.f32 1.0, %v7385
    %v7387 = vrcp.pop %v7165
    %v7388 = vmul.f32 1.0, %v7387
    %v7389 = vrcp.pop %v7166
    %v7390 = vmul.f32 1.0, %v7389
    %v7391 = vrcp.pop %v7167
    %v7392 = vmul.f32 1.0, %v7391
    %v7393 = vrcp.pop %v7168
    %v7394 = vmul.f32 1.0, %v7393
    %v7395 = vrcp.pop %v7169
    %v7396 = vmul.f32 1.0, %v7395
    %v7397 = vrcp.pop %v7170
    %v7398 = vmul.f32 1.0, %v7397
    %v7399 = vrcp.pop %v7171
    %v7400 = vmul.f32 1.0, %v7399
    %v7401 = vrcp.pop %v7172
    %v7402 = vmul.f32 1.0, %v7401
    %v7403 = vrcp.pop %v7173
    %v7404 = vmul.f32 1.0, %v7403
    %v7405 = vrcp.pop %v7174
    %v7406 = vmul.f32 1.0, %v7405
    %v7407 = vrcp.pop %v7175
    %v7408 = vmul.f32 1.0, %v7407
    %v7409 = vrcp.pop %v7176
    %v7410 = vmul.f32 1.0, %v7409
    %v7411 = vrcp.pop %v7177
    %v7412 = vmul.f32 1.0, %v7411
    %v7413 = vrcp.pop %v7178
    %v7414 = vmul.f32 1.0, %v7413
    %v7415 = vrcp.pop %v7179
    %v7416 = vmul.f32 1.0, %v7415
    %v7417 = vrcp.pop %v7180
    %v7418 = vmul.f32 1.0, %v7417
    %v7419 = vrcp.pop %v7181
    %v7420 = vmul.f32 1.0, %v7419
    %v7421 = vrcp.pop %v7182
    %v7422 = vmul.f32 1.0, %v7421
    %v7423 = vrcp.pop %v7183
    %v7424 = vmul.f32 1.0, %v7423
    %v7425 = vrcp.pop %v7184
    %v7426 = vmul.f32 1.0, %v7425
    %v7427 = vrcp.pop %v7185
    %v7428 = vmul.f32 1.0, %v7427
    %v7429 = vrcp.pop %v7186
    %v7430 = vmul.f32 1.0, %v7429
    %v7431 = vrcp.pop %v7187
    %v7432 = vmul.f32 1.0, %v7431
    %v7433 = vrcp.pop %v7188
    %v7434 = vmul.f32 1.0, %v7433
    %v7435 = vrcp.pop %v7189
    %v7436 = vmul.f32 1.0, %v7435
    %v7437 = vrcp.pop %v7190
    %v7438 = vmul.f32 1.0, %v7437
    %v7439 = vrcp.pop %v7191
    %v7440 = vmul.f32 1.0, %v7439
    %v7441 = vrcp.pop %v7192
    %v7442 = vmul.f32 1.0, %v7441
    %v7443 = vrcp.pop %v7193
    %v7444 = vmul.f32 1.0, %v7443
    %v7445 = vrcp.pop %v7194
    %v7446 = vmul.f32 1.0, %v7445
    %v7447 = vrcp.pop %v7195
    %v7448 = vmul.f32 1.0, %v7447
    %v7449 = vrcp.pop %v7196
    %v7450 = vmul.f32 1.0, %v7449
    %v7451 = vrcp.pop %v7197
    %v7452 = vmul.f32 1.0, %v7451
    %v7453 = vrcp.pop %v7198
    %v7454 = vmul.f32 1.0, %v7453
    %v7455 = vstv %s6070
    %v7456 = vmul.f32 %v7200, %v7455
    %v7457 = vmul.f32 %v7202, %v7455
    %v7458 = vmul.f32 %v7204, %v7455
    %v7459 = vmul.f32 %v7206, %v7455
    %v7460 = vmul.f32 %v7208, %v7455
    %v7461 = vmul.f32 %v7210, %v7455
    %v7462 = vmul.f32 %v7212, %v7455
    %v7463 = vmul.f32 %v7214, %v7455
    %v7464 = vmul.f32 %v7216, %v7455
    %v7465 = vmul.f32 %v7218, %v7455
    %v7466 = vmul.f32 %v7220, %v7455
    %v7467 = vmul.f32 %v7222, %v7455
    %v7468 = vmul.f32 %v7224, %v7455
    %v7469 = vmul.f32 %v7226, %v7455
    %v7470 = vmul.f32 %v7228, %v7455
    %v7471 = vmul.f32 %v7230, %v7455
    %v7472 = vmul.f32 %v7232, %v7455
    %v7473 = vmul.f32 %v7234, %v7455
    %v7474 = vmul.f32 %v7236, %v7455
    %v7475 = vmul.f32 %v7238, %v7455
    %v7476 = vmul.f32 %v7240, %v7455
    %v7477 = vmul.f32 %v7242, %v7455
    %v7478 = vmul.f32 %v7244, %v7455
    %v7479 = vmul.f32 %v7246, %v7455
    %v7480 = vmul.f32 %v7248, %v7455
    %v7481 = vmul.f32 %v7250, %v7455
    %v7482 = vmul.f32 %v7252, %v7455
    %v7483 = vmul.f32 %v7254, %v7455
    %v7484 = vmul.f32 %v7256, %v7455
    %v7485 = vmul.f32 %v7258, %v7455
    %v7486 = vmul.f32 %v7260, %v7455
    %v7487 = vmul.f32 %v7262, %v7455
    %v7488 = vmul.f32 %v7264, %v7455
    %v7489 = vmul.f32 %v7266, %v7455
    %v7490 = vmul.f32 %v7268, %v7455
    %v7491 = vmul.f32 %v7270, %v7455
    %v7492 = vmul.f32 %v7272, %v7455
    %v7493 = vmul.f32 %v7274, %v7455
    %v7494 = vmul.f32 %v7276, %v7455
    %v7495 = vmul.f32 %v7278, %v7455
    %v7496 = vmul.f32 %v7280, %v7455
    %v7497 = vmul.f32 %v7282, %v7455
    %v7498 = vmul.f32 %v7284, %v7455
    %v7499 = vmul.f32 %v7286, %v7455
    %v7500 = vmul.f32 %v7288, %v7455
    %v7501 = vmul.f32 %v7290, %v7455
    %v7502 = vmul.f32 %v7292, %v7455
    %v7503 = vmul.f32 %v7294, %v7455
    %v7504 = vmul.f32 %v7296, %v7455
    %v7505 = vmul.f32 %v7298, %v7455
    %v7506 = vmul.f32 %v7300, %v7455
    %v7507 = vmul.f32 %v7302, %v7455
    %v7508 = vmul.f32 %v7304, %v7455
    %v7509 = vmul.f32 %v7306, %v7455
    %v7510 = vmul.f32 %v7308, %v7455
    %v7511 = vmul.f32 %v7310, %v7455
    %v7512 = vmul.f32 %v7312, %v7455
    %v7513 = vmul.f32 %v7314, %v7455
    %v7514 = vmul.f32 %v7316, %v7455
    %v7515 = vmul.f32 %v7318, %v7455
    %v7516 = vmul.f32 %v7320, %v7455
    %v7517 = vmul.f32 %v7322, %v7455
    %v7518 = vmul.f32 %v7324, %v7455
    %v7519 = vmul.f32 %v7326, %v7455
    %v7520 = vmul.f32 %v7328, %v7455
    %v7521 = vmul.f32 %v7330, %v7455
    %v7522 = vmul.f32 %v7332, %v7455
    %v7523 = vmul.f32 %v7334, %v7455
    %v7524 = vmul.f32 %v7336, %v7455
    %v7525 = vmul.f32 %v7338, %v7455
    %v7526 = vmul.f32 %v7340, %v7455
    %v7527 = vmul.f32 %v7342, %v7455
    %v7528 = vmul.f32 %v7344, %v7455
    %v7529 = vmul.f32 %v7346, %v7455
    %v7530 = vmul.f32 %v7348, %v7455
    %v7531 = vmul.f32 %v7350, %v7455
    %v7532 = vmul.f32 %v7352, %v7455
    %v7533 = vmul.f32 %v7354, %v7455
    %v7534 = vmul.f32 %v7356, %v7455
    %v7535 = vmul.f32 %v7358, %v7455
    %v7536 = vmul.f32 %v7360, %v7455
    %v7537 = vmul.f32 %v7362, %v7455
    %v7538 = vmul.f32 %v7364, %v7455
    %v7539 = vmul.f32 %v7366, %v7455
    %v7540 = vmul.f32 %v7368, %v7455
    %v7541 = vmul.f32 %v7370, %v7455
    %v7542 = vmul.f32 %v7372, %v7455
    %v7543 = vmul.f32 %v7374, %v7455
    %v7544 = vmul.f32 %v7376, %v7455
    %v7545 = vmul.f32 %v7378, %v7455
    %v7546 = vmul.f32 %v7380, %v7455
    %v7547 = vmul.f32 %v7382, %v7455
    %v7548 = vmul.f32 %v7384, %v7455
    %v7549 = vmul.f32 %v7386, %v7455
    %v7550 = vmul.f32 %v7388, %v7455
    %v7551 = vmul.f32 %v7390, %v7455
    %v7552 = vmul.f32 %v7392, %v7455
    %v7553 = vmul.f32 %v7394, %v7455
    %v7554 = vmul.f32 %v7396, %v7455
    %v7555 = vmul.f32 %v7398, %v7455
    %v7556 = vmul.f32 %v7400, %v7455
    %v7557 = vmul.f32 %v7402, %v7455
    %v7558 = vmul.f32 %v7404, %v7455
    %v7559 = vmul.f32 %v7406, %v7455
    %v7560 = vmul.f32 %v7408, %v7455
    %v7561 = vmul.f32 %v7410, %v7455
    %v7562 = vmul.f32 %v7412, %v7455
    %v7563 = vmul.f32 %v7414, %v7455
    %v7564 = vmul.f32 %v7416, %v7455
    %v7565 = vmul.f32 %v7418, %v7455
    %v7566 = vmul.f32 %v7420, %v7455
    %v7567 = vmul.f32 %v7422, %v7455
    %v7568 = vmul.f32 %v7424, %v7455
    %v7569 = vmul.f32 %v7426, %v7455
    %v7570 = vmul.f32 %v7428, %v7455
    %v7571 = vmul.f32 %v7430, %v7455
    %v7572 = vmul.f32 %v7432, %v7455
    %v7573 = vmul.f32 %v7434, %v7455
    %v7574 = vmul.f32 %v7436, %v7455
    %v7575 = vmul.f32 %v7438, %v7455
    %v7576 = vmul.f32 %v7440, %v7455
    %v7577 = vmul.f32 %v7442, %v7455
    %v7578 = vmul.f32 %v7444, %v7455
    %v7579 = vmul.f32 %v7446, %v7455
    %v7580 = vmul.f32 %v7448, %v7455
    %v7581 = vmul.f32 %v7450, %v7455
    %v7582 = vmul.f32 %v7452, %v7455
    %v7583 = vmul.f32 %v7454, %v7455
    %v7584 = vadd.f32 %v7456, 1.1
    %v7585 = vadd.f32 %v7457, 1.1
    %v7586 = vadd.f32 %v7458, 1.1
    %v7587 = vadd.f32 %v7459, 1.1
    %v7588 = vadd.f32 %v7460, 1.1
    %v7589 = vadd.f32 %v7461, 1.1
    %v7590 = vadd.f32 %v7462, 1.1
    %v7591 = vadd.f32 %v7463, 1.1
    %v7592 = vadd.f32 %v7464, 1.1
    %v7593 = vadd.f32 %v7465, 1.1
    %v7594 = vadd.f32 %v7466, 1.1
    %v7595 = vadd.f32 %v7467, 1.1
    %v7596 = vadd.f32 %v7468, 1.1
    %v7597 = vadd.f32 %v7469, 1.1
    %v7598 = vadd.f32 %v7470, 1.1
    %v7599 = vadd.f32 %v7471, 1.1
    %v7600 = vadd.f32 %v7472, 1.1
    %v7601 = vadd.f32 %v7473, 1.1
    %v7602 = vadd.f32 %v7474, 1.1
    %v7603 = vadd.f32 %v7475, 1.1
    %v7604 = vadd.f32 %v7476, 1.1
    %v7605 = vadd.f32 %v7477, 1.1
    %v7606 = vadd.f32 %v7478, 1.1
    %v7607 = vadd.f32 %v7479, 1.1
    %v7608 = vadd.f32 %v7480, 1.1
    %v7609 = vadd.f32 %v7481, 1.1
    %v7610 = vadd.f32 %v7482, 1.1
    %v7611 = vadd.f32 %v7483, 1.1
    %v7612 = vadd.f32 %v7484, 1.1
    %v7613 = vadd.f32 %v7485, 1.1
    %v7614 = vadd.f32 %v7486, 1.1
    %v7615 = vadd.f32 %v7487, 1.1
    %v7616 = vadd.f32 %v7488, 1.1
    %v7617 = vadd.f32 %v7489, 1.1
    %v7618 = vadd.f32 %v7490, 1.1
    %v7619 = vadd.f32 %v7491, 1.1
    %v7620 = vadd.f32 %v7492, 1.1
    %v7621 = vadd.f32 %v7493, 1.1
    %v7622 = vadd.f32 %v7494, 1.1
    %v7623 = vadd.f32 %v7495, 1.1
    %v7624 = vadd.f32 %v7496, 1.1
    %v7625 = vadd.f32 %v7497, 1.1
    %v7626 = vadd.f32 %v7498, 1.1
    %v7627 = vadd.f32 %v7499, 1.1
    %v7628 = vadd.f32 %v7500, 1.1
    %v7629 = vadd.f32 %v7501, 1.1
    %v7630 = vadd.f32 %v7502, 1.1
    %v7631 = vadd.f32 %v7503, 1.1
    %v7632 = vadd.f32 %v7504, 1.1
    %v7633 = vadd.f32 %v7505, 1.1
    %v7634 = vadd.f32 %v7506, 1.1
    %v7635 = vadd.f32 %v7507, 1.1
    %v7636 = vadd.f32 %v7508, 1.1
    %v7637 = vadd.f32 %v7509, 1.1
    %v7638 = vadd.f32 %v7510, 1.1
    %v7639 = vadd.f32 %v7511, 1.1
    %v7640 = vadd.f32 %v7512, 1.1
    %v7641 = vadd.f32 %v7513, 1.1
    %v7642 = vadd.f32 %v7514, 1.1
    %v7643 = vadd.f32 %v7515, 1.1
    %v7644 = vadd.f32 %v7516, 1.1
    %v7645 = vadd.f32 %v7517, 1.1
    %v7646 = vadd.f32 %v7518, 1.1
    %v7647 = vadd.f32 %v7519, 1.1
    %v7648 = vadd.f32 %v7520, 1.1
    %v7649 = vadd.f32 %v7521, 1.1
    %v7650 = vadd.f32 %v7522, 1.1
    %v7651 = vadd.f32 %v7523, 1.1
    %v7652 = vadd.f32 %v7524, 1.1
    %v7653 = vadd.f32 %v7525, 1.1
    %v7654 = vadd.f32 %v7526, 1.1
    %v7655 = vadd.f32 %v7527, 1.1
    %v7656 = vadd.f32 %v7528, 1.1
    %v7657 = vadd.f32 %v7529, 1.1
    %v7658 = vadd.f32 %v7530, 1.1
    %v7659 = vadd.f32 %v7531, 1.1
    %v7660 = vadd.f32 %v7532, 1.1
    %v7661 = vadd.f32 %v7533, 1.1
    %v7662 = vadd.f32 %v7534, 1.1
    %v7663 = vadd.f32 %v7535, 1.1
    %v7664 = vadd.f32 %v7536, 1.1
    %v7665 = vadd.f32 %v7537, 1.1
    %v7666 = vadd.f32 %v7538, 1.1
    %v7667 = vadd.f32 %v7539, 1.1
    %v7668 = vadd.f32 %v7540, 1.1
    %v7669 = vadd.f32 %v7541, 1.1
    %v7670 = vadd.f32 %v7542, 1.1
    %v7671 = vadd.f32 %v7543, 1.1
    %v7672 = vadd.f32 %v7544, 1.1
    %v7673 = vadd.f32 %v7545, 1.1
    %v7674 = vadd.f32 %v7546, 1.1
    %v7675 = vadd.f32 %v7547, 1.1
    %v7676 = vadd.f32 %v7548, 1.1
    %v7677 = vadd.f32 %v7549, 1.1
    %v7678 = vadd.f32 %v7550, 1.1
    %v7679 = vadd.f32 %v7551, 1.1
    %v7680 = vadd.f32 %v7552, 1.1
    %v7681 = vadd.f32 %v7553, 1.1
    %v7682 = vadd.f32 %v7554, 1.1
    %v7683 = vadd.f32 %v7555, 1.1
    %v7684 = vadd.f32 %v7556, 1.1
    %v7685 = vadd.f32 %v7557, 1.1
    %v7686 = vadd.f32 %v7558, 1.1
    %v7687 = vadd.f32 %v7559, 1.1
    %v7688 = vadd.f32 %v7560, 1.1
    %v7689 = vadd.f32 %v7561, 1.1
    %v7690 = vadd.f32 %v7562, 1.1
    %v7691 = vadd.f32 %v7563, 1.1
    %v7692 = vadd.f32 %v7564, 1.1
    %v7693 = vadd.f32 %v7565, 1.1
    %v7694 = vadd.f32 %v7566, 1.1
    %v7695 = vadd.f32 %v7567, 1.1
    %v7696 = vadd.f32 %v7568, 1.1
    %v7697 = vadd.f32 %v7569, 1.1
    %v7698 = vadd.f32 %v7570, 1.1
    %v7699 = vadd.f32 %v7571, 1.1
    %v7700 = vadd.f32 %v7572, 1.1
    %v7701 = vadd.f32 %v7573, 1.1
    %v7702 = vadd.f32 %v7574, 1.1
    %v7703 = vadd.f32 %v7575, 1.1
    %v7704 = vadd.f32 %v7576, 1.1
    %v7705 = vadd.f32 %v7577, 1.1
    %v7706 = vadd.f32 %v7578, 1.1
    %v7707 = vadd.f32 %v7579, 1.1
    %v7708 = vadd.f32 %v7580, 1.1
    %v7709 = vadd.f32 %v7581, 1.1
    %v7710 = vadd.f32 %v7582, 1.1
    %v7711 = vadd.f32 %v7583, 1.1
    %v7712 = vsel %vm2227, 0.0, %v6177
    %v7713 = vsel %vm2227, 0.0, %v6180
    %v7714 = vsel %vm2227, 0.0, %v6185
    %v7715 = vsel %vm2227, 0.0, %v6188
    %v7716 = vsel %vm2227, 0.0, %v6193
    %v7717 = vsel %vm2227, 0.0, %v6196
    %v7718 = vsel %vm2227, 0.0, %v6201
    %v7719 = vsel %vm2227, 0.0, %v6204
    %v7720 = vsel %vm2227, 0.0, %v6209
    %v7721 = vsel %vm2227, 0.0, %v6212
    %v7722 = vsel %vm2227, 0.0, %v6217
    %v7723 = vsel %vm2227, 0.0, %v6220
    %v7724 = vsel %vm2227, 0.0, %v6225
    %v7725 = vsel %vm2227, 0.0, %v6228
    %v7726 = vsel %vm2227, 0.0, %v6233
    %v7727 = vsel %vm2227, 0.0, %v6236
    %v7728 = vsel %vm2227, 0.0, %v6241
    %v7729 = vsel %vm2227, 0.0, %v6244
    %v7730 = vsel %vm2227, 0.0, %v6249
    %v7731 = vsel %vm2227, 0.0, %v6252
    %v7732 = vsel %vm2227, 0.0, %v6257
    %v7733 = vsel %vm2227, 0.0, %v6260
    %v7734 = vsel %vm2227, 0.0, %v6265
    %v7735 = vsel %vm2227, 0.0, %v6268
    %v7736 = vsel %vm2227, 0.0, %v6273
    %v7737 = vsel %vm2227, 0.0, %v6276
    %v7738 = vsel %vm2227, 0.0, %v6281
    %v7739 = vsel %vm2227, 0.0, %v6284
    %v7740 = vsel %vm2227, 0.0, %v6289
    %v7741 = vsel %vm2227, 0.0, %v6292
    %v7742 = vsel %vm2227, 0.0, %v6297
    %v7743 = vsel %vm2227, 0.0, %v6300
    %v7744 = vsel %vm2227, 0.0, %v6305
    %v7745 = vsel %vm2227, 0.0, %v6308
    %v7746 = vsel %vm2227, 0.0, %v6313
    %v7747 = vsel %vm2227, 0.0, %v6316
    %v7748 = vsel %vm2227, 0.0, %v6321
    %v7749 = vsel %vm2227, 0.0, %v6324
    %v7750 = vsel %vm2227, 0.0, %v6329
    %v7751 = vsel %vm2227, 0.0, %v6332
    %v7752 = vsel %vm2227, 0.0, %v6337
    %v7753 = vsel %vm2227, 0.0, %v6340
    %v7754 = vsel %vm2227, 0.0, %v6345
    %v7755 = vsel %vm2227, 0.0, %v6348
    %v7756 = vsel %vm2227, 0.0, %v6353
    %v7757 = vsel %vm2227, 0.0, %v6356
    %v7758 = vsel %vm2227, 0.0, %v6361
    %v7759 = vsel %vm2227, 0.0, %v6364
    %v7760 = vsel %vm2227, 0.0, %v6369
    %v7761 = vsel %vm2227, 0.0, %v6372
    %v7762 = vsel %vm2227, 0.0, %v6377
    %v7763 = vsel %vm2227, 0.0, %v6380
    %v7764 = vsel %vm2227, 0.0, %v6385
    %v7765 = vsel %vm2227, 0.0, %v6388
    %v7766 = vsel %vm2227, 0.0, %v6393
    %v7767 = vsel %vm2227, 0.0, %v6396
    %v7768 = vsel %vm2227, 0.0, %v6401
    %v7769 = vsel %vm2227, 0.0, %v6404
    %v7770 = vsel %vm2227, 0.0, %v6409
    %v7771 = vsel %vm2227, 0.0, %v6412
    %v7772 = vsel %vm2227, 0.0, %v6417
    %v7773 = vsel %vm2227, 0.0, %v6420
    %v7774 = vsel %vm2227, 0.0, %v6425
    %v7775 = vsel %vm2227, 0.0, %v6428
    %v7776 = vsel %vm2227, 0.0, %v6433
    %v7777 = vsel %vm2227, 0.0, %v6436
    %v7778 = vsel %vm2227, 0.0, %v6441
    %v7779 = vsel %vm2227, 0.0, %v6444
    %v7780 = vsel %vm2227, 0.0, %v6449
    %v7781 = vsel %vm2227, 0.0, %v6452
    %v7782 = vsel %vm2227, 0.0, %v6457
    %v7783 = vsel %vm2227, 0.0, %v6460
    %v7784 = vsel %vm2227, 0.0, %v6465
    %v7785 = vsel %vm2227, 0.0, %v6468
    %v7786 = vsel %vm2227, 0.0, %v6473
    %v7787 = vsel %vm2227, 0.0, %v6476
    %v7788 = vsel %vm2227, 0.0, %v6481
    %v7789 = vsel %vm2227, 0.0, %v6484
    %v7790 = vsel %vm2227, 0.0, %v6489
    %v7791 = vsel %vm2227, 0.0, %v6492
    %v7792 = vsel %vm2227, 0.0, %v6497
    %v7793 = vsel %vm2227, 0.0, %v6500
    %v7794 = vsel %vm2227, 0.0, %v6505
    %v7795 = vsel %vm2227, 0.0, %v6508
    %v7796 = vsel %vm2227, 0.0, %v6513
    %v7797 = vsel %vm2227, 0.0, %v6516
    %v7798 = vsel %vm2227, 0.0, %v6521
    %v7799 = vsel %vm2227, 0.0, %v6524
    %v7800 = vsel %vm2227, 0.0, %v6529
    %v7801 = vsel %vm2227, 0.0, %v6532
    %v7802 = vsel %vm2227, 0.0, %v6537
    %v7803 = vsel %vm2227, 0.0, %v6540
    %v7804 = vsel %vm2227, 0.0, %v6545
    %v7805 = vsel %vm2227, 0.0, %v6548
    %v7806 = vsel %vm2227, 0.0, %v6553
    %v7807 = vsel %vm2227, 0.0, %v6556
    %v7808 = vsel %vm2227, 0.0, %v6561
    %v7809 = vsel %vm2227, 0.0, %v6564
    %v7810 = vsel %vm2227, 0.0, %v6569
    %v7811 = vsel %vm2227, 0.0, %v6572
    %v7812 = vsel %vm2227, 0.0, %v6577
    %v7813 = vsel %vm2227, 0.0, %v6580
    %v7814 = vsel %vm2227, 0.0, %v6585
    %v7815 = vsel %vm2227, 0.0, %v6588
    %v7816 = vsel %vm2227, 0.0, %v6593
    %v7817 = vsel %vm2227, 0.0, %v6596
    %v7818 = vsel %vm2227, 0.0, %v6601
    %v7819 = vsel %vm2227, 0.0, %v6604
    %v7820 = vsel %vm2227, 0.0, %v6609
    %v7821 = vsel %vm2227, 0.0, %v6612
    %v7822 = vsel %vm2227, 0.0, %v6617
    %v7823 = vsel %vm2227, 0.0, %v6620
    %v7824 = vsel %vm2227, 0.0, %v6625
    %v7825 = vsel %vm2227, 0.0, %v6628
    %v7826 = vsel %vm2227, 0.0, %v6633
    %v7827 = vsel %vm2227, 0.0, %v6636
    %v7828 = vsel %vm2227, 0.0, %v6641
    %v7829 = vsel %vm2227, 0.0, %v6644
    %v7830 = vsel %vm2227, 0.0, %v6649
    %v7831 = vsel %vm2227, 0.0, %v6652
    %v7832 = vsel %vm2227, 0.0, %v6657
    %v7833 = vsel %vm2227, 0.0, %v6660
    %v7834 = vsel %vm2227, 0.0, %v6665
    %v7835 = vsel %vm2227, 0.0, %v6668
    %v7836 = vsel %vm2227, 0.0, %v6673
    %v7837 = vsel %vm2227, 0.0, %v6676
    %v7838 = vsel %vm2227, 0.0, %v6681
    %v7839 = vsel %vm2227, 0.0, %v6684
    %v7840 = vmul.f32 %v7712, %v7712
    %v7841 = vmul.f32 %v7713, %v7713
    %v7842 = vmul.f32 %v7714, %v7714
    %v7843 = vmul.f32 %v7715, %v7715
    %v7844 = vmul.f32 %v7716, %v7716
    %v7845 = vmul.f32 %v7717, %v7717
    %v7846 = vmul.f32 %v7718, %v7718
    %v7847 = vmul.f32 %v7719, %v7719
    %v7848 = vmul.f32 %v7720, %v7720
    %v7849 = vmul.f32 %v7721, %v7721
    %v7850 = vmul.f32 %v7722, %v7722
    %v7851 = vmul.f32 %v7723, %v7723
    %v7852 = vmul.f32 %v7724, %v7724
    %v7853 = vmul.f32 %v7725, %v7725
    %v7854 = vmul.f32 %v7726, %v7726
    %v7855 = vmul.f32 %v7727, %v7727
    %v7856 = vmul.f32 %v7728, %v7728
    %v7857 = vmul.f32 %v7729, %v7729
    %v7858 = vmul.f32 %v7730, %v7730
    %v7859 = vmul.f32 %v7731, %v7731
    %v7860 = vmul.f32 %v7732, %v7732
    %v7861 = vmul.f32 %v7733, %v7733
    %v7862 = vmul.f32 %v7734, %v7734
    %v7863 = vmul.f32 %v7735, %v7735
    %v7864 = vmul.f32 %v7736, %v7736
    %v7865 = vmul.f32 %v7737, %v7737
    %v7866 = vmul.f32 %v7738, %v7738
    %v7867 = vmul.f32 %v7739, %v7739
    %v7868 = vmul.f32 %v7740, %v7740
    %v7869 = vmul.f32 %v7741, %v7741
    %v7870 = vmul.f32 %v7742, %v7742
    %v7871 = vmul.f32 %v7743, %v7743
    %v7872 = vmul.f32 %v7744, %v7744
    %v7873 = vmul.f32 %v7745, %v7745
    %v7874 = vmul.f32 %v7746, %v7746
    %v7875 = vmul.f32 %v7747, %v7747
    %v7876 = vmul.f32 %v7748, %v7748
    %v7877 = vmul.f32 %v7749, %v7749
    %v7878 = vmul.f32 %v7750, %v7750
    %v7879 = vmul.f32 %v7751, %v7751
    %v7880 = vmul.f32 %v7752, %v7752
    %v7881 = vmul.f32 %v7753, %v7753
    %v7882 = vmul.f32 %v7754, %v7754
    %v7883 = vmul.f32 %v7755, %v7755
    %v7884 = vmul.f32 %v7756, %v7756
    %v7885 = vmul.f32 %v7757, %v7757
    %v7886 = vmul.f32 %v7758, %v7758
    %v7887 = vmul.f32 %v7759, %v7759
    %v7888 = vmul.f32 %v7760, %v7760
    %v7889 = vmul.f32 %v7761, %v7761
    %v7890 = vmul.f32 %v7762, %v7762
    %v7891 = vmul.f32 %v7763, %v7763
    %v7892 = vmul.f32 %v7764, %v7764
    %v7893 = vmul.f32 %v7765, %v7765
    %v7894 = vmul.f32 %v7766, %v7766
    %v7895 = vmul.f32 %v7767, %v7767
    %v7896 = vmul.f32 %v7768, %v7768
    %v7897 = vmul.f32 %v7769, %v7769
    %v7898 = vmul.f32 %v7770, %v7770
    %v7899 = vmul.f32 %v7771, %v7771
    %v7900 = vmul.f32 %v7772, %v7772
    %v7901 = vmul.f32 %v7773, %v7773
    %v7902 = vmul.f32 %v7774, %v7774
    %v7903 = vmul.f32 %v7775, %v7775
    %v7904 = vmul.f32 %v7776, %v7776
    %v7905 = vmul.f32 %v7777, %v7777
    %v7906 = vmul.f32 %v7778, %v7778
    %v7907 = vmul.f32 %v7779, %v7779
    %v7908 = vmul.f32 %v7780, %v7780
    %v7909 = vmul.f32 %v7781, %v7781
    %v7910 = vmul.f32 %v7782, %v7782
    %v7911 = vmul.f32 %v7783, %v7783
    %v7912 = vmul.f32 %v7784, %v7784
    %v7913 = vmul.f32 %v7785, %v7785
    %v7914 = vmul.f32 %v7786, %v7786
    %v7915 = vmul.f32 %v7787, %v7787
    %v7916 = vmul.f32 %v7788, %v7788
    %v7917 = vmul.f32 %v7789, %v7789
    %v7918 = vmul.f32 %v7790, %v7790
    %v7919 = vmul.f32 %v7791, %v7791
    %v7920 = vmul.f32 %v7792, %v7792
    %v7921 = vmul.f32 %v7793, %v7793
    %v7922 = vmul.f32 %v7794, %v7794
    %v7923 = vmul.f32 %v7795, %v7795
    %v7924 = vmul.f32 %v7796, %v7796
    %v7925 = vmul.f32 %v7797, %v7797
    %v7926 = vmul.f32 %v7798, %v7798
    %v7927 = vmul.f32 %v7799, %v7799
    %v7928 = vmul.f32 %v7800, %v7800
    %v7929 = vmul.f32 %v7801, %v7801
    %v7930 = vmul.f32 %v7802, %v7802
    %v7931 = vmul.f32 %v7803, %v7803
    %v7932 = vmul.f32 %v7804, %v7804
    %v7933 = vmul.f32 %v7805, %v7805
    %v7934 = vmul.f32 %v7806, %v7806
    %v7935 = vmul.f32 %v7807, %v7807
    %v7936 = vmul.f32 %v7808, %v7808
    %v7937 = vmul.f32 %v7809, %v7809
    %v7938 = vmul.f32 %v7810, %v7810
    %v7939 = vmul.f32 %v7811, %v7811
    %v7940 = vmul.f32 %v7812, %v7812
    %v7941 = vmul.f32 %v7813, %v7813
    %v7942 = vmul.f32 %v7814, %v7814
    %v7943 = vmul.f32 %v7815, %v7815
    %v7944 = vmul.f32 %v7816, %v7816
    %v7945 = vmul.f32 %v7817, %v7817
    %v7946 = vmul.f32 %v7818, %v7818
    %v7947 = vmul.f32 %v7819, %v7819
    %v7948 = vmul.f32 %v7820, %v7820
    %v7949 = vmul.f32 %v7821, %v7821
    %v7950 = vmul.f32 %v7822, %v7822
    %v7951 = vmul.f32 %v7823, %v7823
    %v7952 = vmul.f32 %v7824, %v7824
    %v7953 = vmul.f32 %v7825, %v7825
    %v7954 = vmul.f32 %v7826, %v7826
    %v7955 = vmul.f32 %v7827, %v7827
    %v7956 = vmul.f32 %v7828, %v7828
    %v7957 = vmul.f32 %v7829, %v7829
    %v7958 = vmul.f32 %v7830, %v7830
    %v7959 = vmul.f32 %v7831, %v7831
    %v7960 = vmul.f32 %v7832, %v7832
    %v7961 = vmul.f32 %v7833, %v7833
    %v7962 = vmul.f32 %v7834, %v7834
    %v7963 = vmul.f32 %v7835, %v7835
    %v7964 = vmul.f32 %v7836, %v7836
    %v7965 = vmul.f32 %v7837, %v7837
    %v7966 = vmul.f32 %v7838, %v7838
    %v7967 = vmul.f32 %v7839, %v7839
    %7968 = vadd.xlane.f32.xlu0 %v7840
    %v7969 = vpop.xlane.xlu0 %7968
    %7970 = vadd.xlane.f32.xlu0 %v7841
    %v7971 = vpop.xlane.xlu0 %7970
    %7972 = vadd.xlane.f32.xlu0 %v7842
    %v7973 = vpop.xlane.xlu0 %7972
    %7974 = vadd.xlane.f32.xlu0 %v7843
    %v7975 = vpop.xlane.xlu0 %7974
    %7976 = vadd.xlane.f32.xlu0 %v7844
    %v7977 = vpop.xlane.xlu0 %7976
    %7978 = vadd.xlane.f32.xlu0 %v7845
    %v7979 = vpop.xlane.xlu0 %7978
    %7980 = vadd.xlane.f32.xlu0 %v7846
    %v7981 = vpop.xlane.xlu0 %7980
    %7982 = vadd.xlane.f32.xlu0 %v7847
    %v7983 = vpop.xlane.xlu0 %7982
    %7984 = vadd.xlane.f32.xlu0 %v7848
    %v7985 = vpop.xlane.xlu0 %7984
    %7986 = vadd.xlane.f32.xlu0 %v7849
    %v7987 = vpop.xlane.xlu0 %7986
    %7988 = vadd.xlane.f32.xlu0 %v7850
    %v7989 = vpop.xlane.xlu0 %7988
    %7990 = vadd.xlane.f32.xlu0 %v7851
    %v7991 = vpop.xlane.xlu0 %7990
    %7992 = vadd.xlane.f32.xlu0 %v7852
    %v7993 = vpop.xlane.xlu0 %7992
    %7994 = vadd.xlane.f32.xlu0 %v7853
    %v7995 = vpop.xlane.xlu0 %7994
    %7996 = vadd.xlane.f32.xlu0 %v7854
    %v7997 = vpop.xlane.xlu0 %7996
    %7998 = vadd.xlane.f32.xlu0 %v7855
    %v7999 = vpop.xlane.xlu0 %7998
    %8000 = vadd.xlane.f32.xlu0 %v7856
    %v8001 = vpop.xlane.xlu0 %8000
    %8002 = vadd.xlane.f32.xlu0 %v7857
    %v8003 = vpop.xlane.xlu0 %8002
    %8004 = vadd.xlane.f32.xlu0 %v7858
    %v8005 = vpop.xlane.xlu0 %8004
    %8006 = vadd.xlane.f32.xlu0 %v7859
    %v8007 = vpop.xlane.xlu0 %8006
    %8008 = vadd.xlane.f32.xlu0 %v7860
    %v8009 = vpop.xlane.xlu0 %8008
    %8010 = vadd.xlane.f32.xlu0 %v7861
    %v8011 = vpop.xlane.xlu0 %8010
    %8012 = vadd.xlane.f32.xlu0 %v7862
    %v8013 = vpop.xlane.xlu0 %8012
    %8014 = vadd.xlane.f32.xlu0 %v7863
    %v8015 = vpop.xlane.xlu0 %8014
    %8016 = vadd.xlane.f32.xlu0 %v7864
    %v8017 = vpop.xlane.xlu0 %8016
    %8018 = vadd.xlane.f32.xlu0 %v7865
    %v8019 = vpop.xlane.xlu0 %8018
    %8020 = vadd.xlane.f32.xlu0 %v7866
    %v8021 = vpop.xlane.xlu0 %8020
    %8022 = vadd.xlane.f32.xlu0 %v7867
    %v8023 = vpop.xlane.xlu0 %8022
    %8024 = vadd.xlane.f32.xlu0 %v7868
    %v8025 = vpop.xlane.xlu0 %8024
    %8026 = vadd.xlane.f32.xlu0 %v7869
    %v8027 = vpop.xlane.xlu0 %8026
    %8028 = vadd.xlane.f32.xlu0 %v7870
    %v8029 = vpop.xlane.xlu0 %8028
    %8030 = vadd.xlane.f32.xlu0 %v7871
    %v8031 = vpop.xlane.xlu0 %8030
    %8032 = vadd.xlane.f32.xlu0 %v7872
    %v8033 = vpop.xlane.xlu0 %8032
    %8034 = vadd.xlane.f32.xlu0 %v7873
    %v8035 = vpop.xlane.xlu0 %8034
    %8036 = vadd.xlane.f32.xlu0 %v7874
    %v8037 = vpop.xlane.xlu0 %8036
    %8038 = vadd.xlane.f32.xlu0 %v7875
    %v8039 = vpop.xlane.xlu0 %8038
    %8040 = vadd.xlane.f32.xlu0 %v7876
    %v8041 = vpop.xlane.xlu0 %8040
    %8042 = vadd.xlane.f32.xlu0 %v7877
    %v8043 = vpop.xlane.xlu0 %8042
    %8044 = vadd.xlane.f32.xlu0 %v7878
    %v8045 = vpop.xlane.xlu0 %8044
    %8046 = vadd.xlane.f32.xlu0 %v7879
    %v8047 = vpop.xlane.xlu0 %8046
    %8048 = vadd.xlane.f32.xlu0 %v7880
    %v8049 = vpop.xlane.xlu0 %8048
    %8050 = vadd.xlane.f32.xlu0 %v7881
    %v8051 = vpop.xlane.xlu0 %8050
    %8052 = vadd.xlane.f32.xlu0 %v7882
    %v8053 = vpop.xlane.xlu0 %8052
    %8054 = vadd.xlane.f32.xlu0 %v7883
    %v8055 = vpop.xlane.xlu0 %8054
    %8056 = vadd.xlane.f32.xlu0 %v7884
    %v8057 = vpop.xlane.xlu0 %8056
    %8058 = vadd.xlane.f32.xlu0 %v7885
    %v8059 = vpop.xlane.xlu0 %8058
    %8060 = vadd.xlane.f32.xlu0 %v7886
    %v8061 = vpop.xlane.xlu0 %8060
    %8062 = vadd.xlane.f32.xlu0 %v7887
    %v8063 = vpop.xlane.xlu0 %8062
    %8064 = vadd.xlane.f32.xlu0 %v7888
    %v8065 = vpop.xlane.xlu0 %8064
    %8066 = vadd.xlane.f32.xlu0 %v7889
    %v8067 = vpop.xlane.xlu0 %8066
    %8068 = vadd.xlane.f32.xlu0 %v7890
    %v8069 = vpop.xlane.xlu0 %8068
    %8070 = vadd.xlane.f32.xlu0 %v7891
    %v8071 = vpop.xlane.xlu0 %8070
    %8072 = vadd.xlane.f32.xlu0 %v7892
    %v8073 = vpop.xlane.xlu0 %8072
    %8074 = vadd.xlane.f32.xlu0 %v7893
    %v8075 = vpop.xlane.xlu0 %8074
    %8076 = vadd.xlane.f32.xlu0 %v7894
    %v8077 = vpop.xlane.xlu0 %8076
    %8078 = vadd.xlane.f32.xlu0 %v7895
    %v8079 = vpop.xlane.xlu0 %8078
    %8080 = vadd.xlane.f32.xlu0 %v7896
    %v8081 = vpop.xlane.xlu0 %8080
    %8082 = vadd.xlane.f32.xlu0 %v7897
    %v8083 = vpop.xlane.xlu0 %8082
    %8084 = vadd.xlane.f32.xlu0 %v7898
    %v8085 = vpop.xlane.xlu0 %8084
    %8086 = vadd.xlane.f32.xlu0 %v7899
    %v8087 = vpop.xlane.xlu0 %8086
    %8088 = vadd.xlane.f32.xlu0 %v7900
    %v8089 = vpop.xlane.xlu0 %8088
    %8090 = vadd.xlane.f32.xlu0 %v7901
    %v8091 = vpop.xlane.xlu0 %8090
    %8092 = vadd.xlane.f32.xlu0 %v7902
    %v8093 = vpop.xlane.xlu0 %8092
    %8094 = vadd.xlane.f32.xlu0 %v7903
    %v8095 = vpop.xlane.xlu0 %8094
    %8096 = vadd.xlane.f32.xlu0 %v7904
    %v8097 = vpop.xlane.xlu0 %8096
    %8098 = vadd.xlane.f32.xlu0 %v7905
    %v8099 = vpop.xlane.xlu0 %8098
    %8100 = vadd.xlane.f32.xlu0 %v7906
    %v8101 = vpop.xlane.xlu0 %8100
    %8102 = vadd.xlane.f32.xlu0 %v7907
    %v8103 = vpop.xlane.xlu0 %8102
    %8104 = vadd.xlane.f32.xlu0 %v7908
    %v8105 = vpop.xlane.xlu0 %8104
    %8106 = vadd.xlane.f32.xlu0 %v7909
    %v8107 = vpop.xlane.xlu0 %8106
    %8108 = vadd.xlane.f32.xlu0 %v7910
    %v8109 = vpop.xlane.xlu0 %8108
    %8110 = vadd.xlane.f32.xlu0 %v7911
    %v8111 = vpop.xlane.xlu0 %8110
    %8112 = vadd.xlane.f32.xlu0 %v7912
    %v8113 = vpop.xlane.xlu0 %8112
    %8114 = vadd.xlane.f32.xlu0 %v7913
    %v8115 = vpop.xlane.xlu0 %8114
    %8116 = vadd.xlane.f32.xlu0 %v7914
    %v8117 = vpop.xlane.xlu0 %8116
    %8118 = vadd.xlane.f32.xlu0 %v7915
    %v8119 = vpop.xlane.xlu0 %8118
    %8120 = vadd.xlane.f32.xlu0 %v7916
    %v8121 = vpop.xlane.xlu0 %8120
    %8122 = vadd.xlane.f32.xlu0 %v7917
    %v8123 = vpop.xlane.xlu0 %8122
    %8124 = vadd.xlane.f32.xlu0 %v7918
    %v8125 = vpop.xlane.xlu0 %8124
    %8126 = vadd.xlane.f32.xlu0 %v7919
    %v8127 = vpop.xlane.xlu0 %8126
    %8128 = vadd.xlane.f32.xlu0 %v7920
    %v8129 = vpop.xlane.xlu0 %8128
    %8130 = vadd.xlane.f32.xlu0 %v7921
    %v8131 = vpop.xlane.xlu0 %8130
    %8132 = vadd.xlane.f32.xlu0 %v7922
    %v8133 = vpop.xlane.xlu0 %8132
    %8134 = vadd.xlane.f32.xlu0 %v7923
    %v8135 = vpop.xlane.xlu0 %8134
    %8136 = vadd.xlane.f32.xlu0 %v7924
    %v8137 = vpop.xlane.xlu0 %8136
    %8138 = vadd.xlane.f32.xlu0 %v7925
    %v8139 = vpop.xlane.xlu0 %8138
    %8140 = vadd.xlane.f32.xlu0 %v7926
    %v8141 = vpop.xlane.xlu0 %8140
    %8142 = vadd.xlane.f32.xlu0 %v7927
    %v8143 = vpop.xlane.xlu0 %8142
    %8144 = vadd.xlane.f32.xlu0 %v7928
    %v8145 = vpop.xlane.xlu0 %8144
    %8146 = vadd.xlane.f32.xlu0 %v7929
    %v8147 = vpop.xlane.xlu0 %8146
    %8148 = vadd.xlane.f32.xlu0 %v7930
    %v8149 = vpop.xlane.xlu0 %8148
    %8150 = vadd.xlane.f32.xlu0 %v7931
    %v8151 = vpop.xlane.xlu0 %8150
    %8152 = vadd.xlane.f32.xlu0 %v7932
    %v8153 = vpop.xlane.xlu0 %8152
    %8154 = vadd.xlane.f32.xlu0 %v7933
    %v8155 = vpop.xlane.xlu0 %8154
    %8156 = vadd.xlane.f32.xlu0 %v7934
    %v8157 = vpop.xlane.xlu0 %8156
    %8158 = vadd.xlane.f32.xlu0 %v7935
    %v8159 = vpop.xlane.xlu0 %8158
    %8160 = vadd.xlane.f32.xlu0 %v7936
    %v8161 = vpop.xlane.xlu0 %8160
    %8162 = vadd.xlane.f32.xlu0 %v7937
    %v8163 = vpop.xlane.xlu0 %8162
    %8164 = vadd.xlane.f32.xlu0 %v7938
    %v8165 = vpop.xlane.xlu0 %8164
    %8166 = vadd.xlane.f32.xlu0 %v7939
    %v8167 = vpop.xlane.xlu0 %8166
    %8168 = vadd.xlane.f32.xlu0 %v7940
    %v8169 = vpop.xlane.xlu0 %8168
    %8170 = vadd.xlane.f32.xlu0 %v7941
    %v8171 = vpop.xlane.xlu0 %8170
    %8172 = vadd.xlane.f32.xlu0 %v7942
    %v8173 = vpop.xlane.xlu0 %8172
    %8174 = vadd.xlane.f32.xlu0 %v7943
    %v8175 = vpop.xlane.xlu0 %8174
    %8176 = vadd.xlane.f32.xlu0 %v7944
    %v8177 = vpop.xlane.xlu0 %8176
    %8178 = vadd.xlane.f32.xlu0 %v7945
    %v8179 = vpop.xlane.xlu0 %8178
    %8180 = vadd.xlane.f32.xlu0 %v7946
    %v8181 = vpop.xlane.xlu0 %8180
    %8182 = vadd.xlane.f32.xlu0 %v7947
    %v8183 = vpop.xlane.xlu0 %8182
    %8184 = vadd.xlane.f32.xlu0 %v7948
    %v8185 = vpop.xlane.xlu0 %8184
    %8186 = vadd.xlane.f32.xlu0 %v7949
    %v8187 = vpop.xlane.xlu0 %8186
    %8188 = vadd.xlane.f32.xlu0 %v7950
    %v8189 = vpop.xlane.xlu0 %8188
    %8190 = vadd.xlane.f32.xlu0 %v7951
    %v8191 = vpop.xlane.xlu0 %8190
    %8192 = vadd.xlane.f32.xlu0 %v7952
    %v8193 = vpop.xlane.xlu0 %8192
    %8194 = vadd.xlane.f32.xlu0 %v7953
    %v8195 = vpop.xlane.xlu0 %8194
    %8196 = vadd.xlane.f32.xlu0 %v7954
    %v8197 = vpop.xlane.xlu0 %8196
    %8198 = vadd.xlane.f32.xlu0 %v7955
    %v8199 = vpop.xlane.xlu0 %8198
    %8200 = vadd.xlane.f32.xlu0 %v7956
    %v8201 = vpop.xlane.xlu0 %8200
    %8202 = vadd.xlane.f32.xlu0 %v7957
    %v8203 = vpop.xlane.xlu0 %8202
    %8204 = vadd.xlane.f32.xlu0 %v7958
    %v8205 = vpop.xlane.xlu0 %8204
    %8206 = vadd.xlane.f32.xlu0 %v7959
    %v8207 = vpop.xlane.xlu0 %8206
    %8208 = vadd.xlane.f32.xlu0 %v7960
    %v8209 = vpop.xlane.xlu0 %8208
    %8210 = vadd.xlane.f32.xlu0 %v7961
    %v8211 = vpop.xlane.xlu0 %8210
    %8212 = vadd.xlane.f32.xlu0 %v7962
    %v8213 = vpop.xlane.xlu0 %8212
    %8214 = vadd.xlane.f32.xlu0 %v7963
    %v8215 = vpop.xlane.xlu0 %8214
    %8216 = vadd.xlane.f32.xlu0 %v7964
    %v8217 = vpop.xlane.xlu0 %8216
    %8218 = vadd.xlane.f32.xlu0 %v7965
    %v8219 = vpop.xlane.xlu0 %8218
    %8220 = vadd.xlane.f32.xlu0 %v7966
    %v8221 = vpop.xlane.xlu0 %8220
    %8222 = vadd.xlane.f32.xlu0 %v7967
    %v8223 = vpop.xlane.xlu0 %8222
    %v8224 = vmax.f32 %v7969, 1e-08
    %v8225 = vmax.f32 %v7971, 1e-08
    %v8226 = vmax.f32 %v7973, 1e-08
    %v8227 = vmax.f32 %v7975, 1e-08
    %v8228 = vmax.f32 %v7977, 1e-08
    %v8229 = vmax.f32 %v7979, 1e-08
    %v8230 = vmax.f32 %v7981, 1e-08
    %v8231 = vmax.f32 %v7983, 1e-08
    %v8232 = vmax.f32 %v7985, 1e-08
    %v8233 = vmax.f32 %v7987, 1e-08
    %v8234 = vmax.f32 %v7989, 1e-08
    %v8235 = vmax.f32 %v7991, 1e-08
    %v8236 = vmax.f32 %v7993, 1e-08
    %v8237 = vmax.f32 %v7995, 1e-08
    %v8238 = vmax.f32 %v7997, 1e-08
    %v8239 = vmax.f32 %v7999, 1e-08
    %v8240 = vmax.f32 %v8001, 1e-08
    %v8241 = vmax.f32 %v8003, 1e-08
    %v8242 = vmax.f32 %v8005, 1e-08
    %v8243 = vmax.f32 %v8007, 1e-08
    %v8244 = vmax.f32 %v8009, 1e-08
    %v8245 = vmax.f32 %v8011, 1e-08
    %v8246 = vmax.f32 %v8013, 1e-08
    %v8247 = vmax.f32 %v8015, 1e-08
    %v8248 = vmax.f32 %v8017, 1e-08
    %v8249 = vmax.f32 %v8019, 1e-08
    %v8250 = vmax.f32 %v8021, 1e-08
    %v8251 = vmax.f32 %v8023, 1e-08
    %v8252 = vmax.f32 %v8025, 1e-08
    %v8253 = vmax.f32 %v8027, 1e-08
    %v8254 = vmax.f32 %v8029, 1e-08
    %v8255 = vmax.f32 %v8031, 1e-08
    %v8256 = vmax.f32 %v8033, 1e-08
    %v8257 = vmax.f32 %v8035, 1e-08
    %v8258 = vmax.f32 %v8037, 1e-08
    %v8259 = vmax.f32 %v8039, 1e-08
    %v8260 = vmax.f32 %v8041, 1e-08
    %v8261 = vmax.f32 %v8043, 1e-08
    %v8262 = vmax.f32 %v8045, 1e-08
    %v8263 = vmax.f32 %v8047, 1e-08
    %v8264 = vmax.f32 %v8049, 1e-08
    %v8265 = vmax.f32 %v8051, 1e-08
    %v8266 = vmax.f32 %v8053, 1e-08
    %v8267 = vmax.f32 %v8055, 1e-08
    %v8268 = vmax.f32 %v8057, 1e-08
    %v8269 = vmax.f32 %v8059, 1e-08
    %v8270 = vmax.f32 %v8061, 1e-08
    %v8271 = vmax.f32 %v8063, 1e-08
    %v8272 = vmax.f32 %v8065, 1e-08
    %v8273 = vmax.f32 %v8067, 1e-08
    %v8274 = vmax.f32 %v8069, 1e-08
    %v8275 = vmax.f32 %v8071, 1e-08
    %v8276 = vmax.f32 %v8073, 1e-08
    %v8277 = vmax.f32 %v8075, 1e-08
    %v8278 = vmax.f32 %v8077, 1e-08
    %v8279 = vmax.f32 %v8079, 1e-08
    %v8280 = vmax.f32 %v8081, 1e-08
    %v8281 = vmax.f32 %v8083, 1e-08
    %v8282 = vmax.f32 %v8085, 1e-08
    %v8283 = vmax.f32 %v8087, 1e-08
    %v8284 = vmax.f32 %v8089, 1e-08
    %v8285 = vmax.f32 %v8091, 1e-08
    %v8286 = vmax.f32 %v8093, 1e-08
    %v8287 = vmax.f32 %v8095, 1e-08
    %v8288 = vmax.f32 %v8097, 1e-08
    %v8289 = vmax.f32 %v8099, 1e-08
    %v8290 = vmax.f32 %v8101, 1e-08
    %v8291 = vmax.f32 %v8103, 1e-08
    %v8292 = vmax.f32 %v8105, 1e-08
    %v8293 = vmax.f32 %v8107, 1e-08
    %v8294 = vmax.f32 %v8109, 1e-08
    %v8295 = vmax.f32 %v8111, 1e-08
    %v8296 = vmax.f32 %v8113, 1e-08
    %v8297 = vmax.f32 %v8115, 1e-08
    %v8298 = vmax.f32 %v8117, 1e-08
    %v8299 = vmax.f32 %v8119, 1e-08
    %v8300 = vmax.f32 %v8121, 1e-08
    %v8301 = vmax.f32 %v8123, 1e-08
    %v8302 = vmax.f32 %v8125, 1e-08
    %v8303 = vmax.f32 %v8127, 1e-08
    %v8304 = vmax.f32 %v8129, 1e-08
    %v8305 = vmax.f32 %v8131, 1e-08
    %v8306 = vmax.f32 %v8133, 1e-08
    %v8307 = vmax.f32 %v8135, 1e-08
    %v8308 = vmax.f32 %v8137, 1e-08
    %v8309 = vmax.f32 %v8139, 1e-08
    %v8310 = vmax.f32 %v8141, 1e-08
    %v8311 = vmax.f32 %v8143, 1e-08
    %v8312 = vmax.f32 %v8145, 1e-08
    %v8313 = vmax.f32 %v8147, 1e-08
    %v8314 = vmax.f32 %v8149, 1e-08
    %v8315 = vmax.f32 %v8151, 1e-08
    %v8316 = vmax.f32 %v8153, 1e-08
    %v8317 = vmax.f32 %v8155, 1e-08
    %v8318 = vmax.f32 %v8157, 1e-08
    %v8319 = vmax.f32 %v8159, 1e-08
    %v8320 = vmax.f32 %v8161, 1e-08
    %v8321 = vmax.f32 %v8163, 1e-08
    %v8322 = vmax.f32 %v8165, 1e-08
    %v8323 = vmax.f32 %v8167, 1e-08
    %v8324 = vmax.f32 %v8169, 1e-08
    %v8325 = vmax.f32 %v8171, 1e-08
    %v8326 = vmax.f32 %v8173, 1e-08
    %v8327 = vmax.f32 %v8175, 1e-08
    %v8328 = vmax.f32 %v8177, 1e-08
    %v8329 = vmax.f32 %v8179, 1e-08
    %v8330 = vmax.f32 %v8181, 1e-08
    %v8331 = vmax.f32 %v8183, 1e-08
    %v8332 = vmax.f32 %v8185, 1e-08
    %v8333 = vmax.f32 %v8187, 1e-08
    %v8334 = vmax.f32 %v8189, 1e-08
    %v8335 = vmax.f32 %v8191, 1e-08
    %v8336 = vmax.f32 %v8193, 1e-08
    %v8337 = vmax.f32 %v8195, 1e-08
    %v8338 = vmax.f32 %v8197, 1e-08
    %v8339 = vmax.f32 %v8199, 1e-08
    %v8340 = vmax.f32 %v8201, 1e-08
    %v8341 = vmax.f32 %v8203, 1e-08
    %v8342 = vmax.f32 %v8205, 1e-08
    %v8343 = vmax.f32 %v8207, 1e-08
    %v8344 = vmax.f32 %v8209, 1e-08
    %v8345 = vmax.f32 %v8211, 1e-08
    %v8346 = vmax.f32 %v8213, 1e-08
    %v8347 = vmax.f32 %v8215, 1e-08
    %v8348 = vmax.f32 %v8217, 1e-08
    %v8349 = vmax.f32 %v8219, 1e-08
    %v8350 = vmax.f32 %v8221, 1e-08
    %v8351 = vmax.f32 %v8223, 1e-08
    %v8352 = vmul.f32 %v7584, %v7584
    %v8353 = vmul.f32 %v7585, %v7585
    %v8354 = vmul.f32 %v7586, %v7586
    %v8355 = vmul.f32 %v7587, %v7587
    %v8356 = vmul.f32 %v7588, %v7588
    %v8357 = vmul.f32 %v7589, %v7589
    %v8358 = vmul.f32 %v7590, %v7590
    %v8359 = vmul.f32 %v7591, %v7591
    %v8360 = vmul.f32 %v7592, %v7592
    %v8361 = vmul.f32 %v7593, %v7593
    %v8362 = vmul.f32 %v7594, %v7594
    %v8363 = vmul.f32 %v7595, %v7595
    %v8364 = vmul.f32 %v7596, %v7596
    %v8365 = vmul.f32 %v7597, %v7597
    %v8366 = vmul.f32 %v7598, %v7598
    %v8367 = vmul.f32 %v7599, %v7599
    %v8368 = vmul.f32 %v7600, %v7600
    %v8369 = vmul.f32 %v7601, %v7601
    %v8370 = vmul.f32 %v7602, %v7602
    %v8371 = vmul.f32 %v7603, %v7603
    %v8372 = vmul.f32 %v7604, %v7604
    %v8373 = vmul.f32 %v7605, %v7605
    %v8374 = vmul.f32 %v7606, %v7606
    %v8375 = vmul.f32 %v7607, %v7607
    %v8376 = vmul.f32 %v7608, %v7608
    %v8377 = vmul.f32 %v7609, %v7609
    %v8378 = vmul.f32 %v7610, %v7610
    %v8379 = vmul.f32 %v7611, %v7611
    %v8380 = vmul.f32 %v7612, %v7612
    %v8381 = vmul.f32 %v7613, %v7613
    %v8382 = vmul.f32 %v7614, %v7614
    %v8383 = vmul.f32 %v7615, %v7615
    %v8384 = vmul.f32 %v7616, %v7616
    %v8385 = vmul.f32 %v7617, %v7617
    %v8386 = vmul.f32 %v7618, %v7618
    %v8387 = vmul.f32 %v7619, %v7619
    %v8388 = vmul.f32 %v7620, %v7620
    %v8389 = vmul.f32 %v7621, %v7621
    %v8390 = vmul.f32 %v7622, %v7622
    %v8391 = vmul.f32 %v7623, %v7623
    %v8392 = vmul.f32 %v7624, %v7624
    %v8393 = vmul.f32 %v7625, %v7625
    %v8394 = vmul.f32 %v7626, %v7626
    %v8395 = vmul.f32 %v7627, %v7627
    %v8396 = vmul.f32 %v7628, %v7628
    %v8397 = vmul.f32 %v7629, %v7629
    %v8398 = vmul.f32 %v7630, %v7630
    %v8399 = vmul.f32 %v7631, %v7631
    %v8400 = vmul.f32 %v7632, %v7632
    %v8401 = vmul.f32 %v7633, %v7633
    %v8402 = vmul.f32 %v7634, %v7634
    %v8403 = vmul.f32 %v7635, %v7635
    %v8404 = vmul.f32 %v7636, %v7636
    %v8405 = vmul.f32 %v7637, %v7637
    %v8406 = vmul.f32 %v7638, %v7638
    %v8407 = vmul.f32 %v7639, %v7639
    %v8408 = vmul.f32 %v7640, %v7640
    %v8409 = vmul.f32 %v7641, %v7641
    %v8410 = vmul.f32 %v7642, %v7642
    %v8411 = vmul.f32 %v7643, %v7643
    %v8412 = vmul.f32 %v7644, %v7644
    %v8413 = vmul.f32 %v7645, %v7645
    %v8414 = vmul.f32 %v7646, %v7646
    %v8415 = vmul.f32 %v7647, %v7647
    %v8416 = vmul.f32 %v7648, %v7648
    %v8417 = vmul.f32 %v7649, %v7649
    %v8418 = vmul.f32 %v7650, %v7650
    %v8419 = vmul.f32 %v7651, %v7651
    %v8420 = vmul.f32 %v7652, %v7652
    %v8421 = vmul.f32 %v7653, %v7653
    %v8422 = vmul.f32 %v7654, %v7654
    %v8423 = vmul.f32 %v7655, %v7655
    %v8424 = vmul.f32 %v7656, %v7656
    %v8425 = vmul.f32 %v7657, %v7657
    %v8426 = vmul.f32 %v7658, %v7658
    %v8427 = vmul.f32 %v7659, %v7659
    %v8428 = vmul.f32 %v7660, %v7660
    %v8429 = vmul.f32 %v7661, %v7661
    %v8430 = vmul.f32 %v7662, %v7662
    %v8431 = vmul.f32 %v7663, %v7663
    %v8432 = vmul.f32 %v7664, %v7664
    %v8433 = vmul.f32 %v7665, %v7665
    %v8434 = vmul.f32 %v7666, %v7666
    %v8435 = vmul.f32 %v7667, %v7667
    %v8436 = vmul.f32 %v7668, %v7668
    %v8437 = vmul.f32 %v7669, %v7669
    %v8438 = vmul.f32 %v7670, %v7670
    %v8439 = vmul.f32 %v7671, %v7671
    %v8440 = vmul.f32 %v7672, %v7672
    %v8441 = vmul.f32 %v7673, %v7673
    %v8442 = vmul.f32 %v7674, %v7674
    %v8443 = vmul.f32 %v7675, %v7675
    %v8444 = vmul.f32 %v7676, %v7676
    %v8445 = vmul.f32 %v7677, %v7677
    %v8446 = vmul.f32 %v7678, %v7678
    %v8447 = vmul.f32 %v7679, %v7679
    %v8448 = vmul.f32 %v7680, %v7680
    %v8449 = vmul.f32 %v7681, %v7681
    %v8450 = vmul.f32 %v7682, %v7682
    %v8451 = vmul.f32 %v7683, %v7683
    %v8452 = vmul.f32 %v7684, %v7684
    %v8453 = vmul.f32 %v7685, %v7685
    %v8454 = vmul.f32 %v7686, %v7686
    %v8455 = vmul.f32 %v7687, %v7687
    %v8456 = vmul.f32 %v7688, %v7688
    %v8457 = vmul.f32 %v7689, %v7689
    %v8458 = vmul.f32 %v7690, %v7690
    %v8459 = vmul.f32 %v7691, %v7691
    %v8460 = vmul.f32 %v7692, %v7692
    %v8461 = vmul.f32 %v7693, %v7693
    %v8462 = vmul.f32 %v7694, %v7694
    %v8463 = vmul.f32 %v7695, %v7695
    %v8464 = vmul.f32 %v7696, %v7696
    %v8465 = vmul.f32 %v7697, %v7697
    %v8466 = vmul.f32 %v7698, %v7698
    %v8467 = vmul.f32 %v7699, %v7699
    %v8468 = vmul.f32 %v7700, %v7700
    %v8469 = vmul.f32 %v7701, %v7701
    %v8470 = vmul.f32 %v7702, %v7702
    %v8471 = vmul.f32 %v7703, %v7703
    %v8472 = vmul.f32 %v7704, %v7704
    %v8473 = vmul.f32 %v7705, %v7705
    %v8474 = vmul.f32 %v7706, %v7706
    %v8475 = vmul.f32 %v7707, %v7707
    %v8476 = vmul.f32 %v7708, %v7708
    %v8477 = vmul.f32 %v7709, %v7709
    %v8478 = vmul.f32 %v7710, %v7710
    %v8479 = vmul.f32 %v7711, %v7711
    %v8480 = vsub.f32 %v8352, 1.0
    %v8481 = vsub.f32 %v8353, 1.0
    %v8482 = vsub.f32 %v8354, 1.0
    %v8483 = vsub.f32 %v8355, 1.0
    %v8484 = vsub.f32 %v8356, 1.0
    %v8485 = vsub.f32 %v8357, 1.0
    %v8486 = vsub.f32 %v8358, 1.0
    %v8487 = vsub.f32 %v8359, 1.0
    %v8488 = vsub.f32 %v8360, 1.0
    %v8489 = vsub.f32 %v8361, 1.0
    %v8490 = vsub.f32 %v8362, 1.0
    %v8491 = vsub.f32 %v8363, 1.0
    %v8492 = vsub.f32 %v8364, 1.0
    %v8493 = vsub.f32 %v8365, 1.0
    %v8494 = vsub.f32 %v8366, 1.0
    %v8495 = vsub.f32 %v8367, 1.0
    %v8496 = vsub.f32 %v8368, 1.0
    %v8497 = vsub.f32 %v8369, 1.0
    %v8498 = vsub.f32 %v8370, 1.0
    %v8499 = vsub.f32 %v8371, 1.0
    %v8500 = vsub.f32 %v8372, 1.0
    %v8501 = vsub.f32 %v8373, 1.0
    %v8502 = vsub.f32 %v8374, 1.0
    %v8503 = vsub.f32 %v8375, 1.0
    %v8504 = vsub.f32 %v8376, 1.0
    %v8505 = vsub.f32 %v8377, 1.0
    %v8506 = vsub.f32 %v8378, 1.0
    %v8507 = vsub.f32 %v8379, 1.0
    %v8508 = vsub.f32 %v8380, 1.0
    %v8509 = vsub.f32 %v8381, 1.0
    %v8510 = vsub.f32 %v8382, 1.0
    %v8511 = vsub.f32 %v8383, 1.0
    %v8512 = vsub.f32 %v8384, 1.0
    %v8513 = vsub.f32 %v8385, 1.0
    %v8514 = vsub.f32 %v8386, 1.0
    %v8515 = vsub.f32 %v8387, 1.0
    %v8516 = vsub.f32 %v8388, 1.0
    %v8517 = vsub.f32 %v8389, 1.0
    %v8518 = vsub.f32 %v8390, 1.0
    %v8519 = vsub.f32 %v8391, 1.0
    %v8520 = vsub.f32 %v8392, 1.0
    %v8521 = vsub.f32 %v8393, 1.0
    %v8522 = vsub.f32 %v8394, 1.0
    %v8523 = vsub.f32 %v8395, 1.0
    %v8524 = vsub.f32 %v8396, 1.0
    %v8525 = vsub.f32 %v8397, 1.0
    %v8526 = vsub.f32 %v8398, 1.0
    %v8527 = vsub.f32 %v8399, 1.0
    %v8528 = vsub.f32 %v8400, 1.0
    %v8529 = vsub.f32 %v8401, 1.0
    %v8530 = vsub.f32 %v8402, 1.0
    %v8531 = vsub.f32 %v8403, 1.0
    %v8532 = vsub.f32 %v8404, 1.0
    %v8533 = vsub.f32 %v8405, 1.0
    %v8534 = vsub.f32 %v8406, 1.0
    %v8535 = vsub.f32 %v8407, 1.0
    %v8536 = vsub.f32 %v8408, 1.0
    %v8537 = vsub.f32 %v8409, 1.0
    %v8538 = vsub.f32 %v8410, 1.0
    %v8539 = vsub.f32 %v8411, 1.0
    %v8540 = vsub.f32 %v8412, 1.0
    %v8541 = vsub.f32 %v8413, 1.0
    %v8542 = vsub.f32 %v8414, 1.0
    %v8543 = vsub.f32 %v8415, 1.0
    %v8544 = vsub.f32 %v8416, 1.0
    %v8545 = vsub.f32 %v8417, 1.0
    %v8546 = vsub.f32 %v8418, 1.0
    %v8547 = vsub.f32 %v8419, 1.0
    %v8548 = vsub.f32 %v8420, 1.0
    %v8549 = vsub.f32 %v8421, 1.0
    %v8550 = vsub.f32 %v8422, 1.0
    %v8551 = vsub.f32 %v8423, 1.0
    %v8552 = vsub.f32 %v8424, 1.0
    %v8553 = vsub.f32 %v8425, 1.0
    %v8554 = vsub.f32 %v8426, 1.0
    %v8555 = vsub.f32 %v8427, 1.0
    %v8556 = vsub.f32 %v8428, 1.0
    %v8557 = vsub.f32 %v8429, 1.0
    %v8558 = vsub.f32 %v8430, 1.0
    %v8559 = vsub.f32 %v8431, 1.0
    %v8560 = vsub.f32 %v8432, 1.0
    %v8561 = vsub.f32 %v8433, 1.0
    %v8562 = vsub.f32 %v8434, 1.0
    %v8563 = vsub.f32 %v8435, 1.0
    %v8564 = vsub.f32 %v8436, 1.0
    %v8565 = vsub.f32 %v8437, 1.0
    %v8566 = vsub.f32 %v8438, 1.0
    %v8567 = vsub.f32 %v8439, 1.0
    %v8568 = vsub.f32 %v8440, 1.0
    %v8569 = vsub.f32 %v8441, 1.0
    %v8570 = vsub.f32 %v8442, 1.0
    %v8571 = vsub.f32 %v8443, 1.0
    %v8572 = vsub.f32 %v8444, 1.0
    %v8573 = vsub.f32 %v8445, 1.0
    %v8574 = vsub.f32 %v8446, 1.0
    %v8575 = vsub.f32 %v8447, 1.0
    %v8576 = vsub.f32 %v8448, 1.0
    %v8577 = vsub.f32 %v8449, 1.0
    %v8578 = vsub.f32 %v8450, 1.0
    %v8579 = vsub.f32 %v8451, 1.0
    %v8580 = vsub.f32 %v8452, 1.0
    %v8581 = vsub.f32 %v8453, 1.0
    %v8582 = vsub.f32 %v8454, 1.0
    %v8583 = vsub.f32 %v8455, 1.0
    %v8584 = vsub.f32 %v8456, 1.0
    %v8585 = vsub.f32 %v8457, 1.0
    %v8586 = vsub.f32 %v8458, 1.0
    %v8587 = vsub.f32 %v8459, 1.0
    %v8588 = vsub.f32 %v8460, 1.0
    %v8589 = vsub.f32 %v8461, 1.0
    %v8590 = vsub.f32 %v8462, 1.0
    %v8591 = vsub.f32 %v8463, 1.0
    %v8592 = vsub.f32 %v8464, 1.0
    %v8593 = vsub.f32 %v8465, 1.0
    %v8594 = vsub.f32 %v8466, 1.0
    %v8595 = vsub.f32 %v8467, 1.0
    %v8596 = vsub.f32 %v8468, 1.0
    %v8597 = vsub.f32 %v8469, 1.0
    %v8598 = vsub.f32 %v8470, 1.0
    %v8599 = vsub.f32 %v8471, 1.0
    %v8600 = vsub.f32 %v8472, 1.0
    %v8601 = vsub.f32 %v8473, 1.0
    %v8602 = vsub.f32 %v8474, 1.0
    %v8603 = vsub.f32 %v8475, 1.0
    %v8604 = vsub.f32 %v8476, 1.0
    %v8605 = vsub.f32 %v8477, 1.0
    %v8606 = vsub.f32 %v8478, 1.0
    %v8607 = vsub.f32 %v8479, 1.0
    %v8608 = vrcp.pop %v8224
    %v8609 = vmul.f32 %v8480, %v8608
    %v8610 = vrcp.pop %v8225
    %v8611 = vmul.f32 %v8481, %v8610
    %v8612 = vrcp.pop %v8226
    %v8613 = vmul.f32 %v8482, %v8612
    %v8614 = vrcp.pop %v8227
    %v8615 = vmul.f32 %v8483, %v8614
    %v8616 = vrcp.pop %v8228
    %v8617 = vmul.f32 %v8484, %v8616
    %v8618 = vrcp.pop %v8229
    %v8619 = vmul.f32 %v8485, %v8618
    %v8620 = vrcp.pop %v8230
    %v8621 = vmul.f32 %v8486, %v8620
    %v8622 = vrcp.pop %v8231
    %v8623 = vmul.f32 %v8487, %v8622
    %v8624 = vrcp.pop %v8232
    %v8625 = vmul.f32 %v8488, %v8624
    %v8626 = vrcp.pop %v8233
    %v8627 = vmul.f32 %v8489, %v8626
    %v8628 = vrcp.pop %v8234
    %v8629 = vmul.f32 %v8490, %v8628
    %v8630 = vrcp.pop %v8235
    %v8631 = vmul.f32 %v8491, %v8630
    %v8632 = vrcp.pop %v8236
    %v8633 = vmul.f32 %v8492, %v8632
    %v8634 = vrcp.pop %v8237
    %v8635 = vmul.f32 %v8493, %v8634
    %v8636 = vrcp.pop %v8238
    %v8637 = vmul.f32 %v8494, %v8636
    %v8638 = vrcp.pop %v8239
    %v8639 = vmul.f32 %v8495, %v8638
    %v8640 = vrcp.pop %v8240
    %v8641 = vmul.f32 %v8496, %v8640
    %v8642 = vrcp.pop %v8241
    %v8643 = vmul.f32 %v8497, %v8642
    %v8644 = vrcp.pop %v8242
    %v8645 = vmul.f32 %v8498, %v8644
    %v8646 = vrcp.pop %v8243
    %v8647 = vmul.f32 %v8499, %v8646
    %v8648 = vrcp.pop %v8244
    %v8649 = vmul.f32 %v8500, %v8648
    %v8650 = vrcp.pop %v8245
    %v8651 = vmul.f32 %v8501, %v8650
    %v8652 = vrcp.pop %v8246
    %v8653 = vmul.f32 %v8502, %v8652
    %v8654 = vrcp.pop %v8247
    %v8655 = vmul.f32 %v8503, %v8654
    %v8656 = vrcp.pop %v8248
    %v8657 = vmul.f32 %v8504, %v8656
    %v8658 = vrcp.pop %v8249
    %v8659 = vmul.f32 %v8505, %v8658
    %v8660 = vrcp.pop %v8250
    %v8661 = vmul.f32 %v8506, %v8660
    %v8662 = vrcp.pop %v8251
    %v8663 = vmul.f32 %v8507, %v8662
    %v8664 = vrcp.pop %v8252
    %v8665 = vmul.f32 %v8508, %v8664
    %v8666 = vrcp.pop %v8253
    %v8667 = vmul.f32 %v8509, %v8666
    %v8668 = vrcp.pop %v8254
    %v8669 = vmul.f32 %v8510, %v8668
    %v8670 = vrcp.pop %v8255
    %v8671 = vmul.f32 %v8511, %v8670
    %v8672 = vrcp.pop %v8256
    %v8673 = vmul.f32 %v8512, %v8672
    %v8674 = vrcp.pop %v8257
    %v8675 = vmul.f32 %v8513, %v8674
    %v8676 = vrcp.pop %v8258
    %v8677 = vmul.f32 %v8514, %v8676
    %v8678 = vrcp.pop %v8259
    %v8679 = vmul.f32 %v8515, %v8678
    %v8680 = vrcp.pop %v8260
    %v8681 = vmul.f32 %v8516, %v8680
    %v8682 = vrcp.pop %v8261
    %v8683 = vmul.f32 %v8517, %v8682
    %v8684 = vrcp.pop %v8262
    %v8685 = vmul.f32 %v8518, %v8684
    %v8686 = vrcp.pop %v8263
    %v8687 = vmul.f32 %v8519, %v8686
    %v8688 = vrcp.pop %v8264
    %v8689 = vmul.f32 %v8520, %v8688
    %v8690 = vrcp.pop %v8265
    %v8691 = vmul.f32 %v8521, %v8690
    %v8692 = vrcp.pop %v8266
    %v8693 = vmul.f32 %v8522, %v8692
    %v8694 = vrcp.pop %v8267
    %v8695 = vmul.f32 %v8523, %v8694
    %v8696 = vrcp.pop %v8268
    %v8697 = vmul.f32 %v8524, %v8696
    %v8698 = vrcp.pop %v8269
    %v8699 = vmul.f32 %v8525, %v8698
    %v8700 = vrcp.pop %v8270
    %v8701 = vmul.f32 %v8526, %v8700
    %v8702 = vrcp.pop %v8271
    %v8703 = vmul.f32 %v8527, %v8702
    %v8704 = vrcp.pop %v8272
    %v8705 = vmul.f32 %v8528, %v8704
    %v8706 = vrcp.pop %v8273
    %v8707 = vmul.f32 %v8529, %v8706
    %v8708 = vrcp.pop %v8274
    %v8709 = vmul.f32 %v8530, %v8708
    %v8710 = vrcp.pop %v8275
    %v8711 = vmul.f32 %v8531, %v8710
    %v8712 = vrcp.pop %v8276
    %v8713 = vmul.f32 %v8532, %v8712
    %v8714 = vrcp.pop %v8277
    %v8715 = vmul.f32 %v8533, %v8714
    %v8716 = vrcp.pop %v8278
    %v8717 = vmul.f32 %v8534, %v8716
    %v8718 = vrcp.pop %v8279
    %v8719 = vmul.f32 %v8535, %v8718
    %v8720 = vrcp.pop %v8280
    %v8721 = vmul.f32 %v8536, %v8720
    %v8722 = vrcp.pop %v8281
    %v8723 = vmul.f32 %v8537, %v8722
    %v8724 = vrcp.pop %v8282
    %v8725 = vmul.f32 %v8538, %v8724
    %v8726 = vrcp.pop %v8283
    %v8727 = vmul.f32 %v8539, %v8726
    %v8728 = vrcp.pop %v8284
    %v8729 = vmul.f32 %v8540, %v8728
    %v8730 = vrcp.pop %v8285
    %v8731 = vmul.f32 %v8541, %v8730
    %v8732 = vrcp.pop %v8286
    %v8733 = vmul.f32 %v8542, %v8732
    %v8734 = vrcp.pop %v8287
    %v8735 = vmul.f32 %v8543, %v8734
    %v8736 = vrcp.pop %v8288
    %v8737 = vmul.f32 %v8544, %v8736
    %v8738 = vrcp.pop %v8289
    %v8739 = vmul.f32 %v8545, %v8738
    %v8740 = vrcp.pop %v8290
    %v8741 = vmul.f32 %v8546, %v8740
    %v8742 = vrcp.pop %v8291
    %v8743 = vmul.f32 %v8547, %v8742
    %v8744 = vrcp.pop %v8292
    %v8745 = vmul.f32 %v8548, %v8744
    %v8746 = vrcp.pop %v8293
    %v8747 = vmul.f32 %v8549, %v8746
    %v8748 = vrcp.pop %v8294
    %v8749 = vmul.f32 %v8550, %v8748
    %v8750 = vrcp.pop %v8295
    %v8751 = vmul.f32 %v8551, %v8750
    %v8752 = vrcp.pop %v8296
    %v8753 = vmul.f32 %v8552, %v8752
    %v8754 = vrcp.pop %v8297
    %v8755 = vmul.f32 %v8553, %v8754
    %v8756 = vrcp.pop %v8298
    %v8757 = vmul.f32 %v8554, %v8756
    %v8758 = vrcp.pop %v8299
    %v8759 = vmul.f32 %v8555, %v8758
    %v8760 = vrcp.pop %v8300
    %v8761 = vmul.f32 %v8556, %v8760
    %v8762 = vrcp.pop %v8301
    %v8763 = vmul.f32 %v8557, %v8762
    %v8764 = vrcp.pop %v8302
    %v8765 = vmul.f32 %v8558, %v8764
    %v8766 = vrcp.pop %v8303
    %v8767 = vmul.f32 %v8559, %v8766
    %v8768 = vrcp.pop %v8304
    %v8769 = vmul.f32 %v8560, %v8768
    %v8770 = vrcp.pop %v8305
    %v8771 = vmul.f32 %v8561, %v8770
    %v8772 = vrcp.pop %v8306
    %v8773 = vmul.f32 %v8562, %v8772
    %v8774 = vrcp.pop %v8307
    %v8775 = vmul.f32 %v8563, %v8774
    %v8776 = vrcp.pop %v8308
    %v8777 = vmul.f32 %v8564, %v8776
    %v8778 = vrcp.pop %v8309
    %v8779 = vmul.f32 %v8565, %v8778
    %v8780 = vrcp.pop %v8310
    %v8781 = vmul.f32 %v8566, %v8780
    %v8782 = vrcp.pop %v8311
    %v8783 = vmul.f32 %v8567, %v8782
    %v8784 = vrcp.pop %v8312
    %v8785 = vmul.f32 %v8568, %v8784
    %v8786 = vrcp.pop %v8313
    %v8787 = vmul.f32 %v8569, %v8786
    %v8788 = vrcp.pop %v8314
    %v8789 = vmul.f32 %v8570, %v8788
    %v8790 = vrcp.pop %v8315
    %v8791 = vmul.f32 %v8571, %v8790
    %v8792 = vrcp.pop %v8316
    %v8793 = vmul.f32 %v8572, %v8792
    %v8794 = vrcp.pop %v8317
    %v8795 = vmul.f32 %v8573, %v8794
    %v8796 = vrcp.pop %v8318
    %v8797 = vmul.f32 %v8574, %v8796
    %v8798 = vrcp.pop %v8319
    %v8799 = vmul.f32 %v8575, %v8798
    %v8800 = vrcp.pop %v8320
    %v8801 = vmul.f32 %v8576, %v8800
    %v8802 = vrcp.pop %v8321
    %v8803 = vmul.f32 %v8577, %v8802
    %v8804 = vrcp.pop %v8322
    %v8805 = vmul.f32 %v8578, %v8804
    %v8806 = vrcp.pop %v8323
    %v8807 = vmul.f32 %v8579, %v8806
    %v8808 = vrcp.pop %v8324
    %v8809 = vmul.f32 %v8580, %v8808
    %v8810 = vrcp.pop %v8325
    %v8811 = vmul.f32 %v8581, %v8810
    %v8812 = vrcp.pop %v8326
    %v8813 = vmul.f32 %v8582, %v8812
    %v8814 = vrcp.pop %v8327
    %v8815 = vmul.f32 %v8583, %v8814
    %v8816 = vrcp.pop %v8328
    %v8817 = vmul.f32 %v8584, %v8816
    %v8818 = vrcp.pop %v8329
    %v8819 = vmul.f32 %v8585, %v8818
    %v8820 = vrcp.pop %v8330
    %v8821 = vmul.f32 %v8586, %v8820
    %v8822 = vrcp.pop %v8331
    %v8823 = vmul.f32 %v8587, %v8822
    %v8824 = vrcp.pop %v8332
    %v8825 = vmul.f32 %v8588, %v8824
    %v8826 = vrcp.pop %v8333
    %v8827 = vmul.f32 %v8589, %v8826
    %v8828 = vrcp.pop %v8334
    %v8829 = vmul.f32 %v8590, %v8828
    %v8830 = vrcp.pop %v8335
    %v8831 = vmul.f32 %v8591, %v8830
    %v8832 = vrcp.pop %v8336
    %v8833 = vmul.f32 %v8592, %v8832
    %v8834 = vrcp.pop %v8337
    %v8835 = vmul.f32 %v8593, %v8834
    %v8836 = vrcp.pop %v8338
    %v8837 = vmul.f32 %v8594, %v8836
    %v8838 = vrcp.pop %v8339
    %v8839 = vmul.f32 %v8595, %v8838
    %v8840 = vrcp.pop %v8340
    %v8841 = vmul.f32 %v8596, %v8840
    %v8842 = vrcp.pop %v8341
    %v8843 = vmul.f32 %v8597, %v8842
    %v8844 = vrcp.pop %v8342
    %v8845 = vmul.f32 %v8598, %v8844
    %v8846 = vrcp.pop %v8343
    %v8847 = vmul.f32 %v8599, %v8846
    %v8848 = vrcp.pop %v8344
    %v8849 = vmul.f32 %v8600, %v8848
    %v8850 = vrcp.pop %v8345
    %v8851 = vmul.f32 %v8601, %v8850
    %v8852 = vrcp.pop %v8346
    %v8853 = vmul.f32 %v8602, %v8852
    %v8854 = vrcp.pop %v8347
    %v8855 = vmul.f32 %v8603, %v8854
    %v8856 = vrcp.pop %v8348
    %v8857 = vmul.f32 %v8604, %v8856
    %v8858 = vrcp.pop %v8349
    %v8859 = vmul.f32 %v8605, %v8858
    %v8860 = vrcp.pop %v8350
    %v8861 = vmul.f32 %v8606, %v8860
    %v8862 = vrcp.pop %v8351
    %v8863 = vmul.f32 %v8607, %v8862
    %v8864 = vrsqrt.pop %v8609
    %v8865 = vmul.f32 %v8609, %v8864
    %vm8866 = vcmp.eq.f32.partialorder %v8609, inf
    %v8867 = vsel %vm8866, %v8609, %v8865
    %vm8868 = vcmp.eq.f32.partialorder %v8609, 0.0
    %v8869 = vand.u32 %v8609, 2147483648
    %v8870 = vsel %vm8868, %v8869, %v8867
    %v8871 = vrsqrt.pop %v8611
    %v8872 = vmul.f32 %v8611, %v8871
    %vm8873 = vcmp.eq.f32.partialorder %v8611, inf
    %v8874 = vsel %vm8873, %v8611, %v8872
    %vm8875 = vcmp.eq.f32.partialorder %v8611, 0.0
    %v8876 = vand.u32 %v8611, 2147483648
    %v8877 = vsel %vm8875, %v8876, %v8874
    %v8878 = vrsqrt.pop %v8613
    %v8879 = vmul.f32 %v8613, %v8878
    %vm8880 = vcmp.eq.f32.partialorder %v8613, inf
    %v8881 = vsel %vm8880, %v8613, %v8879
    %vm8882 = vcmp.eq.f32.partialorder %v8613, 0.0
    %v8883 = vand.u32 %v8613, 2147483648
    %v8884 = vsel %vm8882, %v8883, %v8881
    %v8885 = vrsqrt.pop %v8615
    %v8886 = vmul.f32 %v8615, %v8885
    %vm8887 = vcmp.eq.f32.partialorder %v8615, inf
    %v8888 = vsel %vm8887, %v8615, %v8886
    %vm8889 = vcmp.eq.f32.partialorder %v8615, 0.0
    %v8890 = vand.u32 %v8615, 2147483648
    %v8891 = vsel %vm8889, %v8890, %v8888
    %v8892 = vrsqrt.pop %v8617
    %v8893 = vmul.f32 %v8617, %v8892
    %vm8894 = vcmp.eq.f32.partialorder %v8617, inf
    %v8895 = vsel %vm8894, %v8617, %v8893
    %vm8896 = vcmp.eq.f32.partialorder %v8617, 0.0
    %v8897 = vand.u32 %v8617, 2147483648
    %v8898 = vsel %vm8896, %v8897, %v8895
    %v8899 = vrsqrt.pop %v8619
    %v8900 = vmul.f32 %v8619, %v8899
    %vm8901 = vcmp.eq.f32.partialorder %v8619, inf
    %v8902 = vsel %vm8901, %v8619, %v8900
    %vm8903 = vcmp.eq.f32.partialorder %v8619, 0.0
    %v8904 = vand.u32 %v8619, 2147483648
    %v8905 = vsel %vm8903, %v8904, %v8902
    %v8906 = vrsqrt.pop %v8621
    %v8907 = vmul.f32 %v8621, %v8906
    %vm8908 = vcmp.eq.f32.partialorder %v8621, inf
    %v8909 = vsel %vm8908, %v8621, %v8907
    %vm8910 = vcmp.eq.f32.partialorder %v8621, 0.0
    %v8911 = vand.u32 %v8621, 2147483648
    %v8912 = vsel %vm8910, %v8911, %v8909
    %v8913 = vrsqrt.pop %v8623
    %v8914 = vmul.f32 %v8623, %v8913
    %vm8915 = vcmp.eq.f32.partialorder %v8623, inf
    %v8916 = vsel %vm8915, %v8623, %v8914
    %vm8917 = vcmp.eq.f32.partialorder %v8623, 0.0
    %v8918 = vand.u32 %v8623, 2147483648
    %v8919 = vsel %vm8917, %v8918, %v8916
    %v8920 = vrsqrt.pop %v8625
    %v8921 = vmul.f32 %v8625, %v8920
    %vm8922 = vcmp.eq.f32.partialorder %v8625, inf
    %v8923 = vsel %vm8922, %v8625, %v8921
    %vm8924 = vcmp.eq.f32.partialorder %v8625, 0.0
    %v8925 = vand.u32 %v8625, 2147483648
    %v8926 = vsel %vm8924, %v8925, %v8923
    %v8927 = vrsqrt.pop %v8627
    %v8928 = vmul.f32 %v8627, %v8927
    %vm8929 = vcmp.eq.f32.partialorder %v8627, inf
    %v8930 = vsel %vm8929, %v8627, %v8928
    %vm8931 = vcmp.eq.f32.partialorder %v8627, 0.0
    %v8932 = vand.u32 %v8627, 2147483648
    %v8933 = vsel %vm8931, %v8932, %v8930
    %v8934 = vrsqrt.pop %v8629
    %v8935 = vmul.f32 %v8629, %v8934
    %vm8936 = vcmp.eq.f32.partialorder %v8629, inf
    %v8937 = vsel %vm8936, %v8629, %v8935
    %vm8938 = vcmp.eq.f32.partialorder %v8629, 0.0
    %v8939 = vand.u32 %v8629, 2147483648
    %v8940 = vsel %vm8938, %v8939, %v8937
    %v8941 = vrsqrt.pop %v8631
    %v8942 = vmul.f32 %v8631, %v8941
    %vm8943 = vcmp.eq.f32.partialorder %v8631, inf
    %v8944 = vsel %vm8943, %v8631, %v8942
    %vm8945 = vcmp.eq.f32.partialorder %v8631, 0.0
    %v8946 = vand.u32 %v8631, 2147483648
    %v8947 = vsel %vm8945, %v8946, %v8944
    %v8948 = vrsqrt.pop %v8633
    %v8949 = vmul.f32 %v8633, %v8948
    %vm8950 = vcmp.eq.f32.partialorder %v8633, inf
    %v8951 = vsel %vm8950, %v8633, %v8949
    %vm8952 = vcmp.eq.f32.partialorder %v8633, 0.0
    %v8953 = vand.u32 %v8633, 2147483648
    %v8954 = vsel %vm8952, %v8953, %v8951
    %v8955 = vrsqrt.pop %v8635
    %v8956 = vmul.f32 %v8635, %v8955
    %vm8957 = vcmp.eq.f32.partialorder %v8635, inf
    %v8958 = vsel %vm8957, %v8635, %v8956
    %vm8959 = vcmp.eq.f32.partialorder %v8635, 0.0
    %v8960 = vand.u32 %v8635, 2147483648
    %v8961 = vsel %vm8959, %v8960, %v8958
    %v8962 = vrsqrt.pop %v8637
    %v8963 = vmul.f32 %v8637, %v8962
    %vm8964 = vcmp.eq.f32.partialorder %v8637, inf
    %v8965 = vsel %vm8964, %v8637, %v8963
    %vm8966 = vcmp.eq.f32.partialorder %v8637, 0.0
    %v8967 = vand.u32 %v8637, 2147483648
    %v8968 = vsel %vm8966, %v8967, %v8965
    %v8969 = vrsqrt.pop %v8639
    %v8970 = vmul.f32 %v8639, %v8969
    %vm8971 = vcmp.eq.f32.partialorder %v8639, inf
    %v8972 = vsel %vm8971, %v8639, %v8970
    %vm8973 = vcmp.eq.f32.partialorder %v8639, 0.0
    %v8974 = vand.u32 %v8639, 2147483648
    %v8975 = vsel %vm8973, %v8974, %v8972
    %v8976 = vrsqrt.pop %v8641
    %v8977 = vmul.f32 %v8641, %v8976
    %vm8978 = vcmp.eq.f32.partialorder %v8641, inf
    %v8979 = vsel %vm8978, %v8641, %v8977
    %vm8980 = vcmp.eq.f32.partialorder %v8641, 0.0
    %v8981 = vand.u32 %v8641, 2147483648
    %v8982 = vsel %vm8980, %v8981, %v8979
    %v8983 = vrsqrt.pop %v8643
    %v8984 = vmul.f32 %v8643, %v8983
    %vm8985 = vcmp.eq.f32.partialorder %v8643, inf
    %v8986 = vsel %vm8985, %v8643, %v8984
    %vm8987 = vcmp.eq.f32.partialorder %v8643, 0.0
    %v8988 = vand.u32 %v8643, 2147483648
    %v8989 = vsel %vm8987, %v8988, %v8986
    %v8990 = vrsqrt.pop %v8645
    %v8991 = vmul.f32 %v8645, %v8990
    %vm8992 = vcmp.eq.f32.partialorder %v8645, inf
    %v8993 = vsel %vm8992, %v8645, %v8991
    %vm8994 = vcmp.eq.f32.partialorder %v8645, 0.0
    %v8995 = vand.u32 %v8645, 2147483648
    %v8996 = vsel %vm8994, %v8995, %v8993
    %v8997 = vrsqrt.pop %v8647
    %v8998 = vmul.f32 %v8647, %v8997
    %vm8999 = vcmp.eq.f32.partialorder %v8647, inf
    %v9000 = vsel %vm8999, %v8647, %v8998
    %vm9001 = vcmp.eq.f32.partialorder %v8647, 0.0
    %v9002 = vand.u32 %v8647, 2147483648
    %v9003 = vsel %vm9001, %v9002, %v9000
    %v9004 = vrsqrt.pop %v8649
    %v9005 = vmul.f32 %v8649, %v9004
    %vm9006 = vcmp.eq.f32.partialorder %v8649, inf
    %v9007 = vsel %vm9006, %v8649, %v9005
    %vm9008 = vcmp.eq.f32.partialorder %v8649, 0.0
    %v9009 = vand.u32 %v8649, 2147483648
    %v9010 = vsel %vm9008, %v9009, %v9007
    %v9011 = vrsqrt.pop %v8651
    %v9012 = vmul.f32 %v8651, %v9011
    %vm9013 = vcmp.eq.f32.partialorder %v8651, inf
    %v9014 = vsel %vm9013, %v8651, %v9012
    %vm9015 = vcmp.eq.f32.partialorder %v8651, 0.0
    %v9016 = vand.u32 %v8651, 2147483648
    %v9017 = vsel %vm9015, %v9016, %v9014
    %v9018 = vrsqrt.pop %v8653
    %v9019 = vmul.f32 %v8653, %v9018
    %vm9020 = vcmp.eq.f32.partialorder %v8653, inf
    %v9021 = vsel %vm9020, %v8653, %v9019
    %vm9022 = vcmp.eq.f32.partialorder %v8653, 0.0
    %v9023 = vand.u32 %v8653, 2147483648
    %v9024 = vsel %vm9022, %v9023, %v9021
    %v9025 = vrsqrt.pop %v8655
    %v9026 = vmul.f32 %v8655, %v9025
    %vm9027 = vcmp.eq.f32.partialorder %v8655, inf
    %v9028 = vsel %vm9027, %v8655, %v9026
    %vm9029 = vcmp.eq.f32.partialorder %v8655, 0.0
    %v9030 = vand.u32 %v8655, 2147483648
    %v9031 = vsel %vm9029, %v9030, %v9028
    %v9032 = vrsqrt.pop %v8657
    %v9033 = vmul.f32 %v8657, %v9032
    %vm9034 = vcmp.eq.f32.partialorder %v8657, inf
    %v9035 = vsel %vm9034, %v8657, %v9033
    %vm9036 = vcmp.eq.f32.partialorder %v8657, 0.0
    %v9037 = vand.u32 %v8657, 2147483648
    %v9038 = vsel %vm9036, %v9037, %v9035
    %v9039 = vrsqrt.pop %v8659
    %v9040 = vmul.f32 %v8659, %v9039
    %vm9041 = vcmp.eq.f32.partialorder %v8659, inf
    %v9042 = vsel %vm9041, %v8659, %v9040
    %vm9043 = vcmp.eq.f32.partialorder %v8659, 0.0
    %v9044 = vand.u32 %v8659, 2147483648
    %v9045 = vsel %vm9043, %v9044, %v9042
    %v9046 = vrsqrt.pop %v8661
    %v9047 = vmul.f32 %v8661, %v9046
    %vm9048 = vcmp.eq.f32.partialorder %v8661, inf
    %v9049 = vsel %vm9048, %v8661, %v9047
    %vm9050 = vcmp.eq.f32.partialorder %v8661, 0.0
    %v9051 = vand.u32 %v8661, 2147483648
    %v9052 = vsel %vm9050, %v9051, %v9049
    %v9053 = vrsqrt.pop %v8663
    %v9054 = vmul.f32 %v8663, %v9053
    %vm9055 = vcmp.eq.f32.partialorder %v8663, inf
    %v9056 = vsel %vm9055, %v8663, %v9054
    %vm9057 = vcmp.eq.f32.partialorder %v8663, 0.0
    %v9058 = vand.u32 %v8663, 2147483648
    %v9059 = vsel %vm9057, %v9058, %v9056
    %v9060 = vrsqrt.pop %v8665
    %v9061 = vmul.f32 %v8665, %v9060
    %vm9062 = vcmp.eq.f32.partialorder %v8665, inf
    %v9063 = vsel %vm9062, %v8665, %v9061
    %vm9064 = vcmp.eq.f32.partialorder %v8665, 0.0
    %v9065 = vand.u32 %v8665, 2147483648
    %v9066 = vsel %vm9064, %v9065, %v9063
    %v9067 = vrsqrt.pop %v8667
    %v9068 = vmul.f32 %v8667, %v9067
    %vm9069 = vcmp.eq.f32.partialorder %v8667, inf
    %v9070 = vsel %vm9069, %v8667, %v9068
    %vm9071 = vcmp.eq.f32.partialorder %v8667, 0.0
    %v9072 = vand.u32 %v8667, 2147483648
    %v9073 = vsel %vm9071, %v9072, %v9070
    %v9074 = vrsqrt.pop %v8669
    %v9075 = vmul.f32 %v8669, %v9074
    %vm9076 = vcmp.eq.f32.partialorder %v8669, inf
    %v9077 = vsel %vm9076, %v8669, %v9075
    %vm9078 = vcmp.eq.f32.partialorder %v8669, 0.0
    %v9079 = vand.u32 %v8669, 2147483648
    %v9080 = vsel %vm9078, %v9079, %v9077
    %v9081 = vrsqrt.pop %v8671
    %v9082 = vmul.f32 %v8671, %v9081
    %vm9083 = vcmp.eq.f32.partialorder %v8671, inf
    %v9084 = vsel %vm9083, %v8671, %v9082
    %vm9085 = vcmp.eq.f32.partialorder %v8671, 0.0
    %v9086 = vand.u32 %v8671, 2147483648
    %v9087 = vsel %vm9085, %v9086, %v9084
    %v9088 = vrsqrt.pop %v8673
    %v9089 = vmul.f32 %v8673, %v9088
    %vm9090 = vcmp.eq.f32.partialorder %v8673, inf
    %v9091 = vsel %vm9090, %v8673, %v9089
    %vm9092 = vcmp.eq.f32.partialorder %v8673, 0.0
    %v9093 = vand.u32 %v8673, 2147483648
    %v9094 = vsel %vm9092, %v9093, %v9091
    %v9095 = vrsqrt.pop %v8675
    %v9096 = vmul.f32 %v8675, %v9095
    %vm9097 = vcmp.eq.f32.partialorder %v8675, inf
    %v9098 = vsel %vm9097, %v8675, %v9096
    %vm9099 = vcmp.eq.f32.partialorder %v8675, 0.0
    %v9100 = vand.u32 %v8675, 2147483648
    %v9101 = vsel %vm9099, %v9100, %v9098
    %v9102 = vrsqrt.pop %v8677
    %v9103 = vmul.f32 %v8677, %v9102
    %vm9104 = vcmp.eq.f32.partialorder %v8677, inf
    %v9105 = vsel %vm9104, %v8677, %v9103
    %vm9106 = vcmp.eq.f32.partialorder %v8677, 0.0
    %v9107 = vand.u32 %v8677, 2147483648
    %v9108 = vsel %vm9106, %v9107, %v9105
    %v9109 = vrsqrt.pop %v8679
    %v9110 = vmul.f32 %v8679, %v9109
    %vm9111 = vcmp.eq.f32.partialorder %v8679, inf
    %v9112 = vsel %vm9111, %v8679, %v9110
    %vm9113 = vcmp.eq.f32.partialorder %v8679, 0.0
    %v9114 = vand.u32 %v8679, 2147483648
    %v9115 = vsel %vm9113, %v9114, %v9112
    %v9116 = vrsqrt.pop %v8681
    %v9117 = vmul.f32 %v8681, %v9116
    %vm9118 = vcmp.eq.f32.partialorder %v8681, inf
    %v9119 = vsel %vm9118, %v8681, %v9117
    %vm9120 = vcmp.eq.f32.partialorder %v8681, 0.0
    %v9121 = vand.u32 %v8681, 2147483648
    %v9122 = vsel %vm9120, %v9121, %v9119
    %v9123 = vrsqrt.pop %v8683
    %v9124 = vmul.f32 %v8683, %v9123
    %vm9125 = vcmp.eq.f32.partialorder %v8683, inf
    %v9126 = vsel %vm9125, %v8683, %v9124
    %vm9127 = vcmp.eq.f32.partialorder %v8683, 0.0
    %v9128 = vand.u32 %v8683, 2147483648
    %v9129 = vsel %vm9127, %v9128, %v9126
    %v9130 = vrsqrt.pop %v8685
    %v9131 = vmul.f32 %v8685, %v9130
    %vm9132 = vcmp.eq.f32.partialorder %v8685, inf
    %v9133 = vsel %vm9132, %v8685, %v9131
    %vm9134 = vcmp.eq.f32.partialorder %v8685, 0.0
    %v9135 = vand.u32 %v8685, 2147483648
    %v9136 = vsel %vm9134, %v9135, %v9133
    %v9137 = vrsqrt.pop %v8687
    %v9138 = vmul.f32 %v8687, %v9137
    %vm9139 = vcmp.eq.f32.partialorder %v8687, inf
    %v9140 = vsel %vm9139, %v8687, %v9138
    %vm9141 = vcmp.eq.f32.partialorder %v8687, 0.0
    %v9142 = vand.u32 %v8687, 2147483648
    %v9143 = vsel %vm9141, %v9142, %v9140
    %v9144 = vrsqrt.pop %v8689
    %v9145 = vmul.f32 %v8689, %v9144
    %vm9146 = vcmp.eq.f32.partialorder %v8689, inf
    %v9147 = vsel %vm9146, %v8689, %v9145
    %vm9148 = vcmp.eq.f32.partialorder %v8689, 0.0
    %v9149 = vand.u32 %v8689, 2147483648
    %v9150 = vsel %vm9148, %v9149, %v9147
    %v9151 = vrsqrt.pop %v8691
    %v9152 = vmul.f32 %v8691, %v9151
    %vm9153 = vcmp.eq.f32.partialorder %v8691, inf
    %v9154 = vsel %vm9153, %v8691, %v9152
    %vm9155 = vcmp.eq.f32.partialorder %v8691, 0.0
    %v9156 = vand.u32 %v8691, 2147483648
    %v9157 = vsel %vm9155, %v9156, %v9154
    %v9158 = vrsqrt.pop %v8693
    %v9159 = vmul.f32 %v8693, %v9158
    %vm9160 = vcmp.eq.f32.partialorder %v8693, inf
    %v9161 = vsel %vm9160, %v8693, %v9159
    %vm9162 = vcmp.eq.f32.partialorder %v8693, 0.0
    %v9163 = vand.u32 %v8693, 2147483648
    %v9164 = vsel %vm9162, %v9163, %v9161
    %v9165 = vrsqrt.pop %v8695
    %v9166 = vmul.f32 %v8695, %v9165
    %vm9167 = vcmp.eq.f32.partialorder %v8695, inf
    %v9168 = vsel %vm9167, %v8695, %v9166
    %vm9169 = vcmp.eq.f32.partialorder %v8695, 0.0
    %v9170 = vand.u32 %v8695, 2147483648
    %v9171 = vsel %vm9169, %v9170, %v9168
    %v9172 = vrsqrt.pop %v8697
    %v9173 = vmul.f32 %v8697, %v9172
    %vm9174 = vcmp.eq.f32.partialorder %v8697, inf
    %v9175 = vsel %vm9174, %v8697, %v9173
    %vm9176 = vcmp.eq.f32.partialorder %v8697, 0.0
    %v9177 = vand.u32 %v8697, 2147483648
    %v9178 = vsel %vm9176, %v9177, %v9175
    %v9179 = vrsqrt.pop %v8699
    %v9180 = vmul.f32 %v8699, %v9179
    %vm9181 = vcmp.eq.f32.partialorder %v8699, inf
    %v9182 = vsel %vm9181, %v8699, %v9180
    %vm9183 = vcmp.eq.f32.partialorder %v8699, 0.0
    %v9184 = vand.u32 %v8699, 2147483648
    %v9185 = vsel %vm9183, %v9184, %v9182
    %v9186 = vrsqrt.pop %v8701
    %v9187 = vmul.f32 %v8701, %v9186
    %vm9188 = vcmp.eq.f32.partialorder %v8701, inf
    %v9189 = vsel %vm9188, %v8701, %v9187
    %vm9190 = vcmp.eq.f32.partialorder %v8701, 0.0
    %v9191 = vand.u32 %v8701, 2147483648
    %v9192 = vsel %vm9190, %v9191, %v9189
    %v9193 = vrsqrt.pop %v8703
    %v9194 = vmul.f32 %v8703, %v9193
    %vm9195 = vcmp.eq.f32.partialorder %v8703, inf
    %v9196 = vsel %vm9195, %v8703, %v9194
    %vm9197 = vcmp.eq.f32.partialorder %v8703, 0.0
    %v9198 = vand.u32 %v8703, 2147483648
    %v9199 = vsel %vm9197, %v9198, %v9196
    %v9200 = vrsqrt.pop %v8705
    %v9201 = vmul.f32 %v8705, %v9200
    %vm9202 = vcmp.eq.f32.partialorder %v8705, inf
    %v9203 = vsel %vm9202, %v8705, %v9201
    %vm9204 = vcmp.eq.f32.partialorder %v8705, 0.0
    %v9205 = vand.u32 %v8705, 2147483648
    %v9206 = vsel %vm9204, %v9205, %v9203
    %v9207 = vrsqrt.pop %v8707
    %v9208 = vmul.f32 %v8707, %v9207
    %vm9209 = vcmp.eq.f32.partialorder %v8707, inf
    %v9210 = vsel %vm9209, %v8707, %v9208
    %vm9211 = vcmp.eq.f32.partialorder %v8707, 0.0
    %v9212 = vand.u32 %v8707, 2147483648
    %v9213 = vsel %vm9211, %v9212, %v9210
    %v9214 = vrsqrt.pop %v8709
    %v9215 = vmul.f32 %v8709, %v9214
    %vm9216 = vcmp.eq.f32.partialorder %v8709, inf
    %v9217 = vsel %vm9216, %v8709, %v9215
    %vm9218 = vcmp.eq.f32.partialorder %v8709, 0.0
    %v9219 = vand.u32 %v8709, 2147483648
    %v9220 = vsel %vm9218, %v9219, %v9217
    %v9221 = vrsqrt.pop %v8711
    %v9222 = vmul.f32 %v8711, %v9221
    %vm9223 = vcmp.eq.f32.partialorder %v8711, inf
    %v9224 = vsel %vm9223, %v8711, %v9222
    %vm9225 = vcmp.eq.f32.partialorder %v8711, 0.0
    %v9226 = vand.u32 %v8711, 2147483648
    %v9227 = vsel %vm9225, %v9226, %v9224
    %v9228 = vrsqrt.pop %v8713
    %v9229 = vmul.f32 %v8713, %v9228
    %vm9230 = vcmp.eq.f32.partialorder %v8713, inf
    %v9231 = vsel %vm9230, %v8713, %v9229
    %vm9232 = vcmp.eq.f32.partialorder %v8713, 0.0
    %v9233 = vand.u32 %v8713, 2147483648
    %v9234 = vsel %vm9232, %v9233, %v9231
    %v9235 = vrsqrt.pop %v8715
    %v9236 = vmul.f32 %v8715, %v9235
    %vm9237 = vcmp.eq.f32.partialorder %v8715, inf
    %v9238 = vsel %vm9237, %v8715, %v9236
    %vm9239 = vcmp.eq.f32.partialorder %v8715, 0.0
    %v9240 = vand.u32 %v8715, 2147483648
    %v9241 = vsel %vm9239, %v9240, %v9238
    %v9242 = vrsqrt.pop %v8717
    %v9243 = vmul.f32 %v8717, %v9242
    %vm9244 = vcmp.eq.f32.partialorder %v8717, inf
    %v9245 = vsel %vm9244, %v8717, %v9243
    %vm9246 = vcmp.eq.f32.partialorder %v8717, 0.0
    %v9247 = vand.u32 %v8717, 2147483648
    %v9248 = vsel %vm9246, %v9247, %v9245
    %v9249 = vrsqrt.pop %v8719
    %v9250 = vmul.f32 %v8719, %v9249
    %vm9251 = vcmp.eq.f32.partialorder %v8719, inf
    %v9252 = vsel %vm9251, %v8719, %v9250
    %vm9253 = vcmp.eq.f32.partialorder %v8719, 0.0
    %v9254 = vand.u32 %v8719, 2147483648
    %v9255 = vsel %vm9253, %v9254, %v9252
    %v9256 = vrsqrt.pop %v8721
    %v9257 = vmul.f32 %v8721, %v9256
    %vm9258 = vcmp.eq.f32.partialorder %v8721, inf
    %v9259 = vsel %vm9258, %v8721, %v9257
    %vm9260 = vcmp.eq.f32.partialorder %v8721, 0.0
    %v9261 = vand.u32 %v8721, 2147483648
    %v9262 = vsel %vm9260, %v9261, %v9259
    %v9263 = vrsqrt.pop %v8723
    %v9264 = vmul.f32 %v8723, %v9263
    %vm9265 = vcmp.eq.f32.partialorder %v8723, inf
    %v9266 = vsel %vm9265, %v8723, %v9264
    %vm9267 = vcmp.eq.f32.partialorder %v8723, 0.0
    %v9268 = vand.u32 %v8723, 2147483648
    %v9269 = vsel %vm9267, %v9268, %v9266
    %v9270 = vrsqrt.pop %v8725
    %v9271 = vmul.f32 %v8725, %v9270
    %vm9272 = vcmp.eq.f32.partialorder %v8725, inf
    %v9273 = vsel %vm9272, %v8725, %v9271
    %vm9274 = vcmp.eq.f32.partialorder %v8725, 0.0
    %v9275 = vand.u32 %v8725, 2147483648
    %v9276 = vsel %vm9274, %v9275, %v9273
    %v9277 = vrsqrt.pop %v8727
    %v9278 = vmul.f32 %v8727, %v9277
    %vm9279 = vcmp.eq.f32.partialorder %v8727, inf
    %v9280 = vsel %vm9279, %v8727, %v9278
    %vm9281 = vcmp.eq.f32.partialorder %v8727, 0.0
    %v9282 = vand.u32 %v8727, 2147483648
    %v9283 = vsel %vm9281, %v9282, %v9280
    %v9284 = vrsqrt.pop %v8729
    %v9285 = vmul.f32 %v8729, %v9284
    %vm9286 = vcmp.eq.f32.partialorder %v8729, inf
    %v9287 = vsel %vm9286, %v8729, %v9285
    %vm9288 = vcmp.eq.f32.partialorder %v8729, 0.0
    %v9289 = vand.u32 %v8729, 2147483648
    %v9290 = vsel %vm9288, %v9289, %v9287
    %v9291 = vrsqrt.pop %v8731
    %v9292 = vmul.f32 %v8731, %v9291
    %vm9293 = vcmp.eq.f32.partialorder %v8731, inf
    %v9294 = vsel %vm9293, %v8731, %v9292
    %vm9295 = vcmp.eq.f32.partialorder %v8731, 0.0
    %v9296 = vand.u32 %v8731, 2147483648
    %v9297 = vsel %vm9295, %v9296, %v9294
    %v9298 = vrsqrt.pop %v8733
    %v9299 = vmul.f32 %v8733, %v9298
    %vm9300 = vcmp.eq.f32.partialorder %v8733, inf
    %v9301 = vsel %vm9300, %v8733, %v9299
    %vm9302 = vcmp.eq.f32.partialorder %v8733, 0.0
    %v9303 = vand.u32 %v8733, 2147483648
    %v9304 = vsel %vm9302, %v9303, %v9301
    %v9305 = vrsqrt.pop %v8735
    %v9306 = vmul.f32 %v8735, %v9305
    %vm9307 = vcmp.eq.f32.partialorder %v8735, inf
    %v9308 = vsel %vm9307, %v8735, %v9306
    %vm9309 = vcmp.eq.f32.partialorder %v8735, 0.0
    %v9310 = vand.u32 %v8735, 2147483648
    %v9311 = vsel %vm9309, %v9310, %v9308
    %v9312 = vrsqrt.pop %v8737
    %v9313 = vmul.f32 %v8737, %v9312
    %vm9314 = vcmp.eq.f32.partialorder %v8737, inf
    %v9315 = vsel %vm9314, %v8737, %v9313
    %vm9316 = vcmp.eq.f32.partialorder %v8737, 0.0
    %v9317 = vand.u32 %v8737, 2147483648
    %v9318 = vsel %vm9316, %v9317, %v9315
    %v9319 = vrsqrt.pop %v8739
    %v9320 = vmul.f32 %v8739, %v9319
    %vm9321 = vcmp.eq.f32.partialorder %v8739, inf
    %v9322 = vsel %vm9321, %v8739, %v9320
    %vm9323 = vcmp.eq.f32.partialorder %v8739, 0.0
    %v9324 = vand.u32 %v8739, 2147483648
    %v9325 = vsel %vm9323, %v9324, %v9322
    %v9326 = vrsqrt.pop %v8741
    %v9327 = vmul.f32 %v8741, %v9326
    %vm9328 = vcmp.eq.f32.partialorder %v8741, inf
    %v9329 = vsel %vm9328, %v8741, %v9327
    %vm9330 = vcmp.eq.f32.partialorder %v8741, 0.0
    %v9331 = vand.u32 %v8741, 2147483648
    %v9332 = vsel %vm9330, %v9331, %v9329
    %v9333 = vrsqrt.pop %v8743
    %v9334 = vmul.f32 %v8743, %v9333
    %vm9335 = vcmp.eq.f32.partialorder %v8743, inf
    %v9336 = vsel %vm9335, %v8743, %v9334
    %vm9337 = vcmp.eq.f32.partialorder %v8743, 0.0
    %v9338 = vand.u32 %v8743, 2147483648
    %v9339 = vsel %vm9337, %v9338, %v9336
    %v9340 = vrsqrt.pop %v8745
    %v9341 = vmul.f32 %v8745, %v9340
    %vm9342 = vcmp.eq.f32.partialorder %v8745, inf
    %v9343 = vsel %vm9342, %v8745, %v9341
    %vm9344 = vcmp.eq.f32.partialorder %v8745, 0.0
    %v9345 = vand.u32 %v8745, 2147483648
    %v9346 = vsel %vm9344, %v9345, %v9343
    %v9347 = vrsqrt.pop %v8747
    %v9348 = vmul.f32 %v8747, %v9347
    %vm9349 = vcmp.eq.f32.partialorder %v8747, inf
    %v9350 = vsel %vm9349, %v8747, %v9348
    %vm9351 = vcmp.eq.f32.partialorder %v8747, 0.0
    %v9352 = vand.u32 %v8747, 2147483648
    %v9353 = vsel %vm9351, %v9352, %v9350
    %v9354 = vrsqrt.pop %v8749
    %v9355 = vmul.f32 %v8749, %v9354
    %vm9356 = vcmp.eq.f32.partialorder %v8749, inf
    %v9357 = vsel %vm9356, %v8749, %v9355
    %vm9358 = vcmp.eq.f32.partialorder %v8749, 0.0
    %v9359 = vand.u32 %v8749, 2147483648
    %v9360 = vsel %vm9358, %v9359, %v9357
    %v9361 = vrsqrt.pop %v8751
    %v9362 = vmul.f32 %v8751, %v9361
    %vm9363 = vcmp.eq.f32.partialorder %v8751, inf
    %v9364 = vsel %vm9363, %v8751, %v9362
    %vm9365 = vcmp.eq.f32.partialorder %v8751, 0.0
    %v9366 = vand.u32 %v8751, 2147483648
    %v9367 = vsel %vm9365, %v9366, %v9364
    %v9368 = vrsqrt.pop %v8753
    %v9369 = vmul.f32 %v8753, %v9368
    %vm9370 = vcmp.eq.f32.partialorder %v8753, inf
    %v9371 = vsel %vm9370, %v8753, %v9369
    %vm9372 = vcmp.eq.f32.partialorder %v8753, 0.0
    %v9373 = vand.u32 %v8753, 2147483648
    %v9374 = vsel %vm9372, %v9373, %v9371
    %v9375 = vrsqrt.pop %v8755
    %v9376 = vmul.f32 %v8755, %v9375
    %vm9377 = vcmp.eq.f32.partialorder %v8755, inf
    %v9378 = vsel %vm9377, %v8755, %v9376
    %vm9379 = vcmp.eq.f32.partialorder %v8755, 0.0
    %v9380 = vand.u32 %v8755, 2147483648
    %v9381 = vsel %vm9379, %v9380, %v9378
    %v9382 = vrsqrt.pop %v8757
    %v9383 = vmul.f32 %v8757, %v9382
    %vm9384 = vcmp.eq.f32.partialorder %v8757, inf
    %v9385 = vsel %vm9384, %v8757, %v9383
    %vm9386 = vcmp.eq.f32.partialorder %v8757, 0.0
    %v9387 = vand.u32 %v8757, 2147483648
    %v9388 = vsel %vm9386, %v9387, %v9385
    %v9389 = vrsqrt.pop %v8759
    %v9390 = vmul.f32 %v8759, %v9389
    %vm9391 = vcmp.eq.f32.partialorder %v8759, inf
    %v9392 = vsel %vm9391, %v8759, %v9390
    %vm9393 = vcmp.eq.f32.partialorder %v8759, 0.0
    %v9394 = vand.u32 %v8759, 2147483648
    %v9395 = vsel %vm9393, %v9394, %v9392
    %v9396 = vrsqrt.pop %v8761
    %v9397 = vmul.f32 %v8761, %v9396
    %vm9398 = vcmp.eq.f32.partialorder %v8761, inf
    %v9399 = vsel %vm9398, %v8761, %v9397
    %vm9400 = vcmp.eq.f32.partialorder %v8761, 0.0
    %v9401 = vand.u32 %v8761, 2147483648
    %v9402 = vsel %vm9400, %v9401, %v9399
    %v9403 = vrsqrt.pop %v8763
    %v9404 = vmul.f32 %v8763, %v9403
    %vm9405 = vcmp.eq.f32.partialorder %v8763, inf
    %v9406 = vsel %vm9405, %v8763, %v9404
    %vm9407 = vcmp.eq.f32.partialorder %v8763, 0.0
    %v9408 = vand.u32 %v8763, 2147483648
    %v9409 = vsel %vm9407, %v9408, %v9406
    %v9410 = vrsqrt.pop %v8765
    %v9411 = vmul.f32 %v8765, %v9410
    %vm9412 = vcmp.eq.f32.partialorder %v8765, inf
    %v9413 = vsel %vm9412, %v8765, %v9411
    %vm9414 = vcmp.eq.f32.partialorder %v8765, 0.0
    %v9415 = vand.u32 %v8765, 2147483648
    %v9416 = vsel %vm9414, %v9415, %v9413
    %v9417 = vrsqrt.pop %v8767
    %v9418 = vmul.f32 %v8767, %v9417
    %vm9419 = vcmp.eq.f32.partialorder %v8767, inf
    %v9420 = vsel %vm9419, %v8767, %v9418
    %vm9421 = vcmp.eq.f32.partialorder %v8767, 0.0
    %v9422 = vand.u32 %v8767, 2147483648
    %v9423 = vsel %vm9421, %v9422, %v9420
    %v9424 = vrsqrt.pop %v8769
    %v9425 = vmul.f32 %v8769, %v9424
    %vm9426 = vcmp.eq.f32.partialorder %v8769, inf
    %v9427 = vsel %vm9426, %v8769, %v9425
    %vm9428 = vcmp.eq.f32.partialorder %v8769, 0.0
    %v9429 = vand.u32 %v8769, 2147483648
    %v9430 = vsel %vm9428, %v9429, %v9427
    %v9431 = vrsqrt.pop %v8771
    %v9432 = vmul.f32 %v8771, %v9431
    %vm9433 = vcmp.eq.f32.partialorder %v8771, inf
    %v9434 = vsel %vm9433, %v8771, %v9432
    %vm9435 = vcmp.eq.f32.partialorder %v8771, 0.0
    %v9436 = vand.u32 %v8771, 2147483648
    %v9437 = vsel %vm9435, %v9436, %v9434
    %v9438 = vrsqrt.pop %v8773
    %v9439 = vmul.f32 %v8773, %v9438
    %vm9440 = vcmp.eq.f32.partialorder %v8773, inf
    %v9441 = vsel %vm9440, %v8773, %v9439
    %vm9442 = vcmp.eq.f32.partialorder %v8773, 0.0
    %v9443 = vand.u32 %v8773, 2147483648
    %v9444 = vsel %vm9442, %v9443, %v9441
    %v9445 = vrsqrt.pop %v8775
    %v9446 = vmul.f32 %v8775, %v9445
    %vm9447 = vcmp.eq.f32.partialorder %v8775, inf
    %v9448 = vsel %vm9447, %v8775, %v9446
    %vm9449 = vcmp.eq.f32.partialorder %v8775, 0.0
    %v9450 = vand.u32 %v8775, 2147483648
    %v9451 = vsel %vm9449, %v9450, %v9448
    %v9452 = vrsqrt.pop %v8777
    %v9453 = vmul.f32 %v8777, %v9452
    %vm9454 = vcmp.eq.f32.partialorder %v8777, inf
    %v9455 = vsel %vm9454, %v8777, %v9453
    %vm9456 = vcmp.eq.f32.partialorder %v8777, 0.0
    %v9457 = vand.u32 %v8777, 2147483648
    %v9458 = vsel %vm9456, %v9457, %v9455
    %v9459 = vrsqrt.pop %v8779
    %v9460 = vmul.f32 %v8779, %v9459
    %vm9461 = vcmp.eq.f32.partialorder %v8779, inf
    %v9462 = vsel %vm9461, %v8779, %v9460
    %vm9463 = vcmp.eq.f32.partialorder %v8779, 0.0
    %v9464 = vand.u32 %v8779, 2147483648
    %v9465 = vsel %vm9463, %v9464, %v9462
    %v9466 = vrsqrt.pop %v8781
    %v9467 = vmul.f32 %v8781, %v9466
    %vm9468 = vcmp.eq.f32.partialorder %v8781, inf
    %v9469 = vsel %vm9468, %v8781, %v9467
    %vm9470 = vcmp.eq.f32.partialorder %v8781, 0.0
    %v9471 = vand.u32 %v8781, 2147483648
    %v9472 = vsel %vm9470, %v9471, %v9469
    %v9473 = vrsqrt.pop %v8783
    %v9474 = vmul.f32 %v8783, %v9473
    %vm9475 = vcmp.eq.f32.partialorder %v8783, inf
    %v9476 = vsel %vm9475, %v8783, %v9474
    %vm9477 = vcmp.eq.f32.partialorder %v8783, 0.0
    %v9478 = vand.u32 %v8783, 2147483648
    %v9479 = vsel %vm9477, %v9478, %v9476
    %v9480 = vrsqrt.pop %v8785
    %v9481 = vmul.f32 %v8785, %v9480
    %vm9482 = vcmp.eq.f32.partialorder %v8785, inf
    %v9483 = vsel %vm9482, %v8785, %v9481
    %vm9484 = vcmp.eq.f32.partialorder %v8785, 0.0
    %v9485 = vand.u32 %v8785, 2147483648
    %v9486 = vsel %vm9484, %v9485, %v9483
    %v9487 = vrsqrt.pop %v8787
    %v9488 = vmul.f32 %v8787, %v9487
    %vm9489 = vcmp.eq.f32.partialorder %v8787, inf
    %v9490 = vsel %vm9489, %v8787, %v9488
    %vm9491 = vcmp.eq.f32.partialorder %v8787, 0.0
    %v9492 = vand.u32 %v8787, 2147483648
    %v9493 = vsel %vm9491, %v9492, %v9490
    %v9494 = vrsqrt.pop %v8789
    %v9495 = vmul.f32 %v8789, %v9494
    %vm9496 = vcmp.eq.f32.partialorder %v8789, inf
    %v9497 = vsel %vm9496, %v8789, %v9495
    %vm9498 = vcmp.eq.f32.partialorder %v8789, 0.0
    %v9499 = vand.u32 %v8789, 2147483648
    %v9500 = vsel %vm9498, %v9499, %v9497
    %v9501 = vrsqrt.pop %v8791
    %v9502 = vmul.f32 %v8791, %v9501
    %vm9503 = vcmp.eq.f32.partialorder %v8791, inf
    %v9504 = vsel %vm9503, %v8791, %v9502
    %vm9505 = vcmp.eq.f32.partialorder %v8791, 0.0
    %v9506 = vand.u32 %v8791, 2147483648
    %v9507 = vsel %vm9505, %v9506, %v9504
    %v9508 = vrsqrt.pop %v8793
    %v9509 = vmul.f32 %v8793, %v9508
    %vm9510 = vcmp.eq.f32.partialorder %v8793, inf
    %v9511 = vsel %vm9510, %v8793, %v9509
    %vm9512 = vcmp.eq.f32.partialorder %v8793, 0.0
    %v9513 = vand.u32 %v8793, 2147483648
    %v9514 = vsel %vm9512, %v9513, %v9511
    %v9515 = vrsqrt.pop %v8795
    %v9516 = vmul.f32 %v8795, %v9515
    %vm9517 = vcmp.eq.f32.partialorder %v8795, inf
    %v9518 = vsel %vm9517, %v8795, %v9516
    %vm9519 = vcmp.eq.f32.partialorder %v8795, 0.0
    %v9520 = vand.u32 %v8795, 2147483648
    %v9521 = vsel %vm9519, %v9520, %v9518
    %v9522 = vrsqrt.pop %v8797
    %v9523 = vmul.f32 %v8797, %v9522
    %vm9524 = vcmp.eq.f32.partialorder %v8797, inf
    %v9525 = vsel %vm9524, %v8797, %v9523
    %vm9526 = vcmp.eq.f32.partialorder %v8797, 0.0
    %v9527 = vand.u32 %v8797, 2147483648
    %v9528 = vsel %vm9526, %v9527, %v9525
    %v9529 = vrsqrt.pop %v8799
    %v9530 = vmul.f32 %v8799, %v9529
    %vm9531 = vcmp.eq.f32.partialorder %v8799, inf
    %v9532 = vsel %vm9531, %v8799, %v9530
    %vm9533 = vcmp.eq.f32.partialorder %v8799, 0.0
    %v9534 = vand.u32 %v8799, 2147483648
    %v9535 = vsel %vm9533, %v9534, %v9532
    %v9536 = vrsqrt.pop %v8801
    %v9537 = vmul.f32 %v8801, %v9536
    %vm9538 = vcmp.eq.f32.partialorder %v8801, inf
    %v9539 = vsel %vm9538, %v8801, %v9537
    %vm9540 = vcmp.eq.f32.partialorder %v8801, 0.0
    %v9541 = vand.u32 %v8801, 2147483648
    %v9542 = vsel %vm9540, %v9541, %v9539
    %v9543 = vrsqrt.pop %v8803
    %v9544 = vmul.f32 %v8803, %v9543
    %vm9545 = vcmp.eq.f32.partialorder %v8803, inf
    %v9546 = vsel %vm9545, %v8803, %v9544
    %vm9547 = vcmp.eq.f32.partialorder %v8803, 0.0
    %v9548 = vand.u32 %v8803, 2147483648
    %v9549 = vsel %vm9547, %v9548, %v9546
    %v9550 = vrsqrt.pop %v8805
    %v9551 = vmul.f32 %v8805, %v9550
    %vm9552 = vcmp.eq.f32.partialorder %v8805, inf
    %v9553 = vsel %vm9552, %v8805, %v9551
    %vm9554 = vcmp.eq.f32.partialorder %v8805, 0.0
    %v9555 = vand.u32 %v8805, 2147483648
    %v9556 = vsel %vm9554, %v9555, %v9553
    %v9557 = vrsqrt.pop %v8807
    %v9558 = vmul.f32 %v8807, %v9557
    %vm9559 = vcmp.eq.f32.partialorder %v8807, inf
    %v9560 = vsel %vm9559, %v8807, %v9558
    %vm9561 = vcmp.eq.f32.partialorder %v8807, 0.0
    %v9562 = vand.u32 %v8807, 2147483648
    %v9563 = vsel %vm9561, %v9562, %v9560
    %v9564 = vrsqrt.pop %v8809
    %v9565 = vmul.f32 %v8809, %v9564
    %vm9566 = vcmp.eq.f32.partialorder %v8809, inf
    %v9567 = vsel %vm9566, %v8809, %v9565
    %vm9568 = vcmp.eq.f32.partialorder %v8809, 0.0
    %v9569 = vand.u32 %v8809, 2147483648
    %v9570 = vsel %vm9568, %v9569, %v9567
    %v9571 = vrsqrt.pop %v8811
    %v9572 = vmul.f32 %v8811, %v9571
    %vm9573 = vcmp.eq.f32.partialorder %v8811, inf
    %v9574 = vsel %vm9573, %v8811, %v9572
    %vm9575 = vcmp.eq.f32.partialorder %v8811, 0.0
    %v9576 = vand.u32 %v8811, 2147483648
    %v9577 = vsel %vm9575, %v9576, %v9574
    %v9578 = vrsqrt.pop %v8813
    %v9579 = vmul.f32 %v8813, %v9578
    %vm9580 = vcmp.eq.f32.partialorder %v8813, inf
    %v9581 = vsel %vm9580, %v8813, %v9579
    %vm9582 = vcmp.eq.f32.partialorder %v8813, 0.0
    %v9583 = vand.u32 %v8813, 2147483648
    %v9584 = vsel %vm9582, %v9583, %v9581
    %v9585 = vrsqrt.pop %v8815
    %v9586 = vmul.f32 %v8815, %v9585
    %vm9587 = vcmp.eq.f32.partialorder %v8815, inf
    %v9588 = vsel %vm9587, %v8815, %v9586
    %vm9589 = vcmp.eq.f32.partialorder %v8815, 0.0
    %v9590 = vand.u32 %v8815, 2147483648
    %v9591 = vsel %vm9589, %v9590, %v9588
    %v9592 = vrsqrt.pop %v8817
    %v9593 = vmul.f32 %v8817, %v9592
    %vm9594 = vcmp.eq.f32.partialorder %v8817, inf
    %v9595 = vsel %vm9594, %v8817, %v9593
    %vm9596 = vcmp.eq.f32.partialorder %v8817, 0.0
    %v9597 = vand.u32 %v8817, 2147483648
    %v9598 = vsel %vm9596, %v9597, %v9595
    %v9599 = vrsqrt.pop %v8819
    %v9600 = vmul.f32 %v8819, %v9599
    %vm9601 = vcmp.eq.f32.partialorder %v8819, inf
    %v9602 = vsel %vm9601, %v8819, %v9600
    %vm9603 = vcmp.eq.f32.partialorder %v8819, 0.0
    %v9604 = vand.u32 %v8819, 2147483648
    %v9605 = vsel %vm9603, %v9604, %v9602
    %v9606 = vrsqrt.pop %v8821
    %v9607 = vmul.f32 %v8821, %v9606
    %vm9608 = vcmp.eq.f32.partialorder %v8821, inf
    %v9609 = vsel %vm9608, %v8821, %v9607
    %vm9610 = vcmp.eq.f32.partialorder %v8821, 0.0
    %v9611 = vand.u32 %v8821, 2147483648
    %v9612 = vsel %vm9610, %v9611, %v9609
    %v9613 = vrsqrt.pop %v8823
    %v9614 = vmul.f32 %v8823, %v9613
    %vm9615 = vcmp.eq.f32.partialorder %v8823, inf
    %v9616 = vsel %vm9615, %v8823, %v9614
    %vm9617 = vcmp.eq.f32.partialorder %v8823, 0.0
    %v9618 = vand.u32 %v8823, 2147483648
    %v9619 = vsel %vm9617, %v9618, %v9616
    %v9620 = vrsqrt.pop %v8825
    %v9621 = vmul.f32 %v8825, %v9620
    %vm9622 = vcmp.eq.f32.partialorder %v8825, inf
    %v9623 = vsel %vm9622, %v8825, %v9621
    %vm9624 = vcmp.eq.f32.partialorder %v8825, 0.0
    %v9625 = vand.u32 %v8825, 2147483648
    %v9626 = vsel %vm9624, %v9625, %v9623
    %v9627 = vrsqrt.pop %v8827
    %v9628 = vmul.f32 %v8827, %v9627
    %vm9629 = vcmp.eq.f32.partialorder %v8827, inf
    %v9630 = vsel %vm9629, %v8827, %v9628
    %vm9631 = vcmp.eq.f32.partialorder %v8827, 0.0
    %v9632 = vand.u32 %v8827, 2147483648
    %v9633 = vsel %vm9631, %v9632, %v9630
    %v9634 = vrsqrt.pop %v8829
    %v9635 = vmul.f32 %v8829, %v9634
    %vm9636 = vcmp.eq.f32.partialorder %v8829, inf
    %v9637 = vsel %vm9636, %v8829, %v9635
    %vm9638 = vcmp.eq.f32.partialorder %v8829, 0.0
    %v9639 = vand.u32 %v8829, 2147483648
    %v9640 = vsel %vm9638, %v9639, %v9637
    %v9641 = vrsqrt.pop %v8831
    %v9642 = vmul.f32 %v8831, %v9641
    %vm9643 = vcmp.eq.f32.partialorder %v8831, inf
    %v9644 = vsel %vm9643, %v8831, %v9642
    %vm9645 = vcmp.eq.f32.partialorder %v8831, 0.0
    %v9646 = vand.u32 %v8831, 2147483648
    %v9647 = vsel %vm9645, %v9646, %v9644
    %v9648 = vrsqrt.pop %v8833
    %v9649 = vmul.f32 %v8833, %v9648
    %vm9650 = vcmp.eq.f32.partialorder %v8833, inf
    %v9651 = vsel %vm9650, %v8833, %v9649
    %vm9652 = vcmp.eq.f32.partialorder %v8833, 0.0
    %v9653 = vand.u32 %v8833, 2147483648
    %v9654 = vsel %vm9652, %v9653, %v9651
    %v9655 = vrsqrt.pop %v8835
    %v9656 = vmul.f32 %v8835, %v9655
    %vm9657 = vcmp.eq.f32.partialorder %v8835, inf
    %v9658 = vsel %vm9657, %v8835, %v9656
    %vm9659 = vcmp.eq.f32.partialorder %v8835, 0.0
    %v9660 = vand.u32 %v8835, 2147483648
    %v9661 = vsel %vm9659, %v9660, %v9658
    %v9662 = vrsqrt.pop %v8837
    %v9663 = vmul.f32 %v8837, %v9662
    %vm9664 = vcmp.eq.f32.partialorder %v8837, inf
    %v9665 = vsel %vm9664, %v8837, %v9663
    %vm9666 = vcmp.eq.f32.partialorder %v8837, 0.0
    %v9667 = vand.u32 %v8837, 2147483648
    %v9668 = vsel %vm9666, %v9667, %v9665
    %v9669 = vrsqrt.pop %v8839
    %v9670 = vmul.f32 %v8839, %v9669
    %vm9671 = vcmp.eq.f32.partialorder %v8839, inf
    %v9672 = vsel %vm9671, %v8839, %v9670
    %vm9673 = vcmp.eq.f32.partialorder %v8839, 0.0
    %v9674 = vand.u32 %v8839, 2147483648
    %v9675 = vsel %vm9673, %v9674, %v9672
    %v9676 = vrsqrt.pop %v8841
    %v9677 = vmul.f32 %v8841, %v9676
    %vm9678 = vcmp.eq.f32.partialorder %v8841, inf
    %v9679 = vsel %vm9678, %v8841, %v9677
    %vm9680 = vcmp.eq.f32.partialorder %v8841, 0.0
    %v9681 = vand.u32 %v8841, 2147483648
    %v9682 = vsel %vm9680, %v9681, %v9679
    %v9683 = vrsqrt.pop %v8843
    %v9684 = vmul.f32 %v8843, %v9683
    %vm9685 = vcmp.eq.f32.partialorder %v8843, inf
    %v9686 = vsel %vm9685, %v8843, %v9684
    %vm9687 = vcmp.eq.f32.partialorder %v8843, 0.0
    %v9688 = vand.u32 %v8843, 2147483648
    %v9689 = vsel %vm9687, %v9688, %v9686
    %v9690 = vrsqrt.pop %v8845
    %v9691 = vmul.f32 %v8845, %v9690
    %vm9692 = vcmp.eq.f32.partialorder %v8845, inf
    %v9693 = vsel %vm9692, %v8845, %v9691
    %vm9694 = vcmp.eq.f32.partialorder %v8845, 0.0
    %v9695 = vand.u32 %v8845, 2147483648
    %v9696 = vsel %vm9694, %v9695, %v9693
    %v9697 = vrsqrt.pop %v8847
    %v9698 = vmul.f32 %v8847, %v9697
    %vm9699 = vcmp.eq.f32.partialorder %v8847, inf
    %v9700 = vsel %vm9699, %v8847, %v9698
    %vm9701 = vcmp.eq.f32.partialorder %v8847, 0.0
    %v9702 = vand.u32 %v8847, 2147483648
    %v9703 = vsel %vm9701, %v9702, %v9700
    %v9704 = vrsqrt.pop %v8849
    %v9705 = vmul.f32 %v8849, %v9704
    %vm9706 = vcmp.eq.f32.partialorder %v8849, inf
    %v9707 = vsel %vm9706, %v8849, %v9705
    %vm9708 = vcmp.eq.f32.partialorder %v8849, 0.0
    %v9709 = vand.u32 %v8849, 2147483648
    %v9710 = vsel %vm9708, %v9709, %v9707
    %v9711 = vrsqrt.pop %v8851
    %v9712 = vmul.f32 %v8851, %v9711
    %vm9713 = vcmp.eq.f32.partialorder %v8851, inf
    %v9714 = vsel %vm9713, %v8851, %v9712
    %vm9715 = vcmp.eq.f32.partialorder %v8851, 0.0
    %v9716 = vand.u32 %v8851, 2147483648
    %v9717 = vsel %vm9715, %v9716, %v9714
    %v9718 = vrsqrt.pop %v8853
    %v9719 = vmul.f32 %v8853, %v9718
    %vm9720 = vcmp.eq.f32.partialorder %v8853, inf
    %v9721 = vsel %vm9720, %v8853, %v9719
    %vm9722 = vcmp.eq.f32.partialorder %v8853, 0.0
    %v9723 = vand.u32 %v8853, 2147483648
    %v9724 = vsel %vm9722, %v9723, %v9721
    %v9725 = vrsqrt.pop %v8855
    %v9726 = vmul.f32 %v8855, %v9725
    %vm9727 = vcmp.eq.f32.partialorder %v8855, inf
    %v9728 = vsel %vm9727, %v8855, %v9726
    %vm9729 = vcmp.eq.f32.partialorder %v8855, 0.0
    %v9730 = vand.u32 %v8855, 2147483648
    %v9731 = vsel %vm9729, %v9730, %v9728
    %v9732 = vrsqrt.pop %v8857
    %v9733 = vmul.f32 %v8857, %v9732
    %vm9734 = vcmp.eq.f32.partialorder %v8857, inf
    %v9735 = vsel %vm9734, %v8857, %v9733
    %vm9736 = vcmp.eq.f32.partialorder %v8857, 0.0
    %v9737 = vand.u32 %v8857, 2147483648
    %v9738 = vsel %vm9736, %v9737, %v9735
    %v9739 = vrsqrt.pop %v8859
    %v9740 = vmul.f32 %v8859, %v9739
    %vm9741 = vcmp.eq.f32.partialorder %v8859, inf
    %v9742 = vsel %vm9741, %v8859, %v9740
    %vm9743 = vcmp.eq.f32.partialorder %v8859, 0.0
    %v9744 = vand.u32 %v8859, 2147483648
    %v9745 = vsel %vm9743, %v9744, %v9742
    %v9746 = vrsqrt.pop %v8861
    %v9747 = vmul.f32 %v8861, %v9746
    %vm9748 = vcmp.eq.f32.partialorder %v8861, inf
    %v9749 = vsel %vm9748, %v8861, %v9747
    %vm9750 = vcmp.eq.f32.partialorder %v8861, 0.0
    %v9751 = vand.u32 %v8861, 2147483648
    %v9752 = vsel %vm9750, %v9751, %v9749
    %v9753 = vrsqrt.pop %v8863
    %v9754 = vmul.f32 %v8863, %v9753
    %vm9755 = vcmp.eq.f32.partialorder %v8863, inf
    %v9756 = vsel %vm9755, %v8863, %v9754
    %vm9757 = vcmp.eq.f32.partialorder %v8863, 0.0
    %v9758 = vand.u32 %v8863, 2147483648
    %v9759 = vsel %vm9757, %v9758, %v9756
    %9761 = vset.pattern.permute.xlu0 0
    %9762 = vperm.xlu0 %9761, %v8870
    %v9763 = vpop.permute.xlu0 %9762
    %9766 = vset.pattern.permute.xlu0 0
    %9767 = vperm.xlu0 %9766, %v8877
    %v9768 = vpop.permute.xlu0 %9767
    %9771 = vset.pattern.permute.xlu0 0
    %9772 = vperm.xlu0 %9771, %v8884
    %v9773 = vpop.permute.xlu0 %9772
    %9776 = vset.pattern.permute.xlu0 0
    %9777 = vperm.xlu0 %9776, %v8891
    %v9778 = vpop.permute.xlu0 %9777
    %9781 = vset.pattern.permute.xlu0 0
    %9782 = vperm.xlu0 %9781, %v8898
    %v9783 = vpop.permute.xlu0 %9782
    %9786 = vset.pattern.permute.xlu0 0
    %9787 = vperm.xlu0 %9786, %v8905
    %v9788 = vpop.permute.xlu0 %9787
    %9791 = vset.pattern.permute.xlu0 0
    %9792 = vperm.xlu0 %9791, %v8912
    %v9793 = vpop.permute.xlu0 %9792
    %9796 = vset.pattern.permute.xlu0 0
    %9797 = vperm.xlu0 %9796, %v8919
    %v9798 = vpop.permute.xlu0 %9797
    %9801 = vset.pattern.permute.xlu0 0
    %9802 = vperm.xlu0 %9801, %v8926
    %v9803 = vpop.permute.xlu0 %9802
    %9806 = vset.pattern.permute.xlu0 0
    %9807 = vperm.xlu0 %9806, %v8933
    %v9808 = vpop.permute.xlu0 %9807
    %9811 = vset.pattern.permute.xlu0 0
    %9812 = vperm.xlu0 %9811, %v8940
    %v9813 = vpop.permute.xlu0 %9812
    %9816 = vset.pattern.permute.xlu0 0
    %9817 = vperm.xlu0 %9816, %v8947
    %v9818 = vpop.permute.xlu0 %9817
    %9821 = vset.pattern.permute.xlu0 0
    %9822 = vperm.xlu0 %9821, %v8954
    %v9823 = vpop.permute.xlu0 %9822
    %9826 = vset.pattern.permute.xlu0 0
    %9827 = vperm.xlu0 %9826, %v8961
    %v9828 = vpop.permute.xlu0 %9827
    %9831 = vset.pattern.permute.xlu0 0
    %9832 = vperm.xlu0 %9831, %v8968
    %v9833 = vpop.permute.xlu0 %9832
    %9836 = vset.pattern.permute.xlu0 0
    %9837 = vperm.xlu0 %9836, %v8975
    %v9838 = vpop.permute.xlu0 %9837
    %9841 = vset.pattern.permute.xlu0 0
    %9842 = vperm.xlu0 %9841, %v8982
    %v9843 = vpop.permute.xlu0 %9842
    %9846 = vset.pattern.permute.xlu0 0
    %9847 = vperm.xlu0 %9846, %v8989
    %v9848 = vpop.permute.xlu0 %9847
    %9851 = vset.pattern.permute.xlu0 0
    %9852 = vperm.xlu0 %9851, %v8996
    %v9853 = vpop.permute.xlu0 %9852
    %9856 = vset.pattern.permute.xlu0 0
    %9857 = vperm.xlu0 %9856, %v9003
    %v9858 = vpop.permute.xlu0 %9857
    %9861 = vset.pattern.permute.xlu0 0
    %9862 = vperm.xlu0 %9861, %v9010
    %v9863 = vpop.permute.xlu0 %9862
    %9866 = vset.pattern.permute.xlu0 0
    %9867 = vperm.xlu0 %9866, %v9017
    %v9868 = vpop.permute.xlu0 %9867
    %9871 = vset.pattern.permute.xlu0 0
    %9872 = vperm.xlu0 %9871, %v9024
    %v9873 = vpop.permute.xlu0 %9872
    %9876 = vset.pattern.permute.xlu0 0
    %9877 = vperm.xlu0 %9876, %v9031
    %v9878 = vpop.permute.xlu0 %9877
    %9881 = vset.pattern.permute.xlu0 0
    %9882 = vperm.xlu0 %9881, %v9038
    %v9883 = vpop.permute.xlu0 %9882
    %9886 = vset.pattern.permute.xlu0 0
    %9887 = vperm.xlu0 %9886, %v9045
    %v9888 = vpop.permute.xlu0 %9887
    %9891 = vset.pattern.permute.xlu0 0
    %9892 = vperm.xlu0 %9891, %v9052
    %v9893 = vpop.permute.xlu0 %9892
    %9896 = vset.pattern.permute.xlu0 0
    %9897 = vperm.xlu0 %9896, %v9059
    %v9898 = vpop.permute.xlu0 %9897
    %9901 = vset.pattern.permute.xlu0 0
    %9902 = vperm.xlu0 %9901, %v9066
    %v9903 = vpop.permute.xlu0 %9902
    %9906 = vset.pattern.permute.xlu0 0
    %9907 = vperm.xlu0 %9906, %v9073
    %v9908 = vpop.permute.xlu0 %9907
    %9911 = vset.pattern.permute.xlu0 0
    %9912 = vperm.xlu0 %9911, %v9080
    %v9913 = vpop.permute.xlu0 %9912
    %9916 = vset.pattern.permute.xlu0 0
    %9917 = vperm.xlu0 %9916, %v9087
    %v9918 = vpop.permute.xlu0 %9917
    %9921 = vset.pattern.permute.xlu0 0
    %9922 = vperm.xlu0 %9921, %v9094
    %v9923 = vpop.permute.xlu0 %9922
    %9926 = vset.pattern.permute.xlu0 0
    %9927 = vperm.xlu0 %9926, %v9101
    %v9928 = vpop.permute.xlu0 %9927
    %9931 = vset.pattern.permute.xlu0 0
    %9932 = vperm.xlu0 %9931, %v9108
    %v9933 = vpop.permute.xlu0 %9932
    %9936 = vset.pattern.permute.xlu0 0
    %9937 = vperm.xlu0 %9936, %v9115
    %v9938 = vpop.permute.xlu0 %9937
    %9941 = vset.pattern.permute.xlu0 0
    %9942 = vperm.xlu0 %9941, %v9122
    %v9943 = vpop.permute.xlu0 %9942
    %9946 = vset.pattern.permute.xlu0 0
    %9947 = vperm.xlu0 %9946, %v9129
    %v9948 = vpop.permute.xlu0 %9947
    %9951 = vset.pattern.permute.xlu0 0
    %9952 = vperm.xlu0 %9951, %v9136
    %v9953 = vpop.permute.xlu0 %9952
    %9956 = vset.pattern.permute.xlu0 0
    %9957 = vperm.xlu0 %9956, %v9143
    %v9958 = vpop.permute.xlu0 %9957
    %9961 = vset.pattern.permute.xlu0 0
    %9962 = vperm.xlu0 %9961, %v9150
    %v9963 = vpop.permute.xlu0 %9962
    %9966 = vset.pattern.permute.xlu0 0
    %9967 = vperm.xlu0 %9966, %v9157
    %v9968 = vpop.permute.xlu0 %9967
    %9971 = vset.pattern.permute.xlu0 0
    %9972 = vperm.xlu0 %9971, %v9164
    %v9973 = vpop.permute.xlu0 %9972
    %9976 = vset.pattern.permute.xlu0 0
    %9977 = vperm.xlu0 %9976, %v9171
    %v9978 = vpop.permute.xlu0 %9977
    %9981 = vset.pattern.permute.xlu0 0
    %9982 = vperm.xlu0 %9981, %v9178
    %v9983 = vpop.permute.xlu0 %9982
    %9986 = vset.pattern.permute.xlu0 0
    %9987 = vperm.xlu0 %9986, %v9185
    %v9988 = vpop.permute.xlu0 %9987
    %9991 = vset.pattern.permute.xlu0 0
    %9992 = vperm.xlu0 %9991, %v9192
    %v9993 = vpop.permute.xlu0 %9992
    %9996 = vset.pattern.permute.xlu0 0
    %9997 = vperm.xlu0 %9996, %v9199
    %v9998 = vpop.permute.xlu0 %9997
    %10001 = vset.pattern.permute.xlu0 0
    %10002 = vperm.xlu0 %10001, %v9206
    %v10003 = vpop.permute.xlu0 %10002
    %10006 = vset.pattern.permute.xlu0 0
    %10007 = vperm.xlu0 %10006, %v9213
    %v10008 = vpop.permute.xlu0 %10007
    %10011 = vset.pattern.permute.xlu0 0
    %10012 = vperm.xlu0 %10011, %v9220
    %v10013 = vpop.permute.xlu0 %10012
    %10016 = vset.pattern.permute.xlu0 0
    %10017 = vperm.xlu0 %10016, %v9227
    %v10018 = vpop.permute.xlu0 %10017
    %10021 = vset.pattern.permute.xlu0 0
    %10022 = vperm.xlu0 %10021, %v9234
    %v10023 = vpop.permute.xlu0 %10022
    %10026 = vset.pattern.permute.xlu0 0
    %10027 = vperm.xlu0 %10026, %v9241
    %v10028 = vpop.permute.xlu0 %10027
    %10031 = vset.pattern.permute.xlu0 0
    %10032 = vperm.xlu0 %10031, %v9248
    %v10033 = vpop.permute.xlu0 %10032
    %10036 = vset.pattern.permute.xlu0 0
    %10037 = vperm.xlu0 %10036, %v9255
    %v10038 = vpop.permute.xlu0 %10037
    %10041 = vset.pattern.permute.xlu0 0
    %10042 = vperm.xlu0 %10041, %v9262
    %v10043 = vpop.permute.xlu0 %10042
    %10046 = vset.pattern.permute.xlu0 0
    %10047 = vperm.xlu0 %10046, %v9269
    %v10048 = vpop.permute.xlu0 %10047
    %10051 = vset.pattern.permute.xlu0 0
    %10052 = vperm.xlu0 %10051, %v9276
    %v10053 = vpop.permute.xlu0 %10052
    %10056 = vset.pattern.permute.xlu0 0
    %10057 = vperm.xlu0 %10056, %v9283
    %v10058 = vpop.permute.xlu0 %10057
    %10061 = vset.pattern.permute.xlu0 0
    %10062 = vperm.xlu0 %10061, %v9290
    %v10063 = vpop.permute.xlu0 %10062
    %10066 = vset.pattern.permute.xlu0 0
    %10067 = vperm.xlu0 %10066, %v9297
    %v10068 = vpop.permute.xlu0 %10067
    %10071 = vset.pattern.permute.xlu0 0
    %10072 = vperm.xlu0 %10071, %v9304
    %v10073 = vpop.permute.xlu0 %10072
    %10076 = vset.pattern.permute.xlu0 0
    %10077 = vperm.xlu0 %10076, %v9311
    %v10078 = vpop.permute.xlu0 %10077
    %10081 = vset.pattern.permute.xlu0 0
    %10082 = vperm.xlu0 %10081, %v9318
    %v10083 = vpop.permute.xlu0 %10082
    %10086 = vset.pattern.permute.xlu0 0
    %10087 = vperm.xlu0 %10086, %v9325
    %v10088 = vpop.permute.xlu0 %10087
    %10091 = vset.pattern.permute.xlu0 0
    %10092 = vperm.xlu0 %10091, %v9332
    %v10093 = vpop.permute.xlu0 %10092
    %10096 = vset.pattern.permute.xlu0 0
    %10097 = vperm.xlu0 %10096, %v9339
    %v10098 = vpop.permute.xlu0 %10097
    %10101 = vset.pattern.permute.xlu0 0
    %10102 = vperm.xlu0 %10101, %v9346
    %v10103 = vpop.permute.xlu0 %10102
    %10106 = vset.pattern.permute.xlu0 0
    %10107 = vperm.xlu0 %10106, %v9353
    %v10108 = vpop.permute.xlu0 %10107
    %10111 = vset.pattern.permute.xlu0 0
    %10112 = vperm.xlu0 %10111, %v9360
    %v10113 = vpop.permute.xlu0 %10112
    %10116 = vset.pattern.permute.xlu0 0
    %10117 = vperm.xlu0 %10116, %v9367
    %v10118 = vpop.permute.xlu0 %10117
    %10121 = vset.pattern.permute.xlu0 0
    %10122 = vperm.xlu0 %10121, %v9374
    %v10123 = vpop.permute.xlu0 %10122
    %10126 = vset.pattern.permute.xlu0 0
    %10127 = vperm.xlu0 %10126, %v9381
    %v10128 = vpop.permute.xlu0 %10127
    %10131 = vset.pattern.permute.xlu0 0
    %10132 = vperm.xlu0 %10131, %v9388
    %v10133 = vpop.permute.xlu0 %10132
    %10136 = vset.pattern.permute.xlu0 0
    %10137 = vperm.xlu0 %10136, %v9395
    %v10138 = vpop.permute.xlu0 %10137
    %10141 = vset.pattern.permute.xlu0 0
    %10142 = vperm.xlu0 %10141, %v9402
    %v10143 = vpop.permute.xlu0 %10142
    %10146 = vset.pattern.permute.xlu0 0
    %10147 = vperm.xlu0 %10146, %v9409
    %v10148 = vpop.permute.xlu0 %10147
    %10151 = vset.pattern.permute.xlu0 0
    %10152 = vperm.xlu0 %10151, %v9416
    %v10153 = vpop.permute.xlu0 %10152
    %10156 = vset.pattern.permute.xlu0 0
    %10157 = vperm.xlu0 %10156, %v9423
    %v10158 = vpop.permute.xlu0 %10157
    %10161 = vset.pattern.permute.xlu0 0
    %10162 = vperm.xlu0 %10161, %v9430
    %v10163 = vpop.permute.xlu0 %10162
    %10166 = vset.pattern.permute.xlu0 0
    %10167 = vperm.xlu0 %10166, %v9437
    %v10168 = vpop.permute.xlu0 %10167
    %10171 = vset.pattern.permute.xlu0 0
    %10172 = vperm.xlu0 %10171, %v9444
    %v10173 = vpop.permute.xlu0 %10172
    %10176 = vset.pattern.permute.xlu0 0
    %10177 = vperm.xlu0 %10176, %v9451
    %v10178 = vpop.permute.xlu0 %10177
    %10181 = vset.pattern.permute.xlu0 0
    %10182 = vperm.xlu0 %10181, %v9458
    %v10183 = vpop.permute.xlu0 %10182
    %10186 = vset.pattern.permute.xlu0 0
    %10187 = vperm.xlu0 %10186, %v9465
    %v10188 = vpop.permute.xlu0 %10187
    %10191 = vset.pattern.permute.xlu0 0
    %10192 = vperm.xlu0 %10191, %v9472
    %v10193 = vpop.permute.xlu0 %10192
    %10196 = vset.pattern.permute.xlu0 0
    %10197 = vperm.xlu0 %10196, %v9479
    %v10198 = vpop.permute.xlu0 %10197
    %10201 = vset.pattern.permute.xlu0 0
    %10202 = vperm.xlu0 %10201, %v9486
    %v10203 = vpop.permute.xlu0 %10202
    %10206 = vset.pattern.permute.xlu0 0
    %10207 = vperm.xlu0 %10206, %v9493
    %v10208 = vpop.permute.xlu0 %10207
    %10211 = vset.pattern.permute.xlu0 0
    %10212 = vperm.xlu0 %10211, %v9500
    %v10213 = vpop.permute.xlu0 %10212
    %10216 = vset.pattern.permute.xlu0 0
    %10217 = vperm.xlu0 %10216, %v9507
    %v10218 = vpop.permute.xlu0 %10217
    %10221 = vset.pattern.permute.xlu0 0
    %10222 = vperm.xlu0 %10221, %v9514
    %v10223 = vpop.permute.xlu0 %10222
    %10226 = vset.pattern.permute.xlu0 0
    %10227 = vperm.xlu0 %10226, %v9521
    %v10228 = vpop.permute.xlu0 %10227
    %10231 = vset.pattern.permute.xlu0 0
    %10232 = vperm.xlu0 %10231, %v9528
    %v10233 = vpop.permute.xlu0 %10232
    %10236 = vset.pattern.permute.xlu0 0
    %10237 = vperm.xlu0 %10236, %v9535
    %v10238 = vpop.permute.xlu0 %10237
    %10241 = vset.pattern.permute.xlu0 0
    %10242 = vperm.xlu0 %10241, %v9542
    %v10243 = vpop.permute.xlu0 %10242
    %10246 = vset.pattern.permute.xlu0 0
    %10247 = vperm.xlu0 %10246, %v9549
    %v10248 = vpop.permute.xlu0 %10247
    %10251 = vset.pattern.permute.xlu0 0
    %10252 = vperm.xlu0 %10251, %v9556
    %v10253 = vpop.permute.xlu0 %10252
    %10256 = vset.pattern.permute.xlu0 0
    %10257 = vperm.xlu0 %10256, %v9563
    %v10258 = vpop.permute.xlu0 %10257
    %10261 = vset.pattern.permute.xlu0 0
    %10262 = vperm.xlu0 %10261, %v9570
    %v10263 = vpop.permute.xlu0 %10262
    %10266 = vset.pattern.permute.xlu0 0
    %10267 = vperm.xlu0 %10266, %v9577
    %v10268 = vpop.permute.xlu0 %10267
    %10271 = vset.pattern.permute.xlu0 0
    %10272 = vperm.xlu0 %10271, %v9584
    %v10273 = vpop.permute.xlu0 %10272
    %10276 = vset.pattern.permute.xlu0 0
    %10277 = vperm.xlu0 %10276, %v9591
    %v10278 = vpop.permute.xlu0 %10277
    %10281 = vset.pattern.permute.xlu0 0
    %10282 = vperm.xlu0 %10281, %v9598
    %v10283 = vpop.permute.xlu0 %10282
    %10286 = vset.pattern.permute.xlu0 0
    %10287 = vperm.xlu0 %10286, %v9605
    %v10288 = vpop.permute.xlu0 %10287
    %10291 = vset.pattern.permute.xlu0 0
    %10292 = vperm.xlu0 %10291, %v9612
    %v10293 = vpop.permute.xlu0 %10292
    %10296 = vset.pattern.permute.xlu0 0
    %10297 = vperm.xlu0 %10296, %v9619
    %v10298 = vpop.permute.xlu0 %10297
    %10301 = vset.pattern.permute.xlu0 0
    %10302 = vperm.xlu0 %10301, %v9626
    %v10303 = vpop.permute.xlu0 %10302
    %10306 = vset.pattern.permute.xlu0 0
    %10307 = vperm.xlu0 %10306, %v9633
    %v10308 = vpop.permute.xlu0 %10307
    %10311 = vset.pattern.permute.xlu0 0
    %10312 = vperm.xlu0 %10311, %v9640
    %v10313 = vpop.permute.xlu0 %10312
    %10316 = vset.pattern.permute.xlu0 0
    %10317 = vperm.xlu0 %10316, %v9647
    %v10318 = vpop.permute.xlu0 %10317
    %10321 = vset.pattern.permute.xlu0 0
    %10322 = vperm.xlu0 %10321, %v9654
    %v10323 = vpop.permute.xlu0 %10322
    %10326 = vset.pattern.permute.xlu0 0
    %10327 = vperm.xlu0 %10326, %v9661
    %v10328 = vpop.permute.xlu0 %10327
    %10331 = vset.pattern.permute.xlu0 0
    %10332 = vperm.xlu0 %10331, %v9668
    %v10333 = vpop.permute.xlu0 %10332
    %10336 = vset.pattern.permute.xlu0 0
    %10337 = vperm.xlu0 %10336, %v9675
    %v10338 = vpop.permute.xlu0 %10337
    %10341 = vset.pattern.permute.xlu0 0
    %10342 = vperm.xlu0 %10341, %v9682
    %v10343 = vpop.permute.xlu0 %10342
    %10346 = vset.pattern.permute.xlu0 0
    %10347 = vperm.xlu0 %10346, %v9689
    %v10348 = vpop.permute.xlu0 %10347
    %10351 = vset.pattern.permute.xlu0 0
    %10352 = vperm.xlu0 %10351, %v9696
    %v10353 = vpop.permute.xlu0 %10352
    %10356 = vset.pattern.permute.xlu0 0
    %10357 = vperm.xlu0 %10356, %v9703
    %v10358 = vpop.permute.xlu0 %10357
    %10361 = vset.pattern.permute.xlu0 0
    %10362 = vperm.xlu0 %10361, %v9710
    %v10363 = vpop.permute.xlu0 %10362
    %10366 = vset.pattern.permute.xlu0 0
    %10367 = vperm.xlu0 %10366, %v9717
    %v10368 = vpop.permute.xlu0 %10367
    %10371 = vset.pattern.permute.xlu0 0
    %10372 = vperm.xlu0 %10371, %v9724
    %v10373 = vpop.permute.xlu0 %10372
    %10376 = vset.pattern.permute.xlu0 0
    %10377 = vperm.xlu0 %10376, %v9731
    %v10378 = vpop.permute.xlu0 %10377
    %10381 = vset.pattern.permute.xlu0 0
    %10382 = vperm.xlu0 %10381, %v9738
    %v10383 = vpop.permute.xlu0 %10382
    %10386 = vset.pattern.permute.xlu0 0
    %10387 = vperm.xlu0 %10386, %v9745
    %v10388 = vpop.permute.xlu0 %10387
    %10391 = vset.pattern.permute.xlu0 0
    %10392 = vperm.xlu0 %10391, %v9752
    %v10393 = vpop.permute.xlu0 %10392
    %10396 = vset.pattern.permute.xlu0 0
    %10397 = vperm.xlu0 %10396, %v9759
    %v10398 = vpop.permute.xlu0 %10397
    %v10400 = vmul.f32 %v7712, %v9763
    %v10401 = vmul.f32 %v7713, %v9768
    %v10402 = vmul.f32 %v7714, %v9773
    %v10403 = vmul.f32 %v7715, %v9778
    %v10404 = vmul.f32 %v7716, %v9783
    %v10405 = vmul.f32 %v7717, %v9788
    %v10406 = vmul.f32 %v7718, %v9793
    %v10407 = vmul.f32 %v7719, %v9798
    %v10408 = vmul.f32 %v7720, %v9803
    %v10409 = vmul.f32 %v7721, %v9808
    %v10410 = vmul.f32 %v7722, %v9813
    %v10411 = vmul.f32 %v7723, %v9818
    %v10412 = vmul.f32 %v7724, %v9823
    %v10413 = vmul.f32 %v7725, %v9828
    %v10414 = vmul.f32 %v7726, %v9833
    %v10415 = vmul.f32 %v7727, %v9838
    %v10416 = vmul.f32 %v7728, %v9843
    %v10417 = vmul.f32 %v7729, %v9848
    %v10418 = vmul.f32 %v7730, %v9853
    %v10419 = vmul.f32 %v7731, %v9858
    %v10420 = vmul.f32 %v7732, %v9863
    %v10421 = vmul.f32 %v7733, %v9868
    %v10422 = vmul.f32 %v7734, %v9873
    %v10423 = vmul.f32 %v7735, %v9878
    %v10424 = vmul.f32 %v7736, %v9883
    %v10425 = vmul.f32 %v7737, %v9888
    %v10426 = vmul.f32 %v7738, %v9893
    %v10427 = vmul.f32 %v7739, %v9898
    %v10428 = vmul.f32 %v7740, %v9903
    %v10429 = vmul.f32 %v7741, %v9908
    %v10430 = vmul.f32 %v7742, %v9913
    %v10431 = vmul.f32 %v7743, %v9918
    %v10432 = vmul.f32 %v7744, %v9923
    %v10433 = vmul.f32 %v7745, %v9928
    %v10434 = vmul.f32 %v7746, %v9933
    %v10435 = vmul.f32 %v7747, %v9938
    %v10436 = vmul.f32 %v7748, %v9943
    %v10437 = vmul.f32 %v7749, %v9948
    %v10438 = vmul.f32 %v7750, %v9953
    %v10439 = vmul.f32 %v7751, %v9958
    %v10440 = vmul.f32 %v7752, %v9963
    %v10441 = vmul.f32 %v7753, %v9968
    %v10442 = vmul.f32 %v7754, %v9973
    %v10443 = vmul.f32 %v7755, %v9978
    %v10444 = vmul.f32 %v7756, %v9983
    %v10445 = vmul.f32 %v7757, %v9988
    %v10446 = vmul.f32 %v7758, %v9993
    %v10447 = vmul.f32 %v7759, %v9998
    %v10448 = vmul.f32 %v7760, %v10003
    %v10449 = vmul.f32 %v7761, %v10008
    %v10450 = vmul.f32 %v7762, %v10013
    %v10451 = vmul.f32 %v7763, %v10018
    %v10452 = vmul.f32 %v7764, %v10023
    %v10453 = vmul.f32 %v7765, %v10028
    %v10454 = vmul.f32 %v7766, %v10033
    %v10455 = vmul.f32 %v7767, %v10038
    %v10456 = vmul.f32 %v7768, %v10043
    %v10457 = vmul.f32 %v7769, %v10048
    %v10458 = vmul.f32 %v7770, %v10053
    %v10459 = vmul.f32 %v7771, %v10058
    %v10460 = vmul.f32 %v7772, %v10063
    %v10461 = vmul.f32 %v7773, %v10068
    %v10462 = vmul.f32 %v7774, %v10073
    %v10463 = vmul.f32 %v7775, %v10078
    %v10464 = vmul.f32 %v7776, %v10083
    %v10465 = vmul.f32 %v7777, %v10088
    %v10466 = vmul.f32 %v7778, %v10093
    %v10467 = vmul.f32 %v7779, %v10098
    %v10468 = vmul.f32 %v7780, %v10103
    %v10469 = vmul.f32 %v7781, %v10108
    %v10470 = vmul.f32 %v7782, %v10113
    %v10471 = vmul.f32 %v7783, %v10118
    %v10472 = vmul.f32 %v7784, %v10123
    %v10473 = vmul.f32 %v7785, %v10128
    %v10474 = vmul.f32 %v7786, %v10133
    %v10475 = vmul.f32 %v7787, %v10138
    %v10476 = vmul.f32 %v7788, %v10143
    %v10477 = vmul.f32 %v7789, %v10148
    %v10478 = vmul.f32 %v7790, %v10153
    %v10479 = vmul.f32 %v7791, %v10158
    %v10480 = vmul.f32 %v7792, %v10163
    %v10481 = vmul.f32 %v7793, %v10168
    %v10482 = vmul.f32 %v7794, %v10173
    %v10483 = vmul.f32 %v7795, %v10178
    %v10484 = vmul.f32 %v7796, %v10183
    %v10485 = vmul.f32 %v7797, %v10188
    %v10486 = vmul.f32 %v7798, %v10193
    %v10487 = vmul.f32 %v7799, %v10198
    %v10488 = vmul.f32 %v7800, %v10203
    %v10489 = vmul.f32 %v7801, %v10208
    %v10490 = vmul.f32 %v7802, %v10213
    %v10491 = vmul.f32 %v7803, %v10218
    %v10492 = vmul.f32 %v7804, %v10223
    %v10493 = vmul.f32 %v7805, %v10228
    %v10494 = vmul.f32 %v7806, %v10233
    %v10495 = vmul.f32 %v7807, %v10238
    %v10496 = vmul.f32 %v7808, %v10243
    %v10497 = vmul.f32 %v7809, %v10248
    %v10498 = vmul.f32 %v7810, %v10253
    %v10499 = vmul.f32 %v7811, %v10258
    %v10500 = vmul.f32 %v7812, %v10263
    %v10501 = vmul.f32 %v7813, %v10268
    %v10502 = vmul.f32 %v7814, %v10273
    %v10503 = vmul.f32 %v7815, %v10278
    %v10504 = vmul.f32 %v7816, %v10283
    %v10505 = vmul.f32 %v7817, %v10288
    %v10506 = vmul.f32 %v7818, %v10293
    %v10507 = vmul.f32 %v7819, %v10298
    %v10508 = vmul.f32 %v7820, %v10303
    %v10509 = vmul.f32 %v7821, %v10308
    %v10510 = vmul.f32 %v7822, %v10313
    %v10511 = vmul.f32 %v7823, %v10318
    %v10512 = vmul.f32 %v7824, %v10323
    %v10513 = vmul.f32 %v7825, %v10328
    %v10514 = vmul.f32 %v7826, %v10333
    %v10515 = vmul.f32 %v7827, %v10338
    %v10516 = vmul.f32 %v7828, %v10343
    %v10517 = vmul.f32 %v7829, %v10348
    %v10518 = vmul.f32 %v7830, %v10353
    %v10519 = vmul.f32 %v7831, %v10358
    %v10520 = vmul.f32 %v7832, %v10363
    %v10521 = vmul.f32 %v7833, %v10368
    %v10522 = vmul.f32 %v7834, %v10373
    %v10523 = vmul.f32 %v7835, %v10378
    %v10524 = vmul.f32 %v7836, %v10383
    %v10525 = vmul.f32 %v7837, %v10388
    %v10526 = vmul.f32 %v7838, %v10393
    %v10527 = vmul.f32 %v7839, %v10398
    %10529 = vset.pattern.permute.xlu0 0
    %10530 = vperm.xlu0 %10529, %v7584
    %v10531 = vpop.permute.xlu0 %10530
    %10534 = vset.pattern.permute.xlu0 0
    %10535 = vperm.xlu0 %10534, %v7585
    %v10536 = vpop.permute.xlu0 %10535
    %10539 = vset.pattern.permute.xlu0 0
    %10540 = vperm.xlu0 %10539, %v7586
    %v10541 = vpop.permute.xlu0 %10540
    %10544 = vset.pattern.permute.xlu0 0
    %10545 = vperm.xlu0 %10544, %v7587
    %v10546 = vpop.permute.xlu0 %10545
    %10549 = vset.pattern.permute.xlu0 0
    %10550 = vperm.xlu0 %10549, %v7588
    %v10551 = vpop.permute.xlu0 %10550
    %10554 = vset.pattern.permute.xlu0 0
    %10555 = vperm.xlu0 %10554, %v7589
    %v10556 = vpop.permute.xlu0 %10555
    %10559 = vset.pattern.permute.xlu0 0
    %10560 = vperm.xlu0 %10559, %v7590
    %v10561 = vpop.permute.xlu0 %10560
    %10564 = vset.pattern.permute.xlu0 0
    %10565 = vperm.xlu0 %10564, %v7591
    %v10566 = vpop.permute.xlu0 %10565
    %10569 = vset.pattern.permute.xlu0 0
    %10570 = vperm.xlu0 %10569, %v7592
    %v10571 = vpop.permute.xlu0 %10570
    %10574 = vset.pattern.permute.xlu0 0
    %10575 = vperm.xlu0 %10574, %v7593
    %v10576 = vpop.permute.xlu0 %10575
    %10579 = vset.pattern.permute.xlu0 0
    %10580 = vperm.xlu0 %10579, %v7594
    %v10581 = vpop.permute.xlu0 %10580
    %10584 = vset.pattern.permute.xlu0 0
    %10585 = vperm.xlu0 %10584, %v7595
    %v10586 = vpop.permute.xlu0 %10585
    %10589 = vset.pattern.permute.xlu0 0
    %10590 = vperm.xlu0 %10589, %v7596
    %v10591 = vpop.permute.xlu0 %10590
    %10594 = vset.pattern.permute.xlu0 0
    %10595 = vperm.xlu0 %10594, %v7597
    %v10596 = vpop.permute.xlu0 %10595
    %10599 = vset.pattern.permute.xlu0 0
    %10600 = vperm.xlu0 %10599, %v7598
    %v10601 = vpop.permute.xlu0 %10600
    %10604 = vset.pattern.permute.xlu0 0
    %10605 = vperm.xlu0 %10604, %v7599
    %v10606 = vpop.permute.xlu0 %10605
    %10609 = vset.pattern.permute.xlu0 0
    %10610 = vperm.xlu0 %10609, %v7600
    %v10611 = vpop.permute.xlu0 %10610
    %10614 = vset.pattern.permute.xlu0 0
    %10615 = vperm.xlu0 %10614, %v7601
    %v10616 = vpop.permute.xlu0 %10615
    %10619 = vset.pattern.permute.xlu0 0
    %10620 = vperm.xlu0 %10619, %v7602
    %v10621 = vpop.permute.xlu0 %10620
    %10624 = vset.pattern.permute.xlu0 0
    %10625 = vperm.xlu0 %10624, %v7603
    %v10626 = vpop.permute.xlu0 %10625
    %10629 = vset.pattern.permute.xlu0 0
    %10630 = vperm.xlu0 %10629, %v7604
    %v10631 = vpop.permute.xlu0 %10630
    %10634 = vset.pattern.permute.xlu0 0
    %10635 = vperm.xlu0 %10634, %v7605
    %v10636 = vpop.permute.xlu0 %10635
    %10639 = vset.pattern.permute.xlu0 0
    %10640 = vperm.xlu0 %10639, %v7606
    %v10641 = vpop.permute.xlu0 %10640
    %10644 = vset.pattern.permute.xlu0 0
    %10645 = vperm.xlu0 %10644, %v7607
    %v10646 = vpop.permute.xlu0 %10645
    %10649 = vset.pattern.permute.xlu0 0
    %10650 = vperm.xlu0 %10649, %v7608
    %v10651 = vpop.permute.xlu0 %10650
    %10654 = vset.pattern.permute.xlu0 0
    %10655 = vperm.xlu0 %10654, %v7609
    %v10656 = vpop.permute.xlu0 %10655
    %10659 = vset.pattern.permute.xlu0 0
    %10660 = vperm.xlu0 %10659, %v7610
    %v10661 = vpop.permute.xlu0 %10660
    %10664 = vset.pattern.permute.xlu0 0
    %10665 = vperm.xlu0 %10664, %v7611
    %v10666 = vpop.permute.xlu0 %10665
    %10669 = vset.pattern.permute.xlu0 0
    %10670 = vperm.xlu0 %10669, %v7612
    %v10671 = vpop.permute.xlu0 %10670
    %10674 = vset.pattern.permute.xlu0 0
    %10675 = vperm.xlu0 %10674, %v7613
    %v10676 = vpop.permute.xlu0 %10675
    %10679 = vset.pattern.permute.xlu0 0
    %10680 = vperm.xlu0 %10679, %v7614
    %v10681 = vpop.permute.xlu0 %10680
    %10684 = vset.pattern.permute.xlu0 0
    %10685 = vperm.xlu0 %10684, %v7615
    %v10686 = vpop.permute.xlu0 %10685
    %10689 = vset.pattern.permute.xlu0 0
    %10690 = vperm.xlu0 %10689, %v7616
    %v10691 = vpop.permute.xlu0 %10690
    %10694 = vset.pattern.permute.xlu0 0
    %10695 = vperm.xlu0 %10694, %v7617
    %v10696 = vpop.permute.xlu0 %10695
    %10699 = vset.pattern.permute.xlu0 0
    %10700 = vperm.xlu0 %10699, %v7618
    %v10701 = vpop.permute.xlu0 %10700
    %10704 = vset.pattern.permute.xlu0 0
    %10705 = vperm.xlu0 %10704, %v7619
    %v10706 = vpop.permute.xlu0 %10705
    %10709 = vset.pattern.permute.xlu0 0
    %10710 = vperm.xlu0 %10709, %v7620
    %v10711 = vpop.permute.xlu0 %10710
    %10714 = vset.pattern.permute.xlu0 0
    %10715 = vperm.xlu0 %10714, %v7621
    %v10716 = vpop.permute.xlu0 %10715
    %10719 = vset.pattern.permute.xlu0 0
    %10720 = vperm.xlu0 %10719, %v7622
    %v10721 = vpop.permute.xlu0 %10720
    %10724 = vset.pattern.permute.xlu0 0
    %10725 = vperm.xlu0 %10724, %v7623
    %v10726 = vpop.permute.xlu0 %10725
    %10729 = vset.pattern.permute.xlu0 0
    %10730 = vperm.xlu0 %10729, %v7624
    %v10731 = vpop.permute.xlu0 %10730
    %10734 = vset.pattern.permute.xlu0 0
    %10735 = vperm.xlu0 %10734, %v7625
    %v10736 = vpop.permute.xlu0 %10735
    %10739 = vset.pattern.permute.xlu0 0
    %10740 = vperm.xlu0 %10739, %v7626
    %v10741 = vpop.permute.xlu0 %10740
    %10744 = vset.pattern.permute.xlu0 0
    %10745 = vperm.xlu0 %10744, %v7627
    %v10746 = vpop.permute.xlu0 %10745
    %10749 = vset.pattern.permute.xlu0 0
    %10750 = vperm.xlu0 %10749, %v7628
    %v10751 = vpop.permute.xlu0 %10750
    %10754 = vset.pattern.permute.xlu0 0
    %10755 = vperm.xlu0 %10754, %v7629
    %v10756 = vpop.permute.xlu0 %10755
    %10759 = vset.pattern.permute.xlu0 0
    %10760 = vperm.xlu0 %10759, %v7630
    %v10761 = vpop.permute.xlu0 %10760
    %10764 = vset.pattern.permute.xlu0 0
    %10765 = vperm.xlu0 %10764, %v7631
    %v10766 = vpop.permute.xlu0 %10765
    %10769 = vset.pattern.permute.xlu0 0
    %10770 = vperm.xlu0 %10769, %v7632
    %v10771 = vpop.permute.xlu0 %10770
    %10774 = vset.pattern.permute.xlu0 0
    %10775 = vperm.xlu0 %10774, %v7633
    %v10776 = vpop.permute.xlu0 %10775
    %10779 = vset.pattern.permute.xlu0 0
    %10780 = vperm.xlu0 %10779, %v7634
    %v10781 = vpop.permute.xlu0 %10780
    %10784 = vset.pattern.permute.xlu0 0
    %10785 = vperm.xlu0 %10784, %v7635
    %v10786 = vpop.permute.xlu0 %10785
    %10789 = vset.pattern.permute.xlu0 0
    %10790 = vperm.xlu0 %10789, %v7636
    %v10791 = vpop.permute.xlu0 %10790
    %10794 = vset.pattern.permute.xlu0 0
    %10795 = vperm.xlu0 %10794, %v7637
    %v10796 = vpop.permute.xlu0 %10795
    %10799 = vset.pattern.permute.xlu0 0
    %10800 = vperm.xlu0 %10799, %v7638
    %v10801 = vpop.permute.xlu0 %10800
    %10804 = vset.pattern.permute.xlu0 0
    %10805 = vperm.xlu0 %10804, %v7639
    %v10806 = vpop.permute.xlu0 %10805
    %10809 = vset.pattern.permute.xlu0 0
    %10810 = vperm.xlu0 %10809, %v7640
    %v10811 = vpop.permute.xlu0 %10810
    %10814 = vset.pattern.permute.xlu0 0
    %10815 = vperm.xlu0 %10814, %v7641
    %v10816 = vpop.permute.xlu0 %10815
    %10819 = vset.pattern.permute.xlu0 0
    %10820 = vperm.xlu0 %10819, %v7642
    %v10821 = vpop.permute.xlu0 %10820
    %10824 = vset.pattern.permute.xlu0 0
    %10825 = vperm.xlu0 %10824, %v7643
    %v10826 = vpop.permute.xlu0 %10825
    %10829 = vset.pattern.permute.xlu0 0
    %10830 = vperm.xlu0 %10829, %v7644
    %v10831 = vpop.permute.xlu0 %10830
    %10834 = vset.pattern.permute.xlu0 0
    %10835 = vperm.xlu0 %10834, %v7645
    %v10836 = vpop.permute.xlu0 %10835
    %10839 = vset.pattern.permute.xlu0 0
    %10840 = vperm.xlu0 %10839, %v7646
    %v10841 = vpop.permute.xlu0 %10840
    %10844 = vset.pattern.permute.xlu0 0
    %10845 = vperm.xlu0 %10844, %v7647
    %v10846 = vpop.permute.xlu0 %10845
    %10849 = vset.pattern.permute.xlu0 0
    %10850 = vperm.xlu0 %10849, %v7648
    %v10851 = vpop.permute.xlu0 %10850
    %10854 = vset.pattern.permute.xlu0 0
    %10855 = vperm.xlu0 %10854, %v7649
    %v10856 = vpop.permute.xlu0 %10855
    %10859 = vset.pattern.permute.xlu0 0
    %10860 = vperm.xlu0 %10859, %v7650
    %v10861 = vpop.permute.xlu0 %10860
    %10864 = vset.pattern.permute.xlu0 0
    %10865 = vperm.xlu0 %10864, %v7651
    %v10866 = vpop.permute.xlu0 %10865
    %10869 = vset.pattern.permute.xlu0 0
    %10870 = vperm.xlu0 %10869, %v7652
    %v10871 = vpop.permute.xlu0 %10870
    %10874 = vset.pattern.permute.xlu0 0
    %10875 = vperm.xlu0 %10874, %v7653
    %v10876 = vpop.permute.xlu0 %10875
    %10879 = vset.pattern.permute.xlu0 0
    %10880 = vperm.xlu0 %10879, %v7654
    %v10881 = vpop.permute.xlu0 %10880
    %10884 = vset.pattern.permute.xlu0 0
    %10885 = vperm.xlu0 %10884, %v7655
    %v10886 = vpop.permute.xlu0 %10885
    %10889 = vset.pattern.permute.xlu0 0
    %10890 = vperm.xlu0 %10889, %v7656
    %v10891 = vpop.permute.xlu0 %10890
    %10894 = vset.pattern.permute.xlu0 0
    %10895 = vperm.xlu0 %10894, %v7657
    %v10896 = vpop.permute.xlu0 %10895
    %10899 = vset.pattern.permute.xlu0 0
    %10900 = vperm.xlu0 %10899, %v7658
    %v10901 = vpop.permute.xlu0 %10900
    %10904 = vset.pattern.permute.xlu0 0
    %10905 = vperm.xlu0 %10904, %v7659
    %v10906 = vpop.permute.xlu0 %10905
    %10909 = vset.pattern.permute.xlu0 0
    %10910 = vperm.xlu0 %10909, %v7660
    %v10911 = vpop.permute.xlu0 %10910
    %10914 = vset.pattern.permute.xlu0 0
    %10915 = vperm.xlu0 %10914, %v7661
    %v10916 = vpop.permute.xlu0 %10915
    %10919 = vset.pattern.permute.xlu0 0
    %10920 = vperm.xlu0 %10919, %v7662
    %v10921 = vpop.permute.xlu0 %10920
    %10924 = vset.pattern.permute.xlu0 0
    %10925 = vperm.xlu0 %10924, %v7663
    %v10926 = vpop.permute.xlu0 %10925
    %10929 = vset.pattern.permute.xlu0 0
    %10930 = vperm.xlu0 %10929, %v7664
    %v10931 = vpop.permute.xlu0 %10930
    %10934 = vset.pattern.permute.xlu0 0
    %10935 = vperm.xlu0 %10934, %v7665
    %v10936 = vpop.permute.xlu0 %10935
    %10939 = vset.pattern.permute.xlu0 0
    %10940 = vperm.xlu0 %10939, %v7666
    %v10941 = vpop.permute.xlu0 %10940
    %10944 = vset.pattern.permute.xlu0 0
    %10945 = vperm.xlu0 %10944, %v7667
    %v10946 = vpop.permute.xlu0 %10945
    %10949 = vset.pattern.permute.xlu0 0
    %10950 = vperm.xlu0 %10949, %v7668
    %v10951 = vpop.permute.xlu0 %10950
    %10954 = vset.pattern.permute.xlu0 0
    %10955 = vperm.xlu0 %10954, %v7669
    %v10956 = vpop.permute.xlu0 %10955
    %10959 = vset.pattern.permute.xlu0 0
    %10960 = vperm.xlu0 %10959, %v7670
    %v10961 = vpop.permute.xlu0 %10960
    %10964 = vset.pattern.permute.xlu0 0
    %10965 = vperm.xlu0 %10964, %v7671
    %v10966 = vpop.permute.xlu0 %10965
    %10969 = vset.pattern.permute.xlu0 0
    %10970 = vperm.xlu0 %10969, %v7672
    %v10971 = vpop.permute.xlu0 %10970
    %10974 = vset.pattern.permute.xlu0 0
    %10975 = vperm.xlu0 %10974, %v7673
    %v10976 = vpop.permute.xlu0 %10975
    %10979 = vset.pattern.permute.xlu0 0
    %10980 = vperm.xlu0 %10979, %v7674
    %v10981 = vpop.permute.xlu0 %10980
    %10984 = vset.pattern.permute.xlu0 0
    %10985 = vperm.xlu0 %10984, %v7675
    %v10986 = vpop.permute.xlu0 %10985
    %10989 = vset.pattern.permute.xlu0 0
    %10990 = vperm.xlu0 %10989, %v7676
    %v10991 = vpop.permute.xlu0 %10990
    %10994 = vset.pattern.permute.xlu0 0
    %10995 = vperm.xlu0 %10994, %v7677
    %v10996 = vpop.permute.xlu0 %10995
    %10999 = vset.pattern.permute.xlu0 0
    %11000 = vperm.xlu0 %10999, %v7678
    %v11001 = vpop.permute.xlu0 %11000
    %11004 = vset.pattern.permute.xlu0 0
    %11005 = vperm.xlu0 %11004, %v7679
    %v11006 = vpop.permute.xlu0 %11005
    %11009 = vset.pattern.permute.xlu0 0
    %11010 = vperm.xlu0 %11009, %v7680
    %v11011 = vpop.permute.xlu0 %11010
    %11014 = vset.pattern.permute.xlu0 0
    %11015 = vperm.xlu0 %11014, %v7681
    %v11016 = vpop.permute.xlu0 %11015
    %11019 = vset.pattern.permute.xlu0 0
    %11020 = vperm.xlu0 %11019, %v7682
    %v11021 = vpop.permute.xlu0 %11020
    %11024 = vset.pattern.permute.xlu0 0
    %11025 = vperm.xlu0 %11024, %v7683
    %v11026 = vpop.permute.xlu0 %11025
    %11029 = vset.pattern.permute.xlu0 0
    %11030 = vperm.xlu0 %11029, %v7684
    %v11031 = vpop.permute.xlu0 %11030
    %11034 = vset.pattern.permute.xlu0 0
    %11035 = vperm.xlu0 %11034, %v7685
    %v11036 = vpop.permute.xlu0 %11035
    %11039 = vset.pattern.permute.xlu0 0
    %11040 = vperm.xlu0 %11039, %v7686
    %v11041 = vpop.permute.xlu0 %11040
    %11044 = vset.pattern.permute.xlu0 0
    %11045 = vperm.xlu0 %11044, %v7687
    %v11046 = vpop.permute.xlu0 %11045
    %11049 = vset.pattern.permute.xlu0 0
    %11050 = vperm.xlu0 %11049, %v7688
    %v11051 = vpop.permute.xlu0 %11050
    %11054 = vset.pattern.permute.xlu0 0
    %11055 = vperm.xlu0 %11054, %v7689
    %v11056 = vpop.permute.xlu0 %11055
    %11059 = vset.pattern.permute.xlu0 0
    %11060 = vperm.xlu0 %11059, %v7690
    %v11061 = vpop.permute.xlu0 %11060
    %11064 = vset.pattern.permute.xlu0 0
    %11065 = vperm.xlu0 %11064, %v7691
    %v11066 = vpop.permute.xlu0 %11065
    %11069 = vset.pattern.permute.xlu0 0
    %11070 = vperm.xlu0 %11069, %v7692
    %v11071 = vpop.permute.xlu0 %11070
    %11074 = vset.pattern.permute.xlu0 0
    %11075 = vperm.xlu0 %11074, %v7693
    %v11076 = vpop.permute.xlu0 %11075
    %11079 = vset.pattern.permute.xlu0 0
    %11080 = vperm.xlu0 %11079, %v7694
    %v11081 = vpop.permute.xlu0 %11080
    %11084 = vset.pattern.permute.xlu0 0
    %11085 = vperm.xlu0 %11084, %v7695
    %v11086 = vpop.permute.xlu0 %11085
    %11089 = vset.pattern.permute.xlu0 0
    %11090 = vperm.xlu0 %11089, %v7696
    %v11091 = vpop.permute.xlu0 %11090
    %11094 = vset.pattern.permute.xlu0 0
    %11095 = vperm.xlu0 %11094, %v7697
    %v11096 = vpop.permute.xlu0 %11095
    %11099 = vset.pattern.permute.xlu0 0
    %11100 = vperm.xlu0 %11099, %v7698
    %v11101 = vpop.permute.xlu0 %11100
    %11104 = vset.pattern.permute.xlu0 0
    %11105 = vperm.xlu0 %11104, %v7699
    %v11106 = vpop.permute.xlu0 %11105
    %11109 = vset.pattern.permute.xlu0 0
    %11110 = vperm.xlu0 %11109, %v7700
    %v11111 = vpop.permute.xlu0 %11110
    %11114 = vset.pattern.permute.xlu0 0
    %11115 = vperm.xlu0 %11114, %v7701
    %v11116 = vpop.permute.xlu0 %11115
    %11119 = vset.pattern.permute.xlu0 0
    %11120 = vperm.xlu0 %11119, %v7702
    %v11121 = vpop.permute.xlu0 %11120
    %11124 = vset.pattern.permute.xlu0 0
    %11125 = vperm.xlu0 %11124, %v7703
    %v11126 = vpop.permute.xlu0 %11125
    %11129 = vset.pattern.permute.xlu0 0
    %11130 = vperm.xlu0 %11129, %v7704
    %v11131 = vpop.permute.xlu0 %11130
    %11134 = vset.pattern.permute.xlu0 0
    %11135 = vperm.xlu0 %11134, %v7705
    %v11136 = vpop.permute.xlu0 %11135
    %11139 = vset.pattern.permute.xlu0 0
    %11140 = vperm.xlu0 %11139, %v7706
    %v11141 = vpop.permute.xlu0 %11140
    %11144 = vset.pattern.permute.xlu0 0
    %11145 = vperm.xlu0 %11144, %v7707
    %v11146 = vpop.permute.xlu0 %11145
    %11149 = vset.pattern.permute.xlu0 0
    %11150 = vperm.xlu0 %11149, %v7708
    %v11151 = vpop.permute.xlu0 %11150
    %11154 = vset.pattern.permute.xlu0 0
    %11155 = vperm.xlu0 %11154, %v7709
    %v11156 = vpop.permute.xlu0 %11155
    %11159 = vset.pattern.permute.xlu0 0
    %11160 = vperm.xlu0 %11159, %v7710
    %v11161 = vpop.permute.xlu0 %11160
    %11164 = vset.pattern.permute.xlu0 0
    %11165 = vperm.xlu0 %11164, %v7711
    %v11166 = vpop.permute.xlu0 %11165
    %v11168 = vsel %vm2227, %v10531, %v10400
    %v11169 = vsel %vm2227, %v10536, %v10401
    %v11170 = vsel %vm2227, %v10541, %v10402
    %v11171 = vsel %vm2227, %v10546, %v10403
    %v11172 = vsel %vm2227, %v10551, %v10404
    %v11173 = vsel %vm2227, %v10556, %v10405
    %v11174 = vsel %vm2227, %v10561, %v10406
    %v11175 = vsel %vm2227, %v10566, %v10407
    %v11176 = vsel %vm2227, %v10571, %v10408
    %v11177 = vsel %vm2227, %v10576, %v10409
    %v11178 = vsel %vm2227, %v10581, %v10410
    %v11179 = vsel %vm2227, %v10586, %v10411
    %v11180 = vsel %vm2227, %v10591, %v10412
    %v11181 = vsel %vm2227, %v10596, %v10413
    %v11182 = vsel %vm2227, %v10601, %v10414
    %v11183 = vsel %vm2227, %v10606, %v10415
    %v11184 = vsel %vm2227, %v10611, %v10416
    %v11185 = vsel %vm2227, %v10616, %v10417
    %v11186 = vsel %vm2227, %v10621, %v10418
    %v11187 = vsel %vm2227, %v10626, %v10419
    %v11188 = vsel %vm2227, %v10631, %v10420
    %v11189 = vsel %vm2227, %v10636, %v10421
    %v11190 = vsel %vm2227, %v10641, %v10422
    %v11191 = vsel %vm2227, %v10646, %v10423
    %v11192 = vsel %vm2227, %v10651, %v10424
    %v11193 = vsel %vm2227, %v10656, %v10425
    %v11194 = vsel %vm2227, %v10661, %v10426
    %v11195 = vsel %vm2227, %v10666, %v10427
    %v11196 = vsel %vm2227, %v10671, %v10428
    %v11197 = vsel %vm2227, %v10676, %v10429
    %v11198 = vsel %vm2227, %v10681, %v10430
    %v11199 = vsel %vm2227, %v10686, %v10431
    %v11200 = vsel %vm2227, %v10691, %v10432
    %v11201 = vsel %vm2227, %v10696, %v10433
    %v11202 = vsel %vm2227, %v10701, %v10434
    %v11203 = vsel %vm2227, %v10706, %v10435
    %v11204 = vsel %vm2227, %v10711, %v10436
    %v11205 = vsel %vm2227, %v10716, %v10437
    %v11206 = vsel %vm2227, %v10721, %v10438
    %v11207 = vsel %vm2227, %v10726, %v10439
    %v11208 = vsel %vm2227, %v10731, %v10440
    %v11209 = vsel %vm2227, %v10736, %v10441
    %v11210 = vsel %vm2227, %v10741, %v10442
    %v11211 = vsel %vm2227, %v10746, %v10443
    %v11212 = vsel %vm2227, %v10751, %v10444
    %v11213 = vsel %vm2227, %v10756, %v10445
    %v11214 = vsel %vm2227, %v10761, %v10446
    %v11215 = vsel %vm2227, %v10766, %v10447
    %v11216 = vsel %vm2227, %v10771, %v10448
    %v11217 = vsel %vm2227, %v10776, %v10449
    %v11218 = vsel %vm2227, %v10781, %v10450
    %v11219 = vsel %vm2227, %v10786, %v10451
    %v11220 = vsel %vm2227, %v10791, %v10452
    %v11221 = vsel %vm2227, %v10796, %v10453
    %v11222 = vsel %vm2227, %v10801, %v10454
    %v11223 = vsel %vm2227, %v10806, %v10455
    %v11224 = vsel %vm2227, %v10811, %v10456
    %v11225 = vsel %vm2227, %v10816, %v10457
    %v11226 = vsel %vm2227, %v10821, %v10458
    %v11227 = vsel %vm2227, %v10826, %v10459
    %v11228 = vsel %vm2227, %v10831, %v10460
    %v11229 = vsel %vm2227, %v10836, %v10461
    %v11230 = vsel %vm2227, %v10841, %v10462
    %v11231 = vsel %vm2227, %v10846, %v10463
    %v11232 = vsel %vm2227, %v10851, %v10464
    %v11233 = vsel %vm2227, %v10856, %v10465
    %v11234 = vsel %vm2227, %v10861, %v10466
    %v11235 = vsel %vm2227, %v10866, %v10467
    %v11236 = vsel %vm2227, %v10871, %v10468
    %v11237 = vsel %vm2227, %v10876, %v10469
    %v11238 = vsel %vm2227, %v10881, %v10470
    %v11239 = vsel %vm2227, %v10886, %v10471
    %v11240 = vsel %vm2227, %v10891, %v10472
    %v11241 = vsel %vm2227, %v10896, %v10473
    %v11242 = vsel %vm2227, %v10901, %v10474
    %v11243 = vsel %vm2227, %v10906, %v10475
    %v11244 = vsel %vm2227, %v10911, %v10476
    %v11245 = vsel %vm2227, %v10916, %v10477
    %v11246 = vsel %vm2227, %v10921, %v10478
    %v11247 = vsel %vm2227, %v10926, %v10479
    %v11248 = vsel %vm2227, %v10931, %v10480
    %v11249 = vsel %vm2227, %v10936, %v10481
    %v11250 = vsel %vm2227, %v10941, %v10482
    %v11251 = vsel %vm2227, %v10946, %v10483
    %v11252 = vsel %vm2227, %v10951, %v10484
    %v11253 = vsel %vm2227, %v10956, %v10485
    %v11254 = vsel %vm2227, %v10961, %v10486
    %v11255 = vsel %vm2227, %v10966, %v10487
    %v11256 = vsel %vm2227, %v10971, %v10488
    %v11257 = vsel %vm2227, %v10976, %v10489
    %v11258 = vsel %vm2227, %v10981, %v10490
    %v11259 = vsel %vm2227, %v10986, %v10491
    %v11260 = vsel %vm2227, %v10991, %v10492
    %v11261 = vsel %vm2227, %v10996, %v10493
    %v11262 = vsel %vm2227, %v11001, %v10494
    %v11263 = vsel %vm2227, %v11006, %v10495
    %v11264 = vsel %vm2227, %v11011, %v10496
    %v11265 = vsel %vm2227, %v11016, %v10497
    %v11266 = vsel %vm2227, %v11021, %v10498
    %v11267 = vsel %vm2227, %v11026, %v10499
    %v11268 = vsel %vm2227, %v11031, %v10500
    %v11269 = vsel %vm2227, %v11036, %v10501
    %v11270 = vsel %vm2227, %v11041, %v10502
    %v11271 = vsel %vm2227, %v11046, %v10503
    %v11272 = vsel %vm2227, %v11051, %v10504
    %v11273 = vsel %vm2227, %v11056, %v10505
    %v11274 = vsel %vm2227, %v11061, %v10506
    %v11275 = vsel %vm2227, %v11066, %v10507
    %v11276 = vsel %vm2227, %v11071, %v10508
    %v11277 = vsel %vm2227, %v11076, %v10509
    %v11278 = vsel %vm2227, %v11081, %v10510
    %v11279 = vsel %vm2227, %v11086, %v10511
    %v11280 = vsel %vm2227, %v11091, %v10512
    %v11281 = vsel %vm2227, %v11096, %v10513
    %v11282 = vsel %vm2227, %v11101, %v10514
    %v11283 = vsel %vm2227, %v11106, %v10515
    %v11284 = vsel %vm2227, %v11111, %v10516
    %v11285 = vsel %vm2227, %v11116, %v10517
    %v11286 = vsel %vm2227, %v11121, %v10518
    %v11287 = vsel %vm2227, %v11126, %v10519
    %v11288 = vsel %vm2227, %v11131, %v10520
    %v11289 = vsel %vm2227, %v11136, %v10521
    %v11290 = vsel %vm2227, %v11141, %v10522
    %v11291 = vsel %vm2227, %v11146, %v10523
    %v11292 = vsel %vm2227, %v11151, %v10524
    %v11293 = vsel %vm2227, %v11156, %v10525
    %v11294 = vsel %vm2227, %v11161, %v10526
    %v11295 = vsel %vm2227, %v11166, %v10527
    %vm11296 = vcmp.eq.s32.totalorder %v200, 32
    %s11297 = sld [smem:[#allocation3 + $0x3]]
    %v11298 = vstv %s11297
    %v11299 = vsel %vm11296, %v11298, %v5942
    %v11300 = vsel %vm11296, %v11298, %v5943
    %v11301 = vsel %vm11296, %v11298, %v5944
    %v11302 = vsel %vm11296, %v11298, %v5945
    %v11303 = vsel %vm11296, %v11298, %v5946
    %v11304 = vsel %vm11296, %v11298, %v5947
    %v11305 = vsel %vm11296, %v11298, %v5948
    %v11306 = vsel %vm11296, %v11298, %v5949
    %v11307 = vsel %vm11296, %v11298, %v5950
    %v11308 = vsel %vm11296, %v11298, %v5951
    %v11309 = vsel %vm11296, %v11298, %v5952
    %v11310 = vsel %vm11296, %v11298, %v5953
    %v11311 = vsel %vm11296, %v11298, %v5954
    %v11312 = vsel %vm11296, %v11298, %v5955
    %v11313 = vsel %vm11296, %v11298, %v5956
    %v11314 = vsel %vm11296, %v11298, %v5957
    %v11315 = vsel %vm11296, %v11298, %v5958
    %v11316 = vsel %vm11296, %v11298, %v5959
    %v11317 = vsel %vm11296, %v11298, %v5960
    %v11318 = vsel %vm11296, %v11298, %v5961
    %v11319 = vsel %vm11296, %v11298, %v5962
    %v11320 = vsel %vm11296, %v11298, %v5963
    %v11321 = vsel %vm11296, %v11298, %v5964
    %v11322 = vsel %vm11296, %v11298, %v5965
    %v11323 = vsel %vm11296, %v11298, %v5966
    %v11324 = vsel %vm11296, %v11298, %v5967
    %v11325 = vsel %vm11296, %v11298, %v5968
    %v11326 = vsel %vm11296, %v11298, %v5969
    %v11327 = vsel %vm11296, %v11298, %v5970
    %v11328 = vsel %vm11296, %v11298, %v5971
    %v11329 = vsel %vm11296, %v11298, %v5972
    %v11330 = vsel %vm11296, %v11298, %v5973
    %v11331 = vsel %vm11296, %v11298, %v5974
    %v11332 = vsel %vm11296, %v11298, %v5975
    %v11333 = vsel %vm11296, %v11298, %v5976
    %v11334 = vsel %vm11296, %v11298, %v5977
    %v11335 = vsel %vm11296, %v11298, %v5978
    %v11336 = vsel %vm11296, %v11298, %v5979
    %v11337 = vsel %vm11296, %v11298, %v5980
    %v11338 = vsel %vm11296, %v11298, %v5981
    %v11339 = vsel %vm11296, %v11298, %v5982
    %v11340 = vsel %vm11296, %v11298, %v5983
    %v11341 = vsel %vm11296, %v11298, %v5984
    %v11342 = vsel %vm11296, %v11298, %v5985
    %v11343 = vsel %vm11296, %v11298, %v5986
    %v11344 = vsel %vm11296, %v11298, %v5987
    %v11345 = vsel %vm11296, %v11298, %v5988
    %v11346 = vsel %vm11296, %v11298, %v5989
    %v11347 = vsel %vm11296, %v11298, %v5990
    %v11348 = vsel %vm11296, %v11298, %v5991
    %v11349 = vsel %vm11296, %v11298, %v5992
    %v11350 = vsel %vm11296, %v11298, %v5993
    %v11351 = vsel %vm11296, %v11298, %v5994
    %v11352 = vsel %vm11296, %v11298, %v5995
    %v11353 = vsel %vm11296, %v11298, %v5996
    %v11354 = vsel %vm11296, %v11298, %v5997
    %v11355 = vsel %vm11296, %v11298, %v5998
    %v11356 = vsel %vm11296, %v11298, %v5999
    %v11357 = vsel %vm11296, %v11298, %v6000
    %v11358 = vsel %vm11296, %v11298, %v6001
    %v11359 = vsel %vm11296, %v11298, %v6002
    %v11360 = vsel %vm11296, %v11298, %v6003
    %v11361 = vsel %vm11296, %v11298, %v6004
    %v11362 = vsel %vm11296, %v11298, %v6005
    %v11363 = vsel %vm11296, %v11298, %v6006
    %v11364 = vsel %vm11296, %v11298, %v6007
    %v11365 = vsel %vm11296, %v11298, %v6008
    %v11366 = vsel %vm11296, %v11298, %v6009
    %v11367 = vsel %vm11296, %v11298, %v6010
    %v11368 = vsel %vm11296, %v11298, %v6011
    %v11369 = vsel %vm11296, %v11298, %v6012
    %v11370 = vsel %vm11296, %v11298, %v6013
    %v11371 = vsel %vm11296, %v11298, %v6014
    %v11372 = vsel %vm11296, %v11298, %v6015
    %v11373 = vsel %vm11296, %v11298, %v6016
    %v11374 = vsel %vm11296, %v11298, %v6017
    %v11375 = vsel %vm11296, %v11298, %v6018
    %v11376 = vsel %vm11296, %v11298, %v6019
    %v11377 = vsel %vm11296, %v11298, %v6020
    %v11378 = vsel %vm11296, %v11298, %v6021
    %v11379 = vsel %vm11296, %v11298, %v6022
    %v11380 = vsel %vm11296, %v11298, %v6023
    %v11381 = vsel %vm11296, %v11298, %v6024
    %v11382 = vsel %vm11296, %v11298, %v6025
    %v11383 = vsel %vm11296, %v11298, %v6026
    %v11384 = vsel %vm11296, %v11298, %v6027
    %v11385 = vsel %vm11296, %v11298, %v6028
    %v11386 = vsel %vm11296, %v11298, %v6029
    %v11387 = vsel %vm11296, %v11298, %v6030
    %v11388 = vsel %vm11296, %v11298, %v6031
    %v11389 = vsel %vm11296, %v11298, %v6032
    %v11390 = vsel %vm11296, %v11298, %v6033
    %v11391 = vsel %vm11296, %v11298, %v6034
    %v11392 = vsel %vm11296, %v11298, %v6035
    %v11393 = vsel %vm11296, %v11298, %v6036
    %v11394 = vsel %vm11296, %v11298, %v6037
    %v11395 = vsel %vm11296, %v11298, %v6038
    %v11396 = vsel %vm11296, %v11298, %v6039
    %v11397 = vsel %vm11296, %v11298, %v6040
    %v11398 = vsel %vm11296, %v11298, %v6041
    %v11399 = vsel %vm11296, %v11298, %v6042
    %v11400 = vsel %vm11296, %v11298, %v6043
    %v11401 = vsel %vm11296, %v11298, %v6044
    %v11402 = vsel %vm11296, %v11298, %v6045
    %v11403 = vsel %vm11296, %v11298, %v6046
    %v11404 = vsel %vm11296, %v11298, %v6047
    %v11405 = vsel %vm11296, %v11298, %v6048
    %v11406 = vsel %vm11296, %v11298, %v6049
    %v11407 = vsel %vm11296, %v11298, %v6050
    %v11408 = vsel %vm11296, %v11298, %v6051
    %v11409 = vsel %vm11296, %v11298, %v6052
    %v11410 = vsel %vm11296, %v11298, %v6053
    %v11411 = vsel %vm11296, %v11298, %v6054
    %v11412 = vsel %vm11296, %v11298, %v6055
    %v11413 = vsel %vm11296, %v11298, %v6056
    %v11414 = vsel %vm11296, %v11298, %v6057
    %v11415 = vsel %vm11296, %v11298, %v6058
    %v11416 = vsel %vm11296, %v11298, %v6059
    %v11417 = vsel %vm11296, %v11298, %v6060
    %v11418 = vsel %vm11296, %v11298, %v6061
    %v11419 = vsel %vm11296, %v11298, %v6062
    %v11420 = vsel %vm11296, %v11298, %v6063
    %v11421 = vsel %vm11296, %v11298, %v6064
    %v11422 = vsel %vm11296, %v11298, %v6065
    %v11423 = vsel %vm11296, %v11298, %v6066
    %v11424 = vsel %vm11296, %v11298, %v6067
    %v11425 = vsel %vm11296, %v11298, %v6068
    %v11426 = vsel %vm11296, %v11298, %v6069
    %v11427 = vsel %vm11296, 1.0, %v11168
    %v11428 = vsel %vm11296, 1.0, %v11169
    %v11429 = vsel %vm11296, 1.0, %v11170
    %v11430 = vsel %vm11296, 1.0, %v11171
    %v11431 = vsel %vm11296, 1.0, %v11172
    %v11432 = vsel %vm11296, 1.0, %v11173
    %v11433 = vsel %vm11296, 1.0, %v11174
    %v11434 = vsel %vm11296, 1.0, %v11175
    %v11435 = vsel %vm11296, 1.0, %v11176
    %v11436 = vsel %vm11296, 1.0, %v11177
    %v11437 = vsel %vm11296, 1.0, %v11178
    %v11438 = vsel %vm11296, 1.0, %v11179
    %v11439 = vsel %vm11296, 1.0, %v11180
    %v11440 = vsel %vm11296, 1.0, %v11181
    %v11441 = vsel %vm11296, 1.0, %v11182
    %v11442 = vsel %vm11296, 1.0, %v11183
    %v11443 = vsel %vm11296, 1.0, %v11184
    %v11444 = vsel %vm11296, 1.0, %v11185
    %v11445 = vsel %vm11296, 1.0, %v11186
    %v11446 = vsel %vm11296, 1.0, %v11187
    %v11447 = vsel %vm11296, 1.0, %v11188
    %v11448 = vsel %vm11296, 1.0, %v11189
    %v11449 = vsel %vm11296, 1.0, %v11190
    %v11450 = vsel %vm11296, 1.0, %v11191
    %v11451 = vsel %vm11296, 1.0, %v11192
    %v11452 = vsel %vm11296, 1.0, %v11193
    %v11453 = vsel %vm11296, 1.0, %v11194
    %v11454 = vsel %vm11296, 1.0, %v11195
    %v11455 = vsel %vm11296, 1.0, %v11196
    %v11456 = vsel %vm11296, 1.0, %v11197
    %v11457 = vsel %vm11296, 1.0, %v11198
    %v11458 = vsel %vm11296, 1.0, %v11199
    %v11459 = vsel %vm11296, 1.0, %v11200
    %v11460 = vsel %vm11296, 1.0, %v11201
    %v11461 = vsel %vm11296, 1.0, %v11202
    %v11462 = vsel %vm11296, 1.0, %v11203
    %v11463 = vsel %vm11296, 1.0, %v11204
    %v11464 = vsel %vm11296, 1.0, %v11205
    %v11465 = vsel %vm11296, 1.0, %v11206
    %v11466 = vsel %vm11296, 1.0, %v11207
    %v11467 = vsel %vm11296, 1.0, %v11208
    %v11468 = vsel %vm11296, 1.0, %v11209
    %v11469 = vsel %vm11296, 1.0, %v11210
    %v11470 = vsel %vm11296, 1.0, %v11211
    %v11471 = vsel %vm11296, 1.0, %v11212
    %v11472 = vsel %vm11296, 1.0, %v11213
    %v11473 = vsel %vm11296, 1.0, %v11214
    %v11474 = vsel %vm11296, 1.0, %v11215
    %v11475 = vsel %vm11296, 1.0, %v11216
    %v11476 = vsel %vm11296, 1.0, %v11217
    %v11477 = vsel %vm11296, 1.0, %v11218
    %v11478 = vsel %vm11296, 1.0, %v11219
    %v11479 = vsel %vm11296, 1.0, %v11220
    %v11480 = vsel %vm11296, 1.0, %v11221
    %v11481 = vsel %vm11296, 1.0, %v11222
    %v11482 = vsel %vm11296, 1.0, %v11223
    %v11483 = vsel %vm11296, 1.0, %v11224
    %v11484 = vsel %vm11296, 1.0, %v11225
    %v11485 = vsel %vm11296, 1.0, %v11226
    %v11486 = vsel %vm11296, 1.0, %v11227
    %v11487 = vsel %vm11296, 1.0, %v11228
    %v11488 = vsel %vm11296, 1.0, %v11229
    %v11489 = vsel %vm11296, 1.0, %v11230
    %v11490 = vsel %vm11296, 1.0, %v11231
    %v11491 = vsel %vm11296, 1.0, %v11232
    %v11492 = vsel %vm11296, 1.0, %v11233
    %v11493 = vsel %vm11296, 1.0, %v11234
    %v11494 = vsel %vm11296, 1.0, %v11235
    %v11495 = vsel %vm11296, 1.0, %v11236
    %v11496 = vsel %vm11296, 1.0, %v11237
    %v11497 = vsel %vm11296, 1.0, %v11238
    %v11498 = vsel %vm11296, 1.0, %v11239
    %v11499 = vsel %vm11296, 1.0, %v11240
    %v11500 = vsel %vm11296, 1.0, %v11241
    %v11501 = vsel %vm11296, 1.0, %v11242
    %v11502 = vsel %vm11296, 1.0, %v11243
    %v11503 = vsel %vm11296, 1.0, %v11244
    %v11504 = vsel %vm11296, 1.0, %v11245
    %v11505 = vsel %vm11296, 1.0, %v11246
    %v11506 = vsel %vm11296, 1.0, %v11247
    %v11507 = vsel %vm11296, 1.0, %v11248
    %v11508 = vsel %vm11296, 1.0, %v11249
    %v11509 = vsel %vm11296, 1.0, %v11250
    %v11510 = vsel %vm11296, 1.0, %v11251
    %v11511 = vsel %vm11296, 1.0, %v11252
    %v11512 = vsel %vm11296, 1.0, %v11253
    %v11513 = vsel %vm11296, 1.0, %v11254
    %v11514 = vsel %vm11296, 1.0, %v11255
    %v11515 = vsel %vm11296, 1.0, %v11256
    %v11516 = vsel %vm11296, 1.0, %v11257
    %v11517 = vsel %vm11296, 1.0, %v11258
    %v11518 = vsel %vm11296, 1.0, %v11259
    %v11519 = vsel %vm11296, 1.0, %v11260
    %v11520 = vsel %vm11296, 1.0, %v11261
    %v11521 = vsel %vm11296, 1.0, %v11262
    %v11522 = vsel %vm11296, 1.0, %v11263
    %v11523 = vsel %vm11296, 1.0, %v11264
    %v11524 = vsel %vm11296, 1.0, %v11265
    %v11525 = vsel %vm11296, 1.0, %v11266
    %v11526 = vsel %vm11296, 1.0, %v11267
    %v11527 = vsel %vm11296, 1.0, %v11268
    %v11528 = vsel %vm11296, 1.0, %v11269
    %v11529 = vsel %vm11296, 1.0, %v11270
    %v11530 = vsel %vm11296, 1.0, %v11271
    %v11531 = vsel %vm11296, 1.0, %v11272
    %v11532 = vsel %vm11296, 1.0, %v11273
    %v11533 = vsel %vm11296, 1.0, %v11274
    %v11534 = vsel %vm11296, 1.0, %v11275
    %v11535 = vsel %vm11296, 1.0, %v11276
    %v11536 = vsel %vm11296, 1.0, %v11277
    %v11537 = vsel %vm11296, 1.0, %v11278
    %v11538 = vsel %vm11296, 1.0, %v11279
    %v11539 = vsel %vm11296, 1.0, %v11280
    %v11540 = vsel %vm11296, 1.0, %v11281
    %v11541 = vsel %vm11296, 1.0, %v11282
    %v11542 = vsel %vm11296, 1.0, %v11283
    %v11543 = vsel %vm11296, 1.0, %v11284
    %v11544 = vsel %vm11296, 1.0, %v11285
    %v11545 = vsel %vm11296, 1.0, %v11286
    %v11546 = vsel %vm11296, 1.0, %v11287
    %v11547 = vsel %vm11296, 1.0, %v11288
    %v11548 = vsel %vm11296, 1.0, %v11289
    %v11549 = vsel %vm11296, 1.0, %v11290
    %v11550 = vsel %vm11296, 1.0, %v11291
    %v11551 = vsel %vm11296, 1.0, %v11292
    %v11552 = vsel %vm11296, 1.0, %v11293
    %v11553 = vsel %vm11296, 1.0, %v11294
    %v11554 = vsel %vm11296, 1.0, %v11295
    %v11555 = vpack.c.bf16 %v11300, %v11299
    %v11556 = vpack.c.bf16 %v11302, %v11301
    %v11557 = vpack.c.bf16 %v11304, %v11303
    %v11558 = vpack.c.bf16 %v11306, %v11305
    %v11559 = vpack.c.bf16 %v11308, %v11307
    %v11560 = vpack.c.bf16 %v11310, %v11309
    %v11561 = vpack.c.bf16 %v11312, %v11311
    %v11562 = vpack.c.bf16 %v11314, %v11313
    %v11563 = vpack.c.bf16 %v11316, %v11315
    %v11564 = vpack.c.bf16 %v11318, %v11317
    %v11565 = vpack.c.bf16 %v11320, %v11319
    %v11566 = vpack.c.bf16 %v11322, %v11321
    %v11567 = vpack.c.bf16 %v11324, %v11323
    %v11568 = vpack.c.bf16 %v11326, %v11325
    %v11569 = vpack.c.bf16 %v11328, %v11327
    %v11570 = vpack.c.bf16 %v11330, %v11329
    %v11571 = vpack.c.bf16 %v11332, %v11331
    %v11572 = vpack.c.bf16 %v11334, %v11333
    %v11573 = vpack.c.bf16 %v11336, %v11335
    %v11574 = vpack.c.bf16 %v11338, %v11337
    %v11575 = vpack.c.bf16 %v11340, %v11339
    %v11576 = vpack.c.bf16 %v11342, %v11341
    %v11577 = vpack.c.bf16 %v11344, %v11343
    %v11578 = vpack.c.bf16 %v11346, %v11345
    %v11579 = vpack.c.bf16 %v11348, %v11347
    %v11580 = vpack.c.bf16 %v11350, %v11349
    %v11581 = vpack.c.bf16 %v11352, %v11351
    %v11582 = vpack.c.bf16 %v11354, %v11353
    %v11583 = vpack.c.bf16 %v11356, %v11355
    %v11584 = vpack.c.bf16 %v11358, %v11357
    %v11585 = vpack.c.bf16 %v11360, %v11359
    %v11586 = vpack.c.bf16 %v11362, %v11361
    %v11587 = vpack.c.bf16 %v11364, %v11363
    %v11588 = vpack.c.bf16 %v11366, %v11365
    %v11589 = vpack.c.bf16 %v11368, %v11367
    %v11590 = vpack.c.bf16 %v11370, %v11369
    %v11591 = vpack.c.bf16 %v11372, %v11371
    %v11592 = vpack.c.bf16 %v11374, %v11373
    %v11593 = vpack.c.bf16 %v11376, %v11375
    %v11594 = vpack.c.bf16 %v11378, %v11377
    %v11595 = vpack.c.bf16 %v11380, %v11379
    %v11596 = vpack.c.bf16 %v11382, %v11381
    %v11597 = vpack.c.bf16 %v11384, %v11383
    %v11598 = vpack.c.bf16 %v11386, %v11385
    %v11599 = vpack.c.bf16 %v11388, %v11387
    %v11600 = vpack.c.bf16 %v11390, %v11389
    %v11601 = vpack.c.bf16 %v11392, %v11391
    %v11602 = vpack.c.bf16 %v11394, %v11393
    %v11603 = vpack.c.bf16 %v11396, %v11395
    %v11604 = vpack.c.bf16 %v11398, %v11397
    %v11605 = vpack.c.bf16 %v11400, %v11399
    %v11606 = vpack.c.bf16 %v11402, %v11401
    %v11607 = vpack.c.bf16 %v11404, %v11403
    %v11608 = vpack.c.bf16 %v11406, %v11405
    %v11609 = vpack.c.bf16 %v11408, %v11407
    %v11610 = vpack.c.bf16 %v11410, %v11409
    %v11611 = vpack.c.bf16 %v11412, %v11411
    %v11612 = vpack.c.bf16 %v11414, %v11413
    %v11613 = vpack.c.bf16 %v11416, %v11415
    %v11614 = vpack.c.bf16 %v11418, %v11417
    %v11615 = vpack.c.bf16 %v11420, %v11419
    %v11616 = vpack.c.bf16 %v11422, %v11421
    %v11617 = vpack.c.bf16 %v11424, %v11423
    %v11618 = vpack.c.bf16 %v11426, %v11425
    %v11683 = vunpack.c.l.b16 %v11555
    %v11684 = vunpack.c.h.b16 %v11555
    %v11685 = vunpack.c.l.b16 %v11556
    %v11686 = vunpack.c.h.b16 %v11556
    %v11687 = vunpack.c.l.b16 %v11557
    %v11688 = vunpack.c.h.b16 %v11557
    %v11689 = vunpack.c.l.b16 %v11558
    %v11690 = vunpack.c.h.b16 %v11558
    %v11691 = vunpack.c.l.b16 %v11559
    %v11692 = vunpack.c.h.b16 %v11559
    %v11693 = vunpack.c.l.b16 %v11560
    %v11694 = vunpack.c.h.b16 %v11560
    %v11695 = vunpack.c.l.b16 %v11561
    %v11696 = vunpack.c.h.b16 %v11561
    %v11697 = vunpack.c.l.b16 %v11562
    %v11698 = vunpack.c.h.b16 %v11562
    %v11699 = vunpack.c.l.b16 %v11563
    %v11700 = vunpack.c.h.b16 %v11563
    %v11701 = vunpack.c.l.b16 %v11564
    %v11702 = vunpack.c.h.b16 %v11564
    %v11703 = vunpack.c.l.b16 %v11565
    %v11704 = vunpack.c.h.b16 %v11565
    %v11705 = vunpack.c.l.b16 %v11566
    %v11706 = vunpack.c.h.b16 %v11566
    %v11707 = vunpack.c.l.b16 %v11567
    %v11708 = vunpack.c.h.b16 %v11567
    %v11709 = vunpack.c.l.b16 %v11568
    %v11710 = vunpack.c.h.b16 %v11568
    %v11711 = vunpack.c.l.b16 %v11569
    %v11712 = vunpack.c.h.b16 %v11569
    %v11713 = vunpack.c.l.b16 %v11570
    %v11714 = vunpack.c.h.b16 %v11570
    %v11715 = vunpack.c.l.b16 %v11571
    %v11716 = vunpack.c.h.b16 %v11571
    %v11717 = vunpack.c.l.b16 %v11572
    %v11718 = vunpack.c.h.b16 %v11572
    %v11719 = vunpack.c.l.b16 %v11573
    %v11720 = vunpack.c.h.b16 %v11573
    %v11721 = vunpack.c.l.b16 %v11574
    %v11722 = vunpack.c.h.b16 %v11574
    %v11723 = vunpack.c.l.b16 %v11575
    %v11724 = vunpack.c.h.b16 %v11575
    %v11725 = vunpack.c.l.b16 %v11576
    %v11726 = vunpack.c.h.b16 %v11576
    %v11727 = vunpack.c.l.b16 %v11577
    %v11728 = vunpack.c.h.b16 %v11577
    %v11729 = vunpack.c.l.b16 %v11578
    %v11730 = vunpack.c.h.b16 %v11578
    %v11731 = vunpack.c.l.b16 %v11579
    %v11732 = vunpack.c.h.b16 %v11579
    %v11733 = vunpack.c.l.b16 %v11580
    %v11734 = vunpack.c.h.b16 %v11580
    %v11735 = vunpack.c.l.b16 %v11581
    %v11736 = vunpack.c.h.b16 %v11581
    %v11737 = vunpack.c.l.b16 %v11582
    %v11738 = vunpack.c.h.b16 %v11582
    %v11739 = vunpack.c.l.b16 %v11583
    %v11740 = vunpack.c.h.b16 %v11583
    %v11741 = vunpack.c.l.b16 %v11584
    %v11742 = vunpack.c.h.b16 %v11584
    %v11743 = vunpack.c.l.b16 %v11585
    %v11744 = vunpack.c.h.b16 %v11585
    %v11745 = vunpack.c.l.b16 %v11586
    %v11746 = vunpack.c.h.b16 %v11586
    %v11747 = vunpack.c.l.b16 %v11587
    %v11748 = vunpack.c.h.b16 %v11587
    %v11749 = vunpack.c.l.b16 %v11588
    %v11750 = vunpack.c.h.b16 %v11588
    %v11751 = vunpack.c.l.b16 %v11589
    %v11752 = vunpack.c.h.b16 %v11589
    %v11753 = vunpack.c.l.b16 %v11590
    %v11754 = vunpack.c.h.b16 %v11590
    %v11755 = vunpack.c.l.b16 %v11591
    %v11756 = vunpack.c.h.b16 %v11591
    %v11757 = vunpack.c.l.b16 %v11592
    %v11758 = vunpack.c.h.b16 %v11592
    %v11759 = vunpack.c.l.b16 %v11593
    %v11760 = vunpack.c.h.b16 %v11593
    %v11761 = vunpack.c.l.b16 %v11594
    %v11762 = vunpack.c.h.b16 %v11594
    %v11763 = vunpack.c.l.b16 %v11595
    %v11764 = vunpack.c.h.b16 %v11595
    %v11765 = vunpack.c.l.b16 %v11596
    %v11766 = vunpack.c.h.b16 %v11596
    %v11767 = vunpack.c.l.b16 %v11597
    %v11768 = vunpack.c.h.b16 %v11597
    %v11769 = vunpack.c.l.b16 %v11598
    %v11770 = vunpack.c.h.b16 %v11598
    %v11771 = vunpack.c.l.b16 %v11599
    %v11772 = vunpack.c.h.b16 %v11599
    %v11773 = vunpack.c.l.b16 %v11600
    %v11774 = vunpack.c.h.b16 %v11600
    %v11775 = vunpack.c.l.b16 %v11601
    %v11776 = vunpack.c.h.b16 %v11601
    %v11777 = vunpack.c.l.b16 %v11602
    %v11778 = vunpack.c.h.b16 %v11602
    %v11779 = vunpack.c.l.b16 %v11603
    %v11780 = vunpack.c.h.b16 %v11603
    %v11781 = vunpack.c.l.b16 %v11604
    %v11782 = vunpack.c.h.b16 %v11604
    %v11783 = vunpack.c.l.b16 %v11605
    %v11784 = vunpack.c.h.b16 %v11605
    %v11785 = vunpack.c.l.b16 %v11606
    %v11786 = vunpack.c.h.b16 %v11606
    %v11787 = vunpack.c.l.b16 %v11607
    %v11788 = vunpack.c.h.b16 %v11607
    %v11789 = vunpack.c.l.b16 %v11608
    %v11790 = vunpack.c.h.b16 %v11608
    %v11791 = vunpack.c.l.b16 %v11609
    %v11792 = vunpack.c.h.b16 %v11609
    %v11793 = vunpack.c.l.b16 %v11610
    %v11794 = vunpack.c.h.b16 %v11610
    %v11795 = vunpack.c.l.b16 %v11611
    %v11796 = vunpack.c.h.b16 %v11611
    %v11797 = vunpack.c.l.b16 %v11612
    %v11798 = vunpack.c.h.b16 %v11612
    %v11799 = vunpack.c.l.b16 %v11613
    %v11800 = vunpack.c.h.b16 %v11613
    %v11801 = vunpack.c.l.b16 %v11614
    %v11802 = vunpack.c.h.b16 %v11614
    %v11803 = vunpack.c.l.b16 %v11615
    %v11804 = vunpack.c.h.b16 %v11615
    %v11805 = vunpack.c.l.b16 %v11616
    %v11806 = vunpack.c.h.b16 %v11616
    %v11807 = vunpack.c.l.b16 %v11617
    %v11808 = vunpack.c.h.b16 %v11617
    %v11809 = vunpack.c.l.b16 %v11618
    %v11810 = vunpack.c.h.b16 %v11618
    %v11811 = vpack.c.b16 %v11683, %v11683
    %v11812 = vpack.c.b16 %v11684, %v11684
    %v11813 = vpack.c.b16 %v11685, %v11685
    %v11814 = vpack.c.b16 %v11686, %v11686
    %v11815 = vpack.c.b16 %v11687, %v11687
    %v11816 = vpack.c.b16 %v11688, %v11688
    %v11817 = vpack.c.b16 %v11689, %v11689
    %v11818 = vpack.c.b16 %v11690, %v11690
    %v11819 = vpack.c.b16 %v11691, %v11691
    %v11820 = vpack.c.b16 %v11692, %v11692
    %v11821 = vpack.c.b16 %v11693, %v11693
    %v11822 = vpack.c.b16 %v11694, %v11694
    %v11823 = vpack.c.b16 %v11695, %v11695
    %v11824 = vpack.c.b16 %v11696, %v11696
    %v11825 = vpack.c.b16 %v11697, %v11697
    %v11826 = vpack.c.b16 %v11698, %v11698
    %v11827 = vpack.c.b16 %v11699, %v11699
    %v11828 = vpack.c.b16 %v11700, %v11700
    %v11829 = vpack.c.b16 %v11701, %v11701
    %v11830 = vpack.c.b16 %v11702, %v11702
    %v11831 = vpack.c.b16 %v11703, %v11703
    %v11832 = vpack.c.b16 %v11704, %v11704
    %v11833 = vpack.c.b16 %v11705, %v11705
    %v11834 = vpack.c.b16 %v11706, %v11706
    %v11835 = vpack.c.b16 %v11707, %v11707
    %v11836 = vpack.c.b16 %v11708, %v11708
    %v11837 = vpack.c.b16 %v11709, %v11709
    %v11838 = vpack.c.b16 %v11710, %v11710
    %v11839 = vpack.c.b16 %v11711, %v11711
    %v11840 = vpack.c.b16 %v11712, %v11712
    %v11841 = vpack.c.b16 %v11713, %v11713
    %v11842 = vpack.c.b16 %v11714, %v11714
    %v11843 = vpack.c.b16 %v11715, %v11715
    %v11844 = vpack.c.b16 %v11716, %v11716
    %v11845 = vpack.c.b16 %v11717, %v11717
    %v11846 = vpack.c.b16 %v11718, %v11718
    %v11847 = vpack.c.b16 %v11719, %v11719
    %v11848 = vpack.c.b16 %v11720, %v11720
    %v11849 = vpack.c.b16 %v11721, %v11721
    %v11850 = vpack.c.b16 %v11722, %v11722
    %v11851 = vpack.c.b16 %v11723, %v11723
    %v11852 = vpack.c.b16 %v11724, %v11724
    %v11853 = vpack.c.b16 %v11725, %v11725
    %v11854 = vpack.c.b16 %v11726, %v11726
    %v11855 = vpack.c.b16 %v11727, %v11727
    %v11856 = vpack.c.b16 %v11728, %v11728
    %v11857 = vpack.c.b16 %v11729, %v11729
    %v11858 = vpack.c.b16 %v11730, %v11730
    %v11859 = vpack.c.b16 %v11731, %v11731
    %v11860 = vpack.c.b16 %v11732, %v11732
    %v11861 = vpack.c.b16 %v11733, %v11733
    %v11862 = vpack.c.b16 %v11734, %v11734
    %v11863 = vpack.c.b16 %v11735, %v11735
    %v11864 = vpack.c.b16 %v11736, %v11736
    %v11865 = vpack.c.b16 %v11737, %v11737
    %v11866 = vpack.c.b16 %v11738, %v11738
    %v11867 = vpack.c.b16 %v11739, %v11739
    %v11868 = vpack.c.b16 %v11740, %v11740
    %v11869 = vpack.c.b16 %v11741, %v11741
    %v11870 = vpack.c.b16 %v11742, %v11742
    %v11871 = vpack.c.b16 %v11743, %v11743
    %v11872 = vpack.c.b16 %v11744, %v11744
    %v11873 = vpack.c.b16 %v11745, %v11745
    %v11874 = vpack.c.b16 %v11746, %v11746
    %v11875 = vpack.c.b16 %v11747, %v11747
    %v11876 = vpack.c.b16 %v11748, %v11748
    %v11877 = vpack.c.b16 %v11749, %v11749
    %v11878 = vpack.c.b16 %v11750, %v11750
    %v11879 = vpack.c.b16 %v11751, %v11751
    %v11880 = vpack.c.b16 %v11752, %v11752
    %v11881 = vpack.c.b16 %v11753, %v11753
    %v11882 = vpack.c.b16 %v11754, %v11754
    %v11883 = vpack.c.b16 %v11755, %v11755
    %v11884 = vpack.c.b16 %v11756, %v11756
    %v11885 = vpack.c.b16 %v11757, %v11757
    %v11886 = vpack.c.b16 %v11758, %v11758
    %v11887 = vpack.c.b16 %v11759, %v11759
    %v11888 = vpack.c.b16 %v11760, %v11760
    %v11889 = vpack.c.b16 %v11761, %v11761
    %v11890 = vpack.c.b16 %v11762, %v11762
    %v11891 = vpack.c.b16 %v11763, %v11763
    %v11892 = vpack.c.b16 %v11764, %v11764
    %v11893 = vpack.c.b16 %v11765, %v11765
    %v11894 = vpack.c.b16 %v11766, %v11766
    %v11895 = vpack.c.b16 %v11767, %v11767
    %v11896 = vpack.c.b16 %v11768, %v11768
    %v11897 = vpack.c.b16 %v11769, %v11769
    %v11898 = vpack.c.b16 %v11770, %v11770
    %v11899 = vpack.c.b16 %v11771, %v11771
    %v11900 = vpack.c.b16 %v11772, %v11772
    %v11901 = vpack.c.b16 %v11773, %v11773
    %v11902 = vpack.c.b16 %v11774, %v11774
    %v11903 = vpack.c.b16 %v11775, %v11775
    %v11904 = vpack.c.b16 %v11776, %v11776
    %v11905 = vpack.c.b16 %v11777, %v11777
    %v11906 = vpack.c.b16 %v11778, %v11778
    %v11907 = vpack.c.b16 %v11779, %v11779
    %v11908 = vpack.c.b16 %v11780, %v11780
    %v11909 = vpack.c.b16 %v11781, %v11781
    %v11910 = vpack.c.b16 %v11782, %v11782
    %v11911 = vpack.c.b16 %v11783, %v11783
    %v11912 = vpack.c.b16 %v11784, %v11784
    %v11913 = vpack.c.b16 %v11785, %v11785
    %v11914 = vpack.c.b16 %v11786, %v11786
    %v11915 = vpack.c.b16 %v11787, %v11787
    %v11916 = vpack.c.b16 %v11788, %v11788
    %v11917 = vpack.c.b16 %v11789, %v11789
    %v11918 = vpack.c.b16 %v11790, %v11790
    %v11919 = vpack.c.b16 %v11791, %v11791
    %v11920 = vpack.c.b16 %v11792, %v11792
    %v11921 = vpack.c.b16 %v11793, %v11793
    %v11922 = vpack.c.b16 %v11794, %v11794
    %v11923 = vpack.c.b16 %v11795, %v11795
    %v11924 = vpack.c.b16 %v11796, %v11796
    %v11925 = vpack.c.b16 %v11797, %v11797
    %v11926 = vpack.c.b16 %v11798, %v11798
    %v11927 = vpack.c.b16 %v11799, %v11799
    %v11928 = vpack.c.b16 %v11800, %v11800
    %v11929 = vpack.c.b16 %v11801, %v11801
    %v11930 = vpack.c.b16 %v11802, %v11802
    %v11931 = vpack.c.b16 %v11803, %v11803
    %v11932 = vpack.c.b16 %v11804, %v11804
    %v11933 = vpack.c.b16 %v11805, %v11805
    %v11934 = vpack.c.b16 %v11806, %v11806
    %v11935 = vpack.c.b16 %v11807, %v11807
    %v11936 = vpack.c.b16 %v11808, %v11808
    %v11937 = vpack.c.b16 %v11809, %v11809
    %v11938 = vpack.c.b16 %v11810, %v11810
    %12067 = vst [vmem:[#allocation10] sm:$0xf] %v11811
    %12068 = vst [vmem:[#allocation10 + $0x4] sm:$0xf] %v11812
    %12069 = vst [vmem:[#allocation10 + $0x8] sm:$0xf] %v11813
    %12070 = vst [vmem:[#allocation10 + $0xc] sm:$0xf] %v11814
    %12071 = vst [vmem:[#allocation10 + $0x10] sm:$0xf] %v11815
    %12072 = vst [vmem:[#allocation10 + $0x14] sm:$0xf] %v11816
    %12073 = vst [vmem:[#allocation10 + $0x18] sm:$0xf] %v11817
    %12074 = vst [vmem:[#allocation10 + $0x1c] sm:$0xf] %v11818
    %12075 = vst [vmem:[#allocation10 + $0x20] sm:$0xf] %v11819
    %12076 = vst [vmem:[#allocation10 + $0x24] sm:$0xf] %v11820
    %12077 = vst [vmem:[#allocation10 + $0x28] sm:$0xf] %v11821
    %12078 = vst [vmem:[#allocation10 + $0x2c] sm:$0xf] %v11822
    %12079 = vst [vmem:[#allocation10 + $0x30] sm:$0xf] %v11823
    %12080 = vst [vmem:[#allocation10 + $0x34] sm:$0xf] %v11824
    %12081 = vst [vmem:[#allocation10 + $0x38] sm:$0xf] %v11825
    %12082 = vst [vmem:[#allocation10 + $0x3c] sm:$0xf] %v11826
    %12083 = vst [vmem:[#allocation10 + $0x40] sm:$0xf] %v11827
    %12084 = vst [vmem:[#allocation10 + $0x44] sm:$0xf] %v11828
    %12085 = vst [vmem:[#allocation10 + $0x48] sm:$0xf] %v11829
    %12086 = vst [vmem:[#allocation10 + $0x4c] sm:$0xf] %v11830
    %12087 = vst [vmem:[#allocation10 + $0x50] sm:$0xf] %v11831
    %12088 = vst [vmem:[#allocation10 + $0x54] sm:$0xf] %v11832
    %12089 = vst [vmem:[#allocation10 + $0x58] sm:$0xf] %v11833
    %12090 = vst [vmem:[#allocation10 + $0x5c] sm:$0xf] %v11834
    %12091 = vst [vmem:[#allocation10 + $0x60] sm:$0xf] %v11835
    %12092 = vst [vmem:[#allocation10 + $0x64] sm:$0xf] %v11836
    %12093 = vst [vmem:[#allocation10 + $0x68] sm:$0xf] %v11837
    %12094 = vst [vmem:[#allocation10 + $0x6c] sm:$0xf] %v11838
    %12095 = vst [vmem:[#allocation10 + $0x70] sm:$0xf] %v11839
    %12096 = vst [vmem:[#allocation10 + $0x74] sm:$0xf] %v11840
    %12097 = vst [vmem:[#allocation10 + $0x78] sm:$0xf] %v11841
    %12098 = vst [vmem:[#allocation10 + $0x7c] sm:$0xf] %v11842
    %12099 = vst [vmem:[#allocation10 + $0x80] sm:$0xf] %v11843
    %12100 = vst [vmem:[#allocation10 + $0x84] sm:$0xf] %v11844
    %12101 = vst [vmem:[#allocation10 + $0x88] sm:$0xf] %v11845
    %12102 = vst [vmem:[#allocation10 + $0x8c] sm:$0xf] %v11846
    %12103 = vst [vmem:[#allocation10 + $0x90] sm:$0xf] %v11847
    %12104 = vst [vmem:[#allocation10 + $0x94] sm:$0xf] %v11848
    %12105 = vst [vmem:[#allocation10 + $0x98] sm:$0xf] %v11849
    %12106 = vst [vmem:[#allocation10 + $0x9c] sm:$0xf] %v11850
    %12107 = vst [vmem:[#allocation10 + $0xa0] sm:$0xf] %v11851
    %12108 = vst [vmem:[#allocation10 + $0xa4] sm:$0xf] %v11852
    %12109 = vst [vmem:[#allocation10 + $0xa8] sm:$0xf] %v11853
    %12110 = vst [vmem:[#allocation10 + $0xac] sm:$0xf] %v11854
    %12111 = vst [vmem:[#allocation10 + $0xb0] sm:$0xf] %v11855
    %12112 = vst [vmem:[#allocation10 + $0xb4] sm:$0xf] %v11856
    %12113 = vst [vmem:[#allocation10 + $0xb8] sm:$0xf] %v11857
    %12114 = vst [vmem:[#allocation10 + $0xbc] sm:$0xf] %v11858
    %12115 = vst [vmem:[#allocation10 + $0xc0] sm:$0xf] %v11859
    %12116 = vst [vmem:[#allocation10 + $0xc4] sm:$0xf] %v11860
    %12117 = vst [vmem:[#allocation10 + $0xc8] sm:$0xf] %v11861
    %12118 = vst [vmem:[#allocation10 + $0xcc] sm:$0xf] %v11862
    %12119 = vst [vmem:[#allocation10 + $0xd0] sm:$0xf] %v11863
    %12120 = vst [vmem:[#allocation10 + $0xd4] sm:$0xf] %v11864
    %12121 = vst [vmem:[#allocation10 + $0xd8] sm:$0xf] %v11865
    %12122 = vst [vmem:[#allocation10 + $0xdc] sm:$0xf] %v11866
    %12123 = vst [vmem:[#allocation10 + $0xe0] sm:$0xf] %v11867
    %12124 = vst [vmem:[#allocation10 + $0xe4] sm:$0xf] %v11868
    %12125 = vst [vmem:[#allocation10 + $0xe8] sm:$0xf] %v11869
    %12126 = vst [vmem:[#allocation10 + $0xec] sm:$0xf] %v11870
    %12127 = vst [vmem:[#allocation10 + $0xf0] sm:$0xf] %v11871
    %12128 = vst [vmem:[#allocation10 + $0xf4] sm:$0xf] %v11872
    %12129 = vst [vmem:[#allocation10 + $0xf8] sm:$0xf] %v11873
    %12130 = vst [vmem:[#allocation10 + $0xfc] sm:$0xf] %v11874
    %12131 = vst [vmem:[#allocation10 + $0x100] sm:$0xf] %v11875
    %12132 = vst [vmem:[#allocation10 + $0x104] sm:$0xf] %v11876
    %12133 = vst [vmem:[#allocation10 + $0x108] sm:$0xf] %v11877
    %12134 = vst [vmem:[#allocation10 + $0x10c] sm:$0xf] %v11878
    %12135 = vst [vmem:[#allocation10 + $0x110] sm:$0xf] %v11879
    %12136 = vst [vmem:[#allocation10 + $0x114] sm:$0xf] %v11880
    %12137 = vst [vmem:[#allocation10 + $0x118] sm:$0xf] %v11881
    %12138 = vst [vmem:[#allocation10 + $0x11c] sm:$0xf] %v11882
    %12139 = vst [vmem:[#allocation10 + $0x120] sm:$0xf] %v11883
    %12140 = vst [vmem:[#allocation10 + $0x124] sm:$0xf] %v11884
    %12141 = vst [vmem:[#allocation10 + $0x128] sm:$0xf] %v11885
    %12142 = vst [vmem:[#allocation10 + $0x12c] sm:$0xf] %v11886
    %12143 = vst [vmem:[#allocation10 + $0x130] sm:$0xf] %v11887
    %12144 = vst [vmem:[#allocation10 + $0x134] sm:$0xf] %v11888
    %12145 = vst [vmem:[#allocation10 + $0x138] sm:$0xf] %v11889
    %12146 = vst [vmem:[#allocation10 + $0x13c] sm:$0xf] %v11890
    %12147 = vst [vmem:[#allocation10 + $0x140] sm:$0xf] %v11891
    %12148 = vst [vmem:[#allocation10 + $0x144] sm:$0xf] %v11892
    %12149 = vst [vmem:[#allocation10 + $0x148] sm:$0xf] %v11893
    %12150 = vst [vmem:[#allocation10 + $0x14c] sm:$0xf] %v11894
    %12151 = vst [vmem:[#allocation10 + $0x150] sm:$0xf] %v11895
    %12152 = vst [vmem:[#allocation10 + $0x154] sm:$0xf] %v11896
    %12153 = vst [vmem:[#allocation10 + $0x158] sm:$0xf] %v11897
    %12154 = vst [vmem:[#allocation10 + $0x15c] sm:$0xf] %v11898
    %12155 = vst [vmem:[#allocation10 + $0x160] sm:$0xf] %v11899
    %12156 = vst [vmem:[#allocation10 + $0x164] sm:$0xf] %v11900
    %12157 = vst [vmem:[#allocation10 + $0x168] sm:$0xf] %v11901
    %12158 = vst [vmem:[#allocation10 + $0x16c] sm:$0xf] %v11902
    %12159 = vst [vmem:[#allocation10 + $0x170] sm:$0xf] %v11903
    %12160 = vst [vmem:[#allocation10 + $0x174] sm:$0xf] %v11904
    %12161 = vst [vmem:[#allocation10 + $0x178] sm:$0xf] %v11905
    %12162 = vst [vmem:[#allocation10 + $0x17c] sm:$0xf] %v11906
    %12163 = vst [vmem:[#allocation10 + $0x180] sm:$0xf] %v11907
    %12164 = vst [vmem:[#allocation10 + $0x184] sm:$0xf] %v11908
    %12165 = vst [vmem:[#allocation10 + $0x188] sm:$0xf] %v11909
    %12166 = vst [vmem:[#allocation10 + $0x18c] sm:$0xf] %v11910
    %12167 = vst [vmem:[#allocation10 + $0x190] sm:$0xf] %v11911
    %12168 = vst [vmem:[#allocation10 + $0x194] sm:$0xf] %v11912
    %12169 = vst [vmem:[#allocation10 + $0x198] sm:$0xf] %v11913
    %12170 = vst [vmem:[#allocation10 + $0x19c] sm:$0xf] %v11914
    %12171 = vst [vmem:[#allocation10 + $0x1a0] sm:$0xf] %v11915
    %12172 = vst [vmem:[#allocation10 + $0x1a4] sm:$0xf] %v11916
    %12173 = vst [vmem:[#allocation10 + $0x1a8] sm:$0xf] %v11917
    %12174 = vst [vmem:[#allocation10 + $0x1ac] sm:$0xf] %v11918
    %12175 = vst [vmem:[#allocation10 + $0x1b0] sm:$0xf] %v11919
    %12176 = vst [vmem:[#allocation10 + $0x1b4] sm:$0xf] %v11920
    %12177 = vst [vmem:[#allocation10 + $0x1b8] sm:$0xf] %v11921
    %12178 = vst [vmem:[#allocation10 + $0x1bc] sm:$0xf] %v11922
    %12179 = vst [vmem:[#allocation10 + $0x1c0] sm:$0xf] %v11923
    %12180 = vst [vmem:[#allocation10 + $0x1c4] sm:$0xf] %v11924
    %12181 = vst [vmem:[#allocation10 + $0x1c8] sm:$0xf] %v11925
    %12182 = vst [vmem:[#allocation10 + $0x1cc] sm:$0xf] %v11926
    %12183 = vst [vmem:[#allocation10 + $0x1d0] sm:$0xf] %v11927
    %12184 = vst [vmem:[#allocation10 + $0x1d4] sm:$0xf] %v11928
    %12185 = vst [vmem:[#allocation10 + $0x1d8] sm:$0xf] %v11929
    %12186 = vst [vmem:[#allocation10 + $0x1dc] sm:$0xf] %v11930
    %12187 = vst [vmem:[#allocation10 + $0x1e0] sm:$0xf] %v11931
    %12188 = vst [vmem:[#allocation10 + $0x1e4] sm:$0xf] %v11932
    %12189 = vst [vmem:[#allocation10 + $0x1e8] sm:$0xf] %v11933
    %12190 = vst [vmem:[#allocation10 + $0x1ec] sm:$0xf] %v11934
    %12191 = vst [vmem:[#allocation10 + $0x1f0] sm:$0xf] %v11935
    %12192 = vst [vmem:[#allocation10 + $0x1f4] sm:$0xf] %v11936
    %12193 = vst [vmem:[#allocation10 + $0x1f8] sm:$0xf] %v11937
    %12194 = vst [vmem:[#allocation10 + $0x1fc] sm:$0xf] %v11938
    %v12195 = vpack.c.bf16 %v11428, %v11427
    %v12196 = vpack.c.bf16 %v11430, %v11429
    %v12197 = vpack.c.bf16 %v11432, %v11431
    %v12198 = vpack.c.bf16 %v11434, %v11433
    %v12199 = vpack.c.bf16 %v11436, %v11435
    %v12200 = vpack.c.bf16 %v11438, %v11437
    %v12201 = vpack.c.bf16 %v11440, %v11439
    %v12202 = vpack.c.bf16 %v11442, %v11441
    %v12203 = vpack.c.bf16 %v11444, %v11443
    %v12204 = vpack.c.bf16 %v11446, %v11445
    %v12205 = vpack.c.bf16 %v11448, %v11447
    %v12206 = vpack.c.bf16 %v11450, %v11449
    %v12207 = vpack.c.bf16 %v11452, %v11451
    %v12208 = vpack.c.bf16 %v11454, %v11453
    %v12209 = vpack.c.bf16 %v11456, %v11455
    %v12210 = vpack.c.bf16 %v11458, %v11457
    %v12211 = vpack.c.bf16 %v11460, %v11459
    %v12212 = vpack.c.bf16 %v11462, %v11461
    %v12213 = vpack.c.bf16 %v11464, %v11463
    %v12214 = vpack.c.bf16 %v11466, %v11465
    %v12215 = vpack.c.bf16 %v11468, %v11467
    %v12216 = vpack.c.bf16 %v11470, %v11469
    %v12217 = vpack.c.bf16 %v11472, %v11471
    %v12218 = vpack.c.bf16 %v11474, %v11473
    %v12219 = vpack.c.bf16 %v11476, %v11475
    %v12220 = vpack.c.bf16 %v11478, %v11477
    %v12221 = vpack.c.bf16 %v11480, %v11479
    %v12222 = vpack.c.bf16 %v11482, %v11481
    %v12223 = vpack.c.bf16 %v11484, %v11483
    %v12224 = vpack.c.bf16 %v11486, %v11485
    %v12225 = vpack.c.bf16 %v11488, %v11487
    %v12226 = vpack.c.bf16 %v11490, %v11489
    %v12227 = vpack.c.bf16 %v11492, %v11491
    %v12228 = vpack.c.bf16 %v11494, %v11493
    %v12229 = vpack.c.bf16 %v11496, %v11495
    %v12230 = vpack.c.bf16 %v11498, %v11497
    %v12231 = vpack.c.bf16 %v11500, %v11499
    %v12232 = vpack.c.bf16 %v11502, %v11501
    %v12233 = vpack.c.bf16 %v11504, %v11503
    %v12234 = vpack.c.bf16 %v11506, %v11505
    %v12235 = vpack.c.bf16 %v11508, %v11507
    %v12236 = vpack.c.bf16 %v11510, %v11509
    %v12237 = vpack.c.bf16 %v11512, %v11511
    %v12238 = vpack.c.bf16 %v11514, %v11513
    %v12239 = vpack.c.bf16 %v11516, %v11515
    %v12240 = vpack.c.bf16 %v11518, %v11517
    %v12241 = vpack.c.bf16 %v11520, %v11519
    %v12242 = vpack.c.bf16 %v11522, %v11521
    %v12243 = vpack.c.bf16 %v11524, %v11523
    %v12244 = vpack.c.bf16 %v11526, %v11525
    %v12245 = vpack.c.bf16 %v11528, %v11527
    %v12246 = vpack.c.bf16 %v11530, %v11529
    %v12247 = vpack.c.bf16 %v11532, %v11531
    %v12248 = vpack.c.bf16 %v11534, %v11533
    %v12249 = vpack.c.bf16 %v11536, %v11535
    %v12250 = vpack.c.bf16 %v11538, %v11537
    %v12251 = vpack.c.bf16 %v11540, %v11539
    %v12252 = vpack.c.bf16 %v11542, %v11541
    %v12253 = vpack.c.bf16 %v11544, %v11543
    %v12254 = vpack.c.bf16 %v11546, %v11545
    %v12255 = vpack.c.bf16 %v11548, %v11547
    %v12256 = vpack.c.bf16 %v11550, %v11549
    %v12257 = vpack.c.bf16 %v11552, %v11551
    %v12258 = vpack.c.bf16 %v11554, %v11553
    %v12323 = vunpack.c.l.b16 %v12195
    %v12324 = vunpack.c.h.b16 %v12195
    %v12325 = vunpack.c.l.b16 %v12196
    %v12326 = vunpack.c.h.b16 %v12196
    %v12327 = vunpack.c.l.b16 %v12197
    %v12328 = vunpack.c.h.b16 %v12197
    %v12329 = vunpack.c.l.b16 %v12198
    %v12330 = vunpack.c.h.b16 %v12198
    %v12331 = vunpack.c.l.b16 %v12199
    %v12332 = vunpack.c.h.b16 %v12199
    %v12333 = vunpack.c.l.b16 %v12200
    %v12334 = vunpack.c.h.b16 %v12200
    %v12335 = vunpack.c.l.b16 %v12201
    %v12336 = vunpack.c.h.b16 %v12201
    %v12337 = vunpack.c.l.b16 %v12202
    %v12338 = vunpack.c.h.b16 %v12202
    %v12339 = vunpack.c.l.b16 %v12203
    %v12340 = vunpack.c.h.b16 %v12203
    %v12341 = vunpack.c.l.b16 %v12204
    %v12342 = vunpack.c.h.b16 %v12204
    %v12343 = vunpack.c.l.b16 %v12205
    %v12344 = vunpack.c.h.b16 %v12205
    %v12345 = vunpack.c.l.b16 %v12206
    %v12346 = vunpack.c.h.b16 %v12206
    %v12347 = vunpack.c.l.b16 %v12207
    %v12348 = vunpack.c.h.b16 %v12207
    %v12349 = vunpack.c.l.b16 %v12208
    %v12350 = vunpack.c.h.b16 %v12208
    %v12351 = vunpack.c.l.b16 %v12209
    %v12352 = vunpack.c.h.b16 %v12209
    %v12353 = vunpack.c.l.b16 %v12210
    %v12354 = vunpack.c.h.b16 %v12210
    %v12355 = vunpack.c.l.b16 %v12211
    %v12356 = vunpack.c.h.b16 %v12211
    %v12357 = vunpack.c.l.b16 %v12212
    %v12358 = vunpack.c.h.b16 %v12212
    %v12359 = vunpack.c.l.b16 %v12213
    %v12360 = vunpack.c.h.b16 %v12213
    %v12361 = vunpack.c.l.b16 %v12214
    %v12362 = vunpack.c.h.b16 %v12214
    %v12363 = vunpack.c.l.b16 %v12215
    %v12364 = vunpack.c.h.b16 %v12215
    %v12365 = vunpack.c.l.b16 %v12216
    %v12366 = vunpack.c.h.b16 %v12216
    %v12367 = vunpack.c.l.b16 %v12217
    %v12368 = vunpack.c.h.b16 %v12217
    %v12369 = vunpack.c.l.b16 %v12218
    %v12370 = vunpack.c.h.b16 %v12218
    %v12371 = vunpack.c.l.b16 %v12219
    %v12372 = vunpack.c.h.b16 %v12219
    %v12373 = vunpack.c.l.b16 %v12220
    %v12374 = vunpack.c.h.b16 %v12220
    %v12375 = vunpack.c.l.b16 %v12221
    %v12376 = vunpack.c.h.b16 %v12221
    %v12377 = vunpack.c.l.b16 %v12222
    %v12378 = vunpack.c.h.b16 %v12222
    %v12379 = vunpack.c.l.b16 %v12223
    %v12380 = vunpack.c.h.b16 %v12223
    %v12381 = vunpack.c.l.b16 %v12224
    %v12382 = vunpack.c.h.b16 %v12224
    %v12383 = vunpack.c.l.b16 %v12225
    %v12384 = vunpack.c.h.b16 %v12225
    %v12385 = vunpack.c.l.b16 %v12226
    %v12386 = vunpack.c.h.b16 %v12226
    %v12387 = vunpack.c.l.b16 %v12227
    %v12388 = vunpack.c.h.b16 %v12227
    %v12389 = vunpack.c.l.b16 %v12228
    %v12390 = vunpack.c.h.b16 %v12228
    %v12391 = vunpack.c.l.b16 %v12229
    %v12392 = vunpack.c.h.b16 %v12229
    %v12393 = vunpack.c.l.b16 %v12230
    %v12394 = vunpack.c.h.b16 %v12230
    %v12395 = vunpack.c.l.b16 %v12231
    %v12396 = vunpack.c.h.b16 %v12231
    %v12397 = vunpack.c.l.b16 %v12232
    %v12398 = vunpack.c.h.b16 %v12232
    %v12399 = vunpack.c.l.b16 %v12233
    %v12400 = vunpack.c.h.b16 %v12233
    %v12401 = vunpack.c.l.b16 %v12234
    %v12402 = vunpack.c.h.b16 %v12234
    %v12403 = vunpack.c.l.b16 %v12235
    %v12404 = vunpack.c.h.b16 %v12235
    %v12405 = vunpack.c.l.b16 %v12236
    %v12406 = vunpack.c.h.b16 %v12236
    %v12407 = vunpack.c.l.b16 %v12237
    %v12408 = vunpack.c.h.b16 %v12237
    %v12409 = vunpack.c.l.b16 %v12238
    %v12410 = vunpack.c.h.b16 %v12238
    %v12411 = vunpack.c.l.b16 %v12239
    %v12412 = vunpack.c.h.b16 %v12239
    %v12413 = vunpack.c.l.b16 %v12240
    %v12414 = vunpack.c.h.b16 %v12240
    %v12415 = vunpack.c.l.b16 %v12241
    %v12416 = vunpack.c.h.b16 %v12241
    %v12417 = vunpack.c.l.b16 %v12242
    %v12418 = vunpack.c.h.b16 %v12242
    %v12419 = vunpack.c.l.b16 %v12243
    %v12420 = vunpack.c.h.b16 %v12243
    %v12421 = vunpack.c.l.b16 %v12244
    %v12422 = vunpack.c.h.b16 %v12244
    %v12423 = vunpack.c.l.b16 %v12245
    %v12424 = vunpack.c.h.b16 %v12245
    %v12425 = vunpack.c.l.b16 %v12246
    %v12426 = vunpack.c.h.b16 %v12246
    %v12427 = vunpack.c.l.b16 %v12247
    %v12428 = vunpack.c.h.b16 %v12247
    %v12429 = vunpack.c.l.b16 %v12248
    %v12430 = vunpack.c.h.b16 %v12248
    %v12431 = vunpack.c.l.b16 %v12249
    %v12432 = vunpack.c.h.b16 %v12249
    %v12433 = vunpack.c.l.b16 %v12250
    %v12434 = vunpack.c.h.b16 %v12250
    %v12435 = vunpack.c.l.b16 %v12251
    %v12436 = vunpack.c.h.b16 %v12251
    %v12437 = vunpack.c.l.b16 %v12252
    %v12438 = vunpack.c.h.b16 %v12252
    %v12439 = vunpack.c.l.b16 %v12253
    %v12440 = vunpack.c.h.b16 %v12253
    %v12441 = vunpack.c.l.b16 %v12254
    %v12442 = vunpack.c.h.b16 %v12254
    %v12443 = vunpack.c.l.b16 %v12255
    %v12444 = vunpack.c.h.b16 %v12255
    %v12445 = vunpack.c.l.b16 %v12256
    %v12446 = vunpack.c.h.b16 %v12256
    %v12447 = vunpack.c.l.b16 %v12257
    %v12448 = vunpack.c.h.b16 %v12257
    %v12449 = vunpack.c.l.b16 %v12258
    %v12450 = vunpack.c.h.b16 %v12258
    %v12451 = vpack.c.b16 %v12323, %v12323
    %v12452 = vpack.c.b16 %v12324, %v12324
    %v12453 = vpack.c.b16 %v12325, %v12325
    %v12454 = vpack.c.b16 %v12326, %v12326
    %v12455 = vpack.c.b16 %v12327, %v12327
    %v12456 = vpack.c.b16 %v12328, %v12328
    %v12457 = vpack.c.b16 %v12329, %v12329
    %v12458 = vpack.c.b16 %v12330, %v12330
    %v12459 = vpack.c.b16 %v12331, %v12331
    %v12460 = vpack.c.b16 %v12332, %v12332
    %v12461 = vpack.c.b16 %v12333, %v12333
    %v12462 = vpack.c.b16 %v12334, %v12334
    %v12463 = vpack.c.b16 %v12335, %v12335
    %v12464 = vpack.c.b16 %v12336, %v12336
    %v12465 = vpack.c.b16 %v12337, %v12337
    %v12466 = vpack.c.b16 %v12338, %v12338
    %v12467 = vpack.c.b16 %v12339, %v12339
    %v12468 = vpack.c.b16 %v12340, %v12340
    %v12469 = vpack.c.b16 %v12341, %v12341
    %v12470 = vpack.c.b16 %v12342, %v12342
    %v12471 = vpack.c.b16 %v12343, %v12343
    %v12472 = vpack.c.b16 %v12344, %v12344
    %v12473 = vpack.c.b16 %v12345, %v12345
    %v12474 = vpack.c.b16 %v12346, %v12346
    %v12475 = vpack.c.b16 %v12347, %v12347
    %v12476 = vpack.c.b16 %v12348, %v12348
    %v12477 = vpack.c.b16 %v12349, %v12349
    %v12478 = vpack.c.b16 %v12350, %v12350
    %v12479 = vpack.c.b16 %v12351, %v12351
    %v12480 = vpack.c.b16 %v12352, %v12352
    %v12481 = vpack.c.b16 %v12353, %v12353
    %v12482 = vpack.c.b16 %v12354, %v12354
    %v12483 = vpack.c.b16 %v12355, %v12355
    %v12484 = vpack.c.b16 %v12356, %v12356
    %v12485 = vpack.c.b16 %v12357, %v12357
    %v12486 = vpack.c.b16 %v12358, %v12358
    %v12487 = vpack.c.b16 %v12359, %v12359
    %v12488 = vpack.c.b16 %v12360, %v12360
    %v12489 = vpack.c.b16 %v12361, %v12361
    %v12490 = vpack.c.b16 %v12362, %v12362
    %v12491 = vpack.c.b16 %v12363, %v12363
    %v12492 = vpack.c.b16 %v12364, %v12364
    %v12493 = vpack.c.b16 %v12365, %v12365
    %v12494 = vpack.c.b16 %v12366, %v12366
    %v12495 = vpack.c.b16 %v12367, %v12367
    %v12496 = vpack.c.b16 %v12368, %v12368
    %v12497 = vpack.c.b16 %v12369, %v12369
    %v12498 = vpack.c.b16 %v12370, %v12370
    %v12499 = vpack.c.b16 %v12371, %v12371
    %v12500 = vpack.c.b16 %v12372, %v12372
    %v12501 = vpack.c.b16 %v12373, %v12373
    %v12502 = vpack.c.b16 %v12374, %v12374
    %v12503 = vpack.c.b16 %v12375, %v12375
    %v12504 = vpack.c.b16 %v12376, %v12376
    %v12505 = vpack.c.b16 %v12377, %v12377
    %v12506 = vpack.c.b16 %v12378, %v12378
    %v12507 = vpack.c.b16 %v12379, %v12379
    %v12508 = vpack.c.b16 %v12380, %v12380
    %v12509 = vpack.c.b16 %v12381, %v12381
    %v12510 = vpack.c.b16 %v12382, %v12382
    %v12511 = vpack.c.b16 %v12383, %v12383
    %v12512 = vpack.c.b16 %v12384, %v12384
    %v12513 = vpack.c.b16 %v12385, %v12385
    %v12514 = vpack.c.b16 %v12386, %v12386
    %v12515 = vpack.c.b16 %v12387, %v12387
    %v12516 = vpack.c.b16 %v12388, %v12388
    %v12517 = vpack.c.b16 %v12389, %v12389
    %v12518 = vpack.c.b16 %v12390, %v12390
    %v12519 = vpack.c.b16 %v12391, %v12391
    %v12520 = vpack.c.b16 %v12392, %v12392
    %v12521 = vpack.c.b16 %v12393, %v12393
    %v12522 = vpack.c.b16 %v12394, %v12394
    %v12523 = vpack.c.b16 %v12395, %v12395
    %v12524 = vpack.c.b16 %v12396, %v12396
    %v12525 = vpack.c.b16 %v12397, %v12397
    %v12526 = vpack.c.b16 %v12398, %v12398
    %v12527 = vpack.c.b16 %v12399, %v12399
    %v12528 = vpack.c.b16 %v12400, %v12400
    %v12529 = vpack.c.b16 %v12401, %v12401
    %v12530 = vpack.c.b16 %v12402, %v12402
    %v12531 = vpack.c.b16 %v12403, %v12403
    %v12532 = vpack.c.b16 %v12404, %v12404
    %v12533 = vpack.c.b16 %v12405, %v12405
    %v12534 = vpack.c.b16 %v12406, %v12406
    %v12535 = vpack.c.b16 %v12407, %v12407
    %v12536 = vpack.c.b16 %v12408, %v12408
    %v12537 = vpack.c.b16 %v12409, %v12409
    %v12538 = vpack.c.b16 %v12410, %v12410
    %v12539 = vpack.c.b16 %v12411, %v12411
    %v12540 = vpack.c.b16 %v12412, %v12412
    %v12541 = vpack.c.b16 %v12413, %v12413
    %v12542 = vpack.c.b16 %v12414, %v12414
    %v12543 = vpack.c.b16 %v12415, %v12415
    %v12544 = vpack.c.b16 %v12416, %v12416
    %v12545 = vpack.c.b16 %v12417, %v12417
    %v12546 = vpack.c.b16 %v12418, %v12418
    %v12547 = vpack.c.b16 %v12419, %v12419
    %v12548 = vpack.c.b16 %v12420, %v12420
    %v12549 = vpack.c.b16 %v12421, %v12421
    %v12550 = vpack.c.b16 %v12422, %v12422
    %v12551 = vpack.c.b16 %v12423, %v12423
    %v12552 = vpack.c.b16 %v12424, %v12424
    %v12553 = vpack.c.b16 %v12425, %v12425
    %v12554 = vpack.c.b16 %v12426, %v12426
    %v12555 = vpack.c.b16 %v12427, %v12427
    %v12556 = vpack.c.b16 %v12428, %v12428
    %v12557 = vpack.c.b16 %v12429, %v12429
    %v12558 = vpack.c.b16 %v12430, %v12430
    %v12559 = vpack.c.b16 %v12431, %v12431
    %v12560 = vpack.c.b16 %v12432, %v12432
    %v12561 = vpack.c.b16 %v12433, %v12433
    %v12562 = vpack.c.b16 %v12434, %v12434
    %v12563 = vpack.c.b16 %v12435, %v12435
    %v12564 = vpack.c.b16 %v12436, %v12436
    %v12565 = vpack.c.b16 %v12437, %v12437
    %v12566 = vpack.c.b16 %v12438, %v12438
    %v12567 = vpack.c.b16 %v12439, %v12439
    %v12568 = vpack.c.b16 %v12440, %v12440
    %v12569 = vpack.c.b16 %v12441, %v12441
    %v12570 = vpack.c.b16 %v12442, %v12442
    %v12571 = vpack.c.b16 %v12443, %v12443
    %v12572 = vpack.c.b16 %v12444, %v12444
    %v12573 = vpack.c.b16 %v12445, %v12445
    %v12574 = vpack.c.b16 %v12446, %v12446
    %v12575 = vpack.c.b16 %v12447, %v12447
    %v12576 = vpack.c.b16 %v12448, %v12448
    %v12577 = vpack.c.b16 %v12449, %v12449
    %v12578 = vpack.c.b16 %v12450, %v12450
    %12707 = vst [vmem:[#allocation11] sm:$0xf] %v12451
    %12708 = vst [vmem:[#allocation11 + $0x4] sm:$0xf] %v12452
    %12709 = vst [vmem:[#allocation11 + $0x8] sm:$0xf] %v12453
    %12710 = vst [vmem:[#allocation11 + $0xc] sm:$0xf] %v12454
    %12711 = vst [vmem:[#allocation11 + $0x10] sm:$0xf] %v12455
    %12712 = vst [vmem:[#allocation11 + $0x14] sm:$0xf] %v12456
    %12713 = vst [vmem:[#allocation11 + $0x18] sm:$0xf] %v12457
    %12714 = vst [vmem:[#allocation11 + $0x1c] sm:$0xf] %v12458
    %12715 = vst [vmem:[#allocation11 + $0x20] sm:$0xf] %v12459
    %12716 = vst [vmem:[#allocation11 + $0x24] sm:$0xf] %v12460
    %12717 = vst [vmem:[#allocation11 + $0x28] sm:$0xf] %v12461
    %12718 = vst [vmem:[#allocation11 + $0x2c] sm:$0xf] %v12462
    %12719 = vst [vmem:[#allocation11 + $0x30] sm:$0xf] %v12463
    %12720 = vst [vmem:[#allocation11 + $0x34] sm:$0xf] %v12464
    %12721 = vst [vmem:[#allocation11 + $0x38] sm:$0xf] %v12465
    %12722 = vst [vmem:[#allocation11 + $0x3c] sm:$0xf] %v12466
    %12723 = vst [vmem:[#allocation11 + $0x40] sm:$0xf] %v12467
    %12724 = vst [vmem:[#allocation11 + $0x44] sm:$0xf] %v12468
    %12725 = vst [vmem:[#allocation11 + $0x48] sm:$0xf] %v12469
    %12726 = vst [vmem:[#allocation11 + $0x4c] sm:$0xf] %v12470
    %12727 = vst [vmem:[#allocation11 + $0x50] sm:$0xf] %v12471
    %12728 = vst [vmem:[#allocation11 + $0x54] sm:$0xf] %v12472
    %12729 = vst [vmem:[#allocation11 + $0x58] sm:$0xf] %v12473
    %12730 = vst [vmem:[#allocation11 + $0x5c] sm:$0xf] %v12474
    %12731 = vst [vmem:[#allocation11 + $0x60] sm:$0xf] %v12475
    %12732 = vst [vmem:[#allocation11 + $0x64] sm:$0xf] %v12476
    %12733 = vst [vmem:[#allocation11 + $0x68] sm:$0xf] %v12477
    %12734 = vst [vmem:[#allocation11 + $0x6c] sm:$0xf] %v12478
    %12735 = vst [vmem:[#allocation11 + $0x70] sm:$0xf] %v12479
    %12736 = vst [vmem:[#allocation11 + $0x74] sm:$0xf] %v12480
    %12737 = vst [vmem:[#allocation11 + $0x78] sm:$0xf] %v12481
    %12738 = vst [vmem:[#allocation11 + $0x7c] sm:$0xf] %v12482
    %12739 = vst [vmem:[#allocation11 + $0x80] sm:$0xf] %v12483
    %12740 = vst [vmem:[#allocation11 + $0x84] sm:$0xf] %v12484
    %12741 = vst [vmem:[#allocation11 + $0x88] sm:$0xf] %v12485
    %12742 = vst [vmem:[#allocation11 + $0x8c] sm:$0xf] %v12486
    %12743 = vst [vmem:[#allocation11 + $0x90] sm:$0xf] %v12487
    %12744 = vst [vmem:[#allocation11 + $0x94] sm:$0xf] %v12488
    %12745 = vst [vmem:[#allocation11 + $0x98] sm:$0xf] %v12489
    %12746 = vst [vmem:[#allocation11 + $0x9c] sm:$0xf] %v12490
    %12747 = vst [vmem:[#allocation11 + $0xa0] sm:$0xf] %v12491
    %12748 = vst [vmem:[#allocation11 + $0xa4] sm:$0xf] %v12492
    %12749 = vst [vmem:[#allocation11 + $0xa8] sm:$0xf] %v12493
    %12750 = vst [vmem:[#allocation11 + $0xac] sm:$0xf] %v12494
    %12751 = vst [vmem:[#allocation11 + $0xb0] sm:$0xf] %v12495
    %12752 = vst [vmem:[#allocation11 + $0xb4] sm:$0xf] %v12496
    %12753 = vst [vmem:[#allocation11 + $0xb8] sm:$0xf] %v12497
    %12754 = vst [vmem:[#allocation11 + $0xbc] sm:$0xf] %v12498
    %12755 = vst [vmem:[#allocation11 + $0xc0] sm:$0xf] %v12499
    %12756 = vst [vmem:[#allocation11 + $0xc4] sm:$0xf] %v12500
    %12757 = vst [vmem:[#allocation11 + $0xc8] sm:$0xf] %v12501
    %12758 = vst [vmem:[#allocation11 + $0xcc] sm:$0xf] %v12502
    %12759 = vst [vmem:[#allocation11 + $0xd0] sm:$0xf] %v12503
    %12760 = vst [vmem:[#allocation11 + $0xd4] sm:$0xf] %v12504
    %12761 = vst [vmem:[#allocation11 + $0xd8] sm:$0xf] %v12505
    %12762 = vst [vmem:[#allocation11 + $0xdc] sm:$0xf] %v12506
    %12763 = vst [vmem:[#allocation11 + $0xe0] sm:$0xf] %v12507
    %12764 = vst [vmem:[#allocation11 + $0xe4] sm:$0xf] %v12508
    %12765 = vst [vmem:[#allocation11 + $0xe8] sm:$0xf] %v12509
    %12766 = vst [vmem:[#allocation11 + $0xec] sm:$0xf] %v12510
    %12767 = vst [vmem:[#allocation11 + $0xf0] sm:$0xf] %v12511
    %12768 = vst [vmem:[#allocation11 + $0xf4] sm:$0xf] %v12512
    %12769 = vst [vmem:[#allocation11 + $0xf8] sm:$0xf] %v12513
    %12770 = vst [vmem:[#allocation11 + $0xfc] sm:$0xf] %v12514
    %12771 = vst [vmem:[#allocation11 + $0x100] sm:$0xf] %v12515
    %12772 = vst [vmem:[#allocation11 + $0x104] sm:$0xf] %v12516
    %12773 = vst [vmem:[#allocation11 + $0x108] sm:$0xf] %v12517
    %12774 = vst [vmem:[#allocation11 + $0x10c] sm:$0xf] %v12518
    %12775 = vst [vmem:[#allocation11 + $0x110] sm:$0xf] %v12519
    %12776 = vst [vmem:[#allocation11 + $0x114] sm:$0xf] %v12520
    %12777 = vst [vmem:[#allocation11 + $0x118] sm:$0xf] %v12521
    %12778 = vst [vmem:[#allocation11 + $0x11c] sm:$0xf] %v12522
    %12779 = vst [vmem:[#allocation11 + $0x120] sm:$0xf] %v12523
    %12780 = vst [vmem:[#allocation11 + $0x124] sm:$0xf] %v12524
    %12781 = vst [vmem:[#allocation11 + $0x128] sm:$0xf] %v12525
    %12782 = vst [vmem:[#allocation11 + $0x12c] sm:$0xf] %v12526
    %12783 = vst [vmem:[#allocation11 + $0x130] sm:$0xf] %v12527
    %12784 = vst [vmem:[#allocation11 + $0x134] sm:$0xf] %v12528
    %12785 = vst [vmem:[#allocation11 + $0x138] sm:$0xf] %v12529
    %12786 = vst [vmem:[#allocation11 + $0x13c] sm:$0xf] %v12530
    %12787 = vst [vmem:[#allocation11 + $0x140] sm:$0xf] %v12531
    %12788 = vst [vmem:[#allocation11 + $0x144] sm:$0xf] %v12532
    %12789 = vst [vmem:[#allocation11 + $0x148] sm:$0xf] %v12533
    %12790 = vst [vmem:[#allocation11 + $0x14c] sm:$0xf] %v12534
    %12791 = vst [vmem:[#allocation11 + $0x150] sm:$0xf] %v12535
    %12792 = vst [vmem:[#allocation11 + $0x154] sm:$0xf] %v12536
    %12793 = vst [vmem:[#allocation11 + $0x158] sm:$0xf] %v12537
    %12794 = vst [vmem:[#allocation11 + $0x15c] sm:$0xf] %v12538
    %12795 = vst [vmem:[#allocation11 + $0x160] sm:$0xf] %v12539
    %12796 = vst [vmem:[#allocation11 + $0x164] sm:$0xf] %v12540
    %12797 = vst [vmem:[#allocation11 + $0x168] sm:$0xf] %v12541
    %12798 = vst [vmem:[#allocation11 + $0x16c] sm:$0xf] %v12542
    %12799 = vst [vmem:[#allocation11 + $0x170] sm:$0xf] %v12543
    %12800 = vst [vmem:[#allocation11 + $0x174] sm:$0xf] %v12544
    %12801 = vst [vmem:[#allocation11 + $0x178] sm:$0xf] %v12545
    %12802 = vst [vmem:[#allocation11 + $0x17c] sm:$0xf] %v12546
    %12803 = vst [vmem:[#allocation11 + $0x180] sm:$0xf] %v12547
    %12804 = vst [vmem:[#allocation11 + $0x184] sm:$0xf] %v12548
    %12805 = vst [vmem:[#allocation11 + $0x188] sm:$0xf] %v12549
    %12806 = vst [vmem:[#allocation11 + $0x18c] sm:$0xf] %v12550
    %12807 = vst [vmem:[#allocation11 + $0x190] sm:$0xf] %v12551
    %12808 = vst [vmem:[#allocation11 + $0x194] sm:$0xf] %v12552
    %12809 = vst [vmem:[#allocation11 + $0x198] sm:$0xf] %v12553
    %12810 = vst [vmem:[#allocation11 + $0x19c] sm:$0xf] %v12554
    %12811 = vst [vmem:[#allocation11 + $0x1a0] sm:$0xf] %v12555
    %12812 = vst [vmem:[#allocation11 + $0x1a4] sm:$0xf] %v12556
    %12813 = vst [vmem:[#allocation11 + $0x1a8] sm:$0xf] %v12557
    %12814 = vst [vmem:[#allocation11 + $0x1ac] sm:$0xf] %v12558
    %12815 = vst [vmem:[#allocation11 + $0x1b0] sm:$0xf] %v12559
    %12816 = vst [vmem:[#allocation11 + $0x1b4] sm:$0xf] %v12560
    %12817 = vst [vmem:[#allocation11 + $0x1b8] sm:$0xf] %v12561
    %12818 = vst [vmem:[#allocation11 + $0x1bc] sm:$0xf] %v12562
    %12819 = vst [vmem:[#allocation11 + $0x1c0] sm:$0xf] %v12563
    %12820 = vst [vmem:[#allocation11 + $0x1c4] sm:$0xf] %v12564
    %12821 = vst [vmem:[#allocation11 + $0x1c8] sm:$0xf] %v12565
    %12822 = vst [vmem:[#allocation11 + $0x1cc] sm:$0xf] %v12566
    %12823 = vst [vmem:[#allocation11 + $0x1d0] sm:$0xf] %v12567
    %12824 = vst [vmem:[#allocation11 + $0x1d4] sm:$0xf] %v12568
    %12825 = vst [vmem:[#allocation11 + $0x1d8] sm:$0xf] %v12569
    %12826 = vst [vmem:[#allocation11 + $0x1dc] sm:$0xf] %v12570
    %12827 = vst [vmem:[#allocation11 + $0x1e0] sm:$0xf] %v12571
    %12828 = vst [vmem:[#allocation11 + $0x1e4] sm:$0xf] %v12572
    %12829 = vst [vmem:[#allocation11 + $0x1e8] sm:$0xf] %v12573
    %12830 = vst [vmem:[#allocation11 + $0x1ec] sm:$0xf] %v12574
    %12831 = vst [vmem:[#allocation11 + $0x1f0] sm:$0xf] %v12575
    %12832 = vst [vmem:[#allocation11 + $0x1f4] sm:$0xf] %v12576
    %12833 = vst [vmem:[#allocation11 + $0x1f8] sm:$0xf] %v12577
    %12834 = vst [vmem:[#allocation11 + $0x1fc] sm:$0xf] %v12578
    // Predicated region
    $region34: #{tpu_custom_call.1} parent=1 // pred_check
      _
    $region35: #{tpu_custom_call.1} parent=1 // pred_check_branch
      %12836 = sbr.rel (0) target = $region37
    $region36: #{tpu_custom_call.1} parent=1 // pred_region
      %s12838 = ssub.s32 8192, 8192
      %12839 = vsyncadd [#allocation6], %s12838
      %s12840 = sshll.u32 [#allocation10], 4
      %s12841 = int_to_ptr.vmem [resolvable:$true] %s12840
      %12846 = dma.vmem_to_hbm [thread:$0]  %s12841, 8192, %s6, [#allocation6], 64, 64, 4
    $region37: #{tpu_custom_call.1} parent=1 // pred_fallthru
      _
    // Predicated region
    $region38: #{tpu_custom_call.1} parent=1 // pred_check
      _
    $region39: #{tpu_custom_call.1} parent=1 // pred_check_branch
      %12848 = sbr.rel (0) target = $region41
    $region40: #{tpu_custom_call.1} parent=1 // pred_region
      %s12850 = ssub.s32 8192, 8192
      %12851 = vsyncadd [#allocation12], %s12850
      %s12852 = sshll.u32 [#allocation11], 4
      %s12853 = int_to_ptr.vmem [resolvable:$true] %s12852
      %12858 = dma.vmem_to_hbm [thread:$0]  %s12853, 8192, %s7, [#allocation12], 64, 64, 4
    $region41: #{tpu_custom_call.1} parent=1 // pred_fallthru
      _
    // Predicated region
    $region42: #{tpu_custom_call.1} parent=1 // pred_check
      _
    $region43: #{tpu_custom_call.1} parent=1 // pred_check_branch
      %12860 = sbr.rel (0) target = $region45
    $region44: #{tpu_custom_call.1} parent=1 // pred_region
      %12861 = dma.done [#allocation6], 8192
    $region45: #{tpu_custom_call.1} parent=1 // pred_fallthru
      _
    // Predicated region
    $region46: #{tpu_custom_call.1} parent=1 // pred_check
      _
    $region47: #{tpu_custom_call.1} parent=1 // pred_check_branch
      %12863 = sbr.rel (0) target = $region49
    $region48: #{tpu_custom_call.1} parent=1 // pred_region
      %12864 = dma.done [#allocation12], 8192
    $region49: #{tpu_custom_call.1} parent=1 // pred_fallthru
      _
    %12865 = vsyncpa [#allocation5], 1
    %12866 = vsyncpa [#allocation8], 1
    %12867 = vsyncpa [#allocation6], 1
    %12868 = vsyncpa [#allocation12], 1

</llo_original>
